<compile_context>
chip_gen: v6e
topology: v6e:2x2x1
jax: 0.10.0
libtpu: 0.0.40
codegen_flags: <defaults>
</compile_context>

<pallas_src>
import jax
import jax.numpy as jnp
from jax.experimental import pallas as pl
from jax.experimental.pallas import tpu as pltpu


# --------------------------------------------------------------------------
# Single fused kernel: cond vector -> (T+1)-step GRU -> log-softmax NLL loss
# --------------------------------------------------------------------------
def generator_kernel(img_ref, noise_ref,            # activations
                     wenc_ref, benc_ref,            # encoder Linear(4096, img_dim)
                     w1_ref, w2_ref, bemb_ref,      # embed2input split [img | noise]
                     emb_ref,                       # embedding table (V, E)
                     wi_ref, wh_ref, bg_ref,        # packed GRU weights
                     wout_ref, bout_ref,            # gru2out Linear(H, V)
                     inp_ref, tgt_ref,              # (T, B, 1) int32 ids
                     loss_ref):                     # (1, 1) f32 output
    B = noise_ref.shape[0]
    H = wh_ref.shape[0]
    V = wout_ref.shape[1]
    T = inp_ref.shape[0]

    # ---- conditioning vector x0 = relu(W_e2i @ [encoder(img); noise] + b) ----
    embed_img = (jnp.dot(img_ref[...], wenc_ref[...],
                         preferred_element_type=jnp.float32) + benc_ref[...])
    x0 = (jnp.dot(embed_img, w1_ref[...], preferred_element_type=jnp.float32)
          + jnp.dot(noise_ref[...], w2_ref[...], preferred_element_type=jnp.float32)
          + bemb_ref[...])
    x0 = jnp.maximum(x0, 0.0)                                    # (B, E)

    # ---- hoist VMEM loads / constants out of the unrolled loop ----
    wi = wi_ref[...]        # (E, 4H)  [Wir | Wiz | Win | 0  ]
    wh = wh_ref[...]        # (H, 4H)  [Whr | Whz | 0   | Whn]
    bg = bg_ref[...]        # (1, 4H)  [br  | bz  | bin | bhn]
    wout = wout_ref[...]    # (H, V)
    bout = bout_ref[...]    # (1, V)
    emb_tbl = emb_ref[...]  # (V, E)
    col = jax.lax.broadcasted_iota(jnp.int32, (B, V), 1)

    def gru_step(x, h):
        g = (jnp.dot(x, wi, preferred_element_type=jnp.float32)
             + jnp.dot(h, wh, preferred_element_type=jnp.float32) + bg)  # (B, 4H)
        r = jax.nn.sigmoid(g[:, 0:H])
        z = jax.nn.sigmoid(g[:, H:2 * H])
        n = jnp.tanh(g[:, 2 * H:3 * H] + r * g[:, 3 * H:4 * H])
        return (1.0 - z) * n + z * h

    # step 0: calc_cond — gru2out output is discarded, so skip the projection
    h = jnp.zeros((B, H), jnp.float32)
    h = gru_step(x0, h)

    total = jnp.zeros((1, 1), jnp.float32)
    for t in range(T):                                           # static unroll
        inp_t = inp_ref[t]                                       # (B, 1) int32
        onehot_in = (col == inp_t).astype(jnp.float32)           # (B, V)
        x = jnp.dot(onehot_in, emb_tbl,
                    preferred_element_type=jnp.float32)          # (B, E) embedding
        h = gru_step(x, h)

        logits = jnp.dot(h, wout,
                         preferred_element_type=jnp.float32) + bout   # (B, V)
        m = jnp.max(logits, axis=1, keepdims=True)
        lse = jnp.log(jnp.sum(jnp.exp(logits - m), axis=1, keepdims=True)) + m
        tgt_t = tgt_ref[t]                                       # (B, 1) int32
        picked = jnp.sum(jnp.where(col == tgt_t, logits, 0.0),
                         axis=1, keepdims=True)                  # (B, 1) logit[target]
        # NLL = lse - logit[target]; accumulate raw sum over batch, divide once
        total = total + jnp.sum(lse - picked, keepdims=True)

    loss_ref[...] = total * (1.0 / B)


# --------------------------------------------------------------------------
# Weight packing (done once, outside the kernel)
# --------------------------------------------------------------------------
def pack_params(p):
    img_dim = p["wenc_T"].shape[1]
    E, H = p["wir_T"].shape
    zE = jnp.zeros((E, H), jnp.float32)
    zH = jnp.zeros((H, H), jnp.float32)
    return {
        "wenc_bf16": p["wenc_T"].astype(jnp.bfloat16),
        "benc": p["benc"],
        "w1": p["w_emb2in_T"][:img_dim],          # (img_dim, E)
        "w2": p["w_emb2in_T"][img_dim:],          # (noise_dim, E)
        "bemb": p["bemb"],
        "emb_table": p["emb_table"],
        # packed gate layout: [ r | z | n_input | n_hidden ]  -> 4H lanes
        "wi_big": jnp.concatenate([p["wir_T"], p["wiz_T"], p["win_T"], zE], axis=1),
        "wh_big": jnp.concatenate([p["whr_T"], p["whz_T"], zH, p["whn_T"]], axis=1),
        "b_big": jnp.concatenate([p["br"], p["bz"], p["bin"], p["bhn"]], axis=1),
        "wout_T": p["wout_T"],
        "bout": p["bout"],
    }


# --------------------------------------------------------------------------
# Wrapper: full GENERATOR forward (MLE loss branch) — one pallas_call
# --------------------------------------------------------------------------
def generator_mle_loss(kp, inp, target, img, noise):
    # inp, target: (B, seq_len) int32 token ids
    inp_t = jnp.transpose(inp).astype(jnp.int32)[..., None]      # (T, B, 1)
    tgt_t = jnp.transpose(target).astype(jnp.int32)[..., None]   # (T, B, 1)

    vmem = pl.BlockSpec(memory_space=pltpu.MemorySpace.VMEM)
    loss = pl.pallas_call(
        generator_kernel,
        out_shape=jax.ShapeDtypeStruct((1, 1), jnp.float32),
        in_specs=[vmem] * 15,
        out_specs=vmem,
    )(img.astype(jnp.bfloat16), noise,
      kp["wenc_bf16"], kp["benc"],
      kp["w1"], kp["w2"], kp["bemb"],
      kp["emb_table"], kp["wi_big"], kp["wh_big"], kp["b_big"],
      kp["wout_T"], kp["bout"],
      inp_t, tgt_t)
    return loss.reshape(1)


# --------------------------------------------------------------------------
# Pure-JAX reference (mirrors kernel numerics; bf16 encoder weights)
# --------------------------------------------------------------------------
def ref_generator_mle_loss(p, inp, target, img, noise):
    embed_img = (jnp.dot(img.astype(jnp.bfloat16),
                         p["wenc_T"].astype(jnp.bfloat16),
                         preferred_element_type=jnp.float32) + p["benc"])
    x0 = jnp.concatenate([embed_img, noise], axis=1)
    x0 = jax.nn.relu(x0 @ p["w_emb2in_T"] + p["bemb"])

    def gru_step(h, x):
        r = jax.nn.sigmoid(x @ p["wir_T"] + h @ p["whr_T"] + p["br"])
        z = jax.nn.sigmoid(x @ p["wiz_T"] + h @ p["whz_T"] + p["bz"])
        n = jnp.tanh(x @ p["win_T"] + p["bin"]
                     + r * (h @ p["whn_T"] + p["bhn"]))
        return (1.0 - z) * n + z * h

    B, T = inp.shape
    h = jnp.zeros((B, p["whr_T"].shape[0]), jnp.float32)
    h = gru_step(h, x0)                                   # calc_cond (output discarded)
    inp_t = jnp.transpose(inp)
    tgt_t = jnp.transpose(target)
    loss = 0.0
    for i in range(T):
        emb = p["emb_table"][inp_t[i]]
        h = gru_step(h, emb)
        logits = h @ p["wout_T"] + p["bout"]
        logp = jax.nn.log_softmax(logits, axis=1)
        loss += -jnp.mean(logp[jnp.arange(B), tgt_t[i]])
    return jnp.reshape(loss, (1,))


# --------------------------------------------------------------------------
if __name__ == "__main__":
    # small, module-consistent shapes
    n_voc, emb_dim, hid_dim = 32, 32, 32
    noise_dim, img_dim, seq_len = 16, 16, 8
    B = 8
    IMG_FEAT = 4096  # hard-coded in nn.Linear(4096, img_dim)

    key = jax.random.PRNGKey(0)
    ks = jax.random.split(key, 24)
    f32 = jnp.float32

    def nrm(k, shape, scale):
        return (scale * jax.random.normal(k, shape)).astype(f32)

    raw = {
        # encoder: Linear(4096, img_dim)
        "wenc_T": nrm(ks[0], (IMG_FEAT, img_dim), 0.02),
        "benc":   nrm(ks[1], (1, img_dim), 0.1),
        # embed2input: Linear(img_dim + noise_dim, emb_dim)
        "w_emb2in_T": nrm(ks[2], (img_dim + noise_dim, emb_dim), 0.1),
        "bemb":       nrm(ks[3], (1, emb_dim), 0.1),
        # embeddings
        "emb_table": nrm(ks[4], (n_voc, emb_dim), 0.1),
        # GRU(emb_dim, hid_dim)  (weights pre-transposed, gate order r,z,n)
        "wir_T": nrm(ks[5], (emb_dim, hid_dim), 0.1),
        "wiz_T": nrm(ks[6], (emb_dim, hid_dim), 0.1),
        "win_T": nrm(ks[7], (emb_dim, hid_dim), 0.1),
        "whr_T": nrm(ks[8], (hid_dim, hid_dim), 0.1),
        "whz_T": nrm(ks[9], (hid_dim, hid_dim), 0.1),
        "whn_T": nrm(ks[10], (hid_dim, hid_dim), 0.1),
        "br":  nrm(ks[11], (1, hid_dim), 0.1),   # b_ir + b_hr folded
        "bz":  nrm(ks[12], (1, hid_dim), 0.1),   # b_iz + b_hz folded
        "bin": nrm(ks[13], (1, hid_dim), 0.1),
        "bhn": nrm(ks[14], (1, hid_dim), 0.1),
        # gru2out: Linear(hid_dim, n_voc)
        "wout_T": nrm(ks[15], (hid_dim, n_voc), 0.1),
        "bout":   nrm(ks[16], (1, n_voc), 0.1),
    }
    kparams = pack_params(raw)

    img = nrm(ks[17], (B, IMG_FEAT), 1.0)
    noise = nrm(ks[18], (B, noise_dim), 1.0)
    inp = jax.random.randint(ks[19], (B, seq_len), 0, n_voc, dtype=jnp.int32)
    target = jax.random.randint(ks[20], (B, seq_len), 0, n_voc, dtype=jnp.int32)

    loss = jax.jit(generator_mle_loss)(kparams, inp, target, img, noise)
    loss = jax.block_until_ready(loss)

    ref = ref_generator_mle_loss(raw, inp, target, img, noise)
    assert loss.shape == (1,)
    assert jnp.allclose(loss, ref, rtol=2e-3, atol=2e-3), (loss, ref)

    print("KERNEL_OK")
</pallas_src>

<mosaic_0001>
module attributes {stable_mosaic.version = 11 : i64} {
  func.func @generator_kernel(%arg0: memref<8x4096xbf16, #tpu.memory_space<vmem>>, %arg1: memref<8x16xf32, #tpu.memory_space<vmem>>, %arg2: memref<4096x16xbf16, #tpu.memory_space<vmem>>, %arg3: memref<1x16xf32, #tpu.memory_space<vmem>>, %arg4: memref<16x32xf32, #tpu.memory_space<vmem>>, %arg5: memref<16x32xf32, #tpu.memory_space<vmem>>, %arg6: memref<1x32xf32, #tpu.memory_space<vmem>>, %arg7: memref<32x32xf32, #tpu.memory_space<vmem>>, %arg8: memref<32x128xf32, #tpu.memory_space<vmem>>, %arg9: memref<32x128xf32, #tpu.memory_space<vmem>>, %arg10: memref<1x128xf32, #tpu.memory_space<vmem>>, %arg11: memref<32x32xf32, #tpu.memory_space<vmem>>, %arg12: memref<1x32xf32, #tpu.memory_space<vmem>>, %arg13: memref<8x8x1xi32, #tpu.memory_space<vmem>>, %arg14: memref<8x8x1xi32, #tpu.memory_space<vmem>>, %arg15: memref<1x1xf32, #tpu.memory_space<vmem>>) attributes {dimension_semantics = [], scalar_prefetch = 0 : i64, scratch_operands = 0 : i64, tpu.core_type = #tpu.core_type<tc>} {
    %c0 = arith.constant 0 : index
    %c0_0 = arith.constant 0 : index
    %0 = vector.load %arg0[%c0, %c0_0] : memref<8x4096xbf16, #tpu.memory_space<vmem>>, vector<8x4096xbf16>
    %c0_1 = arith.constant 0 : index
    %c0_2 = arith.constant 0 : index
    %1 = vector.load %arg2[%c0_1, %c0_2] : memref<4096x16xbf16, #tpu.memory_space<vmem>>, vector<4096x16xbf16>
    %cst = arith.constant dense<0.000000e+00> : vector<8x16xf32>
    %2 = tpu.matmul %0, %1, %cst {dimension_numbers = #tpu.dot_dimension_numbers<[1], [0], [0], [1], [0, 0, 1, 1], [], []>} : vector<8x4096xbf16>, vector<4096x16xbf16>, vector<8x16xf32> -> vector<8x16xf32>
    %c0_3 = arith.constant 0 : index
    %c0_4 = arith.constant 0 : index
    %3 = vector.load %arg3[%c0_3, %c0_4] : memref<1x16xf32, #tpu.memory_space<vmem>>, vector<1x16xf32>
    %4 = vector.broadcast %3 : vector<1x16xf32> to vector<8x16xf32>
    %5 = arith.addf %2, %4 : vector<8x16xf32>
    %c0_5 = arith.constant 0 : index
    %c0_6 = arith.constant 0 : index
    %6 = vector.load %arg4[%c0_5, %c0_6] : memref<16x32xf32, #tpu.memory_space<vmem>>, vector<16x32xf32>
    %cst_7 = arith.constant dense<0.000000e+00> : vector<8x32xf32>
    %7 = tpu.matmul %5, %6, %cst_7 {dimension_numbers = #tpu.dot_dimension_numbers<[1], [0], [0], [1], [0, 0, 1, 1], [], []>} : vector<8x16xf32>, vector<16x32xf32>, vector<8x32xf32> -> vector<8x32xf32>
    %c0_8 = arith.constant 0 : index
    %c0_9 = arith.constant 0 : index
    %8 = vector.load %arg1[%c0_8, %c0_9] : memref<8x16xf32, #tpu.memory_space<vmem>>, vector<8x16xf32>
    %c0_10 = arith.constant 0 : index
    %c0_11 = arith.constant 0 : index
    %9 = vector.load %arg5[%c0_10, %c0_11] : memref<16x32xf32, #tpu.memory_space<vmem>>, vector<16x32xf32>
    %cst_12 = arith.constant dense<0.000000e+00> : vector<8x32xf32>
    %10 = tpu.matmul %8, %9, %cst_12 {dimension_numbers = #tpu.dot_dimension_numbers<[1], [0], [0], [1], [0, 0, 1, 1], [], []>} : vector<8x16xf32>, vector<16x32xf32>, vector<8x32xf32> -> vector<8x32xf32>
    %11 = arith.addf %7, %10 : vector<8x32xf32>
    %c0_13 = arith.constant 0 : index
    %c0_14 = arith.constant 0 : index
    %12 = vector.load %arg6[%c0_13, %c0_14] : memref<1x32xf32, #tpu.memory_space<vmem>>, vector<1x32xf32>
    %13 = vector.broadcast %12 : vector<1x32xf32> to vector<8x32xf32>
    %14 = arith.addf %11, %13 : vector<8x32xf32>
    %cst_15 = arith.constant 0.000000e+00 : f32
    %15 = vector.broadcast %cst_15 : f32 to vector<8x32xf32>
    %16 = arith.maximumf %14, %15 : vector<8x32xf32>
    %c0_16 = arith.constant 0 : index
    %c0_17 = arith.constant 0 : index
    %17 = vector.load %arg8[%c0_16, %c0_17] : memref<32x128xf32, #tpu.memory_space<vmem>>, vector<32x128xf32>
    %c0_18 = arith.constant 0 : index
    %c0_19 = arith.constant 0 : index
    %18 = vector.load %arg9[%c0_18, %c0_19] : memref<32x128xf32, #tpu.memory_space<vmem>>, vector<32x128xf32>
    %c0_20 = arith.constant 0 : index
    %c0_21 = arith.constant 0 : index
    %19 = vector.load %arg10[%c0_20, %c0_21] : memref<1x128xf32, #tpu.memory_space<vmem>>, vector<1x128xf32>
    %c0_22 = arith.constant 0 : index
    %c0_23 = arith.constant 0 : index
    %20 = vector.load %arg11[%c0_22, %c0_23] : memref<32x32xf32, #tpu.memory_space<vmem>>, vector<32x32xf32>
    %c0_24 = arith.constant 0 : index
    %c0_25 = arith.constant 0 : index
    %21 = vector.load %arg12[%c0_24, %c0_25] : memref<1x32xf32, #tpu.memory_space<vmem>>, vector<1x32xf32>
    %c0_26 = arith.constant 0 : index
    %c0_27 = arith.constant 0 : index
    %22 = vector.load %arg7[%c0_26, %c0_27] : memref<32x32xf32, #tpu.memory_space<vmem>>, vector<32x32xf32>
    %23 = tpu.iota {dimensions = array<i32: 1>} : vector<8x32xi32>
    %cst_28 = arith.constant 0.000000e+00 : f32
    %24 = vector.broadcast %cst_28 : f32 to vector<8x32xf32>
    %cst_29 = arith.constant dense<0.000000e+00> : vector<8x128xf32>
    %25 = tpu.matmul %16, %17, %cst_29 {dimension_numbers = #tpu.dot_dimension_numbers<[1], [0], [0], [1], [0, 0, 1, 1], [], []>} : vector<8x32xf32>, vector<32x128xf32>, vector<8x128xf32> -> vector<8x128xf32>
    %cst_30 = arith.constant dense<0.000000e+00> : vector<8x128xf32>
    %26 = tpu.matmul %24, %18, %cst_30 {dimension_numbers = #tpu.dot_dimension_numbers<[1], [0], [0], [1], [0, 0, 1, 1], [], []>} : vector<8x32xf32>, vector<32x128xf32>, vector<8x128xf32> -> vector<8x128xf32>
    %27 = arith.addf %25, %26 : vector<8x128xf32>
    %28 = vector.broadcast %19 : vector<1x128xf32> to vector<8x128xf32>
    %29 = arith.addf %27, %28 : vector<8x128xf32>
    %30 = vector.extract_strided_slice %29 {offsets = [0, 0], sizes = [8, 32], strides = [1, 1]} : vector<8x128xf32> to vector<8x32xf32>
    %31 = arith.negf %30 : vector<8x32xf32>
    %32 = math.exp %31 : vector<8x32xf32>
    %cst_31 = arith.constant 1.000000e+00 : f32
    %33 = vector.broadcast %cst_31 : f32 to vector<8x32xf32>
    %34 = arith.addf %33, %32 : vector<8x32xf32>
    %35 = arith.divf %33, %34 : vector<8x32xf32>
    %36 = vector.extract_strided_slice %29 {offsets = [0, 32], sizes = [8, 32], strides = [1, 1]} : vector<8x128xf32> to vector<8x32xf32>
    %37 = arith.negf %36 : vector<8x32xf32>
    %38 = math.exp %37 : vector<8x32xf32>
    %cst_32 = arith.constant 1.000000e+00 : f32
    %39 = vector.broadcast %cst_32 : f32 to vector<8x32xf32>
    %40 = arith.addf %39, %38 : vector<8x32xf32>
    %41 = arith.divf %39, %40 : vector<8x32xf32>
    %42 = vector.extract_strided_slice %29 {offsets = [0, 64], sizes = [8, 32], strides = [1, 1]} : vector<8x128xf32> to vector<8x32xf32>
    %43 = vector.extract_strided_slice %29 {offsets = [0, 96], sizes = [8, 32], strides = [1, 1]} : vector<8x128xf32> to vector<8x32xf32>
    %44 = arith.mulf %35, %43 : vector<8x32xf32>
    %45 = arith.addf %42, %44 : vector<8x32xf32>
    %46 = math.tanh %45 : vector<8x32xf32>
    %cst_33 = arith.constant 1.000000e+00 : f32
    %47 = vector.broadcast %cst_33 : f32 to vector<8x32xf32>
    %48 = arith.subf %47, %41 : vector<8x32xf32>
    %49 = arith.mulf %48, %46 : vector<8x32xf32>
    %50 = arith.mulf %41, %24 : vector<8x32xf32>
    %51 = arith.addf %49, %50 : vector<8x32xf32>
    %cst_34 = arith.constant 0.000000e+00 : f32
    %52 = vector.broadcast %cst_34 : f32 to vector<1x1xf32>
    %c0_35 = arith.constant 0 : index
    %c0_36 = arith.constant 0 : index
    %c0_37 = arith.constant 0 : index
    %53 = vector.load %arg13[%c0_35, %c0_36, %c0_37] : memref<8x8x1xi32, #tpu.memory_space<vmem>>, vector<1x8x1xi32>
    %54 = vector.shape_cast %53 : vector<1x8x1xi32> to vector<8x1xi32>
    %55 = vector.broadcast %54 : vector<8x1xi32> to vector<8x32xi32>
    %56 = arith.cmpi eq, %23, %55 : vector<8x32xi32>
    %57 = arith.extui %56 : vector<8x32xi1> to vector<8x32xi32>
    %58 = arith.sitofp %57 : vector<8x32xi32> to vector<8x32xf32>
    %cst_38 = arith.constant dense<0.000000e+00> : vector<8x32xf32>
    %59 = tpu.matmul %58, %22, %cst_38 {dimension_numbers = #tpu.dot_dimension_numbers<[1], [0], [0], [1], [0, 0, 1, 1], [], []>} : vector<8x32xf32>, vector<32x32xf32>, vector<8x32xf32> -> vector<8x32xf32>
    %cst_39 = arith.constant dense<0.000000e+00> : vector<8x128xf32>
    %60 = tpu.matmul %59, %17, %cst_39 {dimension_numbers = #tpu.dot_dimension_numbers<[1], [0], [0], [1], [0, 0, 1, 1], [], []>} : vector<8x32xf32>, vector<32x128xf32>, vector<8x128xf32> -> vector<8x128xf32>
    %cst_40 = arith.constant dense<0.000000e+00> : vector<8x128xf32>
    %61 = tpu.matmul %51, %18, %cst_40 {dimension_numbers = #tpu.dot_dimension_numbers<[1], [0], [0], [1], [0, 0, 1, 1], [], []>} : vector<8x32xf32>, vector<32x128xf32>, vector<8x128xf32> -> vector<8x128xf32>
    %62 = arith.addf %60, %61 : vector<8x128xf32>
    %63 = vector.broadcast %19 : vector<1x128xf32> to vector<8x128xf32>
    %64 = arith.addf %62, %63 : vector<8x128xf32>
    %65 = vector.extract_strided_slice %64 {offsets = [0, 0], sizes = [8, 32], strides = [1, 1]} : vector<8x128xf32> to vector<8x32xf32>
    %66 = arith.negf %65 : vector<8x32xf32>
    %67 = math.exp %66 : vector<8x32xf32>
    %cst_41 = arith.constant 1.000000e+00 : f32
    %68 = vector.broadcast %cst_41 : f32 to vector<8x32xf32>
    %69 = arith.addf %68, %67 : vector<8x32xf32>
    %70 = arith.divf %68, %69 : vector<8x32xf32>
    %71 = vector.extract_strided_slice %64 {offsets = [0, 32], sizes = [8, 32], strides = [1, 1]} : vector<8x128xf32> to vector<8x32xf32>
    %72 = arith.negf %71 : vector<8x32xf32>
    %73 = math.exp %72 : vector<8x32xf32>
    %cst_42 = arith.constant 1.000000e+00 : f32
    %74 = vector.broadcast %cst_42 : f32 to vector<8x32xf32>
    %75 = arith.addf %74, %73 : vector<8x32xf32>
    %76 = arith.divf %74, %75 : vector<8x32xf32>
    %77 = vector.extract_strided_slice %64 {offsets = [0, 64], sizes = [8, 32], strides = [1, 1]} : vector<8x128xf32> to vector<8x32xf32>
    %78 = vector.extract_strided_slice %64 {offsets = [0, 96], sizes = [8, 32], strides = [1, 1]} : vector<8x128xf32> to vector<8x32xf32>
    %79 = arith.mulf %70, %78 : vector<8x32xf32>
    %80 = arith.addf %77, %79 : vector<8x32xf32>
    %81 = math.tanh %80 : vector<8x32xf32>
    %cst_43 = arith.constant 1.000000e+00 : f32
    %82 = vector.broadcast %cst_43 : f32 to vector<8x32xf32>
    %83 = arith.subf %82, %76 : vector<8x32xf32>
    %84 = arith.mulf %83, %81 : vector<8x32xf32>
    %85 = arith.mulf %76, %51 : vector<8x32xf32>
    %86 = arith.addf %84, %85 : vector<8x32xf32>
    %cst_44 = arith.constant dense<0.000000e+00> : vector<8x32xf32>
    %87 = tpu.matmul %86, %20, %cst_44 {dimension_numbers = #tpu.dot_dimension_numbers<[1], [0], [0], [1], [0, 0, 1, 1], [], []>} : vector<8x32xf32>, vector<32x32xf32>, vector<8x32xf32> -> vector<8x32xf32>
    %88 = vector.broadcast %21 : vector<1x32xf32> to vector<8x32xf32>
    %89 = arith.addf %87, %88 : vector<8x32xf32>
    %cst_45 = arith.constant dense<0xFF800000> : vector<8xf32>
    %90 = vector.multi_reduction <maximumf>, %89, %cst_45 [1] : vector<8x32xf32> to vector<8xf32>
    %91 = vector.shape_cast %90 : vector<8xf32> to vector<8x1xf32>
    %92 = vector.broadcast %91 : vector<8x1xf32> to vector<8x32xf32>
    %93 = arith.subf %89, %92 : vector<8x32xf32>
    %94 = math.exp %93 : vector<8x32xf32>
    %cst_46 = arith.constant dense<0.000000e+00> : vector<8xf32>
    %95 = vector.multi_reduction <add>, %94, %cst_46 [1] : vector<8x32xf32> to vector<8xf32>
    %96 = vector.shape_cast %95 : vector<8xf32> to vector<8x1xf32>
    %97 = math.log %96 : vector<8x1xf32>
    %98 = arith.addf %97, %91 : vector<8x1xf32>
    %c0_47 = arith.constant 0 : index
    %c0_48 = arith.constant 0 : index
    %c0_49 = arith.constant 0 : index
    %99 = vector.load %arg14[%c0_47, %c0_48, %c0_49] : memref<8x8x1xi32, #tpu.memory_space<vmem>>, vector<1x8x1xi32>
    %100 = vector.shape_cast %99 : vector<1x8x1xi32> to vector<8x1xi32>
    %101 = vector.broadcast %100 : vector<8x1xi32> to vector<8x32xi32>
    %102 = arith.cmpi eq, %23, %101 : vector<8x32xi32>
    %cst_50 = arith.constant 0.000000e+00 : f32
    %103 = vector.broadcast %cst_50 : f32 to vector<8x32xf32>
    %104 = arith.select %102, %89, %103 : vector<8x32xi1>, vector<8x32xf32>
    %cst_51 = arith.constant dense<0.000000e+00> : vector<8xf32>
    %105 = vector.multi_reduction <add>, %104, %cst_51 [1] : vector<8x32xf32> to vector<8xf32>
    %106 = vector.shape_cast %105 : vector<8xf32> to vector<8x1xf32>
    %107 = arith.subf %98, %106 : vector<8x1xf32>
    %108 = vector.shape_cast %107 : vector<8x1xf32> to vector<1x8x1xf32>
    %cst_52 = arith.constant dense<0.000000e+00> : vector<1xf32>
    %109 = vector.multi_reduction <add>, %108, %cst_52 [1, 2] : vector<1x8x1xf32> to vector<1xf32>
    %110 = vector.shape_cast %109 : vector<1xf32> to vector<1x1x1xf32>
    %111 = vector.extract %110[0, 0, 0] : f32 from vector<1x1x1xf32>
    %112 = vector.broadcast %111 : f32 to vector<1x1xf32>
    %113 = arith.addf %52, %112 : vector<1x1xf32>
    %c1 = arith.constant 1 : index
    %c0_53 = arith.constant 0 : index
    %c0_54 = arith.constant 0 : index
    %114 = vector.load %arg13[%c1, %c0_53, %c0_54] : memref<8x8x1xi32, #tpu.memory_space<vmem>>, vector<1x8x1xi32>
    %115 = vector.shape_cast %114 : vector<1x8x1xi32> to vector<8x1xi32>
    %116 = vector.broadcast %115 : vector<8x1xi32> to vector<8x32xi32>
    %117 = arith.cmpi eq, %23, %116 : vector<8x32xi32>
    %118 = arith.extui %117 : vector<8x32xi1> to vector<8x32xi32>
    %119 = arith.sitofp %118 : vector<8x32xi32> to vector<8x32xf32>
    %cst_55 = arith.constant dense<0.000000e+00> : vector<8x32xf32>
    %120 = tpu.matmul %119, %22, %cst_55 {dimension_numbers = #tpu.dot_dimension_numbers<[1], [0], [0], [1], [0, 0, 1, 1], [], []>} : vector<8x32xf32>, vector<32x32xf32>, vector<8x32xf32> -> vector<8x32xf32>
    %cst_56 = arith.constant dense<0.000000e+00> : vector<8x128xf32>
    %121 = tpu.matmul %120, %17, %cst_56 {dimension_numbers = #tpu.dot_dimension_numbers<[1], [0], [0], [1], [0, 0, 1, 1], [], []>} : vector<8x32xf32>, vector<32x128xf32>, vector<8x128xf32> -> vector<8x128xf32>
    %cst_57 = arith.constant dense<0.000000e+00> : vector<8x128xf32>
    %122 = tpu.matmul %86, %18, %cst_57 {dimension_numbers = #tpu.dot_dimension_numbers<[1], [0], [0], [1], [0, 0, 1, 1], [], []>} : vector<8x32xf32>, vector<32x128xf32>, vector<8x128xf32> -> vector<8x128xf32>
    %123 = arith.addf %121, %122 : vector<8x128xf32>
    %124 = vector.broadcast %19 : vector<1x128xf32> to vector<8x128xf32>
    %125 = arith.addf %123, %124 : vector<8x128xf32>
    %126 = vector.extract_strided_slice %125 {offsets = [0, 0], sizes = [8, 32], strides = [1, 1]} : vector<8x128xf32> to vector<8x32xf32>
    %127 = arith.negf %126 : vector<8x32xf32>
    %128 = math.exp %127 : vector<8x32xf32>
    %cst_58 = arith.constant 1.000000e+00 : f32
    %129 = vector.broadcast %cst_58 : f32 to vector<8x32xf32>
    %130 = arith.addf %129, %128 : vector<8x32xf32>
    %131 = arith.divf %129, %130 : vector<8x32xf32>
    %132 = vector.extract_strided_slice %125 {offsets = [0, 32], sizes = [8, 32], strides = [1, 1]} : vector<8x128xf32> to vector<8x32xf32>
    %133 = arith.negf %132 : vector<8x32xf32>
    %134 = math.exp %133 : vector<8x32xf32>
    %cst_59 = arith.constant 1.000000e+00 : f32
    %135 = vector.broadcast %cst_59 : f32 to vector<8x32xf32>
    %136 = arith.addf %135, %134 : vector<8x32xf32>
    %137 = arith.divf %135, %136 : vector<8x32xf32>
    %138 = vector.extract_strided_slice %125 {offsets = [0, 64], sizes = [8, 32], strides = [1, 1]} : vector<8x128xf32> to vector<8x32xf32>
    %139 = vector.extract_strided_slice %125 {offsets = [0, 96], sizes = [8, 32], strides = [1, 1]} : vector<8x128xf32> to vector<8x32xf32>
    %140 = arith.mulf %131, %139 : vector<8x32xf32>
    %141 = arith.addf %138, %140 : vector<8x32xf32>
    %142 = math.tanh %141 : vector<8x32xf32>
    %cst_60 = arith.constant 1.000000e+00 : f32
    %143 = vector.broadcast %cst_60 : f32 to vector<8x32xf32>
    %144 = arith.subf %143, %137 : vector<8x32xf32>
    %145 = arith.mulf %144, %142 : vector<8x32xf32>
    %146 = arith.mulf %137, %86 : vector<8x32xf32>
    %147 = arith.addf %145, %146 : vector<8x32xf32>
    %cst_61 = arith.constant dense<0.000000e+00> : vector<8x32xf32>
    %148 = tpu.matmul %147, %20, %cst_61 {dimension_numbers = #tpu.dot_dimension_numbers<[1], [0], [0], [1], [0, 0, 1, 1], [], []>} : vector<8x32xf32>, vector<32x32xf32>, vector<8x32xf32> -> vector<8x32xf32>
    %149 = vector.broadcast %21 : vector<1x32xf32> to vector<8x32xf32>
    %150 = arith.addf %148, %149 : vector<8x32xf32>
    %cst_62 = arith.constant dense<0xFF800000> : vector<8xf32>
    %151 = vector.multi_reduction <maximumf>, %150, %cst_62 [1] : vector<8x32xf32> to vector<8xf32>
    %152 = vector.shape_cast %151 : vector<8xf32> to vector<8x1xf32>
    %153 = vector.broadcast %152 : vector<8x1xf32> to vector<8x32xf32>
    %154 = arith.subf %150, %153 : vector<8x32xf32>
    %155 = math.exp %154 : vector<8x32xf32>
    %cst_63 = arith.constant dense<0.000000e+00> : vector<8xf32>
    %156 = vector.multi_reduction <add>, %155, %cst_63 [1] : vector<8x32xf32> to vector<8xf32>
    %157 = vector.shape_cast %156 : vector<8xf32> to vector<8x1xf32>
    %158 = math.log %157 : vector<8x1xf32>
    %159 = arith.addf %158, %152 : vector<8x1xf32>
    %c1_64 = arith.constant 1 : index
    %c0_65 = arith.constant 0 : index
    %c0_66 = arith.constant 0 : index
    %160 = vector.load %arg14[%c1_64, %c0_65, %c0_66] : memref<8x8x1xi32, #tpu.memory_space<vmem>>, vector<1x8x1xi32>
    %161 = vector.shape_cast %160 : vector<1x8x1xi32> to vector<8x1xi32>
    %162 = vector.broadcast %161 : vector<8x1xi32> to vector<8x32xi32>
    %163 = arith.cmpi eq, %23, %162 : vector<8x32xi32>
    %cst_67 = arith.constant 0.000000e+00 : f32
    %164 = vector.broadcast %cst_67 : f32 to vector<8x32xf32>
    %165 = arith.select %163, %150, %164 : vector<8x32xi1>, vector<8x32xf32>
    %cst_68 = arith.constant dense<0.000000e+00> : vector<8xf32>
    %166 = vector.multi_reduction <add>, %165, %cst_68 [1] : vector<8x32xf32> to vector<8xf32>
    %167 = vector.shape_cast %166 : vector<8xf32> to vector<8x1xf32>
    %168 = arith.subf %159, %167 : vector<8x1xf32>
    %169 = vector.shape_cast %168 : vector<8x1xf32> to vector<1x8x1xf32>
    %cst_69 = arith.constant dense<0.000000e+00> : vector<1xf32>
    %170 = vector.multi_reduction <add>, %169, %cst_69 [1, 2] : vector<1x8x1xf32> to vector<1xf32>
    %171 = vector.shape_cast %170 : vector<1xf32> to vector<1x1x1xf32>
    %172 = vector.extract %171[0, 0, 0] : f32 from vector<1x1x1xf32>
    %173 = vector.broadcast %172 : f32 to vector<1x1xf32>
    %174 = arith.addf %113, %173 : vector<1x1xf32>
    %c2 = arith.constant 2 : index
    %c0_70 = arith.constant 0 : index
    %c0_71 = arith.constant 0 : index
    %175 = vector.load %arg13[%c2, %c0_70, %c0_71] : memref<8x8x1xi32, #tpu.memory_space<vmem>>, vector<1x8x1xi32>
    %176 = vector.shape_cast %175 : vector<1x8x1xi32> to vector<8x1xi32>
    %177 = vector.broadcast %176 : vector<8x1xi32> to vector<8x32xi32>
    %178 = arith.cmpi eq, %23, %177 : vector<8x32xi32>
    %179 = arith.extui %178 : vector<8x32xi1> to vector<8x32xi32>
    %180 = arith.sitofp %179 : vector<8x32xi32> to vector<8x32xf32>
    %cst_72 = arith.constant dense<0.000000e+00> : vector<8x32xf32>
    %181 = tpu.matmul %180, %22, %cst_72 {dimension_numbers = #tpu.dot_dimension_numbers<[1], [0], [0], [1], [0, 0, 1, 1], [], []>} : vector<8x32xf32>, vector<32x32xf32>, vector<8x32xf32> -> vector<8x32xf32>
    %cst_73 = arith.constant dense<0.000000e+00> : vector<8x128xf32>
    %182 = tpu.matmul %181, %17, %cst_73 {dimension_numbers = #tpu.dot_dimension_numbers<[1], [0], [0], [1], [0, 0, 1, 1], [], []>} : vector<8x32xf32>, vector<32x128xf32>, vector<8x128xf32> -> vector<8x128xf32>
    %cst_74 = arith.constant dense<0.000000e+00> : vector<8x128xf32>
    %183 = tpu.matmul %147, %18, %cst_74 {dimension_numbers = #tpu.dot_dimension_numbers<[1], [0], [0], [1], [0, 0, 1, 1], [], []>} : vector<8x32xf32>, vector<32x128xf32>, vector<8x128xf32> -> vector<8x128xf32>
    %184 = arith.addf %182, %183 : vector<8x128xf32>
    %185 = vector.broadcast %19 : vector<1x128xf32> to vector<8x128xf32>
    %186 = arith.addf %184, %185 : vector<8x128xf32>
    %187 = vector.extract_strided_slice %186 {offsets = [0, 0], sizes = [8, 32], strides = [1, 1]} : vector<8x128xf32> to vector<8x32xf32>
    %188 = arith.negf %187 : vector<8x32xf32>
    %189 = math.exp %188 : vector<8x32xf32>
    %cst_75 = arith.constant 1.000000e+00 : f32
    %190 = vector.broadcast %cst_75 : f32 to vector<8x32xf32>
    %191 = arith.addf %190, %189 : vector<8x32xf32>
    %192 = arith.divf %190, %191 : vector<8x32xf32>
    %193 = vector.extract_strided_slice %186 {offsets = [0, 32], sizes = [8, 32], strides = [1, 1]} : vector<8x128xf32> to vector<8x32xf32>
    %194 = arith.negf %193 : vector<8x32xf32>
    %195 = math.exp %194 : vector<8x32xf32>
    %cst_76 = arith.constant 1.000000e+00 : f32
    %196 = vector.broadcast %cst_76 : f32 to vector<8x32xf32>
    %197 = arith.addf %196, %195 : vector<8x32xf32>
    %198 = arith.divf %196, %197 : vector<8x32xf32>
    %199 = vector.extract_strided_slice %186 {offsets = [0, 64], sizes = [8, 32], strides = [1, 1]} : vector<8x128xf32> to vector<8x32xf32>
    %200 = vector.extract_strided_slice %186 {offsets = [0, 96], sizes = [8, 32], strides = [1, 1]} : vector<8x128xf32> to vector<8x32xf32>
    %201 = arith.mulf %192, %200 : vector<8x32xf32>
    %202 = arith.addf %199, %201 : vector<8x32xf32>
    %203 = math.tanh %202 : vector<8x32xf32>
    %cst_77 = arith.constant 1.000000e+00 : f32
    %204 = vector.broadcast %cst_77 : f32 to vector<8x32xf32>
    %205 = arith.subf %204, %198 : vector<8x32xf32>
    %206 = arith.mulf %205, %203 : vector<8x32xf32>
    %207 = arith.mulf %198, %147 : vector<8x32xf32>
    %208 = arith.addf %206, %207 : vector<8x32xf32>
    %cst_78 = arith.constant dense<0.000000e+00> : vector<8x32xf32>
    %209 = tpu.matmul %208, %20, %cst_78 {dimension_numbers = #tpu.dot_dimension_numbers<[1], [0], [0], [1], [0, 0, 1, 1], [], []>} : vector<8x32xf32>, vector<32x32xf32>, vector<8x32xf32> -> vector<8x32xf32>
    %210 = vector.broadcast %21 : vector<1x32xf32> to vector<8x32xf32>
    %211 = arith.addf %209, %210 : vector<8x32xf32>
    %cst_79 = arith.constant dense<0xFF800000> : vector<8xf32>
    %212 = vector.multi_reduction <maximumf>, %211, %cst_79 [1] : vector<8x32xf32> to vector<8xf32>
    %213 = vector.shape_cast %212 : vector<8xf32> to vector<8x1xf32>
    %214 = vector.broadcast %213 : vector<8x1xf32> to vector<8x32xf32>
    %215 = arith.subf %211, %214 : vector<8x32xf32>
    %216 = math.exp %215 : vector<8x32xf32>
    %cst_80 = arith.constant dense<0.000000e+00> : vector<8xf32>
    %217 = vector.multi_reduction <add>, %216, %cst_80 [1] : vector<8x32xf32> to vector<8xf32>
    %218 = vector.shape_cast %217 : vector<8xf32> to vector<8x1xf32>
    %219 = math.log %218 : vector<8x1xf32>
    %220 = arith.addf %219, %213 : vector<8x1xf32>
    %c2_81 = arith.constant 2 : index
    %c0_82 = arith.constant 0 : index
    %c0_83 = arith.constant 0 : index
    %221 = vector.load %arg14[%c2_81, %c0_82, %c0_83] : memref<8x8x1xi32, #tpu.memory_space<vmem>>, vector<1x8x1xi32>
    %222 = vector.shape_cast %221 : vector<1x8x1xi32> to vector<8x1xi32>
    %223 = vector.broadcast %222 : vector<8x1xi32> to vector<8x32xi32>
    %224 = arith.cmpi eq, %23, %223 : vector<8x32xi32>
    %cst_84 = arith.constant 0.000000e+00 : f32
    %225 = vector.broadcast %cst_84 : f32 to vector<8x32xf32>
    %226 = arith.select %224, %211, %225 : vector<8x32xi1>, vector<8x32xf32>
    %cst_85 = arith.constant dense<0.000000e+00> : vector<8xf32>
    %227 = vector.multi_reduction <add>, %226, %cst_85 [1] : vector<8x32xf32> to vector<8xf32>
    %228 = vector.shape_cast %227 : vector<8xf32> to vector<8x1xf32>
    %229 = arith.subf %220, %228 : vector<8x1xf32>
    %230 = vector.shape_cast %229 : vector<8x1xf32> to vector<1x8x1xf32>
    %cst_86 = arith.constant dense<0.000000e+00> : vector<1xf32>
    %231 = vector.multi_reduction <add>, %230, %cst_86 [1, 2] : vector<1x8x1xf32> to vector<1xf32>
    %232 = vector.shape_cast %231 : vector<1xf32> to vector<1x1x1xf32>
    %233 = vector.extract %232[0, 0, 0] : f32 from vector<1x1x1xf32>
    %234 = vector.broadcast %233 : f32 to vector<1x1xf32>
    %235 = arith.addf %174, %234 : vector<1x1xf32>
    %c3 = arith.constant 3 : index
    %c0_87 = arith.constant 0 : index
    %c0_88 = arith.constant 0 : index
    %236 = vector.load %arg13[%c3, %c0_87, %c0_88] : memref<8x8x1xi32, #tpu.memory_space<vmem>>, vector<1x8x1xi32>
    %237 = vector.shape_cast %236 : vector<1x8x1xi32> to vector<8x1xi32>
    %238 = vector.broadcast %237 : vector<8x1xi32> to vector<8x32xi32>
    %239 = arith.cmpi eq, %23, %238 : vector<8x32xi32>
    %240 = arith.extui %239 : vector<8x32xi1> to vector<8x32xi32>
    %241 = arith.sitofp %240 : vector<8x32xi32> to vector<8x32xf32>
    %cst_89 = arith.constant dense<0.000000e+00> : vector<8x32xf32>
    %242 = tpu.matmul %241, %22, %cst_89 {dimension_numbers = #tpu.dot_dimension_numbers<[1], [0], [0], [1], [0, 0, 1, 1], [], []>} : vector<8x32xf32>, vector<32x32xf32>, vector<8x32xf32> -> vector<8x32xf32>
    %cst_90 = arith.constant dense<0.000000e+00> : vector<8x128xf32>
    %243 = tpu.matmul %242, %17, %cst_90 {dimension_numbers = #tpu.dot_dimension_numbers<[1], [0], [0], [1], [0, 0, 1, 1], [], []>} : vector<8x32xf32>, vector<32x128xf32>, vector<8x128xf32> -> vector<8x128xf32>
    %cst_91 = arith.constant dense<0.000000e+00> : vector<8x128xf32>
    %244 = tpu.matmul %208, %18, %cst_91 {dimension_numbers = #tpu.dot_dimension_numbers<[1], [0], [0], [1], [0, 0, 1, 1], [], []>} : vector<8x32xf32>, vector<32x128xf32>, vector<8x128xf32> -> vector<8x128xf32>
    %245 = arith.addf %243, %244 : vector<8x128xf32>
    %246 = vector.broadcast %19 : vector<1x128xf32> to vector<8x128xf32>
    %247 = arith.addf %245, %246 : vector<8x128xf32>
    %248 = vector.extract_strided_slice %247 {offsets = [0, 0], sizes = [8, 32], strides = [1, 1]} : vector<8x128xf32> to vector<8x32xf32>
    %249 = arith.negf %248 : vector<8x32xf32>
    %250 = math.exp %249 : vector<8x32xf32>
    %cst_92 = arith.constant 1.000000e+00 : f32
    %251 = vector.broadcast %cst_92 : f32 to vector<8x32xf32>
    %252 = arith.addf %251, %250 : vector<8x32xf32>
    %253 = arith.divf %251, %252 : vector<8x32xf32>
    %254 = vector.extract_strided_slice %247 {offsets = [0, 32], sizes = [8, 32], strides = [1, 1]} : vector<8x128xf32> to vector<8x32xf32>
    %255 = arith.negf %254 : vector<8x32xf32>
    %256 = math.exp %255 : vector<8x32xf32>
    %cst_93 = arith.constant 1.000000e+00 : f32
    %257 = vector.broadcast %cst_93 : f32 to vector<8x32xf32>
    %258 = arith.addf %257, %256 : vector<8x32xf32>
    %259 = arith.divf %257, %258 : vector<8x32xf32>
    %260 = vector.extract_strided_slice %247 {offsets = [0, 64], sizes = [8, 32], strides = [1, 1]} : vector<8x128xf32> to vector<8x32xf32>
    %261 = vector.extract_strided_slice %247 {offsets = [0, 96], sizes = [8, 32], strides = [1, 1]} : vector<8x128xf32> to vector<8x32xf32>
    %262 = arith.mulf %253, %261 : vector<8x32xf32>
    %263 = arith.addf %260, %262 : vector<8x32xf32>
    %264 = math.tanh %263 : vector<8x32xf32>
    %cst_94 = arith.constant 1.000000e+00 : f32
    %265 = vector.broadcast %cst_94 : f32 to vector<8x32xf32>
    %266 = arith.subf %265, %259 : vector<8x32xf32>
    %267 = arith.mulf %266, %264 : vector<8x32xf32>
    %268 = arith.mulf %259, %208 : vector<8x32xf32>
    %269 = arith.addf %267, %268 : vector<8x32xf32>
    %cst_95 = arith.constant dense<0.000000e+00> : vector<8x32xf32>
    %270 = tpu.matmul %269, %20, %cst_95 {dimension_numbers = #tpu.dot_dimension_numbers<[1], [0], [0], [1], [0, 0, 1, 1], [], []>} : vector<8x32xf32>, vector<32x32xf32>, vector<8x32xf32> -> vector<8x32xf32>
    %271 = vector.broadcast %21 : vector<1x32xf32> to vector<8x32xf32>
    %272 = arith.addf %270, %271 : vector<8x32xf32>
    %cst_96 = arith.constant dense<0xFF800000> : vector<8xf32>
    %273 = vector.multi_reduction <maximumf>, %272, %cst_96 [1] : vector<8x32xf32> to vector<8xf32>
    %274 = vector.shape_cast %273 : vector<8xf32> to vector<8x1xf32>
    %275 = vector.broadcast %274 : vector<8x1xf32> to vector<8x32xf32>
    %276 = arith.subf %272, %275 : vector<8x32xf32>
    %277 = math.exp %276 : vector<8x32xf32>
    %cst_97 = arith.constant dense<0.000000e+00> : vector<8xf32>
    %278 = vector.multi_reduction <add>, %277, %cst_97 [1] : vector<8x32xf32> to vector<8xf32>
    %279 = vector.shape_cast %278 : vector<8xf32> to vector<8x1xf32>
    %280 = math.log %279 : vector<8x1xf32>
    %281 = arith.addf %280, %274 : vector<8x1xf32>
    %c3_98 = arith.constant 3 : index
    %c0_99 = arith.constant 0 : index
    %c0_100 = arith.constant 0 : index
    %282 = vector.load %arg14[%c3_98, %c0_99, %c0_100] : memref<8x8x1xi32, #tpu.memory_space<vmem>>, vector<1x8x1xi32>
    %283 = vector.shape_cast %282 : vector<1x8x1xi32> to vector<8x1xi32>
    %284 = vector.broadcast %283 : vector<8x1xi32> to vector<8x32xi32>
    %285 = arith.cmpi eq, %23, %284 : vector<8x32xi32>
    %cst_101 = arith.constant 0.000000e+00 : f32
    %286 = vector.broadcast %cst_101 : f32 to vector<8x32xf32>
    %287 = arith.select %285, %272, %286 : vector<8x32xi1>, vector<8x32xf32>
    %cst_102 = arith.constant dense<0.000000e+00> : vector<8xf32>
    %288 = vector.multi_reduction <add>, %287, %cst_102 [1] : vector<8x32xf32> to vector<8xf32>
    %289 = vector.shape_cast %288 : vector<8xf32> to vector<8x1xf32>
    %290 = arith.subf %281, %289 : vector<8x1xf32>
    %291 = vector.shape_cast %290 : vector<8x1xf32> to vector<1x8x1xf32>
    %cst_103 = arith.constant dense<0.000000e+00> : vector<1xf32>
    %292 = vector.multi_reduction <add>, %291, %cst_103 [1, 2] : vector<1x8x1xf32> to vector<1xf32>
    %293 = vector.shape_cast %292 : vector<1xf32> to vector<1x1x1xf32>
    %294 = vector.extract %293[0, 0, 0] : f32 from vector<1x1x1xf32>
    %295 = vector.broadcast %294 : f32 to vector<1x1xf32>
    %296 = arith.addf %235, %295 : vector<1x1xf32>
    %c4 = arith.constant 4 : index
    %c0_104 = arith.constant 0 : index
    %c0_105 = arith.constant 0 : index
    %297 = vector.load %arg13[%c4, %c0_104, %c0_105] : memref<8x8x1xi32, #tpu.memory_space<vmem>>, vector<1x8x1xi32>
    %298 = vector.shape_cast %297 : vector<1x8x1xi32> to vector<8x1xi32>
    %299 = vector.broadcast %298 : vector<8x1xi32> to vector<8x32xi32>
    %300 = arith.cmpi eq, %23, %299 : vector<8x32xi32>
    %301 = arith.extui %300 : vector<8x32xi1> to vector<8x32xi32>
    %302 = arith.sitofp %301 : vector<8x32xi32> to vector<8x32xf32>
    %cst_106 = arith.constant dense<0.000000e+00> : vector<8x32xf32>
    %303 = tpu.matmul %302, %22, %cst_106 {dimension_numbers = #tpu.dot_dimension_numbers<[1], [0], [0], [1], [0, 0, 1, 1], [], []>} : vector<8x32xf32>, vector<32x32xf32>, vector<8x32xf32> -> vector<8x32xf32>
    %cst_107 = arith.constant dense<0.000000e+00> : vector<8x128xf32>
    %304 = tpu.matmul %303, %17, %cst_107 {dimension_numbers = #tpu.dot_dimension_numbers<[1], [0], [0], [1], [0, 0, 1, 1], [], []>} : vector<8x32xf32>, vector<32x128xf32>, vector<8x128xf32> -> vector<8x128xf32>
    %cst_108 = arith.constant dense<0.000000e+00> : vector<8x128xf32>
    %305 = tpu.matmul %269, %18, %cst_108 {dimension_numbers = #tpu.dot_dimension_numbers<[1], [0], [0], [1], [0, 0, 1, 1], [], []>} : vector<8x32xf32>, vector<32x128xf32>, vector<8x128xf32> -> vector<8x128xf32>
    %306 = arith.addf %304, %305 : vector<8x128xf32>
    %307 = vector.broadcast %19 : vector<1x128xf32> to vector<8x128xf32>
    %308 = arith.addf %306, %307 : vector<8x128xf32>
    %309 = vector.extract_strided_slice %308 {offsets = [0, 0], sizes = [8, 32], strides = [1, 1]} : vector<8x128xf32> to vector<8x32xf32>
    %310 = arith.negf %309 : vector<8x32xf32>
    %311 = math.exp %310 : vector<8x32xf32>
    %cst_109 = arith.constant 1.000000e+00 : f32
    %312 = vector.broadcast %cst_109 : f32 to vector<8x32xf32>
    %313 = arith.addf %312, %311 : vector<8x32xf32>
    %314 = arith.divf %312, %313 : vector<8x32xf32>
    %315 = vector.extract_strided_slice %308 {offsets = [0, 32], sizes = [8, 32], strides = [1, 1]} : vector<8x128xf32> to vector<8x32xf32>
    %316 = arith.negf %315 : vector<8x32xf32>
    %317 = math.exp %316 : vector<8x32xf32>
    %cst_110 = arith.constant 1.000000e+00 : f32
    %318 = vector.broadcast %cst_110 : f32 to vector<8x32xf32>
    %319 = arith.addf %318, %317 : vector<8x32xf32>
    %320 = arith.divf %318, %319 : vector<8x32xf32>
    %321 = vector.extract_strided_slice %308 {offsets = [0, 64], sizes = [8, 32], strides = [1, 1]} : vector<8x128xf32> to vector<8x32xf32>
    %322 = vector.extract_strided_slice %308 {offsets = [0, 96], sizes = [8, 32], strides = [1, 1]} : vector<8x128xf32> to vector<8x32xf32>
    %323 = arith.mulf %314, %322 : vector<8x32xf32>
    %324 = arith.addf %321, %323 : vector<8x32xf32>
    %325 = math.tanh %324 : vector<8x32xf32>
    %cst_111 = arith.constant 1.000000e+00 : f32
    %326 = vector.broadcast %cst_111 : f32 to vector<8x32xf32>
    %327 = arith.subf %326, %320 : vector<8x32xf32>
    %328 = arith.mulf %327, %325 : vector<8x32xf32>
    %329 = arith.mulf %320, %269 : vector<8x32xf32>
    %330 = arith.addf %328, %329 : vector<8x32xf32>
    %cst_112 = arith.constant dense<0.000000e+00> : vector<8x32xf32>
    %331 = tpu.matmul %330, %20, %cst_112 {dimension_numbers = #tpu.dot_dimension_numbers<[1], [0], [0], [1], [0, 0, 1, 1], [], []>} : vector<8x32xf32>, vector<32x32xf32>, vector<8x32xf32> -> vector<8x32xf32>
    %332 = vector.broadcast %21 : vector<1x32xf32> to vector<8x32xf32>
    %333 = arith.addf %331, %332 : vector<8x32xf32>
    %cst_113 = arith.constant dense<0xFF800000> : vector<8xf32>
    %334 = vector.multi_reduction <maximumf>, %333, %cst_113 [1] : vector<8x32xf32> to vector<8xf32>
    %335 = vector.shape_cast %334 : vector<8xf32> to vector<8x1xf32>
    %336 = vector.broadcast %335 : vector<8x1xf32> to vector<8x32xf32>
    %337 = arith.subf %333, %336 : vector<8x32xf32>
    %338 = math.exp %337 : vector<8x32xf32>
    %cst_114 = arith.constant dense<0.000000e+00> : vector<8xf32>
    %339 = vector.multi_reduction <add>, %338, %cst_114 [1] : vector<8x32xf32> to vector<8xf32>
    %340 = vector.shape_cast %339 : vector<8xf32> to vector<8x1xf32>
    %341 = math.log %340 : vector<8x1xf32>
    %342 = arith.addf %341, %335 : vector<8x1xf32>
    %c4_115 = arith.constant 4 : index
    %c0_116 = arith.constant 0 : index
    %c0_117 = arith.constant 0 : index
    %343 = vector.load %arg14[%c4_115, %c0_116, %c0_117] : memref<8x8x1xi32, #tpu.memory_space<vmem>>, vector<1x8x1xi32>
    %344 = vector.shape_cast %343 : vector<1x8x1xi32> to vector<8x1xi32>
    %345 = vector.broadcast %344 : vector<8x1xi32> to vector<8x32xi32>
    %346 = arith.cmpi eq, %23, %345 : vector<8x32xi32>
    %cst_118 = arith.constant 0.000000e+00 : f32
    %347 = vector.broadcast %cst_118 : f32 to vector<8x32xf32>
    %348 = arith.select %346, %333, %347 : vector<8x32xi1>, vector<8x32xf32>
    %cst_119 = arith.constant dense<0.000000e+00> : vector<8xf32>
    %349 = vector.multi_reduction <add>, %348, %cst_119 [1] : vector<8x32xf32> to vector<8xf32>
    %350 = vector.shape_cast %349 : vector<8xf32> to vector<8x1xf32>
    %351 = arith.subf %342, %350 : vector<8x1xf32>
    %352 = vector.shape_cast %351 : vector<8x1xf32> to vector<1x8x1xf32>
    %cst_120 = arith.constant dense<0.000000e+00> : vector<1xf32>
    %353 = vector.multi_reduction <add>, %352, %cst_120 [1, 2] : vector<1x8x1xf32> to vector<1xf32>
    %354 = vector.shape_cast %353 : vector<1xf32> to vector<1x1x1xf32>
    %355 = vector.extract %354[0, 0, 0] : f32 from vector<1x1x1xf32>
    %356 = vector.broadcast %355 : f32 to vector<1x1xf32>
    %357 = arith.addf %296, %356 : vector<1x1xf32>
    %c5 = arith.constant 5 : index
    %c0_121 = arith.constant 0 : index
    %c0_122 = arith.constant 0 : index
    %358 = vector.load %arg13[%c5, %c0_121, %c0_122] : memref<8x8x1xi32, #tpu.memory_space<vmem>>, vector<1x8x1xi32>
    %359 = vector.shape_cast %358 : vector<1x8x1xi32> to vector<8x1xi32>
    %360 = vector.broadcast %359 : vector<8x1xi32> to vector<8x32xi32>
    %361 = arith.cmpi eq, %23, %360 : vector<8x32xi32>
    %362 = arith.extui %361 : vector<8x32xi1> to vector<8x32xi32>
    %363 = arith.sitofp %362 : vector<8x32xi32> to vector<8x32xf32>
    %cst_123 = arith.constant dense<0.000000e+00> : vector<8x32xf32>
    %364 = tpu.matmul %363, %22, %cst_123 {dimension_numbers = #tpu.dot_dimension_numbers<[1], [0], [0], [1], [0, 0, 1, 1], [], []>} : vector<8x32xf32>, vector<32x32xf32>, vector<8x32xf32> -> vector<8x32xf32>
    %cst_124 = arith.constant dense<0.000000e+00> : vector<8x128xf32>
    %365 = tpu.matmul %364, %17, %cst_124 {dimension_numbers = #tpu.dot_dimension_numbers<[1], [0], [0], [1], [0, 0, 1, 1], [], []>} : vector<8x32xf32>, vector<32x128xf32>, vector<8x128xf32> -> vector<8x128xf32>
    %cst_125 = arith.constant dense<0.000000e+00> : vector<8x128xf32>
    %366 = tpu.matmul %330, %18, %cst_125 {dimension_numbers = #tpu.dot_dimension_numbers<[1], [0], [0], [1], [0, 0, 1, 1], [], []>} : vector<8x32xf32>, vector<32x128xf32>, vector<8x128xf32> -> vector<8x128xf32>
    %367 = arith.addf %365, %366 : vector<8x128xf32>
    %368 = vector.broadcast %19 : vector<1x128xf32> to vector<8x128xf32>
    %369 = arith.addf %367, %368 : vector<8x128xf32>
    %370 = vector.extract_strided_slice %369 {offsets = [0, 0], sizes = [8, 32], strides = [1, 1]} : vector<8x128xf32> to vector<8x32xf32>
    %371 = arith.negf %370 : vector<8x32xf32>
    %372 = math.exp %371 : vector<8x32xf32>
    %cst_126 = arith.constant 1.000000e+00 : f32
    %373 = vector.broadcast %cst_126 : f32 to vector<8x32xf32>
    %374 = arith.addf %373, %372 : vector<8x32xf32>
    %375 = arith.divf %373, %374 : vector<8x32xf32>
    %376 = vector.extract_strided_slice %369 {offsets = [0, 32], sizes = [8, 32], strides = [1, 1]} : vector<8x128xf32> to vector<8x32xf32>
    %377 = arith.negf %376 : vector<8x32xf32>
    %378 = math.exp %377 : vector<8x32xf32>
    %cst_127 = arith.constant 1.000000e+00 : f32
    %379 = vector.broadcast %cst_127 : f32 to vector<8x32xf32>
    %380 = arith.addf %379, %378 : vector<8x32xf32>
    %381 = arith.divf %379, %380 : vector<8x32xf32>
    %382 = vector.extract_strided_slice %369 {offsets = [0, 64], sizes = [8, 32], strides = [1, 1]} : vector<8x128xf32> to vector<8x32xf32>
    %383 = vector.extract_strided_slice %369 {offsets = [0, 96], sizes = [8, 32], strides = [1, 1]} : vector<8x128xf32> to vector<8x32xf32>
    %384 = arith.mulf %375, %383 : vector<8x32xf32>
    %385 = arith.addf %382, %384 : vector<8x32xf32>
    %386 = math.tanh %385 : vector<8x32xf32>
    %cst_128 = arith.constant 1.000000e+00 : f32
    %387 = vector.broadcast %cst_128 : f32 to vector<8x32xf32>
    %388 = arith.subf %387, %381 : vector<8x32xf32>
    %389 = arith.mulf %388, %386 : vector<8x32xf32>
    %390 = arith.mulf %381, %330 : vector<8x32xf32>
    %391 = arith.addf %389, %390 : vector<8x32xf32>
    %cst_129 = arith.constant dense<0.000000e+00> : vector<8x32xf32>
    %392 = tpu.matmul %391, %20, %cst_129 {dimension_numbers = #tpu.dot_dimension_numbers<[1], [0], [0], [1], [0, 0, 1, 1], [], []>} : vector<8x32xf32>, vector<32x32xf32>, vector<8x32xf32> -> vector<8x32xf32>
    %393 = vector.broadcast %21 : vector<1x32xf32> to vector<8x32xf32>
    %394 = arith.addf %392, %393 : vector<8x32xf32>
    %cst_130 = arith.constant dense<0xFF800000> : vector<8xf32>
    %395 = vector.multi_reduction <maximumf>, %394, %cst_130 [1] : vector<8x32xf32> to vector<8xf32>
    %396 = vector.shape_cast %395 : vector<8xf32> to vector<8x1xf32>
    %397 = vector.broadcast %396 : vector<8x1xf32> to vector<8x32xf32>
    %398 = arith.subf %394, %397 : vector<8x32xf32>
    %399 = math.exp %398 : vector<8x32xf32>
    %cst_131 = arith.constant dense<0.000000e+00> : vector<8xf32>
    %400 = vector.multi_reduction <add>, %399, %cst_131 [1] : vector<8x32xf32> to vector<8xf32>
    %401 = vector.shape_cast %400 : vector<8xf32> to vector<8x1xf32>
    %402 = math.log %401 : vector<8x1xf32>
    %403 = arith.addf %402, %396 : vector<8x1xf32>
    %c5_132 = arith.constant 5 : index
    %c0_133 = arith.constant 0 : index
    %c0_134 = arith.constant 0 : index
    %404 = vector.load %arg14[%c5_132, %c0_133, %c0_134] : memref<8x8x1xi32, #tpu.memory_space<vmem>>, vector<1x8x1xi32>
    %405 = vector.shape_cast %404 : vector<1x8x1xi32> to vector<8x1xi32>
    %406 = vector.broadcast %405 : vector<8x1xi32> to vector<8x32xi32>
    %407 = arith.cmpi eq, %23, %406 : vector<8x32xi32>
    %cst_135 = arith.constant 0.000000e+00 : f32
    %408 = vector.broadcast %cst_135 : f32 to vector<8x32xf32>
    %409 = arith.select %407, %394, %408 : vector<8x32xi1>, vector<8x32xf32>
    %cst_136 = arith.constant dense<0.000000e+00> : vector<8xf32>
    %410 = vector.multi_reduction <add>, %409, %cst_136 [1] : vector<8x32xf32> to vector<8xf32>
    %411 = vector.shape_cast %410 : vector<8xf32> to vector<8x1xf32>
    %412 = arith.subf %403, %411 : vector<8x1xf32>
    %413 = vector.shape_cast %412 : vector<8x1xf32> to vector<1x8x1xf32>
    %cst_137 = arith.constant dense<0.000000e+00> : vector<1xf32>
    %414 = vector.multi_reduction <add>, %413, %cst_137 [1, 2] : vector<1x8x1xf32> to vector<1xf32>
    %415 = vector.shape_cast %414 : vector<1xf32> to vector<1x1x1xf32>
    %416 = vector.extract %415[0, 0, 0] : f32 from vector<1x1x1xf32>
    %417 = vector.broadcast %416 : f32 to vector<1x1xf32>
    %418 = arith.addf %357, %417 : vector<1x1xf32>
    %c6 = arith.constant 6 : index
    %c0_138 = arith.constant 0 : index
    %c0_139 = arith.constant 0 : index
    %419 = vector.load %arg13[%c6, %c0_138, %c0_139] : memref<8x8x1xi32, #tpu.memory_space<vmem>>, vector<1x8x1xi32>
    %420 = vector.shape_cast %419 : vector<1x8x1xi32> to vector<8x1xi32>
    %421 = vector.broadcast %420 : vector<8x1xi32> to vector<8x32xi32>
    %422 = arith.cmpi eq, %23, %421 : vector<8x32xi32>
    %423 = arith.extui %422 : vector<8x32xi1> to vector<8x32xi32>
    %424 = arith.sitofp %423 : vector<8x32xi32> to vector<8x32xf32>
    %cst_140 = arith.constant dense<0.000000e+00> : vector<8x32xf32>
    %425 = tpu.matmul %424, %22, %cst_140 {dimension_numbers = #tpu.dot_dimension_numbers<[1], [0], [0], [1], [0, 0, 1, 1], [], []>} : vector<8x32xf32>, vector<32x32xf32>, vector<8x32xf32> -> vector<8x32xf32>
    %cst_141 = arith.constant dense<0.000000e+00> : vector<8x128xf32>
    %426 = tpu.matmul %425, %17, %cst_141 {dimension_numbers = #tpu.dot_dimension_numbers<[1], [0], [0], [1], [0, 0, 1, 1], [], []>} : vector<8x32xf32>, vector<32x128xf32>, vector<8x128xf32> -> vector<8x128xf32>
    %cst_142 = arith.constant dense<0.000000e+00> : vector<8x128xf32>
    %427 = tpu.matmul %391, %18, %cst_142 {dimension_numbers = #tpu.dot_dimension_numbers<[1], [0], [0], [1], [0, 0, 1, 1], [], []>} : vector<8x32xf32>, vector<32x128xf32>, vector<8x128xf32> -> vector<8x128xf32>
    %428 = arith.addf %426, %427 : vector<8x128xf32>
    %429 = vector.broadcast %19 : vector<1x128xf32> to vector<8x128xf32>
    %430 = arith.addf %428, %429 : vector<8x128xf32>
    %431 = vector.extract_strided_slice %430 {offsets = [0, 0], sizes = [8, 32], strides = [1, 1]} : vector<8x128xf32> to vector<8x32xf32>
    %432 = arith.negf %431 : vector<8x32xf32>
    %433 = math.exp %432 : vector<8x32xf32>
    %cst_143 = arith.constant 1.000000e+00 : f32
    %434 = vector.broadcast %cst_143 : f32 to vector<8x32xf32>
    %435 = arith.addf %434, %433 : vector<8x32xf32>
    %436 = arith.divf %434, %435 : vector<8x32xf32>
    %437 = vector.extract_strided_slice %430 {offsets = [0, 32], sizes = [8, 32], strides = [1, 1]} : vector<8x128xf32> to vector<8x32xf32>
    %438 = arith.negf %437 : vector<8x32xf32>
    %439 = math.exp %438 : vector<8x32xf32>
    %cst_144 = arith.constant 1.000000e+00 : f32
    %440 = vector.broadcast %cst_144 : f32 to vector<8x32xf32>
    %441 = arith.addf %440, %439 : vector<8x32xf32>
    %442 = arith.divf %440, %441 : vector<8x32xf32>
    %443 = vector.extract_strided_slice %430 {offsets = [0, 64], sizes = [8, 32], strides = [1, 1]} : vector<8x128xf32> to vector<8x32xf32>
    %444 = vector.extract_strided_slice %430 {offsets = [0, 96], sizes = [8, 32], strides = [1, 1]} : vector<8x128xf32> to vector<8x32xf32>
    %445 = arith.mulf %436, %444 : vector<8x32xf32>
    %446 = arith.addf %443, %445 : vector<8x32xf32>
    %447 = math.tanh %446 : vector<8x32xf32>
    %cst_145 = arith.constant 1.000000e+00 : f32
    %448 = vector.broadcast %cst_145 : f32 to vector<8x32xf32>
    %449 = arith.subf %448, %442 : vector<8x32xf32>
    %450 = arith.mulf %449, %447 : vector<8x32xf32>
    %451 = arith.mulf %442, %391 : vector<8x32xf32>
    %452 = arith.addf %450, %451 : vector<8x32xf32>
    %cst_146 = arith.constant dense<0.000000e+00> : vector<8x32xf32>
    %453 = tpu.matmul %452, %20, %cst_146 {dimension_numbers = #tpu.dot_dimension_numbers<[1], [0], [0], [1], [0, 0, 1, 1], [], []>} : vector<8x32xf32>, vector<32x32xf32>, vector<8x32xf32> -> vector<8x32xf32>
    %454 = vector.broadcast %21 : vector<1x32xf32> to vector<8x32xf32>
    %455 = arith.addf %453, %454 : vector<8x32xf32>
    %cst_147 = arith.constant dense<0xFF800000> : vector<8xf32>
    %456 = vector.multi_reduction <maximumf>, %455, %cst_147 [1] : vector<8x32xf32> to vector<8xf32>
    %457 = vector.shape_cast %456 : vector<8xf32> to vector<8x1xf32>
    %458 = vector.broadcast %457 : vector<8x1xf32> to vector<8x32xf32>
    %459 = arith.subf %455, %458 : vector<8x32xf32>
    %460 = math.exp %459 : vector<8x32xf32>
    %cst_148 = arith.constant dense<0.000000e+00> : vector<8xf32>
    %461 = vector.multi_reduction <add>, %460, %cst_148 [1] : vector<8x32xf32> to vector<8xf32>
    %462 = vector.shape_cast %461 : vector<8xf32> to vector<8x1xf32>
    %463 = math.log %462 : vector<8x1xf32>
    %464 = arith.addf %463, %457 : vector<8x1xf32>
    %c6_149 = arith.constant 6 : index
    %c0_150 = arith.constant 0 : index
    %c0_151 = arith.constant 0 : index
    %465 = vector.load %arg14[%c6_149, %c0_150, %c0_151] : memref<8x8x1xi32, #tpu.memory_space<vmem>>, vector<1x8x1xi32>
    %466 = vector.shape_cast %465 : vector<1x8x1xi32> to vector<8x1xi32>
    %467 = vector.broadcast %466 : vector<8x1xi32> to vector<8x32xi32>
    %468 = arith.cmpi eq, %23, %467 : vector<8x32xi32>
    %cst_152 = arith.constant 0.000000e+00 : f32
    %469 = vector.broadcast %cst_152 : f32 to vector<8x32xf32>
    %470 = arith.select %468, %455, %469 : vector<8x32xi1>, vector<8x32xf32>
    %cst_153 = arith.constant dense<0.000000e+00> : vector<8xf32>
    %471 = vector.multi_reduction <add>, %470, %cst_153 [1] : vector<8x32xf32> to vector<8xf32>
    %472 = vector.shape_cast %471 : vector<8xf32> to vector<8x1xf32>
    %473 = arith.subf %464, %472 : vector<8x1xf32>
    %474 = vector.shape_cast %473 : vector<8x1xf32> to vector<1x8x1xf32>
    %cst_154 = arith.constant dense<0.000000e+00> : vector<1xf32>
    %475 = vector.multi_reduction <add>, %474, %cst_154 [1, 2] : vector<1x8x1xf32> to vector<1xf32>
    %476 = vector.shape_cast %475 : vector<1xf32> to vector<1x1x1xf32>
    %477 = vector.extract %476[0, 0, 0] : f32 from vector<1x1x1xf32>
    %478 = vector.broadcast %477 : f32 to vector<1x1xf32>
    %479 = arith.addf %418, %478 : vector<1x1xf32>
    %c7 = arith.constant 7 : index
    %c0_155 = arith.constant 0 : index
    %c0_156 = arith.constant 0 : index
    %480 = vector.load %arg13[%c7, %c0_155, %c0_156] : memref<8x8x1xi32, #tpu.memory_space<vmem>>, vector<1x8x1xi32>
    %481 = vector.shape_cast %480 : vector<1x8x1xi32> to vector<8x1xi32>
    %482 = vector.broadcast %481 : vector<8x1xi32> to vector<8x32xi32>
    %483 = arith.cmpi eq, %23, %482 : vector<8x32xi32>
    %484 = arith.extui %483 : vector<8x32xi1> to vector<8x32xi32>
    %485 = arith.sitofp %484 : vector<8x32xi32> to vector<8x32xf32>
    %cst_157 = arith.constant dense<0.000000e+00> : vector<8x32xf32>
    %486 = tpu.matmul %485, %22, %cst_157 {dimension_numbers = #tpu.dot_dimension_numbers<[1], [0], [0], [1], [0, 0, 1, 1], [], []>} : vector<8x32xf32>, vector<32x32xf32>, vector<8x32xf32> -> vector<8x32xf32>
    %cst_158 = arith.constant dense<0.000000e+00> : vector<8x128xf32>
    %487 = tpu.matmul %486, %17, %cst_158 {dimension_numbers = #tpu.dot_dimension_numbers<[1], [0], [0], [1], [0, 0, 1, 1], [], []>} : vector<8x32xf32>, vector<32x128xf32>, vector<8x128xf32> -> vector<8x128xf32>
    %cst_159 = arith.constant dense<0.000000e+00> : vector<8x128xf32>
    %488 = tpu.matmul %452, %18, %cst_159 {dimension_numbers = #tpu.dot_dimension_numbers<[1], [0], [0], [1], [0, 0, 1, 1], [], []>} : vector<8x32xf32>, vector<32x128xf32>, vector<8x128xf32> -> vector<8x128xf32>
    %489 = arith.addf %487, %488 : vector<8x128xf32>
    %490 = vector.broadcast %19 : vector<1x128xf32> to vector<8x128xf32>
    %491 = arith.addf %489, %490 : vector<8x128xf32>
    %492 = vector.extract_strided_slice %491 {offsets = [0, 0], sizes = [8, 32], strides = [1, 1]} : vector<8x128xf32> to vector<8x32xf32>
    %493 = arith.negf %492 : vector<8x32xf32>
    %494 = math.exp %493 : vector<8x32xf32>
    %cst_160 = arith.constant 1.000000e+00 : f32
    %495 = vector.broadcast %cst_160 : f32 to vector<8x32xf32>
    %496 = arith.addf %495, %494 : vector<8x32xf32>
    %497 = arith.divf %495, %496 : vector<8x32xf32>
    %498 = vector.extract_strided_slice %491 {offsets = [0, 32], sizes = [8, 32], strides = [1, 1]} : vector<8x128xf32> to vector<8x32xf32>
    %499 = arith.negf %498 : vector<8x32xf32>
    %500 = math.exp %499 : vector<8x32xf32>
    %cst_161 = arith.constant 1.000000e+00 : f32
    %501 = vector.broadcast %cst_161 : f32 to vector<8x32xf32>
    %502 = arith.addf %501, %500 : vector<8x32xf32>
    %503 = arith.divf %501, %502 : vector<8x32xf32>
    %504 = vector.extract_strided_slice %491 {offsets = [0, 64], sizes = [8, 32], strides = [1, 1]} : vector<8x128xf32> to vector<8x32xf32>
    %505 = vector.extract_strided_slice %491 {offsets = [0, 96], sizes = [8, 32], strides = [1, 1]} : vector<8x128xf32> to vector<8x32xf32>
    %506 = arith.mulf %497, %505 : vector<8x32xf32>
    %507 = arith.addf %504, %506 : vector<8x32xf32>
    %508 = math.tanh %507 : vector<8x32xf32>
    %cst_162 = arith.constant 1.000000e+00 : f32
    %509 = vector.broadcast %cst_162 : f32 to vector<8x32xf32>
    %510 = arith.subf %509, %503 : vector<8x32xf32>
    %511 = arith.mulf %510, %508 : vector<8x32xf32>
    %512 = arith.mulf %503, %452 : vector<8x32xf32>
    %513 = arith.addf %511, %512 : vector<8x32xf32>
    %cst_163 = arith.constant dense<0.000000e+00> : vector<8x32xf32>
    %514 = tpu.matmul %513, %20, %cst_163 {dimension_numbers = #tpu.dot_dimension_numbers<[1], [0], [0], [1], [0, 0, 1, 1], [], []>} : vector<8x32xf32>, vector<32x32xf32>, vector<8x32xf32> -> vector<8x32xf32>
    %515 = vector.broadcast %21 : vector<1x32xf32> to vector<8x32xf32>
    %516 = arith.addf %514, %515 : vector<8x32xf32>
    %cst_164 = arith.constant dense<0xFF800000> : vector<8xf32>
    %517 = vector.multi_reduction <maximumf>, %516, %cst_164 [1] : vector<8x32xf32> to vector<8xf32>
    %518 = vector.shape_cast %517 : vector<8xf32> to vector<8x1xf32>
    %519 = vector.broadcast %518 : vector<8x1xf32> to vector<8x32xf32>
    %520 = arith.subf %516, %519 : vector<8x32xf32>
    %521 = math.exp %520 : vector<8x32xf32>
    %cst_165 = arith.constant dense<0.000000e+00> : vector<8xf32>
    %522 = vector.multi_reduction <add>, %521, %cst_165 [1] : vector<8x32xf32> to vector<8xf32>
    %523 = vector.shape_cast %522 : vector<8xf32> to vector<8x1xf32>
    %524 = math.log %523 : vector<8x1xf32>
    %525 = arith.addf %524, %518 : vector<8x1xf32>
    %c7_166 = arith.constant 7 : index
    %c0_167 = arith.constant 0 : index
    %c0_168 = arith.constant 0 : index
    %526 = vector.load %arg14[%c7_166, %c0_167, %c0_168] : memref<8x8x1xi32, #tpu.memory_space<vmem>>, vector<1x8x1xi32>
    %527 = vector.shape_cast %526 : vector<1x8x1xi32> to vector<8x1xi32>
    %528 = vector.broadcast %527 : vector<8x1xi32> to vector<8x32xi32>
    %529 = arith.cmpi eq, %23, %528 : vector<8x32xi32>
    %cst_169 = arith.constant 0.000000e+00 : f32
    %530 = vector.broadcast %cst_169 : f32 to vector<8x32xf32>
    %531 = arith.select %529, %516, %530 : vector<8x32xi1>, vector<8x32xf32>
    %cst_170 = arith.constant dense<0.000000e+00> : vector<8xf32>
    %532 = vector.multi_reduction <add>, %531, %cst_170 [1] : vector<8x32xf32> to vector<8xf32>
    %533 = vector.shape_cast %532 : vector<8xf32> to vector<8x1xf32>
    %534 = arith.subf %525, %533 : vector<8x1xf32>
    %535 = vector.shape_cast %534 : vector<8x1xf32> to vector<1x8x1xf32>
    %cst_171 = arith.constant dense<0.000000e+00> : vector<1xf32>
    %536 = vector.multi_reduction <add>, %535, %cst_171 [1, 2] : vector<1x8x1xf32> to vector<1xf32>
    %537 = vector.shape_cast %536 : vector<1xf32> to vector<1x1x1xf32>
    %538 = vector.extract %537[0, 0, 0] : f32 from vector<1x1x1xf32>
    %539 = vector.broadcast %538 : f32 to vector<1x1xf32>
    %540 = arith.addf %479, %539 : vector<1x1xf32>
    %cst_172 = arith.constant 1.250000e-01 : f32
    %541 = vector.broadcast %cst_172 : f32 to vector<1x1xf32>
    %542 = arith.mulf %540, %541 : vector<1x1xf32>
    %c0_173 = arith.constant 0 : index
    %c0_174 = arith.constant 0 : index
    %543 = vector.load %arg15[%c0_173, %c0_174] : memref<1x1xf32, #tpu.memory_space<vmem>>, vector<1x1xf32>
    tpu.vector_store %arg15[%c0_173, %c0_174], %542 {strides = array<i32>} : memref<1x1xf32, #tpu.memory_space<vmem>>, vector<1x1xf32>,
    return
  }
}

</mosaic_0001>

<llo_original>
// kernel: generator_mle_loss.1
$region0: #{generator_mle_loss.1}
  #allocation0 [shape = 'u32[]', space=smem, size = 0x4, offset = 0x4, fixed_abs, tag = 'smem constant byte address 0x4 - core index']
  #allocation1 [shape = 'u32[144,128]{1,0:T(1,128)}', space=vmem, size = 0x12000, scoped, tag = 'internal scratch']
  %s0 = inlined_call_operand.vmem [shape: bf16[8,4096], index: 0, kind: input, shape index: {}]
  %s1 = inlined_call_operand.vmem [shape: f32[8,16], index: 1, kind: input, shape index: {}]
  %s2 = inlined_call_operand.vmem [shape: bf16[4096,16], index: 2, kind: input, shape index: {}]
  %s3 = inlined_call_operand.vmem [shape: f32[1,16], index: 3, kind: input, shape index: {}]
  %s4 = inlined_call_operand.vmem [shape: f32[16,32], index: 4, kind: input, shape index: {}]
  %s5 = inlined_call_operand.vmem [shape: f32[16,32], index: 5, kind: input, shape index: {}]
  %s6 = inlined_call_operand.vmem [shape: f32[1,32], index: 6, kind: input, shape index: {}]
  %s7 = inlined_call_operand.vmem [shape: f32[32,32], index: 7, kind: input, shape index: {}]
  %s8 = inlined_call_operand.vmem [shape: f32[32,128], index: 8, kind: input, shape index: {}]
  %s9 = inlined_call_operand.vmem [shape: f32[32,128], index: 9, kind: input, shape index: {}]
  %s10 = inlined_call_operand.vmem [shape: f32[1,128], index: 10, kind: input, shape index: {}]
  %s11 = inlined_call_operand.vmem [shape: f32[32,32], index: 11, kind: input, shape index: {}]
  %s12 = inlined_call_operand.vmem [shape: f32[1,32], index: 12, kind: input, shape index: {}]
  %s13 = inlined_call_operand.vmem [shape: s32[8,8,1], index: 13, kind: input, shape index: {}]
  %s14 = inlined_call_operand.vmem [shape: s32[8,8,1], index: 14, kind: input, shape index: {}]
  %s15 = inlined_call_operand.hbm [shape: f32[1,1], index: 15, kind: output, shape index: {}]
  %s16 = sld [smem:[#allocation0]]
  $region70: #{generator_mle_loss.1} parent=0
    _
  %s18 = ssub.s32 1, %s16
  %s19 = scalar_select 0, %s18, %s16
  $region1: #{generator_mle_loss.1} parent=0
    #allocation2 [shape = 'u8[512]{0}', space=vmem, size = 0x400, scoped, tag = 'output window, operand 0, single buffered']
    #allocation3 [shape = 's32[1]{0}', space=sflag, size = 0x4, scoped, tag = 'scoped memory for generator_mle_loss.1']
    %20 = vsyncpa [#allocation3], 0
    // Predicated region
    $region2: #{generator_mle_loss.1} parent=1 // pred_check
      _
    $region3: #{generator_mle_loss.1} parent=1 // pred_check_branch
      %22 = sbr.rel (0) target = $region5
    $region4: #{generator_mle_loss.1} parent=1 // pred_region
      _
    $region5: #{generator_mle_loss.1} parent=1 // pred_fallthru
      _
    // Predicated region
    $region6: #{generator_mle_loss.1} parent=1 // pred_check
      _
    $region7: #{generator_mle_loss.1} parent=1 // pred_check_branch
      %24 = sbr.rel (0) target = $region9
    $region8: #{generator_mle_loss.1} parent=1 // pred_region
      _
    $region9: #{generator_mle_loss.1} parent=1 // pred_fallthru
      _
    // Predicated region
    $region10: #{generator_mle_loss.1} parent=1 // pred_check
      _
    $region11: #{generator_mle_loss.1} parent=1 // pred_check_branch
      %26 = sbr.rel (0) target = $region13
    $region12: #{generator_mle_loss.1} parent=1 // pred_region
      _
    $region13: #{generator_mle_loss.1} parent=1 // pred_fallthru
      _
    // Predicated region
    $region14: #{generator_mle_loss.1} parent=1 // pred_check
      _
    $region15: #{generator_mle_loss.1} parent=1 // pred_check_branch
      %28 = sbr.rel (0) target = $region17
    $region16: #{generator_mle_loss.1} parent=1 // pred_region
      _
    $region17: #{generator_mle_loss.1} parent=1 // pred_fallthru
      _
    // Predicated region
    $region18: #{generator_mle_loss.1} parent=1 // pred_check
      _
    $region19: #{generator_mle_loss.1} parent=1 // pred_check_branch
      %30 = sbr.rel (0) target = $region21
    $region20: #{generator_mle_loss.1} parent=1 // pred_region
      _
    $region21: #{generator_mle_loss.1} parent=1 // pred_fallthru
      _
    // Predicated region
    $region22: #{generator_mle_loss.1} parent=1 // pred_check
      _
    $region23: #{generator_mle_loss.1} parent=1 // pred_check_branch
      %32 = sbr.rel (0) target = $region25
    $region24: #{generator_mle_loss.1} parent=1 // pred_region
      _
    $region25: #{generator_mle_loss.1} parent=1 // pred_fallthru
      _
    // Predicated region
    $region26: #{generator_mle_loss.1} parent=1 // pred_check
      _
    $region27: #{generator_mle_loss.1} parent=1 // pred_check_branch
      %34 = sbr.rel (0) target = $region29
    $region28: #{generator_mle_loss.1} parent=1 // pred_region
      _
    $region29: #{generator_mle_loss.1} parent=1 // pred_fallthru
      _
    // Predicated region
    $region30: #{generator_mle_loss.1} parent=1 // pred_check
      _
    $region31: #{generator_mle_loss.1} parent=1 // pred_check_branch
      %36 = sbr.rel (0) target = $region33
    $region32: #{generator_mle_loss.1} parent=1 // pred_region
      _
    $region33: #{generator_mle_loss.1} parent=1 // pred_fallthru
      _
    // Predicated region
    $region34: #{generator_mle_loss.1} parent=1 // pred_check
      _
    $region35: #{generator_mle_loss.1} parent=1 // pred_check_branch
      %38 = sbr.rel (0) target = $region37
    $region36: #{generator_mle_loss.1} parent=1 // pred_region
      _
    $region37: #{generator_mle_loss.1} parent=1 // pred_fallthru
      _
    // Predicated region
    $region38: #{generator_mle_loss.1} parent=1 // pred_check
      _
    $region39: #{generator_mle_loss.1} parent=1 // pred_check_branch
      %40 = sbr.rel (0) target = $region41
    $region40: #{generator_mle_loss.1} parent=1 // pred_region
      _
    $region41: #{generator_mle_loss.1} parent=1 // pred_fallthru
      _
    // Predicated region
    $region42: #{generator_mle_loss.1} parent=1 // pred_check
      _
    $region43: #{generator_mle_loss.1} parent=1 // pred_check_branch
      %42 = sbr.rel (0) target = $region45
    $region44: #{generator_mle_loss.1} parent=1 // pred_region
      _
    $region45: #{generator_mle_loss.1} parent=1 // pred_fallthru
      _
    // Predicated region
    $region46: #{generator_mle_loss.1} parent=1 // pred_check
      _
    $region47: #{generator_mle_loss.1} parent=1 // pred_check_branch
      %44 = sbr.rel (0) target = $region49
    $region48: #{generator_mle_loss.1} parent=1 // pred_region
      _
    $region49: #{generator_mle_loss.1} parent=1 // pred_fallthru
      _
    // Predicated region
    $region50: #{generator_mle_loss.1} parent=1 // pred_check
      _
    $region51: #{generator_mle_loss.1} parent=1 // pred_check_branch
      %46 = sbr.rel (0) target = $region53
    $region52: #{generator_mle_loss.1} parent=1 // pred_region
      _
    $region53: #{generator_mle_loss.1} parent=1 // pred_fallthru
      _
    // Predicated region
    $region54: #{generator_mle_loss.1} parent=1 // pred_check
      _
    $region55: #{generator_mle_loss.1} parent=1 // pred_check_branch
      %48 = sbr.rel (0) target = $region57
    $region56: #{generator_mle_loss.1} parent=1 // pred_region
      _
    $region57: #{generator_mle_loss.1} parent=1 // pred_fallthru
      _
    // Predicated region
    $region58: #{generator_mle_loss.1} parent=1 // pred_check
      _
    $region59: #{generator_mle_loss.1} parent=1 // pred_check_branch
      %50 = sbr.rel (0) target = $region61
    $region60: #{generator_mle_loss.1} parent=1 // pred_region
      _
    $region61: #{generator_mle_loss.1} parent=1 // pred_fallthru
      _
    %v52 = vld [vmem:[%s0] sm:$0xff]
    %v53 = vld [vmem:[%s0 + $0x8] sm:$0xff]
    %v54 = vld [vmem:[%s0 + $0x10] sm:$0xff]
    %v55 = vld [vmem:[%s0 + $0x18] sm:$0xff]
    %v56 = vld [vmem:[%s0 + $0x20] sm:$0xff]
    %v57 = vld [vmem:[%s0 + $0x28] sm:$0xff]
    %v58 = vld [vmem:[%s0 + $0x30] sm:$0xff]
    %v59 = vld [vmem:[%s0 + $0x38] sm:$0xff]
    %v60 = vld [vmem:[%s0 + $0x40] sm:$0xff]
    %v61 = vld [vmem:[%s0 + $0x48] sm:$0xff]
    %v62 = vld [vmem:[%s0 + $0x50] sm:$0xff]
    %v63 = vld [vmem:[%s0 + $0x58] sm:$0xff]
    %v64 = vld [vmem:[%s0 + $0x60] sm:$0xff]
    %v65 = vld [vmem:[%s0 + $0x68] sm:$0xff]
    %v66 = vld [vmem:[%s0 + $0x70] sm:$0xff]
    %v67 = vld [vmem:[%s0 + $0x78] sm:$0xff]
    %v68 = vld [vmem:[%s2] sm:$0xf]
    %v69 = vld [vmem:[%s2 + $0x4] sm:$0xf]
    %v70 = vld [vmem:[%s2 + $0x8] sm:$0xf]
    %v71 = vld [vmem:[%s2 + $0xc] sm:$0xf]
    %v72 = vld [vmem:[%s2 + $0x10] sm:$0xf]
    %v73 = vld [vmem:[%s2 + $0x14] sm:$0xf]
    %v74 = vld [vmem:[%s2 + $0x18] sm:$0xf]
    %v75 = vld [vmem:[%s2 + $0x1c] sm:$0xf]
    %v76 = vld [vmem:[%s2 + $0x20] sm:$0xf]
    %v77 = vld [vmem:[%s2 + $0x24] sm:$0xf]
    %v78 = vld [vmem:[%s2 + $0x28] sm:$0xf]
    %v79 = vld [vmem:[%s2 + $0x2c] sm:$0xf]
    %v80 = vld [vmem:[%s2 + $0x30] sm:$0xf]
    %v81 = vld [vmem:[%s2 + $0x34] sm:$0xf]
    %v82 = vld [vmem:[%s2 + $0x38] sm:$0xf]
    %v83 = vld [vmem:[%s2 + $0x3c] sm:$0xf]
    %v84 = vld [vmem:[%s2 + $0x40] sm:$0xf]
    %v85 = vld [vmem:[%s2 + $0x44] sm:$0xf]
    %v86 = vld [vmem:[%s2 + $0x48] sm:$0xf]
    %v87 = vld [vmem:[%s2 + $0x4c] sm:$0xf]
    %v88 = vld [vmem:[%s2 + $0x50] sm:$0xf]
    %v89 = vld [vmem:[%s2 + $0x54] sm:$0xf]
    %v90 = vld [vmem:[%s2 + $0x58] sm:$0xf]
    %v91 = vld [vmem:[%s2 + $0x5c] sm:$0xf]
    %v92 = vld [vmem:[%s2 + $0x60] sm:$0xf]
    %v93 = vld [vmem:[%s2 + $0x64] sm:$0xf]
    %v94 = vld [vmem:[%s2 + $0x68] sm:$0xf]
    %v95 = vld [vmem:[%s2 + $0x6c] sm:$0xf]
    %v96 = vld [vmem:[%s2 + $0x70] sm:$0xf]
    %v97 = vld [vmem:[%s2 + $0x74] sm:$0xf]
    %v98 = vld [vmem:[%s2 + $0x78] sm:$0xf]
    %v99 = vld [vmem:[%s2 + $0x7c] sm:$0xf]
    %v100 = vld [vmem:[%s2 + $0x80] sm:$0xf]
    %v101 = vld [vmem:[%s2 + $0x84] sm:$0xf]
    %v102 = vld [vmem:[%s2 + $0x88] sm:$0xf]
    %v103 = vld [vmem:[%s2 + $0x8c] sm:$0xf]
    %v104 = vld [vmem:[%s2 + $0x90] sm:$0xf]
    %v105 = vld [vmem:[%s2 + $0x94] sm:$0xf]
    %v106 = vld [vmem:[%s2 + $0x98] sm:$0xf]
    %v107 = vld [vmem:[%s2 + $0x9c] sm:$0xf]
    %v108 = vld [vmem:[%s2 + $0xa0] sm:$0xf]
    %v109 = vld [vmem:[%s2 + $0xa4] sm:$0xf]
    %v110 = vld [vmem:[%s2 + $0xa8] sm:$0xf]
    %v111 = vld [vmem:[%s2 + $0xac] sm:$0xf]
    %v112 = vld [vmem:[%s2 + $0xb0] sm:$0xf]
    %v113 = vld [vmem:[%s2 + $0xb4] sm:$0xf]
    %v114 = vld [vmem:[%s2 + $0xb8] sm:$0xf]
    %v115 = vld [vmem:[%s2 + $0xbc] sm:$0xf]
    %v116 = vld [vmem:[%s2 + $0xc0] sm:$0xf]
    %v117 = vld [vmem:[%s2 + $0xc4] sm:$0xf]
    %v118 = vld [vmem:[%s2 + $0xc8] sm:$0xf]
    %v119 = vld [vmem:[%s2 + $0xcc] sm:$0xf]
    %v120 = vld [vmem:[%s2 + $0xd0] sm:$0xf]
    %v121 = vld [vmem:[%s2 + $0xd4] sm:$0xf]
    %v122 = vld [vmem:[%s2 + $0xd8] sm:$0xf]
    %v123 = vld [vmem:[%s2 + $0xdc] sm:$0xf]
    %v124 = vld [vmem:[%s2 + $0xe0] sm:$0xf]
    %v125 = vld [vmem:[%s2 + $0xe4] sm:$0xf]
    %v126 = vld [vmem:[%s2 + $0xe8] sm:$0xf]
    %v127 = vld [vmem:[%s2 + $0xec] sm:$0xf]
    %v128 = vld [vmem:[%s2 + $0xf0] sm:$0xf]
    %v129 = vld [vmem:[%s2 + $0xf4] sm:$0xf]
    %v130 = vld [vmem:[%s2 + $0xf8] sm:$0xf]
    %v131 = vld [vmem:[%s2 + $0xfc] sm:$0xf]
    %v132 = vld [vmem:[%s2 + $0x100] sm:$0xf]
    %v133 = vld [vmem:[%s2 + $0x104] sm:$0xf]
    %v134 = vld [vmem:[%s2 + $0x108] sm:$0xf]
    %v135 = vld [vmem:[%s2 + $0x10c] sm:$0xf]
    %v136 = vld [vmem:[%s2 + $0x110] sm:$0xf]
    %v137 = vld [vmem:[%s2 + $0x114] sm:$0xf]
    %v138 = vld [vmem:[%s2 + $0x118] sm:$0xf]
    %v139 = vld [vmem:[%s2 + $0x11c] sm:$0xf]
    %v140 = vld [vmem:[%s2 + $0x120] sm:$0xf]
    %v141 = vld [vmem:[%s2 + $0x124] sm:$0xf]
    %v142 = vld [vmem:[%s2 + $0x128] sm:$0xf]
    %v143 = vld [vmem:[%s2 + $0x12c] sm:$0xf]
    %v144 = vld [vmem:[%s2 + $0x130] sm:$0xf]
    %v145 = vld [vmem:[%s2 + $0x134] sm:$0xf]
    %v146 = vld [vmem:[%s2 + $0x138] sm:$0xf]
    %v147 = vld [vmem:[%s2 + $0x13c] sm:$0xf]
    %v148 = vld [vmem:[%s2 + $0x140] sm:$0xf]
    %v149 = vld [vmem:[%s2 + $0x144] sm:$0xf]
    %v150 = vld [vmem:[%s2 + $0x148] sm:$0xf]
    %v151 = vld [vmem:[%s2 + $0x14c] sm:$0xf]
    %v152 = vld [vmem:[%s2 + $0x150] sm:$0xf]
    %v153 = vld [vmem:[%s2 + $0x154] sm:$0xf]
    %v154 = vld [vmem:[%s2 + $0x158] sm:$0xf]
    %v155 = vld [vmem:[%s2 + $0x15c] sm:$0xf]
    %v156 = vld [vmem:[%s2 + $0x160] sm:$0xf]
    %v157 = vld [vmem:[%s2 + $0x164] sm:$0xf]
    %v158 = vld [vmem:[%s2 + $0x168] sm:$0xf]
    %v159 = vld [vmem:[%s2 + $0x16c] sm:$0xf]
    %v160 = vld [vmem:[%s2 + $0x170] sm:$0xf]
    %v161 = vld [vmem:[%s2 + $0x174] sm:$0xf]
    %v162 = vld [vmem:[%s2 + $0x178] sm:$0xf]
    %v163 = vld [vmem:[%s2 + $0x17c] sm:$0xf]
    %v164 = vld [vmem:[%s2 + $0x180] sm:$0xf]
    %v165 = vld [vmem:[%s2 + $0x184] sm:$0xf]
    %v166 = vld [vmem:[%s2 + $0x188] sm:$0xf]
    %v167 = vld [vmem:[%s2 + $0x18c] sm:$0xf]
    %v168 = vld [vmem:[%s2 + $0x190] sm:$0xf]
    %v169 = vld [vmem:[%s2 + $0x194] sm:$0xf]
    %v170 = vld [vmem:[%s2 + $0x198] sm:$0xf]
    %v171 = vld [vmem:[%s2 + $0x19c] sm:$0xf]
    %v172 = vld [vmem:[%s2 + $0x1a0] sm:$0xf]
    %v173 = vld [vmem:[%s2 + $0x1a4] sm:$0xf]
    %v174 = vld [vmem:[%s2 + $0x1a8] sm:$0xf]
    %v175 = vld [vmem:[%s2 + $0x1ac] sm:$0xf]
    %v176 = vld [vmem:[%s2 + $0x1b0] sm:$0xf]
    %v177 = vld [vmem:[%s2 + $0x1b4] sm:$0xf]
    %v178 = vld [vmem:[%s2 + $0x1b8] sm:$0xf]
    %v179 = vld [vmem:[%s2 + $0x1bc] sm:$0xf]
    %v180 = vld [vmem:[%s2 + $0x1c0] sm:$0xf]
    %v181 = vld [vmem:[%s2 + $0x1c4] sm:$0xf]
    %v182 = vld [vmem:[%s2 + $0x1c8] sm:$0xf]
    %v183 = vld [vmem:[%s2 + $0x1cc] sm:$0xf]
    %v184 = vld [vmem:[%s2 + $0x1d0] sm:$0xf]
    %v185 = vld [vmem:[%s2 + $0x1d4] sm:$0xf]
    %v186 = vld [vmem:[%s2 + $0x1d8] sm:$0xf]
    %v187 = vld [vmem:[%s2 + $0x1dc] sm:$0xf]
    %v188 = vld [vmem:[%s2 + $0x1e0] sm:$0xf]
    %v189 = vld [vmem:[%s2 + $0x1e4] sm:$0xf]
    %v190 = vld [vmem:[%s2 + $0x1e8] sm:$0xf]
    %v191 = vld [vmem:[%s2 + $0x1ec] sm:$0xf]
    %v192 = vld [vmem:[%s2 + $0x1f0] sm:$0xf]
    %v193 = vld [vmem:[%s2 + $0x1f4] sm:$0xf]
    %v194 = vld [vmem:[%s2 + $0x1f8] sm:$0xf]
    %v195 = vld [vmem:[%s2 + $0x1fc] sm:$0xf]
    %v196 = vld [vmem:[%s2 + $0x200] sm:$0xf]
    %v197 = vld [vmem:[%s2 + $0x204] sm:$0xf]
    %v198 = vld [vmem:[%s2 + $0x208] sm:$0xf]
    %v199 = vld [vmem:[%s2 + $0x20c] sm:$0xf]
    %v200 = vld [vmem:[%s2 + $0x210] sm:$0xf]
    %v201 = vld [vmem:[%s2 + $0x214] sm:$0xf]
    %v202 = vld [vmem:[%s2 + $0x218] sm:$0xf]
    %v203 = vld [vmem:[%s2 + $0x21c] sm:$0xf]
    %v204 = vld [vmem:[%s2 + $0x220] sm:$0xf]
    %v205 = vld [vmem:[%s2 + $0x224] sm:$0xf]
    %v206 = vld [vmem:[%s2 + $0x228] sm:$0xf]
    %v207 = vld [vmem:[%s2 + $0x22c] sm:$0xf]
    %v208 = vld [vmem:[%s2 + $0x230] sm:$0xf]
    %v209 = vld [vmem:[%s2 + $0x234] sm:$0xf]
    %v210 = vld [vmem:[%s2 + $0x238] sm:$0xf]
    %v211 = vld [vmem:[%s2 + $0x23c] sm:$0xf]
    %v212 = vld [vmem:[%s2 + $0x240] sm:$0xf]
    %v213 = vld [vmem:[%s2 + $0x244] sm:$0xf]
    %v214 = vld [vmem:[%s2 + $0x248] sm:$0xf]
    %v215 = vld [vmem:[%s2 + $0x24c] sm:$0xf]
    %v216 = vld [vmem:[%s2 + $0x250] sm:$0xf]
    %v217 = vld [vmem:[%s2 + $0x254] sm:$0xf]
    %v218 = vld [vmem:[%s2 + $0x258] sm:$0xf]
    %v219 = vld [vmem:[%s2 + $0x25c] sm:$0xf]
    %v220 = vld [vmem:[%s2 + $0x260] sm:$0xf]
    %v221 = vld [vmem:[%s2 + $0x264] sm:$0xf]
    %v222 = vld [vmem:[%s2 + $0x268] sm:$0xf]
    %v223 = vld [vmem:[%s2 + $0x26c] sm:$0xf]
    %v224 = vld [vmem:[%s2 + $0x270] sm:$0xf]
    %v225 = vld [vmem:[%s2 + $0x274] sm:$0xf]
    %v226 = vld [vmem:[%s2 + $0x278] sm:$0xf]
    %v227 = vld [vmem:[%s2 + $0x27c] sm:$0xf]
    %v228 = vld [vmem:[%s2 + $0x280] sm:$0xf]
    %v229 = vld [vmem:[%s2 + $0x284] sm:$0xf]
    %v230 = vld [vmem:[%s2 + $0x288] sm:$0xf]
    %v231 = vld [vmem:[%s2 + $0x28c] sm:$0xf]
    %v232 = vld [vmem:[%s2 + $0x290] sm:$0xf]
    %v233 = vld [vmem:[%s2 + $0x294] sm:$0xf]
    %v234 = vld [vmem:[%s2 + $0x298] sm:$0xf]
    %v235 = vld [vmem:[%s2 + $0x29c] sm:$0xf]
    %v236 = vld [vmem:[%s2 + $0x2a0] sm:$0xf]
    %v237 = vld [vmem:[%s2 + $0x2a4] sm:$0xf]
    %v238 = vld [vmem:[%s2 + $0x2a8] sm:$0xf]
    %v239 = vld [vmem:[%s2 + $0x2ac] sm:$0xf]
    %v240 = vld [vmem:[%s2 + $0x2b0] sm:$0xf]
    %v241 = vld [vmem:[%s2 + $0x2b4] sm:$0xf]
    %v242 = vld [vmem:[%s2 + $0x2b8] sm:$0xf]
    %v243 = vld [vmem:[%s2 + $0x2bc] sm:$0xf]
    %v244 = vld [vmem:[%s2 + $0x2c0] sm:$0xf]
    %v245 = vld [vmem:[%s2 + $0x2c4] sm:$0xf]
    %v246 = vld [vmem:[%s2 + $0x2c8] sm:$0xf]
    %v247 = vld [vmem:[%s2 + $0x2cc] sm:$0xf]
    %v248 = vld [vmem:[%s2 + $0x2d0] sm:$0xf]
    %v249 = vld [vmem:[%s2 + $0x2d4] sm:$0xf]
    %v250 = vld [vmem:[%s2 + $0x2d8] sm:$0xf]
    %v251 = vld [vmem:[%s2 + $0x2dc] sm:$0xf]
    %v252 = vld [vmem:[%s2 + $0x2e0] sm:$0xf]
    %v253 = vld [vmem:[%s2 + $0x2e4] sm:$0xf]
    %v254 = vld [vmem:[%s2 + $0x2e8] sm:$0xf]
    %v255 = vld [vmem:[%s2 + $0x2ec] sm:$0xf]
    %v256 = vld [vmem:[%s2 + $0x2f0] sm:$0xf]
    %v257 = vld [vmem:[%s2 + $0x2f4] sm:$0xf]
    %v258 = vld [vmem:[%s2 + $0x2f8] sm:$0xf]
    %v259 = vld [vmem:[%s2 + $0x2fc] sm:$0xf]
    %v260 = vld [vmem:[%s2 + $0x300] sm:$0xf]
    %v261 = vld [vmem:[%s2 + $0x304] sm:$0xf]
    %v262 = vld [vmem:[%s2 + $0x308] sm:$0xf]
    %v263 = vld [vmem:[%s2 + $0x30c] sm:$0xf]
    %v264 = vld [vmem:[%s2 + $0x310] sm:$0xf]
    %v265 = vld [vmem:[%s2 + $0x314] sm:$0xf]
    %v266 = vld [vmem:[%s2 + $0x318] sm:$0xf]
    %v267 = vld [vmem:[%s2 + $0x31c] sm:$0xf]
    %v268 = vld [vmem:[%s2 + $0x320] sm:$0xf]
    %v269 = vld [vmem:[%s2 + $0x324] sm:$0xf]
    %v270 = vld [vmem:[%s2 + $0x328] sm:$0xf]
    %v271 = vld [vmem:[%s2 + $0x32c] sm:$0xf]
    %v272 = vld [vmem:[%s2 + $0x330] sm:$0xf]
    %v273 = vld [vmem:[%s2 + $0x334] sm:$0xf]
    %v274 = vld [vmem:[%s2 + $0x338] sm:$0xf]
    %v275 = vld [vmem:[%s2 + $0x33c] sm:$0xf]
    %v276 = vld [vmem:[%s2 + $0x340] sm:$0xf]
    %v277 = vld [vmem:[%s2 + $0x344] sm:$0xf]
    %v278 = vld [vmem:[%s2 + $0x348] sm:$0xf]
    %v279 = vld [vmem:[%s2 + $0x34c] sm:$0xf]
    %v280 = vld [vmem:[%s2 + $0x350] sm:$0xf]
    %v281 = vld [vmem:[%s2 + $0x354] sm:$0xf]
    %v282 = vld [vmem:[%s2 + $0x358] sm:$0xf]
    %v283 = vld [vmem:[%s2 + $0x35c] sm:$0xf]
    %v284 = vld [vmem:[%s2 + $0x360] sm:$0xf]
    %v285 = vld [vmem:[%s2 + $0x364] sm:$0xf]
    %v286 = vld [vmem:[%s2 + $0x368] sm:$0xf]
    %v287 = vld [vmem:[%s2 + $0x36c] sm:$0xf]
    %v288 = vld [vmem:[%s2 + $0x370] sm:$0xf]
    %v289 = vld [vmem:[%s2 + $0x374] sm:$0xf]
    %v290 = vld [vmem:[%s2 + $0x378] sm:$0xf]
    %v291 = vld [vmem:[%s2 + $0x37c] sm:$0xf]
    %v292 = vld [vmem:[%s2 + $0x380] sm:$0xf]
    %v293 = vld [vmem:[%s2 + $0x384] sm:$0xf]
    %v294 = vld [vmem:[%s2 + $0x388] sm:$0xf]
    %v295 = vld [vmem:[%s2 + $0x38c] sm:$0xf]
    %v296 = vld [vmem:[%s2 + $0x390] sm:$0xf]
    %v297 = vld [vmem:[%s2 + $0x394] sm:$0xf]
    %v298 = vld [vmem:[%s2 + $0x398] sm:$0xf]
    %v299 = vld [vmem:[%s2 + $0x39c] sm:$0xf]
    %v300 = vld [vmem:[%s2 + $0x3a0] sm:$0xf]
    %v301 = vld [vmem:[%s2 + $0x3a4] sm:$0xf]
    %v302 = vld [vmem:[%s2 + $0x3a8] sm:$0xf]
    %v303 = vld [vmem:[%s2 + $0x3ac] sm:$0xf]
    %v304 = vld [vmem:[%s2 + $0x3b0] sm:$0xf]
    %v305 = vld [vmem:[%s2 + $0x3b4] sm:$0xf]
    %v306 = vld [vmem:[%s2 + $0x3b8] sm:$0xf]
    %v307 = vld [vmem:[%s2 + $0x3bc] sm:$0xf]
    %v308 = vld [vmem:[%s2 + $0x3c0] sm:$0xf]
    %v309 = vld [vmem:[%s2 + $0x3c4] sm:$0xf]
    %v310 = vld [vmem:[%s2 + $0x3c8] sm:$0xf]
    %v311 = vld [vmem:[%s2 + $0x3cc] sm:$0xf]
    %v312 = vld [vmem:[%s2 + $0x3d0] sm:$0xf]
    %v313 = vld [vmem:[%s2 + $0x3d4] sm:$0xf]
    %v314 = vld [vmem:[%s2 + $0x3d8] sm:$0xf]
    %v315 = vld [vmem:[%s2 + $0x3dc] sm:$0xf]
    %v316 = vld [vmem:[%s2 + $0x3e0] sm:$0xf]
    %v317 = vld [vmem:[%s2 + $0x3e4] sm:$0xf]
    %v318 = vld [vmem:[%s2 + $0x3e8] sm:$0xf]
    %v319 = vld [vmem:[%s2 + $0x3ec] sm:$0xf]
    %v320 = vld [vmem:[%s2 + $0x3f0] sm:$0xf]
    %v321 = vld [vmem:[%s2 + $0x3f4] sm:$0xf]
    %v322 = vld [vmem:[%s2 + $0x3f8] sm:$0xf]
    %v323 = vld [vmem:[%s2 + $0x3fc] sm:$0xf]
    %v324 = vld [vmem:[%s2 + $0x400] sm:$0xf]
    %v325 = vld [vmem:[%s2 + $0x404] sm:$0xf]
    %v326 = vld [vmem:[%s2 + $0x408] sm:$0xf]
    %v327 = vld [vmem:[%s2 + $0x40c] sm:$0xf]
    %v328 = vld [vmem:[%s2 + $0x410] sm:$0xf]
    %v329 = vld [vmem:[%s2 + $0x414] sm:$0xf]
    %v330 = vld [vmem:[%s2 + $0x418] sm:$0xf]
    %v331 = vld [vmem:[%s2 + $0x41c] sm:$0xf]
    %v332 = vld [vmem:[%s2 + $0x420] sm:$0xf]
    %v333 = vld [vmem:[%s2 + $0x424] sm:$0xf]
    %v334 = vld [vmem:[%s2 + $0x428] sm:$0xf]
    %v335 = vld [vmem:[%s2 + $0x42c] sm:$0xf]
    %v336 = vld [vmem:[%s2 + $0x430] sm:$0xf]
    %v337 = vld [vmem:[%s2 + $0x434] sm:$0xf]
    %v338 = vld [vmem:[%s2 + $0x438] sm:$0xf]
    %v339 = vld [vmem:[%s2 + $0x43c] sm:$0xf]
    %v340 = vld [vmem:[%s2 + $0x440] sm:$0xf]
    %v341 = vld [vmem:[%s2 + $0x444] sm:$0xf]
    %v342 = vld [vmem:[%s2 + $0x448] sm:$0xf]
    %v343 = vld [vmem:[%s2 + $0x44c] sm:$0xf]
    %v344 = vld [vmem:[%s2 + $0x450] sm:$0xf]
    %v345 = vld [vmem:[%s2 + $0x454] sm:$0xf]
    %v346 = vld [vmem:[%s2 + $0x458] sm:$0xf]
    %v347 = vld [vmem:[%s2 + $0x45c] sm:$0xf]
    %v348 = vld [vmem:[%s2 + $0x460] sm:$0xf]
    %v349 = vld [vmem:[%s2 + $0x464] sm:$0xf]
    %v350 = vld [vmem:[%s2 + $0x468] sm:$0xf]
    %v351 = vld [vmem:[%s2 + $0x46c] sm:$0xf]
    %v352 = vld [vmem:[%s2 + $0x470] sm:$0xf]
    %v353 = vld [vmem:[%s2 + $0x474] sm:$0xf]
    %v354 = vld [vmem:[%s2 + $0x478] sm:$0xf]
    %v355 = vld [vmem:[%s2 + $0x47c] sm:$0xf]
    %v356 = vld [vmem:[%s2 + $0x480] sm:$0xf]
    %v357 = vld [vmem:[%s2 + $0x484] sm:$0xf]
    %v358 = vld [vmem:[%s2 + $0x488] sm:$0xf]
    %v359 = vld [vmem:[%s2 + $0x48c] sm:$0xf]
    %v360 = vld [vmem:[%s2 + $0x490] sm:$0xf]
    %v361 = vld [vmem:[%s2 + $0x494] sm:$0xf]
    %v362 = vld [vmem:[%s2 + $0x498] sm:$0xf]
    %v363 = vld [vmem:[%s2 + $0x49c] sm:$0xf]
    %v364 = vld [vmem:[%s2 + $0x4a0] sm:$0xf]
    %v365 = vld [vmem:[%s2 + $0x4a4] sm:$0xf]
    %v366 = vld [vmem:[%s2 + $0x4a8] sm:$0xf]
    %v367 = vld [vmem:[%s2 + $0x4ac] sm:$0xf]
    %v368 = vld [vmem:[%s2 + $0x4b0] sm:$0xf]
    %v369 = vld [vmem:[%s2 + $0x4b4] sm:$0xf]
    %v370 = vld [vmem:[%s2 + $0x4b8] sm:$0xf]
    %v371 = vld [vmem:[%s2 + $0x4bc] sm:$0xf]
    %v372 = vld [vmem:[%s2 + $0x4c0] sm:$0xf]
    %v373 = vld [vmem:[%s2 + $0x4c4] sm:$0xf]
    %v374 = vld [vmem:[%s2 + $0x4c8] sm:$0xf]
    %v375 = vld [vmem:[%s2 + $0x4cc] sm:$0xf]
    %v376 = vld [vmem:[%s2 + $0x4d0] sm:$0xf]
    %v377 = vld [vmem:[%s2 + $0x4d4] sm:$0xf]
    %v378 = vld [vmem:[%s2 + $0x4d8] sm:$0xf]
    %v379 = vld [vmem:[%s2 + $0x4dc] sm:$0xf]
    %v380 = vld [vmem:[%s2 + $0x4e0] sm:$0xf]
    %v381 = vld [vmem:[%s2 + $0x4e4] sm:$0xf]
    %v382 = vld [vmem:[%s2 + $0x4e8] sm:$0xf]
    %v383 = vld [vmem:[%s2 + $0x4ec] sm:$0xf]
    %v384 = vld [vmem:[%s2 + $0x4f0] sm:$0xf]
    %v385 = vld [vmem:[%s2 + $0x4f4] sm:$0xf]
    %v386 = vld [vmem:[%s2 + $0x4f8] sm:$0xf]
    %v387 = vld [vmem:[%s2 + $0x4fc] sm:$0xf]
    %v388 = vld [vmem:[%s2 + $0x500] sm:$0xf]
    %v389 = vld [vmem:[%s2 + $0x504] sm:$0xf]
    %v390 = vld [vmem:[%s2 + $0x508] sm:$0xf]
    %v391 = vld [vmem:[%s2 + $0x50c] sm:$0xf]
    %v392 = vld [vmem:[%s2 + $0x510] sm:$0xf]
    %v393 = vld [vmem:[%s2 + $0x514] sm:$0xf]
    %v394 = vld [vmem:[%s2 + $0x518] sm:$0xf]
    %v395 = vld [vmem:[%s2 + $0x51c] sm:$0xf]
    %v396 = vld [vmem:[%s2 + $0x520] sm:$0xf]
    %v397 = vld [vmem:[%s2 + $0x524] sm:$0xf]
    %v398 = vld [vmem:[%s2 + $0x528] sm:$0xf]
    %v399 = vld [vmem:[%s2 + $0x52c] sm:$0xf]
    %v400 = vld [vmem:[%s2 + $0x530] sm:$0xf]
    %v401 = vld [vmem:[%s2 + $0x534] sm:$0xf]
    %v402 = vld [vmem:[%s2 + $0x538] sm:$0xf]
    %v403 = vld [vmem:[%s2 + $0x53c] sm:$0xf]
    %v404 = vld [vmem:[%s2 + $0x540] sm:$0xf]
    %v405 = vld [vmem:[%s2 + $0x544] sm:$0xf]
    %v406 = vld [vmem:[%s2 + $0x548] sm:$0xf]
    %v407 = vld [vmem:[%s2 + $0x54c] sm:$0xf]
    %v408 = vld [vmem:[%s2 + $0x550] sm:$0xf]
    %v409 = vld [vmem:[%s2 + $0x554] sm:$0xf]
    %v410 = vld [vmem:[%s2 + $0x558] sm:$0xf]
    %v411 = vld [vmem:[%s2 + $0x55c] sm:$0xf]
    %v412 = vld [vmem:[%s2 + $0x560] sm:$0xf]
    %v413 = vld [vmem:[%s2 + $0x564] sm:$0xf]
    %v414 = vld [vmem:[%s2 + $0x568] sm:$0xf]
    %v415 = vld [vmem:[%s2 + $0x56c] sm:$0xf]
    %v416 = vld [vmem:[%s2 + $0x570] sm:$0xf]
    %v417 = vld [vmem:[%s2 + $0x574] sm:$0xf]
    %v418 = vld [vmem:[%s2 + $0x578] sm:$0xf]
    %v419 = vld [vmem:[%s2 + $0x57c] sm:$0xf]
    %v420 = vld [vmem:[%s2 + $0x580] sm:$0xf]
    %v421 = vld [vmem:[%s2 + $0x584] sm:$0xf]
    %v422 = vld [vmem:[%s2 + $0x588] sm:$0xf]
    %v423 = vld [vmem:[%s2 + $0x58c] sm:$0xf]
    %v424 = vld [vmem:[%s2 + $0x590] sm:$0xf]
    %v425 = vld [vmem:[%s2 + $0x594] sm:$0xf]
    %v426 = vld [vmem:[%s2 + $0x598] sm:$0xf]
    %v427 = vld [vmem:[%s2 + $0x59c] sm:$0xf]
    %v428 = vld [vmem:[%s2 + $0x5a0] sm:$0xf]
    %v429 = vld [vmem:[%s2 + $0x5a4] sm:$0xf]
    %v430 = vld [vmem:[%s2 + $0x5a8] sm:$0xf]
    %v431 = vld [vmem:[%s2 + $0x5ac] sm:$0xf]
    %v432 = vld [vmem:[%s2 + $0x5b0] sm:$0xf]
    %v433 = vld [vmem:[%s2 + $0x5b4] sm:$0xf]
    %v434 = vld [vmem:[%s2 + $0x5b8] sm:$0xf]
    %v435 = vld [vmem:[%s2 + $0x5bc] sm:$0xf]
    %v436 = vld [vmem:[%s2 + $0x5c0] sm:$0xf]
    %v437 = vld [vmem:[%s2 + $0x5c4] sm:$0xf]
    %v438 = vld [vmem:[%s2 + $0x5c8] sm:$0xf]
    %v439 = vld [vmem:[%s2 + $0x5cc] sm:$0xf]
    %v440 = vld [vmem:[%s2 + $0x5d0] sm:$0xf]
    %v441 = vld [vmem:[%s2 + $0x5d4] sm:$0xf]
    %v442 = vld [vmem:[%s2 + $0x5d8] sm:$0xf]
    %v443 = vld [vmem:[%s2 + $0x5dc] sm:$0xf]
    %v444 = vld [vmem:[%s2 + $0x5e0] sm:$0xf]
    %v445 = vld [vmem:[%s2 + $0x5e4] sm:$0xf]
    %v446 = vld [vmem:[%s2 + $0x5e8] sm:$0xf]
    %v447 = vld [vmem:[%s2 + $0x5ec] sm:$0xf]
    %v448 = vld [vmem:[%s2 + $0x5f0] sm:$0xf]
    %v449 = vld [vmem:[%s2 + $0x5f4] sm:$0xf]
    %v450 = vld [vmem:[%s2 + $0x5f8] sm:$0xf]
    %v451 = vld [vmem:[%s2 + $0x5fc] sm:$0xf]
    %v452 = vld [vmem:[%s2 + $0x600] sm:$0xf]
    %v453 = vld [vmem:[%s2 + $0x604] sm:$0xf]
    %v454 = vld [vmem:[%s2 + $0x608] sm:$0xf]
    %v455 = vld [vmem:[%s2 + $0x60c] sm:$0xf]
    %v456 = vld [vmem:[%s2 + $0x610] sm:$0xf]
    %v457 = vld [vmem:[%s2 + $0x614] sm:$0xf]
    %v458 = vld [vmem:[%s2 + $0x618] sm:$0xf]
    %v459 = vld [vmem:[%s2 + $0x61c] sm:$0xf]
    %v460 = vld [vmem:[%s2 + $0x620] sm:$0xf]
    %v461 = vld [vmem:[%s2 + $0x624] sm:$0xf]
    %v462 = vld [vmem:[%s2 + $0x628] sm:$0xf]
    %v463 = vld [vmem:[%s2 + $0x62c] sm:$0xf]
    %v464 = vld [vmem:[%s2 + $0x630] sm:$0xf]
    %v465 = vld [vmem:[%s2 + $0x634] sm:$0xf]
    %v466 = vld [vmem:[%s2 + $0x638] sm:$0xf]
    %v467 = vld [vmem:[%s2 + $0x63c] sm:$0xf]
    %v468 = vld [vmem:[%s2 + $0x640] sm:$0xf]
    %v469 = vld [vmem:[%s2 + $0x644] sm:$0xf]
    %v470 = vld [vmem:[%s2 + $0x648] sm:$0xf]
    %v471 = vld [vmem:[%s2 + $0x64c] sm:$0xf]
    %v472 = vld [vmem:[%s2 + $0x650] sm:$0xf]
    %v473 = vld [vmem:[%s2 + $0x654] sm:$0xf]
    %v474 = vld [vmem:[%s2 + $0x658] sm:$0xf]
    %v475 = vld [vmem:[%s2 + $0x65c] sm:$0xf]
    %v476 = vld [vmem:[%s2 + $0x660] sm:$0xf]
    %v477 = vld [vmem:[%s2 + $0x664] sm:$0xf]
    %v478 = vld [vmem:[%s2 + $0x668] sm:$0xf]
    %v479 = vld [vmem:[%s2 + $0x66c] sm:$0xf]
    %v480 = vld [vmem:[%s2 + $0x670] sm:$0xf]
    %v481 = vld [vmem:[%s2 + $0x674] sm:$0xf]
    %v482 = vld [vmem:[%s2 + $0x678] sm:$0xf]
    %v483 = vld [vmem:[%s2 + $0x67c] sm:$0xf]
    %v484 = vld [vmem:[%s2 + $0x680] sm:$0xf]
    %v485 = vld [vmem:[%s2 + $0x684] sm:$0xf]
    %v486 = vld [vmem:[%s2 + $0x688] sm:$0xf]
    %v487 = vld [vmem:[%s2 + $0x68c] sm:$0xf]
    %v488 = vld [vmem:[%s2 + $0x690] sm:$0xf]
    %v489 = vld [vmem:[%s2 + $0x694] sm:$0xf]
    %v490 = vld [vmem:[%s2 + $0x698] sm:$0xf]
    %v491 = vld [vmem:[%s2 + $0x69c] sm:$0xf]
    %v492 = vld [vmem:[%s2 + $0x6a0] sm:$0xf]
    %v493 = vld [vmem:[%s2 + $0x6a4] sm:$0xf]
    %v494 = vld [vmem:[%s2 + $0x6a8] sm:$0xf]
    %v495 = vld [vmem:[%s2 + $0x6ac] sm:$0xf]
    %v496 = vld [vmem:[%s2 + $0x6b0] sm:$0xf]
    %v497 = vld [vmem:[%s2 + $0x6b4] sm:$0xf]
    %v498 = vld [vmem:[%s2 + $0x6b8] sm:$0xf]
    %v499 = vld [vmem:[%s2 + $0x6bc] sm:$0xf]
    %v500 = vld [vmem:[%s2 + $0x6c0] sm:$0xf]
    %v501 = vld [vmem:[%s2 + $0x6c4] sm:$0xf]
    %v502 = vld [vmem:[%s2 + $0x6c8] sm:$0xf]
    %v503 = vld [vmem:[%s2 + $0x6cc] sm:$0xf]
    %v504 = vld [vmem:[%s2 + $0x6d0] sm:$0xf]
    %v505 = vld [vmem:[%s2 + $0x6d4] sm:$0xf]
    %v506 = vld [vmem:[%s2 + $0x6d8] sm:$0xf]
    %v507 = vld [vmem:[%s2 + $0x6dc] sm:$0xf]
    %v508 = vld [vmem:[%s2 + $0x6e0] sm:$0xf]
    %v509 = vld [vmem:[%s2 + $0x6e4] sm:$0xf]
    %v510 = vld [vmem:[%s2 + $0x6e8] sm:$0xf]
    %v511 = vld [vmem:[%s2 + $0x6ec] sm:$0xf]
    %v512 = vld [vmem:[%s2 + $0x6f0] sm:$0xf]
    %v513 = vld [vmem:[%s2 + $0x6f4] sm:$0xf]
    %v514 = vld [vmem:[%s2 + $0x6f8] sm:$0xf]
    %v515 = vld [vmem:[%s2 + $0x6fc] sm:$0xf]
    %v516 = vld [vmem:[%s2 + $0x700] sm:$0xf]
    %v517 = vld [vmem:[%s2 + $0x704] sm:$0xf]
    %v518 = vld [vmem:[%s2 + $0x708] sm:$0xf]
    %v519 = vld [vmem:[%s2 + $0x70c] sm:$0xf]
    %v520 = vld [vmem:[%s2 + $0x710] sm:$0xf]
    %v521 = vld [vmem:[%s2 + $0x714] sm:$0xf]
    %v522 = vld [vmem:[%s2 + $0x718] sm:$0xf]
    %v523 = vld [vmem:[%s2 + $0x71c] sm:$0xf]
    %v524 = vld [vmem:[%s2 + $0x720] sm:$0xf]
    %v525 = vld [vmem:[%s2 + $0x724] sm:$0xf]
    %v526 = vld [vmem:[%s2 + $0x728] sm:$0xf]
    %v527 = vld [vmem:[%s2 + $0x72c] sm:$0xf]
    %v528 = vld [vmem:[%s2 + $0x730] sm:$0xf]
    %v529 = vld [vmem:[%s2 + $0x734] sm:$0xf]
    %v530 = vld [vmem:[%s2 + $0x738] sm:$0xf]
    %v531 = vld [vmem:[%s2 + $0x73c] sm:$0xf]
    %v532 = vld [vmem:[%s2 + $0x740] sm:$0xf]
    %v533 = vld [vmem:[%s2 + $0x744] sm:$0xf]
    %v534 = vld [vmem:[%s2 + $0x748] sm:$0xf]
    %v535 = vld [vmem:[%s2 + $0x74c] sm:$0xf]
    %v536 = vld [vmem:[%s2 + $0x750] sm:$0xf]
    %v537 = vld [vmem:[%s2 + $0x754] sm:$0xf]
    %v538 = vld [vmem:[%s2 + $0x758] sm:$0xf]
    %v539 = vld [vmem:[%s2 + $0x75c] sm:$0xf]
    %v540 = vld [vmem:[%s2 + $0x760] sm:$0xf]
    %v541 = vld [vmem:[%s2 + $0x764] sm:$0xf]
    %v542 = vld [vmem:[%s2 + $0x768] sm:$0xf]
    %v543 = vld [vmem:[%s2 + $0x76c] sm:$0xf]
    %v544 = vld [vmem:[%s2 + $0x770] sm:$0xf]
    %v545 = vld [vmem:[%s2 + $0x774] sm:$0xf]
    %v546 = vld [vmem:[%s2 + $0x778] sm:$0xf]
    %v547 = vld [vmem:[%s2 + $0x77c] sm:$0xf]
    %v548 = vld [vmem:[%s2 + $0x780] sm:$0xf]
    %v549 = vld [vmem:[%s2 + $0x784] sm:$0xf]
    %v550 = vld [vmem:[%s2 + $0x788] sm:$0xf]
    %v551 = vld [vmem:[%s2 + $0x78c] sm:$0xf]
    %v552 = vld [vmem:[%s2 + $0x790] sm:$0xf]
    %v553 = vld [vmem:[%s2 + $0x794] sm:$0xf]
    %v554 = vld [vmem:[%s2 + $0x798] sm:$0xf]
    %v555 = vld [vmem:[%s2 + $0x79c] sm:$0xf]
    %v556 = vld [vmem:[%s2 + $0x7a0] sm:$0xf]
    %v557 = vld [vmem:[%s2 + $0x7a4] sm:$0xf]
    %v558 = vld [vmem:[%s2 + $0x7a8] sm:$0xf]
    %v559 = vld [vmem:[%s2 + $0x7ac] sm:$0xf]
    %v560 = vld [vmem:[%s2 + $0x7b0] sm:$0xf]
    %v561 = vld [vmem:[%s2 + $0x7b4] sm:$0xf]
    %v562 = vld [vmem:[%s2 + $0x7b8] sm:$0xf]
    %v563 = vld [vmem:[%s2 + $0x7bc] sm:$0xf]
    %v564 = vld [vmem:[%s2 + $0x7c0] sm:$0xf]
    %v565 = vld [vmem:[%s2 + $0x7c4] sm:$0xf]
    %v566 = vld [vmem:[%s2 + $0x7c8] sm:$0xf]
    %v567 = vld [vmem:[%s2 + $0x7cc] sm:$0xf]
    %v568 = vld [vmem:[%s2 + $0x7d0] sm:$0xf]
    %v569 = vld [vmem:[%s2 + $0x7d4] sm:$0xf]
    %v570 = vld [vmem:[%s2 + $0x7d8] sm:$0xf]
    %v571 = vld [vmem:[%s2 + $0x7dc] sm:$0xf]
    %v572 = vld [vmem:[%s2 + $0x7e0] sm:$0xf]
    %v573 = vld [vmem:[%s2 + $0x7e4] sm:$0xf]
    %v574 = vld [vmem:[%s2 + $0x7e8] sm:$0xf]
    %v575 = vld [vmem:[%s2 + $0x7ec] sm:$0xf]
    %v576 = vld [vmem:[%s2 + $0x7f0] sm:$0xf]
    %v577 = vld [vmem:[%s2 + $0x7f4] sm:$0xf]
    %v578 = vld [vmem:[%s2 + $0x7f8] sm:$0xf]
    %v579 = vld [vmem:[%s2 + $0x7fc] sm:$0xf]
    %v580 = vld [vmem:[%s3] sm:$0x1]
    %v582 = vlaneseq
    %v583 = vshrl.u32 %v582, 7
    %v584 = vsub.s32 0, %v583
    %v585 = vrot.slane %v580, %v584
    %v603 = vunpack.c.l.b16 %v52
    %v604 = vunpack.c.h.b16 %v52
    %v605 = vunpack.c.l.b16 %v53
    %v606 = vunpack.c.h.b16 %v53
    %v607 = vunpack.c.l.b16 %v54
    %v608 = vunpack.c.h.b16 %v54
    %v609 = vunpack.c.l.b16 %v55
    %v610 = vunpack.c.h.b16 %v55
    %v611 = vunpack.c.l.b16 %v56
    %v612 = vunpack.c.h.b16 %v56
    %v613 = vunpack.c.l.b16 %v57
    %v614 = vunpack.c.h.b16 %v57
    %v615 = vunpack.c.l.b16 %v58
    %v616 = vunpack.c.h.b16 %v58
    %v617 = vunpack.c.l.b16 %v59
    %v618 = vunpack.c.h.b16 %v59
    %v619 = vunpack.c.l.b16 %v60
    %v620 = vunpack.c.h.b16 %v60
    %v621 = vunpack.c.l.b16 %v61
    %v622 = vunpack.c.h.b16 %v61
    %v623 = vunpack.c.l.b16 %v62
    %v624 = vunpack.c.h.b16 %v62
    %v625 = vunpack.c.l.b16 %v63
    %v626 = vunpack.c.h.b16 %v63
    %v627 = vunpack.c.l.b16 %v64
    %v628 = vunpack.c.h.b16 %v64
    %v629 = vunpack.c.l.b16 %v65
    %v630 = vunpack.c.h.b16 %v65
    %v631 = vunpack.c.l.b16 %v66
    %v632 = vunpack.c.h.b16 %v66
    %v633 = vunpack.c.l.b16 %v67
    %v634 = vunpack.c.h.b16 %v67
    %v635 = vpack.c.b16 %v603, %v603
    %v636 = vpack.c.b16 %v604, %v604
    %v637 = vpack.c.b16 %v605, %v605
    %v638 = vpack.c.b16 %v606, %v606
    %v639 = vpack.c.b16 %v607, %v607
    %v640 = vpack.c.b16 %v608, %v608
    %v641 = vpack.c.b16 %v609, %v609
    %v642 = vpack.c.b16 %v610, %v610
    %v643 = vpack.c.b16 %v611, %v611
    %v644 = vpack.c.b16 %v612, %v612
    %v645 = vpack.c.b16 %v613, %v613
    %v646 = vpack.c.b16 %v614, %v614
    %v647 = vpack.c.b16 %v615, %v615
    %v648 = vpack.c.b16 %v616, %v616
    %v649 = vpack.c.b16 %v617, %v617
    %v650 = vpack.c.b16 %v618, %v618
    %v651 = vpack.c.b16 %v619, %v619
    %v652 = vpack.c.b16 %v620, %v620
    %v653 = vpack.c.b16 %v621, %v621
    %v654 = vpack.c.b16 %v622, %v622
    %v655 = vpack.c.b16 %v623, %v623
    %v656 = vpack.c.b16 %v624, %v624
    %v657 = vpack.c.b16 %v625, %v625
    %v658 = vpack.c.b16 %v626, %v626
    %v659 = vpack.c.b16 %v627, %v627
    %v660 = vpack.c.b16 %v628, %v628
    %v661 = vpack.c.b16 %v629, %v629
    %v662 = vpack.c.b16 %v630, %v630
    %v663 = vpack.c.b16 %v631, %v631
    %v664 = vpack.c.b16 %v632, %v632
    %v665 = vpack.c.b16 %v633, %v633
    %v666 = vpack.c.b16 %v634, %v634
    %v1211 = vunpack.c.l.b16 %v68
    %v1212 = vunpack.c.l.b16 %v69
    %v1213 = vunpack.c.l.b16 %v70
    %v1214 = vunpack.c.l.b16 %v71
    %v1215 = vunpack.c.l.b16 %v72
    %v1216 = vunpack.c.l.b16 %v73
    %v1217 = vunpack.c.l.b16 %v74
    %v1218 = vunpack.c.l.b16 %v75
    %v1219 = vunpack.c.l.b16 %v76
    %v1220 = vunpack.c.l.b16 %v77
    %v1221 = vunpack.c.l.b16 %v78
    %v1222 = vunpack.c.l.b16 %v79
    %v1223 = vunpack.c.l.b16 %v80
    %v1224 = vunpack.c.l.b16 %v81
    %v1225 = vunpack.c.l.b16 %v82
    %v1226 = vunpack.c.l.b16 %v83
    %v1227 = vunpack.c.l.b16 %v84
    %v1228 = vunpack.c.l.b16 %v85
    %v1229 = vunpack.c.l.b16 %v86
    %v1230 = vunpack.c.l.b16 %v87
    %v1231 = vunpack.c.l.b16 %v88
    %v1232 = vunpack.c.l.b16 %v89
    %v1233 = vunpack.c.l.b16 %v90
    %v1234 = vunpack.c.l.b16 %v91
    %v1235 = vunpack.c.l.b16 %v92
    %v1236 = vunpack.c.l.b16 %v93
    %v1237 = vunpack.c.l.b16 %v94
    %v1238 = vunpack.c.l.b16 %v95
    %v1239 = vunpack.c.l.b16 %v96
    %v1240 = vunpack.c.l.b16 %v97
    %v1241 = vunpack.c.l.b16 %v98
    %v1242 = vunpack.c.l.b16 %v99
    %v1243 = vunpack.c.l.b16 %v100
    %v1244 = vunpack.c.l.b16 %v101
    %v1245 = vunpack.c.l.b16 %v102
    %v1246 = vunpack.c.l.b16 %v103
    %v1247 = vunpack.c.l.b16 %v104
    %v1248 = vunpack.c.l.b16 %v105
    %v1249 = vunpack.c.l.b16 %v106
    %v1250 = vunpack.c.l.b16 %v107
    %v1251 = vunpack.c.l.b16 %v108
    %v1252 = vunpack.c.l.b16 %v109
    %v1253 = vunpack.c.l.b16 %v110
    %v1254 = vunpack.c.l.b16 %v111
    %v1255 = vunpack.c.l.b16 %v112
    %v1256 = vunpack.c.l.b16 %v113
    %v1257 = vunpack.c.l.b16 %v114
    %v1258 = vunpack.c.l.b16 %v115
    %v1259 = vunpack.c.l.b16 %v116
    %v1260 = vunpack.c.l.b16 %v117
    %v1261 = vunpack.c.l.b16 %v118
    %v1262 = vunpack.c.l.b16 %v119
    %v1263 = vunpack.c.l.b16 %v120
    %v1264 = vunpack.c.l.b16 %v121
    %v1265 = vunpack.c.l.b16 %v122
    %v1266 = vunpack.c.l.b16 %v123
    %v1267 = vunpack.c.l.b16 %v124
    %v1268 = vunpack.c.l.b16 %v125
    %v1269 = vunpack.c.l.b16 %v126
    %v1270 = vunpack.c.l.b16 %v127
    %v1271 = vunpack.c.l.b16 %v128
    %v1272 = vunpack.c.l.b16 %v129
    %v1273 = vunpack.c.l.b16 %v130
    %v1274 = vunpack.c.l.b16 %v131
    %v1275 = vunpack.c.l.b16 %v132
    %v1276 = vunpack.c.l.b16 %v133
    %v1277 = vunpack.c.l.b16 %v134
    %v1278 = vunpack.c.l.b16 %v135
    %v1279 = vunpack.c.l.b16 %v136
    %v1280 = vunpack.c.l.b16 %v137
    %v1281 = vunpack.c.l.b16 %v138
    %v1282 = vunpack.c.l.b16 %v139
    %v1283 = vunpack.c.l.b16 %v140
    %v1284 = vunpack.c.l.b16 %v141
    %v1285 = vunpack.c.l.b16 %v142
    %v1286 = vunpack.c.l.b16 %v143
    %v1287 = vunpack.c.l.b16 %v144
    %v1288 = vunpack.c.l.b16 %v145
    %v1289 = vunpack.c.l.b16 %v146
    %v1290 = vunpack.c.l.b16 %v147
    %v1291 = vunpack.c.l.b16 %v148
    %v1292 = vunpack.c.l.b16 %v149
    %v1293 = vunpack.c.l.b16 %v150
    %v1294 = vunpack.c.l.b16 %v151
    %v1295 = vunpack.c.l.b16 %v152
    %v1296 = vunpack.c.l.b16 %v153
    %v1297 = vunpack.c.l.b16 %v154
    %v1298 = vunpack.c.l.b16 %v155
    %v1299 = vunpack.c.l.b16 %v156
    %v1300 = vunpack.c.l.b16 %v157
    %v1301 = vunpack.c.l.b16 %v158
    %v1302 = vunpack.c.l.b16 %v159
    %v1303 = vunpack.c.l.b16 %v160
    %v1304 = vunpack.c.l.b16 %v161
    %v1305 = vunpack.c.l.b16 %v162
    %v1306 = vunpack.c.l.b16 %v163
    %v1307 = vunpack.c.l.b16 %v164
    %v1308 = vunpack.c.l.b16 %v165
    %v1309 = vunpack.c.l.b16 %v166
    %v1310 = vunpack.c.l.b16 %v167
    %v1311 = vunpack.c.l.b16 %v168
    %v1312 = vunpack.c.l.b16 %v169
    %v1313 = vunpack.c.l.b16 %v170
    %v1314 = vunpack.c.l.b16 %v171
    %v1315 = vunpack.c.l.b16 %v172
    %v1316 = vunpack.c.l.b16 %v173
    %v1317 = vunpack.c.l.b16 %v174
    %v1318 = vunpack.c.l.b16 %v175
    %v1319 = vunpack.c.l.b16 %v176
    %v1320 = vunpack.c.l.b16 %v177
    %v1321 = vunpack.c.l.b16 %v178
    %v1322 = vunpack.c.l.b16 %v179
    %v1323 = vunpack.c.l.b16 %v180
    %v1324 = vunpack.c.l.b16 %v181
    %v1325 = vunpack.c.l.b16 %v182
    %v1326 = vunpack.c.l.b16 %v183
    %v1327 = vunpack.c.l.b16 %v184
    %v1328 = vunpack.c.l.b16 %v185
    %v1329 = vunpack.c.l.b16 %v186
    %v1330 = vunpack.c.l.b16 %v187
    %v1331 = vunpack.c.l.b16 %v188
    %v1332 = vunpack.c.l.b16 %v189
    %v1333 = vunpack.c.l.b16 %v190
    %v1334 = vunpack.c.l.b16 %v191
    %v1335 = vunpack.c.l.b16 %v192
    %v1336 = vunpack.c.l.b16 %v193
    %v1337 = vunpack.c.l.b16 %v194
    %v1338 = vunpack.c.l.b16 %v195
    %v1339 = vunpack.c.l.b16 %v196
    %v1340 = vunpack.c.l.b16 %v197
    %v1341 = vunpack.c.l.b16 %v198
    %v1342 = vunpack.c.l.b16 %v199
    %v1343 = vunpack.c.l.b16 %v200
    %v1344 = vunpack.c.l.b16 %v201
    %v1345 = vunpack.c.l.b16 %v202
    %v1346 = vunpack.c.l.b16 %v203
    %v1347 = vunpack.c.l.b16 %v204
    %v1348 = vunpack.c.l.b16 %v205
    %v1349 = vunpack.c.l.b16 %v206
    %v1350 = vunpack.c.l.b16 %v207
    %v1351 = vunpack.c.l.b16 %v208
    %v1352 = vunpack.c.l.b16 %v209
    %v1353 = vunpack.c.l.b16 %v210
    %v1354 = vunpack.c.l.b16 %v211
    %v1355 = vunpack.c.l.b16 %v212
    %v1356 = vunpack.c.l.b16 %v213
    %v1357 = vunpack.c.l.b16 %v214
    %v1358 = vunpack.c.l.b16 %v215
    %v1359 = vunpack.c.l.b16 %v216
    %v1360 = vunpack.c.l.b16 %v217
    %v1361 = vunpack.c.l.b16 %v218
    %v1362 = vunpack.c.l.b16 %v219
    %v1363 = vunpack.c.l.b16 %v220
    %v1364 = vunpack.c.l.b16 %v221
    %v1365 = vunpack.c.l.b16 %v222
    %v1366 = vunpack.c.l.b16 %v223
    %v1367 = vunpack.c.l.b16 %v224
    %v1368 = vunpack.c.l.b16 %v225
    %v1369 = vunpack.c.l.b16 %v226
    %v1370 = vunpack.c.l.b16 %v227
    %v1371 = vunpack.c.l.b16 %v228
    %v1372 = vunpack.c.l.b16 %v229
    %v1373 = vunpack.c.l.b16 %v230
    %v1374 = vunpack.c.l.b16 %v231
    %v1375 = vunpack.c.l.b16 %v232
    %v1376 = vunpack.c.l.b16 %v233
    %v1377 = vunpack.c.l.b16 %v234
    %v1378 = vunpack.c.l.b16 %v235
    %v1379 = vunpack.c.l.b16 %v236
    %v1380 = vunpack.c.l.b16 %v237
    %v1381 = vunpack.c.l.b16 %v238
    %v1382 = vunpack.c.l.b16 %v239
    %v1383 = vunpack.c.l.b16 %v240
    %v1384 = vunpack.c.l.b16 %v241
    %v1385 = vunpack.c.l.b16 %v242
    %v1386 = vunpack.c.l.b16 %v243
    %v1387 = vunpack.c.l.b16 %v244
    %v1388 = vunpack.c.l.b16 %v245
    %v1389 = vunpack.c.l.b16 %v246
    %v1390 = vunpack.c.l.b16 %v247
    %v1391 = vunpack.c.l.b16 %v248
    %v1392 = vunpack.c.l.b16 %v249
    %v1393 = vunpack.c.l.b16 %v250
    %v1394 = vunpack.c.l.b16 %v251
    %v1395 = vunpack.c.l.b16 %v252
    %v1396 = vunpack.c.l.b16 %v253
    %v1397 = vunpack.c.l.b16 %v254
    %v1398 = vunpack.c.l.b16 %v255
    %v1399 = vunpack.c.l.b16 %v256
    %v1400 = vunpack.c.l.b16 %v257
    %v1401 = vunpack.c.l.b16 %v258
    %v1402 = vunpack.c.l.b16 %v259
    %v1403 = vunpack.c.l.b16 %v260
    %v1404 = vunpack.c.l.b16 %v261
    %v1405 = vunpack.c.l.b16 %v262
    %v1406 = vunpack.c.l.b16 %v263
    %v1407 = vunpack.c.l.b16 %v264
    %v1408 = vunpack.c.l.b16 %v265
    %v1409 = vunpack.c.l.b16 %v266
    %v1410 = vunpack.c.l.b16 %v267
    %v1411 = vunpack.c.l.b16 %v268
    %v1412 = vunpack.c.l.b16 %v269
    %v1413 = vunpack.c.l.b16 %v270
    %v1414 = vunpack.c.l.b16 %v271
    %v1415 = vunpack.c.l.b16 %v272
    %v1416 = vunpack.c.l.b16 %v273
    %v1417 = vunpack.c.l.b16 %v274
    %v1418 = vunpack.c.l.b16 %v275
    %v1419 = vunpack.c.l.b16 %v276
    %v1420 = vunpack.c.l.b16 %v277
    %v1421 = vunpack.c.l.b16 %v278
    %v1422 = vunpack.c.l.b16 %v279
    %v1423 = vunpack.c.l.b16 %v280
    %v1424 = vunpack.c.l.b16 %v281
    %v1425 = vunpack.c.l.b16 %v282
    %v1426 = vunpack.c.l.b16 %v283
    %v1427 = vunpack.c.l.b16 %v284
    %v1428 = vunpack.c.l.b16 %v285
    %v1429 = vunpack.c.l.b16 %v286
    %v1430 = vunpack.c.l.b16 %v287
    %v1431 = vunpack.c.l.b16 %v288
    %v1432 = vunpack.c.l.b16 %v289
    %v1433 = vunpack.c.l.b16 %v290
    %v1434 = vunpack.c.l.b16 %v291
    %v1435 = vunpack.c.l.b16 %v292
    %v1436 = vunpack.c.l.b16 %v293
    %v1437 = vunpack.c.l.b16 %v294
    %v1438 = vunpack.c.l.b16 %v295
    %v1439 = vunpack.c.l.b16 %v296
    %v1440 = vunpack.c.l.b16 %v297
    %v1441 = vunpack.c.l.b16 %v298
    %v1442 = vunpack.c.l.b16 %v299
    %v1443 = vunpack.c.l.b16 %v300
    %v1444 = vunpack.c.l.b16 %v301
    %v1445 = vunpack.c.l.b16 %v302
    %v1446 = vunpack.c.l.b16 %v303
    %v1447 = vunpack.c.l.b16 %v304
    %v1448 = vunpack.c.l.b16 %v305
    %v1449 = vunpack.c.l.b16 %v306
    %v1450 = vunpack.c.l.b16 %v307
    %v1451 = vunpack.c.l.b16 %v308
    %v1452 = vunpack.c.l.b16 %v309
    %v1453 = vunpack.c.l.b16 %v310
    %v1454 = vunpack.c.l.b16 %v311
    %v1455 = vunpack.c.l.b16 %v312
    %v1456 = vunpack.c.l.b16 %v313
    %v1457 = vunpack.c.l.b16 %v314
    %v1458 = vunpack.c.l.b16 %v315
    %v1459 = vunpack.c.l.b16 %v316
    %v1460 = vunpack.c.l.b16 %v317
    %v1461 = vunpack.c.l.b16 %v318
    %v1462 = vunpack.c.l.b16 %v319
    %v1463 = vunpack.c.l.b16 %v320
    %v1464 = vunpack.c.l.b16 %v321
    %v1465 = vunpack.c.l.b16 %v322
    %v1466 = vunpack.c.l.b16 %v323
    %v1467 = vunpack.c.l.b16 %v324
    %v1468 = vunpack.c.l.b16 %v325
    %v1469 = vunpack.c.l.b16 %v326
    %v1470 = vunpack.c.l.b16 %v327
    %v1471 = vunpack.c.l.b16 %v328
    %v1472 = vunpack.c.l.b16 %v329
    %v1473 = vunpack.c.l.b16 %v330
    %v1474 = vunpack.c.l.b16 %v331
    %v1475 = vunpack.c.l.b16 %v332
    %v1476 = vunpack.c.l.b16 %v333
    %v1477 = vunpack.c.l.b16 %v334
    %v1478 = vunpack.c.l.b16 %v335
    %v1479 = vunpack.c.l.b16 %v336
    %v1480 = vunpack.c.l.b16 %v337
    %v1481 = vunpack.c.l.b16 %v338
    %v1482 = vunpack.c.l.b16 %v339
    %v1483 = vunpack.c.l.b16 %v340
    %v1484 = vunpack.c.l.b16 %v341
    %v1485 = vunpack.c.l.b16 %v342
    %v1486 = vunpack.c.l.b16 %v343
    %v1487 = vunpack.c.l.b16 %v344
    %v1488 = vunpack.c.l.b16 %v345
    %v1489 = vunpack.c.l.b16 %v346
    %v1490 = vunpack.c.l.b16 %v347
    %v1491 = vunpack.c.l.b16 %v348
    %v1492 = vunpack.c.l.b16 %v349
    %v1493 = vunpack.c.l.b16 %v350
    %v1494 = vunpack.c.l.b16 %v351
    %v1495 = vunpack.c.l.b16 %v352
    %v1496 = vunpack.c.l.b16 %v353
    %v1497 = vunpack.c.l.b16 %v354
    %v1498 = vunpack.c.l.b16 %v355
    %v1499 = vunpack.c.l.b16 %v356
    %v1500 = vunpack.c.l.b16 %v357
    %v1501 = vunpack.c.l.b16 %v358
    %v1502 = vunpack.c.l.b16 %v359
    %v1503 = vunpack.c.l.b16 %v360
    %v1504 = vunpack.c.l.b16 %v361
    %v1505 = vunpack.c.l.b16 %v362
    %v1506 = vunpack.c.l.b16 %v363
    %v1507 = vunpack.c.l.b16 %v364
    %v1508 = vunpack.c.l.b16 %v365
    %v1509 = vunpack.c.l.b16 %v366
    %v1510 = vunpack.c.l.b16 %v367
    %v1511 = vunpack.c.l.b16 %v368
    %v1512 = vunpack.c.l.b16 %v369
    %v1513 = vunpack.c.l.b16 %v370
    %v1514 = vunpack.c.l.b16 %v371
    %v1515 = vunpack.c.l.b16 %v372
    %v1516 = vunpack.c.l.b16 %v373
    %v1517 = vunpack.c.l.b16 %v374
    %v1518 = vunpack.c.l.b16 %v375
    %v1519 = vunpack.c.l.b16 %v376
    %v1520 = vunpack.c.l.b16 %v377
    %v1521 = vunpack.c.l.b16 %v378
    %v1522 = vunpack.c.l.b16 %v379
    %v1523 = vunpack.c.l.b16 %v380
    %v1524 = vunpack.c.l.b16 %v381
    %v1525 = vunpack.c.l.b16 %v382
    %v1526 = vunpack.c.l.b16 %v383
    %v1527 = vunpack.c.l.b16 %v384
    %v1528 = vunpack.c.l.b16 %v385
    %v1529 = vunpack.c.l.b16 %v386
    %v1530 = vunpack.c.l.b16 %v387
    %v1531 = vunpack.c.l.b16 %v388
    %v1532 = vunpack.c.l.b16 %v389
    %v1533 = vunpack.c.l.b16 %v390
    %v1534 = vunpack.c.l.b16 %v391
    %v1535 = vunpack.c.l.b16 %v392
    %v1536 = vunpack.c.l.b16 %v393
    %v1537 = vunpack.c.l.b16 %v394
    %v1538 = vunpack.c.l.b16 %v395
    %v1539 = vunpack.c.l.b16 %v396
    %v1540 = vunpack.c.l.b16 %v397
    %v1541 = vunpack.c.l.b16 %v398
    %v1542 = vunpack.c.l.b16 %v399
    %v1543 = vunpack.c.l.b16 %v400
    %v1544 = vunpack.c.l.b16 %v401
    %v1545 = vunpack.c.l.b16 %v402
    %v1546 = vunpack.c.l.b16 %v403
    %v1547 = vunpack.c.l.b16 %v404
    %v1548 = vunpack.c.l.b16 %v405
    %v1549 = vunpack.c.l.b16 %v406
    %v1550 = vunpack.c.l.b16 %v407
    %v1551 = vunpack.c.l.b16 %v408
    %v1552 = vunpack.c.l.b16 %v409
    %v1553 = vunpack.c.l.b16 %v410
    %v1554 = vunpack.c.l.b16 %v411
    %v1555 = vunpack.c.l.b16 %v412
    %v1556 = vunpack.c.l.b16 %v413
    %v1557 = vunpack.c.l.b16 %v414
    %v1558 = vunpack.c.l.b16 %v415
    %v1559 = vunpack.c.l.b16 %v416
    %v1560 = vunpack.c.l.b16 %v417
    %v1561 = vunpack.c.l.b16 %v418
    %v1562 = vunpack.c.l.b16 %v419
    %v1563 = vunpack.c.l.b16 %v420
    %v1564 = vunpack.c.l.b16 %v421
    %v1565 = vunpack.c.l.b16 %v422
    %v1566 = vunpack.c.l.b16 %v423
    %v1567 = vunpack.c.l.b16 %v424
    %v1568 = vunpack.c.l.b16 %v425
    %v1569 = vunpack.c.l.b16 %v426
    %v1570 = vunpack.c.l.b16 %v427
    %v1571 = vunpack.c.l.b16 %v428
    %v1572 = vunpack.c.l.b16 %v429
    %v1573 = vunpack.c.l.b16 %v430
    %v1574 = vunpack.c.l.b16 %v431
    %v1575 = vunpack.c.l.b16 %v432
    %v1576 = vunpack.c.l.b16 %v433
    %v1577 = vunpack.c.l.b16 %v434
    %v1578 = vunpack.c.l.b16 %v435
    %v1579 = vunpack.c.l.b16 %v436
    %v1580 = vunpack.c.l.b16 %v437
    %v1581 = vunpack.c.l.b16 %v438
    %v1582 = vunpack.c.l.b16 %v439
    %v1583 = vunpack.c.l.b16 %v440
    %v1584 = vunpack.c.l.b16 %v441
    %v1585 = vunpack.c.l.b16 %v442
    %v1586 = vunpack.c.l.b16 %v443
    %v1587 = vunpack.c.l.b16 %v444
    %v1588 = vunpack.c.l.b16 %v445
    %v1589 = vunpack.c.l.b16 %v446
    %v1590 = vunpack.c.l.b16 %v447
    %v1591 = vunpack.c.l.b16 %v448
    %v1592 = vunpack.c.l.b16 %v449
    %v1593 = vunpack.c.l.b16 %v450
    %v1594 = vunpack.c.l.b16 %v451
    %v1595 = vunpack.c.l.b16 %v452
    %v1596 = vunpack.c.l.b16 %v453
    %v1597 = vunpack.c.l.b16 %v454
    %v1598 = vunpack.c.l.b16 %v455
    %v1599 = vunpack.c.l.b16 %v456
    %v1600 = vunpack.c.l.b16 %v457
    %v1601 = vunpack.c.l.b16 %v458
    %v1602 = vunpack.c.l.b16 %v459
    %v1603 = vunpack.c.l.b16 %v460
    %v1604 = vunpack.c.l.b16 %v461
    %v1605 = vunpack.c.l.b16 %v462
    %v1606 = vunpack.c.l.b16 %v463
    %v1607 = vunpack.c.l.b16 %v464
    %v1608 = vunpack.c.l.b16 %v465
    %v1609 = vunpack.c.l.b16 %v466
    %v1610 = vunpack.c.l.b16 %v467
    %v1611 = vunpack.c.l.b16 %v468
    %v1612 = vunpack.c.l.b16 %v469
    %v1613 = vunpack.c.l.b16 %v470
    %v1614 = vunpack.c.l.b16 %v471
    %v1615 = vunpack.c.l.b16 %v472
    %v1616 = vunpack.c.l.b16 %v473
    %v1617 = vunpack.c.l.b16 %v474
    %v1618 = vunpack.c.l.b16 %v475
    %v1619 = vunpack.c.l.b16 %v476
    %v1620 = vunpack.c.l.b16 %v477
    %v1621 = vunpack.c.l.b16 %v478
    %v1622 = vunpack.c.l.b16 %v479
    %v1623 = vunpack.c.l.b16 %v480
    %v1624 = vunpack.c.l.b16 %v481
    %v1625 = vunpack.c.l.b16 %v482
    %v1626 = vunpack.c.l.b16 %v483
    %v1627 = vunpack.c.l.b16 %v484
    %v1628 = vunpack.c.l.b16 %v485
    %v1629 = vunpack.c.l.b16 %v486
    %v1630 = vunpack.c.l.b16 %v487
    %v1631 = vunpack.c.l.b16 %v488
    %v1632 = vunpack.c.l.b16 %v489
    %v1633 = vunpack.c.l.b16 %v490
    %v1634 = vunpack.c.l.b16 %v491
    %v1635 = vunpack.c.l.b16 %v492
    %v1636 = vunpack.c.l.b16 %v493
    %v1637 = vunpack.c.l.b16 %v494
    %v1638 = vunpack.c.l.b16 %v495
    %v1639 = vunpack.c.l.b16 %v496
    %v1640 = vunpack.c.l.b16 %v497
    %v1641 = vunpack.c.l.b16 %v498
    %v1642 = vunpack.c.l.b16 %v499
    %v1643 = vunpack.c.l.b16 %v500
    %v1644 = vunpack.c.l.b16 %v501
    %v1645 = vunpack.c.l.b16 %v502
    %v1646 = vunpack.c.l.b16 %v503
    %v1647 = vunpack.c.l.b16 %v504
    %v1648 = vunpack.c.l.b16 %v505
    %v1649 = vunpack.c.l.b16 %v506
    %v1650 = vunpack.c.l.b16 %v507
    %v1651 = vunpack.c.l.b16 %v508
    %v1652 = vunpack.c.l.b16 %v509
    %v1653 = vunpack.c.l.b16 %v510
    %v1654 = vunpack.c.l.b16 %v511
    %v1655 = vunpack.c.l.b16 %v512
    %v1656 = vunpack.c.l.b16 %v513
    %v1657 = vunpack.c.l.b16 %v514
    %v1658 = vunpack.c.l.b16 %v515
    %v1659 = vunpack.c.l.b16 %v516
    %v1660 = vunpack.c.l.b16 %v517
    %v1661 = vunpack.c.l.b16 %v518
    %v1662 = vunpack.c.l.b16 %v519
    %v1663 = vunpack.c.l.b16 %v520
    %v1664 = vunpack.c.l.b16 %v521
    %v1665 = vunpack.c.l.b16 %v522
    %v1666 = vunpack.c.l.b16 %v523
    %v1667 = vunpack.c.l.b16 %v524
    %v1668 = vunpack.c.l.b16 %v525
    %v1669 = vunpack.c.l.b16 %v526
    %v1670 = vunpack.c.l.b16 %v527
    %v1671 = vunpack.c.l.b16 %v528
    %v1672 = vunpack.c.l.b16 %v529
    %v1673 = vunpack.c.l.b16 %v530
    %v1674 = vunpack.c.l.b16 %v531
    %v1675 = vunpack.c.l.b16 %v532
    %v1676 = vunpack.c.l.b16 %v533
    %v1677 = vunpack.c.l.b16 %v534
    %v1678 = vunpack.c.l.b16 %v535
    %v1679 = vunpack.c.l.b16 %v536
    %v1680 = vunpack.c.l.b16 %v537
    %v1681 = vunpack.c.l.b16 %v538
    %v1682 = vunpack.c.l.b16 %v539
    %v1683 = vunpack.c.l.b16 %v540
    %v1684 = vunpack.c.l.b16 %v541
    %v1685 = vunpack.c.l.b16 %v542
    %v1686 = vunpack.c.l.b16 %v543
    %v1687 = vunpack.c.l.b16 %v544
    %v1688 = vunpack.c.l.b16 %v545
    %v1689 = vunpack.c.l.b16 %v546
    %v1690 = vunpack.c.l.b16 %v547
    %v1691 = vunpack.c.l.b16 %v548
    %v1692 = vunpack.c.l.b16 %v549
    %v1693 = vunpack.c.l.b16 %v550
    %v1694 = vunpack.c.l.b16 %v551
    %v1695 = vunpack.c.l.b16 %v552
    %v1696 = vunpack.c.l.b16 %v553
    %v1697 = vunpack.c.l.b16 %v554
    %v1698 = vunpack.c.l.b16 %v555
    %v1699 = vunpack.c.l.b16 %v556
    %v1700 = vunpack.c.l.b16 %v557
    %v1701 = vunpack.c.l.b16 %v558
    %v1702 = vunpack.c.l.b16 %v559
    %v1703 = vunpack.c.l.b16 %v560
    %v1704 = vunpack.c.l.b16 %v561
    %v1705 = vunpack.c.l.b16 %v562
    %v1706 = vunpack.c.l.b16 %v563
    %v1707 = vunpack.c.l.b16 %v564
    %v1708 = vunpack.c.l.b16 %v565
    %v1709 = vunpack.c.l.b16 %v566
    %v1710 = vunpack.c.l.b16 %v567
    %v1711 = vunpack.c.l.b16 %v568
    %v1712 = vunpack.c.l.b16 %v569
    %v1713 = vunpack.c.l.b16 %v570
    %v1714 = vunpack.c.l.b16 %v571
    %v1715 = vunpack.c.l.b16 %v572
    %v1716 = vunpack.c.l.b16 %v573
    %v1717 = vunpack.c.l.b16 %v574
    %v1718 = vunpack.c.l.b16 %v575
    %v1719 = vunpack.c.l.b16 %v576
    %v1720 = vunpack.c.l.b16 %v577
    %v1721 = vunpack.c.l.b16 %v578
    %v1722 = vunpack.c.l.b16 %v579
    %v1723 = vpack.c.b16 %v1212, %v1211
    %v1724 = vpack.c.b16 %v1214, %v1213
    %v1725 = vpack.c.b16 %v1216, %v1215
    %v1726 = vpack.c.b16 %v1218, %v1217
    %v1727 = vpack.c.b16 %v1220, %v1219
    %v1728 = vpack.c.b16 %v1222, %v1221
    %v1729 = vpack.c.b16 %v1224, %v1223
    %v1730 = vpack.c.b16 %v1226, %v1225
    %v1731 = vpack.c.b16 %v1228, %v1227
    %v1732 = vpack.c.b16 %v1230, %v1229
    %v1733 = vpack.c.b16 %v1232, %v1231
    %v1734 = vpack.c.b16 %v1234, %v1233
    %v1735 = vpack.c.b16 %v1236, %v1235
    %v1736 = vpack.c.b16 %v1238, %v1237
    %v1737 = vpack.c.b16 %v1240, %v1239
    %v1738 = vpack.c.b16 %v1242, %v1241
    %v1739 = vpack.c.b16 %v1244, %v1243
    %v1740 = vpack.c.b16 %v1246, %v1245
    %v1741 = vpack.c.b16 %v1248, %v1247
    %v1742 = vpack.c.b16 %v1250, %v1249
    %v1743 = vpack.c.b16 %v1252, %v1251
    %v1744 = vpack.c.b16 %v1254, %v1253
    %v1745 = vpack.c.b16 %v1256, %v1255
    %v1746 = vpack.c.b16 %v1258, %v1257
    %v1747 = vpack.c.b16 %v1260, %v1259
    %v1748 = vpack.c.b16 %v1262, %v1261
    %v1749 = vpack.c.b16 %v1264, %v1263
    %v1750 = vpack.c.b16 %v1266, %v1265
    %v1751 = vpack.c.b16 %v1268, %v1267
    %v1752 = vpack.c.b16 %v1270, %v1269
    %v1753 = vpack.c.b16 %v1272, %v1271
    %v1754 = vpack.c.b16 %v1274, %v1273
    %v1755 = vpack.c.b16 %v1276, %v1275
    %v1756 = vpack.c.b16 %v1278, %v1277
    %v1757 = vpack.c.b16 %v1280, %v1279
    %v1758 = vpack.c.b16 %v1282, %v1281
    %v1759 = vpack.c.b16 %v1284, %v1283
    %v1760 = vpack.c.b16 %v1286, %v1285
    %v1761 = vpack.c.b16 %v1288, %v1287
    %v1762 = vpack.c.b16 %v1290, %v1289
    %v1763 = vpack.c.b16 %v1292, %v1291
    %v1764 = vpack.c.b16 %v1294, %v1293
    %v1765 = vpack.c.b16 %v1296, %v1295
    %v1766 = vpack.c.b16 %v1298, %v1297
    %v1767 = vpack.c.b16 %v1300, %v1299
    %v1768 = vpack.c.b16 %v1302, %v1301
    %v1769 = vpack.c.b16 %v1304, %v1303
    %v1770 = vpack.c.b16 %v1306, %v1305
    %v1771 = vpack.c.b16 %v1308, %v1307
    %v1772 = vpack.c.b16 %v1310, %v1309
    %v1773 = vpack.c.b16 %v1312, %v1311
    %v1774 = vpack.c.b16 %v1314, %v1313
    %v1775 = vpack.c.b16 %v1316, %v1315
    %v1776 = vpack.c.b16 %v1318, %v1317
    %v1777 = vpack.c.b16 %v1320, %v1319
    %v1778 = vpack.c.b16 %v1322, %v1321
    %v1779 = vpack.c.b16 %v1324, %v1323
    %v1780 = vpack.c.b16 %v1326, %v1325
    %v1781 = vpack.c.b16 %v1328, %v1327
    %v1782 = vpack.c.b16 %v1330, %v1329
    %v1783 = vpack.c.b16 %v1332, %v1331
    %v1784 = vpack.c.b16 %v1334, %v1333
    %v1785 = vpack.c.b16 %v1336, %v1335
    %v1786 = vpack.c.b16 %v1338, %v1337
    %v1787 = vpack.c.b16 %v1340, %v1339
    %v1788 = vpack.c.b16 %v1342, %v1341
    %v1789 = vpack.c.b16 %v1344, %v1343
    %v1790 = vpack.c.b16 %v1346, %v1345
    %v1791 = vpack.c.b16 %v1348, %v1347
    %v1792 = vpack.c.b16 %v1350, %v1349
    %v1793 = vpack.c.b16 %v1352, %v1351
    %v1794 = vpack.c.b16 %v1354, %v1353
    %v1795 = vpack.c.b16 %v1356, %v1355
    %v1796 = vpack.c.b16 %v1358, %v1357
    %v1797 = vpack.c.b16 %v1360, %v1359
    %v1798 = vpack.c.b16 %v1362, %v1361
    %v1799 = vpack.c.b16 %v1364, %v1363
    %v1800 = vpack.c.b16 %v1366, %v1365
    %v1801 = vpack.c.b16 %v1368, %v1367
    %v1802 = vpack.c.b16 %v1370, %v1369
    %v1803 = vpack.c.b16 %v1372, %v1371
    %v1804 = vpack.c.b16 %v1374, %v1373
    %v1805 = vpack.c.b16 %v1376, %v1375
    %v1806 = vpack.c.b16 %v1378, %v1377
    %v1807 = vpack.c.b16 %v1380, %v1379
    %v1808 = vpack.c.b16 %v1382, %v1381
    %v1809 = vpack.c.b16 %v1384, %v1383
    %v1810 = vpack.c.b16 %v1386, %v1385
    %v1811 = vpack.c.b16 %v1388, %v1387
    %v1812 = vpack.c.b16 %v1390, %v1389
    %v1813 = vpack.c.b16 %v1392, %v1391
    %v1814 = vpack.c.b16 %v1394, %v1393
    %v1815 = vpack.c.b16 %v1396, %v1395
    %v1816 = vpack.c.b16 %v1398, %v1397
    %v1817 = vpack.c.b16 %v1400, %v1399
    %v1818 = vpack.c.b16 %v1402, %v1401
    %v1819 = vpack.c.b16 %v1404, %v1403
    %v1820 = vpack.c.b16 %v1406, %v1405
    %v1821 = vpack.c.b16 %v1408, %v1407
    %v1822 = vpack.c.b16 %v1410, %v1409
    %v1823 = vpack.c.b16 %v1412, %v1411
    %v1824 = vpack.c.b16 %v1414, %v1413
    %v1825 = vpack.c.b16 %v1416, %v1415
    %v1826 = vpack.c.b16 %v1418, %v1417
    %v1827 = vpack.c.b16 %v1420, %v1419
    %v1828 = vpack.c.b16 %v1422, %v1421
    %v1829 = vpack.c.b16 %v1424, %v1423
    %v1830 = vpack.c.b16 %v1426, %v1425
    %v1831 = vpack.c.b16 %v1428, %v1427
    %v1832 = vpack.c.b16 %v1430, %v1429
    %v1833 = vpack.c.b16 %v1432, %v1431
    %v1834 = vpack.c.b16 %v1434, %v1433
    %v1835 = vpack.c.b16 %v1436, %v1435
    %v1836 = vpack.c.b16 %v1438, %v1437
    %v1837 = vpack.c.b16 %v1440, %v1439
    %v1838 = vpack.c.b16 %v1442, %v1441
    %v1839 = vpack.c.b16 %v1444, %v1443
    %v1840 = vpack.c.b16 %v1446, %v1445
    %v1841 = vpack.c.b16 %v1448, %v1447
    %v1842 = vpack.c.b16 %v1450, %v1449
    %v1843 = vpack.c.b16 %v1452, %v1451
    %v1844 = vpack.c.b16 %v1454, %v1453
    %v1845 = vpack.c.b16 %v1456, %v1455
    %v1846 = vpack.c.b16 %v1458, %v1457
    %v1847 = vpack.c.b16 %v1460, %v1459
    %v1848 = vpack.c.b16 %v1462, %v1461
    %v1849 = vpack.c.b16 %v1464, %v1463
    %v1850 = vpack.c.b16 %v1466, %v1465
    %v1851 = vpack.c.b16 %v1468, %v1467
    %v1852 = vpack.c.b16 %v1470, %v1469
    %v1853 = vpack.c.b16 %v1472, %v1471
    %v1854 = vpack.c.b16 %v1474, %v1473
    %v1855 = vpack.c.b16 %v1476, %v1475
    %v1856 = vpack.c.b16 %v1478, %v1477
    %v1857 = vpack.c.b16 %v1480, %v1479
    %v1858 = vpack.c.b16 %v1482, %v1481
    %v1859 = vpack.c.b16 %v1484, %v1483
    %v1860 = vpack.c.b16 %v1486, %v1485
    %v1861 = vpack.c.b16 %v1488, %v1487
    %v1862 = vpack.c.b16 %v1490, %v1489
    %v1863 = vpack.c.b16 %v1492, %v1491
    %v1864 = vpack.c.b16 %v1494, %v1493
    %v1865 = vpack.c.b16 %v1496, %v1495
    %v1866 = vpack.c.b16 %v1498, %v1497
    %v1867 = vpack.c.b16 %v1500, %v1499
    %v1868 = vpack.c.b16 %v1502, %v1501
    %v1869 = vpack.c.b16 %v1504, %v1503
    %v1870 = vpack.c.b16 %v1506, %v1505
    %v1871 = vpack.c.b16 %v1508, %v1507
    %v1872 = vpack.c.b16 %v1510, %v1509
    %v1873 = vpack.c.b16 %v1512, %v1511
    %v1874 = vpack.c.b16 %v1514, %v1513
    %v1875 = vpack.c.b16 %v1516, %v1515
    %v1876 = vpack.c.b16 %v1518, %v1517
    %v1877 = vpack.c.b16 %v1520, %v1519
    %v1878 = vpack.c.b16 %v1522, %v1521
    %v1879 = vpack.c.b16 %v1524, %v1523
    %v1880 = vpack.c.b16 %v1526, %v1525
    %v1881 = vpack.c.b16 %v1528, %v1527
    %v1882 = vpack.c.b16 %v1530, %v1529
    %v1883 = vpack.c.b16 %v1532, %v1531
    %v1884 = vpack.c.b16 %v1534, %v1533
    %v1885 = vpack.c.b16 %v1536, %v1535
    %v1886 = vpack.c.b16 %v1538, %v1537
    %v1887 = vpack.c.b16 %v1540, %v1539
    %v1888 = vpack.c.b16 %v1542, %v1541
    %v1889 = vpack.c.b16 %v1544, %v1543
    %v1890 = vpack.c.b16 %v1546, %v1545
    %v1891 = vpack.c.b16 %v1548, %v1547
    %v1892 = vpack.c.b16 %v1550, %v1549
    %v1893 = vpack.c.b16 %v1552, %v1551
    %v1894 = vpack.c.b16 %v1554, %v1553
    %v1895 = vpack.c.b16 %v1556, %v1555
    %v1896 = vpack.c.b16 %v1558, %v1557
    %v1897 = vpack.c.b16 %v1560, %v1559
    %v1898 = vpack.c.b16 %v1562, %v1561
    %v1899 = vpack.c.b16 %v1564, %v1563
    %v1900 = vpack.c.b16 %v1566, %v1565
    %v1901 = vpack.c.b16 %v1568, %v1567
    %v1902 = vpack.c.b16 %v1570, %v1569
    %v1903 = vpack.c.b16 %v1572, %v1571
    %v1904 = vpack.c.b16 %v1574, %v1573
    %v1905 = vpack.c.b16 %v1576, %v1575
    %v1906 = vpack.c.b16 %v1578, %v1577
    %v1907 = vpack.c.b16 %v1580, %v1579
    %v1908 = vpack.c.b16 %v1582, %v1581
    %v1909 = vpack.c.b16 %v1584, %v1583
    %v1910 = vpack.c.b16 %v1586, %v1585
    %v1911 = vpack.c.b16 %v1588, %v1587
    %v1912 = vpack.c.b16 %v1590, %v1589
    %v1913 = vpack.c.b16 %v1592, %v1591
    %v1914 = vpack.c.b16 %v1594, %v1593
    %v1915 = vpack.c.b16 %v1596, %v1595
    %v1916 = vpack.c.b16 %v1598, %v1597
    %v1917 = vpack.c.b16 %v1600, %v1599
    %v1918 = vpack.c.b16 %v1602, %v1601
    %v1919 = vpack.c.b16 %v1604, %v1603
    %v1920 = vpack.c.b16 %v1606, %v1605
    %v1921 = vpack.c.b16 %v1608, %v1607
    %v1922 = vpack.c.b16 %v1610, %v1609
    %v1923 = vpack.c.b16 %v1612, %v1611
    %v1924 = vpack.c.b16 %v1614, %v1613
    %v1925 = vpack.c.b16 %v1616, %v1615
    %v1926 = vpack.c.b16 %v1618, %v1617
    %v1927 = vpack.c.b16 %v1620, %v1619
    %v1928 = vpack.c.b16 %v1622, %v1621
    %v1929 = vpack.c.b16 %v1624, %v1623
    %v1930 = vpack.c.b16 %v1626, %v1625
    %v1931 = vpack.c.b16 %v1628, %v1627
    %v1932 = vpack.c.b16 %v1630, %v1629
    %v1933 = vpack.c.b16 %v1632, %v1631
    %v1934 = vpack.c.b16 %v1634, %v1633
    %v1935 = vpack.c.b16 %v1636, %v1635
    %v1936 = vpack.c.b16 %v1638, %v1637
    %v1937 = vpack.c.b16 %v1640, %v1639
    %v1938 = vpack.c.b16 %v1642, %v1641
    %v1939 = vpack.c.b16 %v1644, %v1643
    %v1940 = vpack.c.b16 %v1646, %v1645
    %v1941 = vpack.c.b16 %v1648, %v1647
    %v1942 = vpack.c.b16 %v1650, %v1649
    %v1943 = vpack.c.b16 %v1652, %v1651
    %v1944 = vpack.c.b16 %v1654, %v1653
    %v1945 = vpack.c.b16 %v1656, %v1655
    %v1946 = vpack.c.b16 %v1658, %v1657
    %v1947 = vpack.c.b16 %v1660, %v1659
    %v1948 = vpack.c.b16 %v1662, %v1661
    %v1949 = vpack.c.b16 %v1664, %v1663
    %v1950 = vpack.c.b16 %v1666, %v1665
    %v1951 = vpack.c.b16 %v1668, %v1667
    %v1952 = vpack.c.b16 %v1670, %v1669
    %v1953 = vpack.c.b16 %v1672, %v1671
    %v1954 = vpack.c.b16 %v1674, %v1673
    %v1955 = vpack.c.b16 %v1676, %v1675
    %v1956 = vpack.c.b16 %v1678, %v1677
    %v1957 = vpack.c.b16 %v1680, %v1679
    %v1958 = vpack.c.b16 %v1682, %v1681
    %v1959 = vpack.c.b16 %v1684, %v1683
    %v1960 = vpack.c.b16 %v1686, %v1685
    %v1961 = vpack.c.b16 %v1688, %v1687
    %v1962 = vpack.c.b16 %v1690, %v1689
    %v1963 = vpack.c.b16 %v1692, %v1691
    %v1964 = vpack.c.b16 %v1694, %v1693
    %v1965 = vpack.c.b16 %v1696, %v1695
    %v1966 = vpack.c.b16 %v1698, %v1697
    %v1967 = vpack.c.b16 %v1700, %v1699
    %v1968 = vpack.c.b16 %v1702, %v1701
    %v1969 = vpack.c.b16 %v1704, %v1703
    %v1970 = vpack.c.b16 %v1706, %v1705
    %v1971 = vpack.c.b16 %v1708, %v1707
    %v1972 = vpack.c.b16 %v1710, %v1709
    %v1973 = vpack.c.b16 %v1712, %v1711
    %v1974 = vpack.c.b16 %v1714, %v1713
    %v1975 = vpack.c.b16 %v1716, %v1715
    %v1976 = vpack.c.b16 %v1718, %v1717
    %v1977 = vpack.c.b16 %v1720, %v1719
    %v1978 = vpack.c.b16 %v1722, %v1721
    %2235 = vmatprep.subr.bf16.mxu0 0
    %2236 = vmatpush1.bf16.msra.mxu0 %v1730
    %2237 = vmatprep.subr.bf16.mxu0 0
    %2238 = vmatpush1.bf16.msra.mxu0 %v1729
    %2239 = vmatprep.subr.bf16.mxu0 0
    %2240 = vmatpush1.bf16.msra.mxu0 %v1728
    %2241 = vmatprep.subr.bf16.mxu0 0
    %2242 = vmatpush1.bf16.msra.mxu0 %v1727
    %2243 = vmatprep.subr.bf16.mxu0 0
    %2244 = vmatpush1.bf16.msra.mxu0 %v1726
    %2245 = vmatprep.subr.bf16.mxu0 0
    %2246 = vmatpush1.bf16.msra.mxu0 %v1725
    %2247 = vmatprep.subr.bf16.mxu0 0
    %2248 = vmatpush1.bf16.msra.mxu0 %v1724
    %2249 = vmatprep.subr.bf16.mxu0 0
    %2250 = vmatpush1.bf16.msra.mxu0 %v1723
    %2251 = vmatprep.subr.bf16.mxu0 0
    %2252 = vmatpush2.bf16.msra.mxu0 %v1738
    %2253 = vmatprep.subr.bf16.mxu0 0
    %2254 = vmatpush2.bf16.msra.mxu0 %v1737
    %2255 = vmatprep.subr.bf16.mxu0 0
    %2256 = vmatpush2.bf16.msra.mxu0 %v1736
    %2257 = vmatprep.subr.bf16.mxu0 0
    %2258 = vmatpush2.bf16.msra.mxu0 %v1735
    %2259 = vmatprep.subr.bf16.mxu0 0
    %2260 = vmatpush2.bf16.msra.mxu0 %v1734
    %2261 = vmatprep.subr.bf16.mxu0 0
    %2262 = vmatpush2.bf16.msra.mxu0 %v1733
    %2263 = vmatprep.subr.bf16.mxu0 0
    %2264 = vmatpush2.bf16.msra.mxu0 %v1732
    %2265 = vmatprep.subr.bf16.mxu0 0
    %2266 = vmatpush2.bf16.msra.mxu0 %v1731
    %2267 = vmatprep.mubr.bf16.mxu0 %v636
    %2268 = vmatmul.mubr.bf16.gmra.mxu0 %v635
    %v2269 = vpop.f32.mrf.mxu0
    %v2270 = vadd.f32 %v585, %v2269
    %v2271 = vpop.f32.mrf.mxu0
    %v2272 = vpop.f32.mrf.mxu0
    %v2273 = vpop.f32.mrf.mxu0
    %2274 = vdwg.mxu0
    %2275 = vmatprep.subr.bf16.mxu0 0
    %2276 = vmatpush1.bf16.msra.mxu0 %v1746
    %2277 = vmatprep.subr.bf16.mxu0 0
    %2278 = vmatpush1.bf16.msra.mxu0 %v1745
    %2279 = vmatprep.subr.bf16.mxu0 0
    %2280 = vmatpush1.bf16.msra.mxu0 %v1744
    %2281 = vmatprep.subr.bf16.mxu0 0
    %2282 = vmatpush1.bf16.msra.mxu0 %v1743
    %2283 = vmatprep.subr.bf16.mxu0 0
    %2284 = vmatpush1.bf16.msra.mxu0 %v1742
    %2285 = vmatprep.subr.bf16.mxu0 0
    %2286 = vmatpush1.bf16.msra.mxu0 %v1741
    %2287 = vmatprep.subr.bf16.mxu0 0
    %2288 = vmatpush1.bf16.msra.mxu0 %v1740
    %2289 = vmatprep.subr.bf16.mxu0 0
    %2290 = vmatpush1.bf16.msra.mxu0 %v1739
    %2291 = vmatprep.subr.bf16.mxu0 0
    %2292 = vmatpush2.bf16.msra.mxu0 %v1754
    %2293 = vmatprep.subr.bf16.mxu0 0
    %2294 = vmatpush2.bf16.msra.mxu0 %v1753
    %2295 = vmatprep.subr.bf16.mxu0 0
    %2296 = vmatpush2.bf16.msra.mxu0 %v1752
    %2297 = vmatprep.subr.bf16.mxu0 0
    %2298 = vmatpush2.bf16.msra.mxu0 %v1751
    %2299 = vmatprep.subr.bf16.mxu0 0
    %2300 = vmatpush2.bf16.msra.mxu0 %v1750
    %2301 = vmatprep.subr.bf16.mxu0 0
    %2302 = vmatpush2.bf16.msra.mxu0 %v1749
    %2303 = vmatprep.subr.bf16.mxu0 0
    %2304 = vmatpush2.bf16.msra.mxu0 %v1748
    %2305 = vmatprep.subr.bf16.mxu0 0
    %2306 = vmatpush2.bf16.msra.mxu0 %v1747
    %2307 = vmatprep.mubr.bf16.mxu0 %v638
    %2308 = vmatmul.mubr.bf16.gmra.mxu0 %v637
    %v2309 = vpop.f32.mrf.mxu0
    %v2310 = vadd.f32 %v2270, %v2309
    %v2311 = vpop.f32.mrf.mxu0
    %v2312 = vpop.f32.mrf.mxu0
    %v2313 = vpop.f32.mrf.mxu0
    %2314 = vdwg.mxu0
    %2315 = vmatprep.subr.bf16.mxu0 0
    %2316 = vmatpush1.bf16.msra.mxu0 %v1762
    %2317 = vmatprep.subr.bf16.mxu0 0
    %2318 = vmatpush1.bf16.msra.mxu0 %v1761
    %2319 = vmatprep.subr.bf16.mxu0 0
    %2320 = vmatpush1.bf16.msra.mxu0 %v1760
    %2321 = vmatprep.subr.bf16.mxu0 0
    %2322 = vmatpush1.bf16.msra.mxu0 %v1759
    %2323 = vmatprep.subr.bf16.mxu0 0
    %2324 = vmatpush1.bf16.msra.mxu0 %v1758
    %2325 = vmatprep.subr.bf16.mxu0 0
    %2326 = vmatpush1.bf16.msra.mxu0 %v1757
    %2327 = vmatprep.subr.bf16.mxu0 0
    %2328 = vmatpush1.bf16.msra.mxu0 %v1756
    %2329 = vmatprep.subr.bf16.mxu0 0
    %2330 = vmatpush1.bf16.msra.mxu0 %v1755
    %2331 = vmatprep.subr.bf16.mxu0 0
    %2332 = vmatpush2.bf16.msra.mxu0 %v1770
    %2333 = vmatprep.subr.bf16.mxu0 0
    %2334 = vmatpush2.bf16.msra.mxu0 %v1769
    %2335 = vmatprep.subr.bf16.mxu0 0
    %2336 = vmatpush2.bf16.msra.mxu0 %v1768
    %2337 = vmatprep.subr.bf16.mxu0 0
    %2338 = vmatpush2.bf16.msra.mxu0 %v1767
    %2339 = vmatprep.subr.bf16.mxu0 0
    %2340 = vmatpush2.bf16.msra.mxu0 %v1766
    %2341 = vmatprep.subr.bf16.mxu0 0
    %2342 = vmatpush2.bf16.msra.mxu0 %v1765
    %2343 = vmatprep.subr.bf16.mxu0 0
    %2344 = vmatpush2.bf16.msra.mxu0 %v1764
    %2345 = vmatprep.subr.bf16.mxu0 0
    %2346 = vmatpush2.bf16.msra.mxu0 %v1763
    %2347 = vmatprep.mubr.bf16.mxu0 %v640
    %2348 = vmatmul.mubr.bf16.gmra.mxu0 %v639
    %v2349 = vpop.f32.mrf.mxu0
    %v2350 = vadd.f32 %v2310, %v2349
    %v2351 = vpop.f32.mrf.mxu0
    %v2352 = vpop.f32.mrf.mxu0
    %v2353 = vpop.f32.mrf.mxu0
    %2354 = vdwg.mxu0
    %2355 = vmatprep.subr.bf16.mxu0 0
    %2356 = vmatpush1.bf16.msra.mxu0 %v1778
    %2357 = vmatprep.subr.bf16.mxu0 0
    %2358 = vmatpush1.bf16.msra.mxu0 %v1777
    %2359 = vmatprep.subr.bf16.mxu0 0
    %2360 = vmatpush1.bf16.msra.mxu0 %v1776
    %2361 = vmatprep.subr.bf16.mxu0 0
    %2362 = vmatpush1.bf16.msra.mxu0 %v1775
    %2363 = vmatprep.subr.bf16.mxu0 0
    %2364 = vmatpush1.bf16.msra.mxu0 %v1774
    %2365 = vmatprep.subr.bf16.mxu0 0
    %2366 = vmatpush1.bf16.msra.mxu0 %v1773
    %2367 = vmatprep.subr.bf16.mxu0 0
    %2368 = vmatpush1.bf16.msra.mxu0 %v1772
    %2369 = vmatprep.subr.bf16.mxu0 0
    %2370 = vmatpush1.bf16.msra.mxu0 %v1771
    %2371 = vmatprep.subr.bf16.mxu0 0
    %2372 = vmatpush2.bf16.msra.mxu0 %v1786
    %2373 = vmatprep.subr.bf16.mxu0 0
    %2374 = vmatpush2.bf16.msra.mxu0 %v1785
    %2375 = vmatprep.subr.bf16.mxu0 0
    %2376 = vmatpush2.bf16.msra.mxu0 %v1784
    %2377 = vmatprep.subr.bf16.mxu0 0
    %2378 = vmatpush2.bf16.msra.mxu0 %v1783
    %2379 = vmatprep.subr.bf16.mxu0 0
    %2380 = vmatpush2.bf16.msra.mxu0 %v1782
    %2381 = vmatprep.subr.bf16.mxu0 0
    %2382 = vmatpush2.bf16.msra.mxu0 %v1781
    %2383 = vmatprep.subr.bf16.mxu0 0
    %2384 = vmatpush2.bf16.msra.mxu0 %v1780
    %2385 = vmatprep.subr.bf16.mxu0 0
    %2386 = vmatpush2.bf16.msra.mxu0 %v1779
    %2387 = vmatprep.mubr.bf16.mxu0 %v642
    %2388 = vmatmul.mubr.bf16.gmra.mxu0 %v641
    %v2389 = vpop.f32.mrf.mxu0
    %v2390 = vadd.f32 %v2350, %v2389
    %v2391 = vpop.f32.mrf.mxu0
    %v2392 = vpop.f32.mrf.mxu0
    %v2393 = vpop.f32.mrf.mxu0
    %2394 = vdwg.mxu0
    %2395 = vmatprep.subr.bf16.mxu0 0
    %2396 = vmatpush1.bf16.msra.mxu0 %v1794
    %2397 = vmatprep.subr.bf16.mxu0 0
    %2398 = vmatpush1.bf16.msra.mxu0 %v1793
    %2399 = vmatprep.subr.bf16.mxu0 0
    %2400 = vmatpush1.bf16.msra.mxu0 %v1792
    %2401 = vmatprep.subr.bf16.mxu0 0
    %2402 = vmatpush1.bf16.msra.mxu0 %v1791
    %2403 = vmatprep.subr.bf16.mxu0 0
    %2404 = vmatpush1.bf16.msra.mxu0 %v1790
    %2405 = vmatprep.subr.bf16.mxu0 0
    %2406 = vmatpush1.bf16.msra.mxu0 %v1789
    %2407 = vmatprep.subr.bf16.mxu0 0
    %2408 = vmatpush1.bf16.msra.mxu0 %v1788
    %2409 = vmatprep.subr.bf16.mxu0 0
    %2410 = vmatpush1.bf16.msra.mxu0 %v1787
    %2411 = vmatprep.subr.bf16.mxu0 0
    %2412 = vmatpush2.bf16.msra.mxu0 %v1802
    %2413 = vmatprep.subr.bf16.mxu0 0
    %2414 = vmatpush2.bf16.msra.mxu0 %v1801
    %2415 = vmatprep.subr.bf16.mxu0 0
    %2416 = vmatpush2.bf16.msra.mxu0 %v1800
    %2417 = vmatprep.subr.bf16.mxu0 0
    %2418 = vmatpush2.bf16.msra.mxu0 %v1799
    %2419 = vmatprep.subr.bf16.mxu0 0
    %2420 = vmatpush2.bf16.msra.mxu0 %v1798
    %2421 = vmatprep.subr.bf16.mxu0 0
    %2422 = vmatpush2.bf16.msra.mxu0 %v1797
    %2423 = vmatprep.subr.bf16.mxu0 0
    %2424 = vmatpush2.bf16.msra.mxu0 %v1796
    %2425 = vmatprep.subr.bf16.mxu0 0
    %2426 = vmatpush2.bf16.msra.mxu0 %v1795
    %2427 = vmatprep.mubr.bf16.mxu0 %v644
    %2428 = vmatmul.mubr.bf16.gmra.mxu0 %v643
    %v2429 = vpop.f32.mrf.mxu0
    %v2430 = vadd.f32 %v2390, %v2429
    %v2431 = vpop.f32.mrf.mxu0
    %v2432 = vpop.f32.mrf.mxu0
    %v2433 = vpop.f32.mrf.mxu0
    %2434 = vdwg.mxu0
    %2435 = vmatprep.subr.bf16.mxu0 0
    %2436 = vmatpush1.bf16.msra.mxu0 %v1810
    %2437 = vmatprep.subr.bf16.mxu0 0
    %2438 = vmatpush1.bf16.msra.mxu0 %v1809
    %2439 = vmatprep.subr.bf16.mxu0 0
    %2440 = vmatpush1.bf16.msra.mxu0 %v1808
    %2441 = vmatprep.subr.bf16.mxu0 0
    %2442 = vmatpush1.bf16.msra.mxu0 %v1807
    %2443 = vmatprep.subr.bf16.mxu0 0
    %2444 = vmatpush1.bf16.msra.mxu0 %v1806
    %2445 = vmatprep.subr.bf16.mxu0 0
    %2446 = vmatpush1.bf16.msra.mxu0 %v1805
    %2447 = vmatprep.subr.bf16.mxu0 0
    %2448 = vmatpush1.bf16.msra.mxu0 %v1804
    %2449 = vmatprep.subr.bf16.mxu0 0
    %2450 = vmatpush1.bf16.msra.mxu0 %v1803
    %2451 = vmatprep.subr.bf16.mxu0 0
    %2452 = vmatpush2.bf16.msra.mxu0 %v1818
    %2453 = vmatprep.subr.bf16.mxu0 0
    %2454 = vmatpush2.bf16.msra.mxu0 %v1817
    %2455 = vmatprep.subr.bf16.mxu0 0
    %2456 = vmatpush2.bf16.msra.mxu0 %v1816
    %2457 = vmatprep.subr.bf16.mxu0 0
    %2458 = vmatpush2.bf16.msra.mxu0 %v1815
    %2459 = vmatprep.subr.bf16.mxu0 0
    %2460 = vmatpush2.bf16.msra.mxu0 %v1814
    %2461 = vmatprep.subr.bf16.mxu0 0
    %2462 = vmatpush2.bf16.msra.mxu0 %v1813
    %2463 = vmatprep.subr.bf16.mxu0 0
    %2464 = vmatpush2.bf16.msra.mxu0 %v1812
    %2465 = vmatprep.subr.bf16.mxu0 0
    %2466 = vmatpush2.bf16.msra.mxu0 %v1811
    %2467 = vmatprep.mubr.bf16.mxu0 %v646
    %2468 = vmatmul.mubr.bf16.gmra.mxu0 %v645
    %v2469 = vpop.f32.mrf.mxu0
    %v2470 = vadd.f32 %v2430, %v2469
    %v2471 = vpop.f32.mrf.mxu0
    %v2472 = vpop.f32.mrf.mxu0
    %v2473 = vpop.f32.mrf.mxu0
    %2474 = vdwg.mxu0
    %2475 = vmatprep.subr.bf16.mxu0 0
    %2476 = vmatpush1.bf16.msra.mxu0 %v1826
    %2477 = vmatprep.subr.bf16.mxu0 0
    %2478 = vmatpush1.bf16.msra.mxu0 %v1825
    %2479 = vmatprep.subr.bf16.mxu0 0
    %2480 = vmatpush1.bf16.msra.mxu0 %v1824
    %2481 = vmatprep.subr.bf16.mxu0 0
    %2482 = vmatpush1.bf16.msra.mxu0 %v1823
    %2483 = vmatprep.subr.bf16.mxu0 0
    %2484 = vmatpush1.bf16.msra.mxu0 %v1822
    %2485 = vmatprep.subr.bf16.mxu0 0
    %2486 = vmatpush1.bf16.msra.mxu0 %v1821
    %2487 = vmatprep.subr.bf16.mxu0 0
    %2488 = vmatpush1.bf16.msra.mxu0 %v1820
    %2489 = vmatprep.subr.bf16.mxu0 0
    %2490 = vmatpush1.bf16.msra.mxu0 %v1819
    %2491 = vmatprep.subr.bf16.mxu0 0
    %2492 = vmatpush2.bf16.msra.mxu0 %v1834
    %2493 = vmatprep.subr.bf16.mxu0 0
    %2494 = vmatpush2.bf16.msra.mxu0 %v1833
    %2495 = vmatprep.subr.bf16.mxu0 0
    %2496 = vmatpush2.bf16.msra.mxu0 %v1832
    %2497 = vmatprep.subr.bf16.mxu0 0
    %2498 = vmatpush2.bf16.msra.mxu0 %v1831
    %2499 = vmatprep.subr.bf16.mxu0 0
    %2500 = vmatpush2.bf16.msra.mxu0 %v1830
    %2501 = vmatprep.subr.bf16.mxu0 0
    %2502 = vmatpush2.bf16.msra.mxu0 %v1829
    %2503 = vmatprep.subr.bf16.mxu0 0
    %2504 = vmatpush2.bf16.msra.mxu0 %v1828
    %2505 = vmatprep.subr.bf16.mxu0 0
    %2506 = vmatpush2.bf16.msra.mxu0 %v1827
    %2507 = vmatprep.mubr.bf16.mxu0 %v648
    %2508 = vmatmul.mubr.bf16.gmra.mxu0 %v647
    %v2509 = vpop.f32.mrf.mxu0
    %v2510 = vadd.f32 %v2470, %v2509
    %v2511 = vpop.f32.mrf.mxu0
    %v2512 = vpop.f32.mrf.mxu0
    %v2513 = vpop.f32.mrf.mxu0
    %2514 = vdwg.mxu0
    %2515 = vmatprep.subr.bf16.mxu0 0
    %2516 = vmatpush1.bf16.msra.mxu0 %v1842
    %2517 = vmatprep.subr.bf16.mxu0 0
    %2518 = vmatpush1.bf16.msra.mxu0 %v1841
    %2519 = vmatprep.subr.bf16.mxu0 0
    %2520 = vmatpush1.bf16.msra.mxu0 %v1840
    %2521 = vmatprep.subr.bf16.mxu0 0
    %2522 = vmatpush1.bf16.msra.mxu0 %v1839
    %2523 = vmatprep.subr.bf16.mxu0 0
    %2524 = vmatpush1.bf16.msra.mxu0 %v1838
    %2525 = vmatprep.subr.bf16.mxu0 0
    %2526 = vmatpush1.bf16.msra.mxu0 %v1837
    %2527 = vmatprep.subr.bf16.mxu0 0
    %2528 = vmatpush1.bf16.msra.mxu0 %v1836
    %2529 = vmatprep.subr.bf16.mxu0 0
    %2530 = vmatpush1.bf16.msra.mxu0 %v1835
    %2531 = vmatprep.subr.bf16.mxu0 0
    %2532 = vmatpush2.bf16.msra.mxu0 %v1850
    %2533 = vmatprep.subr.bf16.mxu0 0
    %2534 = vmatpush2.bf16.msra.mxu0 %v1849
    %2535 = vmatprep.subr.bf16.mxu0 0
    %2536 = vmatpush2.bf16.msra.mxu0 %v1848
    %2537 = vmatprep.subr.bf16.mxu0 0
    %2538 = vmatpush2.bf16.msra.mxu0 %v1847
    %2539 = vmatprep.subr.bf16.mxu0 0
    %2540 = vmatpush2.bf16.msra.mxu0 %v1846
    %2541 = vmatprep.subr.bf16.mxu0 0
    %2542 = vmatpush2.bf16.msra.mxu0 %v1845
    %2543 = vmatprep.subr.bf16.mxu0 0
    %2544 = vmatpush2.bf16.msra.mxu0 %v1844
    %2545 = vmatprep.subr.bf16.mxu0 0
    %2546 = vmatpush2.bf16.msra.mxu0 %v1843
    %2547 = vmatprep.mubr.bf16.mxu0 %v650
    %2548 = vmatmul.mubr.bf16.gmra.mxu0 %v649
    %v2549 = vpop.f32.mrf.mxu0
    %v2550 = vadd.f32 %v2510, %v2549
    %v2551 = vpop.f32.mrf.mxu0
    %v2552 = vpop.f32.mrf.mxu0
    %v2553 = vpop.f32.mrf.mxu0
    %2554 = vdwg.mxu0
    %2555 = vmatprep.subr.bf16.mxu0 0
    %2556 = vmatpush1.bf16.msra.mxu0 %v1858
    %2557 = vmatprep.subr.bf16.mxu0 0
    %2558 = vmatpush1.bf16.msra.mxu0 %v1857
    %2559 = vmatprep.subr.bf16.mxu0 0
    %2560 = vmatpush1.bf16.msra.mxu0 %v1856
    %2561 = vmatprep.subr.bf16.mxu0 0
    %2562 = vmatpush1.bf16.msra.mxu0 %v1855
    %2563 = vmatprep.subr.bf16.mxu0 0
    %2564 = vmatpush1.bf16.msra.mxu0 %v1854
    %2565 = vmatprep.subr.bf16.mxu0 0
    %2566 = vmatpush1.bf16.msra.mxu0 %v1853
    %2567 = vmatprep.subr.bf16.mxu0 0
    %2568 = vmatpush1.bf16.msra.mxu0 %v1852
    %2569 = vmatprep.subr.bf16.mxu0 0
    %2570 = vmatpush1.bf16.msra.mxu0 %v1851
    %2571 = vmatprep.subr.bf16.mxu0 0
    %2572 = vmatpush2.bf16.msra.mxu0 %v1866
    %2573 = vmatprep.subr.bf16.mxu0 0
    %2574 = vmatpush2.bf16.msra.mxu0 %v1865
    %2575 = vmatprep.subr.bf16.mxu0 0
    %2576 = vmatpush2.bf16.msra.mxu0 %v1864
    %2577 = vmatprep.subr.bf16.mxu0 0
    %2578 = vmatpush2.bf16.msra.mxu0 %v1863
    %2579 = vmatprep.subr.bf16.mxu0 0
    %2580 = vmatpush2.bf16.msra.mxu0 %v1862
    %2581 = vmatprep.subr.bf16.mxu0 0
    %2582 = vmatpush2.bf16.msra.mxu0 %v1861
    %2583 = vmatprep.subr.bf16.mxu0 0
    %2584 = vmatpush2.bf16.msra.mxu0 %v1860
    %2585 = vmatprep.subr.bf16.mxu0 0
    %2586 = vmatpush2.bf16.msra.mxu0 %v1859
    %2587 = vmatprep.mubr.bf16.mxu0 %v652
    %2588 = vmatmul.mubr.bf16.gmra.mxu0 %v651
    %v2589 = vpop.f32.mrf.mxu0
    %v2590 = vadd.f32 %v2550, %v2589
    %v2591 = vpop.f32.mrf.mxu0
    %v2592 = vpop.f32.mrf.mxu0
    %v2593 = vpop.f32.mrf.mxu0
    %2594 = vdwg.mxu0
    %2595 = vmatprep.subr.bf16.mxu0 0
    %2596 = vmatpush1.bf16.msra.mxu0 %v1874
    %2597 = vmatprep.subr.bf16.mxu0 0
    %2598 = vmatpush1.bf16.msra.mxu0 %v1873
    %2599 = vmatprep.subr.bf16.mxu0 0
    %2600 = vmatpush1.bf16.msra.mxu0 %v1872
    %2601 = vmatprep.subr.bf16.mxu0 0
    %2602 = vmatpush1.bf16.msra.mxu0 %v1871
    %2603 = vmatprep.subr.bf16.mxu0 0
    %2604 = vmatpush1.bf16.msra.mxu0 %v1870
    %2605 = vmatprep.subr.bf16.mxu0 0
    %2606 = vmatpush1.bf16.msra.mxu0 %v1869
    %2607 = vmatprep.subr.bf16.mxu0 0
    %2608 = vmatpush1.bf16.msra.mxu0 %v1868
    %2609 = vmatprep.subr.bf16.mxu0 0
    %2610 = vmatpush1.bf16.msra.mxu0 %v1867
    %2611 = vmatprep.subr.bf16.mxu0 0
    %2612 = vmatpush2.bf16.msra.mxu0 %v1882
    %2613 = vmatprep.subr.bf16.mxu0 0
    %2614 = vmatpush2.bf16.msra.mxu0 %v1881
    %2615 = vmatprep.subr.bf16.mxu0 0
    %2616 = vmatpush2.bf16.msra.mxu0 %v1880
    %2617 = vmatprep.subr.bf16.mxu0 0
    %2618 = vmatpush2.bf16.msra.mxu0 %v1879
    %2619 = vmatprep.subr.bf16.mxu0 0
    %2620 = vmatpush2.bf16.msra.mxu0 %v1878
    %2621 = vmatprep.subr.bf16.mxu0 0
    %2622 = vmatpush2.bf16.msra.mxu0 %v1877
    %2623 = vmatprep.subr.bf16.mxu0 0
    %2624 = vmatpush2.bf16.msra.mxu0 %v1876
    %2625 = vmatprep.subr.bf16.mxu0 0
    %2626 = vmatpush2.bf16.msra.mxu0 %v1875
    %2627 = vmatprep.mubr.bf16.mxu0 %v654
    %2628 = vmatmul.mubr.bf16.gmra.mxu0 %v653
    %v2629 = vpop.f32.mrf.mxu0
    %v2630 = vadd.f32 %v2590, %v2629
    %v2631 = vpop.f32.mrf.mxu0
    %v2632 = vpop.f32.mrf.mxu0
    %v2633 = vpop.f32.mrf.mxu0
    %2634 = vdwg.mxu0
    %2635 = vmatprep.subr.bf16.mxu0 0
    %2636 = vmatpush1.bf16.msra.mxu0 %v1890
    %2637 = vmatprep.subr.bf16.mxu0 0
    %2638 = vmatpush1.bf16.msra.mxu0 %v1889
    %2639 = vmatprep.subr.bf16.mxu0 0
    %2640 = vmatpush1.bf16.msra.mxu0 %v1888
    %2641 = vmatprep.subr.bf16.mxu0 0
    %2642 = vmatpush1.bf16.msra.mxu0 %v1887
    %2643 = vmatprep.subr.bf16.mxu0 0
    %2644 = vmatpush1.bf16.msra.mxu0 %v1886
    %2645 = vmatprep.subr.bf16.mxu0 0
    %2646 = vmatpush1.bf16.msra.mxu0 %v1885
    %2647 = vmatprep.subr.bf16.mxu0 0
    %2648 = vmatpush1.bf16.msra.mxu0 %v1884
    %2649 = vmatprep.subr.bf16.mxu0 0
    %2650 = vmatpush1.bf16.msra.mxu0 %v1883
    %2651 = vmatprep.subr.bf16.mxu0 0
    %2652 = vmatpush2.bf16.msra.mxu0 %v1898
    %2653 = vmatprep.subr.bf16.mxu0 0
    %2654 = vmatpush2.bf16.msra.mxu0 %v1897
    %2655 = vmatprep.subr.bf16.mxu0 0
    %2656 = vmatpush2.bf16.msra.mxu0 %v1896
    %2657 = vmatprep.subr.bf16.mxu0 0
    %2658 = vmatpush2.bf16.msra.mxu0 %v1895
    %2659 = vmatprep.subr.bf16.mxu0 0
    %2660 = vmatpush2.bf16.msra.mxu0 %v1894
    %2661 = vmatprep.subr.bf16.mxu0 0
    %2662 = vmatpush2.bf16.msra.mxu0 %v1893
    %2663 = vmatprep.subr.bf16.mxu0 0
    %2664 = vmatpush2.bf16.msra.mxu0 %v1892
    %2665 = vmatprep.subr.bf16.mxu0 0
    %2666 = vmatpush2.bf16.msra.mxu0 %v1891
    %2667 = vmatprep.mubr.bf16.mxu0 %v656
    %2668 = vmatmul.mubr.bf16.gmra.mxu0 %v655
    %v2669 = vpop.f32.mrf.mxu0
    %v2670 = vadd.f32 %v2630, %v2669
    %v2671 = vpop.f32.mrf.mxu0
    %v2672 = vpop.f32.mrf.mxu0
    %v2673 = vpop.f32.mrf.mxu0
    %2674 = vdwg.mxu0
    %2675 = vmatprep.subr.bf16.mxu0 0
    %2676 = vmatpush1.bf16.msra.mxu0 %v1906
    %2677 = vmatprep.subr.bf16.mxu0 0
    %2678 = vmatpush1.bf16.msra.mxu0 %v1905
    %2679 = vmatprep.subr.bf16.mxu0 0
    %2680 = vmatpush1.bf16.msra.mxu0 %v1904
    %2681 = vmatprep.subr.bf16.mxu0 0
    %2682 = vmatpush1.bf16.msra.mxu0 %v1903
    %2683 = vmatprep.subr.bf16.mxu0 0
    %2684 = vmatpush1.bf16.msra.mxu0 %v1902
    %2685 = vmatprep.subr.bf16.mxu0 0
    %2686 = vmatpush1.bf16.msra.mxu0 %v1901
    %2687 = vmatprep.subr.bf16.mxu0 0
    %2688 = vmatpush1.bf16.msra.mxu0 %v1900
    %2689 = vmatprep.subr.bf16.mxu0 0
    %2690 = vmatpush1.bf16.msra.mxu0 %v1899
    %2691 = vmatprep.subr.bf16.mxu0 0
    %2692 = vmatpush2.bf16.msra.mxu0 %v1914
    %2693 = vmatprep.subr.bf16.mxu0 0
    %2694 = vmatpush2.bf16.msra.mxu0 %v1913
    %2695 = vmatprep.subr.bf16.mxu0 0
    %2696 = vmatpush2.bf16.msra.mxu0 %v1912
    %2697 = vmatprep.subr.bf16.mxu0 0
    %2698 = vmatpush2.bf16.msra.mxu0 %v1911
    %2699 = vmatprep.subr.bf16.mxu0 0
    %2700 = vmatpush2.bf16.msra.mxu0 %v1910
    %2701 = vmatprep.subr.bf16.mxu0 0
    %2702 = vmatpush2.bf16.msra.mxu0 %v1909
    %2703 = vmatprep.subr.bf16.mxu0 0
    %2704 = vmatpush2.bf16.msra.mxu0 %v1908
    %2705 = vmatprep.subr.bf16.mxu0 0
    %2706 = vmatpush2.bf16.msra.mxu0 %v1907
    %2707 = vmatprep.mubr.bf16.mxu0 %v658
    %2708 = vmatmul.mubr.bf16.gmra.mxu0 %v657
    %v2709 = vpop.f32.mrf.mxu0
    %v2710 = vadd.f32 %v2670, %v2709
    %v2711 = vpop.f32.mrf.mxu0
    %v2712 = vpop.f32.mrf.mxu0
    %v2713 = vpop.f32.mrf.mxu0
    %2714 = vdwg.mxu0
    %2715 = vmatprep.subr.bf16.mxu0 0
    %2716 = vmatpush1.bf16.msra.mxu0 %v1922
    %2717 = vmatprep.subr.bf16.mxu0 0
    %2718 = vmatpush1.bf16.msra.mxu0 %v1921
    %2719 = vmatprep.subr.bf16.mxu0 0
    %2720 = vmatpush1.bf16.msra.mxu0 %v1920
    %2721 = vmatprep.subr.bf16.mxu0 0
    %2722 = vmatpush1.bf16.msra.mxu0 %v1919
    %2723 = vmatprep.subr.bf16.mxu0 0
    %2724 = vmatpush1.bf16.msra.mxu0 %v1918
    %2725 = vmatprep.subr.bf16.mxu0 0
    %2726 = vmatpush1.bf16.msra.mxu0 %v1917
    %2727 = vmatprep.subr.bf16.mxu0 0
    %2728 = vmatpush1.bf16.msra.mxu0 %v1916
    %2729 = vmatprep.subr.bf16.mxu0 0
    %2730 = vmatpush1.bf16.msra.mxu0 %v1915
    %2731 = vmatprep.subr.bf16.mxu0 0
    %2732 = vmatpush2.bf16.msra.mxu0 %v1930
    %2733 = vmatprep.subr.bf16.mxu0 0
    %2734 = vmatpush2.bf16.msra.mxu0 %v1929
    %2735 = vmatprep.subr.bf16.mxu0 0
    %2736 = vmatpush2.bf16.msra.mxu0 %v1928
    %2737 = vmatprep.subr.bf16.mxu0 0
    %2738 = vmatpush2.bf16.msra.mxu0 %v1927
    %2739 = vmatprep.subr.bf16.mxu0 0
    %2740 = vmatpush2.bf16.msra.mxu0 %v1926
    %2741 = vmatprep.subr.bf16.mxu0 0
    %2742 = vmatpush2.bf16.msra.mxu0 %v1925
    %2743 = vmatprep.subr.bf16.mxu0 0
    %2744 = vmatpush2.bf16.msra.mxu0 %v1924
    %2745 = vmatprep.subr.bf16.mxu0 0
    %2746 = vmatpush2.bf16.msra.mxu0 %v1923
    %2747 = vmatprep.mubr.bf16.mxu0 %v660
    %2748 = vmatmul.mubr.bf16.gmra.mxu0 %v659
    %v2749 = vpop.f32.mrf.mxu0
    %v2750 = vadd.f32 %v2710, %v2749
    %v2751 = vpop.f32.mrf.mxu0
    %v2752 = vpop.f32.mrf.mxu0
    %v2753 = vpop.f32.mrf.mxu0
    %2754 = vdwg.mxu0
    %2755 = vmatprep.subr.bf16.mxu0 0
    %2756 = vmatpush1.bf16.msra.mxu0 %v1938
    %2757 = vmatprep.subr.bf16.mxu0 0
    %2758 = vmatpush1.bf16.msra.mxu0 %v1937
    %2759 = vmatprep.subr.bf16.mxu0 0
    %2760 = vmatpush1.bf16.msra.mxu0 %v1936
    %2761 = vmatprep.subr.bf16.mxu0 0
    %2762 = vmatpush1.bf16.msra.mxu0 %v1935
    %2763 = vmatprep.subr.bf16.mxu0 0
    %2764 = vmatpush1.bf16.msra.mxu0 %v1934
    %2765 = vmatprep.subr.bf16.mxu0 0
    %2766 = vmatpush1.bf16.msra.mxu0 %v1933
    %2767 = vmatprep.subr.bf16.mxu0 0
    %2768 = vmatpush1.bf16.msra.mxu0 %v1932
    %2769 = vmatprep.subr.bf16.mxu0 0
    %2770 = vmatpush1.bf16.msra.mxu0 %v1931
    %2771 = vmatprep.subr.bf16.mxu0 0
    %2772 = vmatpush2.bf16.msra.mxu0 %v1946
    %2773 = vmatprep.subr.bf16.mxu0 0
    %2774 = vmatpush2.bf16.msra.mxu0 %v1945
    %2775 = vmatprep.subr.bf16.mxu0 0
    %2776 = vmatpush2.bf16.msra.mxu0 %v1944
    %2777 = vmatprep.subr.bf16.mxu0 0
    %2778 = vmatpush2.bf16.msra.mxu0 %v1943
    %2779 = vmatprep.subr.bf16.mxu0 0
    %2780 = vmatpush2.bf16.msra.mxu0 %v1942
    %2781 = vmatprep.subr.bf16.mxu0 0
    %2782 = vmatpush2.bf16.msra.mxu0 %v1941
    %2783 = vmatprep.subr.bf16.mxu0 0
    %2784 = vmatpush2.bf16.msra.mxu0 %v1940
    %2785 = vmatprep.subr.bf16.mxu0 0
    %2786 = vmatpush2.bf16.msra.mxu0 %v1939
    %2787 = vmatprep.mubr.bf16.mxu0 %v662
    %2788 = vmatmul.mubr.bf16.gmra.mxu0 %v661
    %v2789 = vpop.f32.mrf.mxu0
    %v2790 = vadd.f32 %v2750, %v2789
    %v2791 = vpop.f32.mrf.mxu0
    %v2792 = vpop.f32.mrf.mxu0
    %v2793 = vpop.f32.mrf.mxu0
    %2794 = vdwg.mxu0
    %2795 = vmatprep.subr.bf16.mxu0 0
    %2796 = vmatpush1.bf16.msra.mxu0 %v1954
    %2797 = vmatprep.subr.bf16.mxu0 0
    %2798 = vmatpush1.bf16.msra.mxu0 %v1953
    %2799 = vmatprep.subr.bf16.mxu0 0
    %2800 = vmatpush1.bf16.msra.mxu0 %v1952
    %2801 = vmatprep.subr.bf16.mxu0 0
    %2802 = vmatpush1.bf16.msra.mxu0 %v1951
    %2803 = vmatprep.subr.bf16.mxu0 0
    %2804 = vmatpush1.bf16.msra.mxu0 %v1950
    %2805 = vmatprep.subr.bf16.mxu0 0
    %2806 = vmatpush1.bf16.msra.mxu0 %v1949
    %2807 = vmatprep.subr.bf16.mxu0 0
    %2808 = vmatpush1.bf16.msra.mxu0 %v1948
    %2809 = vmatprep.subr.bf16.mxu0 0
    %2810 = vmatpush1.bf16.msra.mxu0 %v1947
    %2811 = vmatprep.subr.bf16.mxu0 0
    %2812 = vmatpush2.bf16.msra.mxu0 %v1962
    %2813 = vmatprep.subr.bf16.mxu0 0
    %2814 = vmatpush2.bf16.msra.mxu0 %v1961
    %2815 = vmatprep.subr.bf16.mxu0 0
    %2816 = vmatpush2.bf16.msra.mxu0 %v1960
    %2817 = vmatprep.subr.bf16.mxu0 0
    %2818 = vmatpush2.bf16.msra.mxu0 %v1959
    %2819 = vmatprep.subr.bf16.mxu0 0
    %2820 = vmatpush2.bf16.msra.mxu0 %v1958
    %2821 = vmatprep.subr.bf16.mxu0 0
    %2822 = vmatpush2.bf16.msra.mxu0 %v1957
    %2823 = vmatprep.subr.bf16.mxu0 0
    %2824 = vmatpush2.bf16.msra.mxu0 %v1956
    %2825 = vmatprep.subr.bf16.mxu0 0
    %2826 = vmatpush2.bf16.msra.mxu0 %v1955
    %2827 = vmatprep.mubr.bf16.mxu0 %v664
    %2828 = vmatmul.mubr.bf16.gmra.mxu0 %v663
    %v2829 = vpop.f32.mrf.mxu0
    %v2830 = vadd.f32 %v2790, %v2829
    %v2831 = vpop.f32.mrf.mxu0
    %v2832 = vpop.f32.mrf.mxu0
    %v2833 = vpop.f32.mrf.mxu0
    %2834 = vdwg.mxu0
    %2835 = vmatprep.subr.bf16.mxu0 0
    %2836 = vmatpush1.bf16.msra.mxu0 %v1970
    %2837 = vmatprep.subr.bf16.mxu0 0
    %2838 = vmatpush1.bf16.msra.mxu0 %v1969
    %2839 = vmatprep.subr.bf16.mxu0 0
    %2840 = vmatpush1.bf16.msra.mxu0 %v1968
    %2841 = vmatprep.subr.bf16.mxu0 0
    %2842 = vmatpush1.bf16.msra.mxu0 %v1967
    %2843 = vmatprep.subr.bf16.mxu0 0
    %2844 = vmatpush1.bf16.msra.mxu0 %v1966
    %2845 = vmatprep.subr.bf16.mxu0 0
    %2846 = vmatpush1.bf16.msra.mxu0 %v1965
    %2847 = vmatprep.subr.bf16.mxu0 0
    %2848 = vmatpush1.bf16.msra.mxu0 %v1964
    %2849 = vmatprep.subr.bf16.mxu0 0
    %2850 = vmatpush1.bf16.msra.mxu0 %v1963
    %2851 = vmatprep.subr.bf16.mxu0 0
    %2852 = vmatpush2.bf16.msra.mxu0 %v1978
    %2853 = vmatprep.subr.bf16.mxu0 0
    %2854 = vmatpush2.bf16.msra.mxu0 %v1977
    %2855 = vmatprep.subr.bf16.mxu0 0
    %2856 = vmatpush2.bf16.msra.mxu0 %v1976
    %2857 = vmatprep.subr.bf16.mxu0 0
    %2858 = vmatpush2.bf16.msra.mxu0 %v1975
    %2859 = vmatprep.subr.bf16.mxu0 0
    %2860 = vmatpush2.bf16.msra.mxu0 %v1974
    %2861 = vmatprep.subr.bf16.mxu0 0
    %2862 = vmatpush2.bf16.msra.mxu0 %v1973
    %2863 = vmatprep.subr.bf16.mxu0 0
    %2864 = vmatpush2.bf16.msra.mxu0 %v1972
    %2865 = vmatprep.subr.bf16.mxu0 0
    %2866 = vmatpush2.bf16.msra.mxu0 %v1971
    %2867 = vmatprep.mubr.bf16.mxu0 %v666
    %2868 = vmatmul.mubr.bf16.gmra.mxu0 %v665
    %v2869 = vpop.f32.mrf.mxu0
    %v2870 = vadd.f32 %v2830, %v2869
    %v2871 = vpop.f32.mrf.mxu0
    %v2872 = vpop.f32.mrf.mxu0
    %v2873 = vpop.f32.mrf.mxu0
    %2874 = vdwg.mxu0
    %v2875 = vld [vmem:[%s4] sm:$0xff]
    %v2876 = vld [vmem:[%s4 + $0x8] sm:$0xff]
    %v2877 = vld [vmem:[%s1] sm:$0xff]
    %v2878 = vld [vmem:[%s5] sm:$0xff]
    %v2879 = vld [vmem:[%s5 + $0x8] sm:$0xff]
    %vm2880 = vcmask 130048
    %v2882 = vsel %vm2880, %v2877, 0
    %2884 = vmatprep.subr.mxu0 0.0
    %2885 = vmatpush1.msra.mxu0 0.0
    %2886 = vmatprep.subr.mxu0 0.0
    %2887 = vmatpush1.msra.mxu0 0.0
    %2888 = vmatprep.subr.mxu0 0.0
    %2889 = vmatpush1.msra.mxu0 0.0
    %2890 = vmatprep.subr.mxu0 0.0
    %2891 = vmatpush1.msra.mxu0 0.0
    %2892 = vmatprep.subr.mxu0 0.0
    %2893 = vmatpush1.msra.mxu0 0.0
    %2894 = vmatprep.subr.mxu0 0.0
    %2895 = vmatpush1.msra.mxu0 0.0
    %2896 = vmatprep.subr.mxu0 0.0
    %2897 = vmatpush1.msra.mxu0 0.0
    %2898 = vmatprep.subr.mxu0 0.0
    %2899 = vmatpush1.msra.mxu0 0.0
    %2900 = vmatprep.subr.mxu0 0.0
    %2901 = vmatpush1.msra.mxu0 0.0
    %2902 = vmatprep.subr.mxu0 0.0
    %2903 = vmatpush1.msra.mxu0 0.0
    %2904 = vmatprep.subr.mxu0 0.0
    %2905 = vmatpush1.msra.mxu0 0.0
    %2906 = vmatprep.subr.mxu0 0.0
    %2907 = vmatpush1.msra.mxu0 0.0
    %2908 = vmatprep.subr.mxu0 0.0
    %2909 = vmatpush1.msra.mxu0 0.0
    %2910 = vmatprep.subr.mxu0 0.0
    %2911 = vmatpush1.msra.mxu0 0.0
    %2912 = vmatprep.subr.mxu0 0.0
    %2913 = vmatpush1.msra.mxu0 %v2879
    %2914 = vmatprep.subr.mxu0 0.0
    %2915 = vmatpush1.msra.mxu0 %v2878
    %2916 = vmatprep.subr.mxu0 0.0
    %2917 = vmatpush2.msra.mxu0 0.0
    %2918 = vmatprep.subr.mxu0 0.0
    %2919 = vmatpush2.msra.mxu0 0.0
    %2920 = vmatprep.subr.mxu0 0.0
    %2921 = vmatpush2.msra.mxu0 0.0
    %2922 = vmatprep.subr.mxu0 0.0
    %2923 = vmatpush2.msra.mxu0 0.0
    %2924 = vmatprep.subr.mxu0 0.0
    %2925 = vmatpush2.msra.mxu0 0.0
    %2926 = vmatprep.subr.mxu0 0.0
    %2927 = vmatpush2.msra.mxu0 0.0
    %2928 = vmatprep.subr.mxu0 0.0
    %2929 = vmatpush2.msra.mxu0 0.0
    %2930 = vmatprep.subr.mxu0 0.0
    %2931 = vmatpush2.msra.mxu0 0.0
    %2932 = vmatprep.subr.mxu0 0.0
    %2933 = vmatpush2.msra.mxu0 0.0
    %2934 = vmatprep.subr.mxu0 0.0
    %2935 = vmatpush2.msra.mxu0 0.0
    %2936 = vmatprep.subr.mxu0 0.0
    %2937 = vmatpush2.msra.mxu0 0.0
    %2938 = vmatprep.subr.mxu0 0.0
    %2939 = vmatpush2.msra.mxu0 0.0
    %2940 = vmatprep.subr.mxu0 0.0
    %2941 = vmatpush2.msra.mxu0 0.0
    %2942 = vmatprep.subr.mxu0 0.0
    %2943 = vmatpush2.msra.mxu0 0.0
    %2944 = vmatprep.subr.mxu0 0.0
    %2945 = vmatpush2.msra.mxu0 0.0
    %2946 = vmatprep.subr.mxu0 0.0
    %2947 = vmatpush2.msra.mxu0 0.0
    %2948 = vmatprep.mubr.f32.mxu0 0.0
    %2949 = vmatmul.mubr.f32.gmra.mxu0 %v2882
    %v2950 = vpop.f32.mrf.mxu0
    %v2951 = vadd.f32 0.0, %v2950
    %v2952 = vpop.f32.mrf.mxu0
    %2953 = vdwg.mxu0
    %v2955 = vsel %vm2880, %v2870, 0
    %2957 = vmatprep.subr.mxu0 0.0
    %2958 = vmatpush1.msra.mxu0 0.0
    %2959 = vmatprep.subr.mxu0 0.0
    %2960 = vmatpush1.msra.mxu0 0.0
    %2961 = vmatprep.subr.mxu0 0.0
    %2962 = vmatpush1.msra.mxu0 0.0
    %2963 = vmatprep.subr.mxu0 0.0
    %2964 = vmatpush1.msra.mxu0 0.0
    %2965 = vmatprep.subr.mxu0 0.0
    %2966 = vmatpush1.msra.mxu0 0.0
    %2967 = vmatprep.subr.mxu0 0.0
    %2968 = vmatpush1.msra.mxu0 0.0
    %2969 = vmatprep.subr.mxu0 0.0
    %2970 = vmatpush1.msra.mxu0 0.0
    %2971 = vmatprep.subr.mxu0 0.0
    %2972 = vmatpush1.msra.mxu0 0.0
    %2973 = vmatprep.subr.mxu0 0.0
    %2974 = vmatpush1.msra.mxu0 0.0
    %2975 = vmatprep.subr.mxu0 0.0
    %2976 = vmatpush1.msra.mxu0 0.0
    %2977 = vmatprep.subr.mxu0 0.0
    %2978 = vmatpush1.msra.mxu0 0.0
    %2979 = vmatprep.subr.mxu0 0.0
    %2980 = vmatpush1.msra.mxu0 0.0
    %2981 = vmatprep.subr.mxu0 0.0
    %2982 = vmatpush1.msra.mxu0 0.0
    %2983 = vmatprep.subr.mxu0 0.0
    %2984 = vmatpush1.msra.mxu0 0.0
    %2985 = vmatprep.subr.mxu0 0.0
    %2986 = vmatpush1.msra.mxu0 %v2876
    %2987 = vmatprep.subr.mxu0 0.0
    %2988 = vmatpush1.msra.mxu0 %v2875
    %2989 = vmatprep.subr.mxu0 0.0
    %2990 = vmatpush2.msra.mxu0 0.0
    %2991 = vmatprep.subr.mxu0 0.0
    %2992 = vmatpush2.msra.mxu0 0.0
    %2993 = vmatprep.subr.mxu0 0.0
    %2994 = vmatpush2.msra.mxu0 0.0
    %2995 = vmatprep.subr.mxu0 0.0
    %2996 = vmatpush2.msra.mxu0 0.0
    %2997 = vmatprep.subr.mxu0 0.0
    %2998 = vmatpush2.msra.mxu0 0.0
    %2999 = vmatprep.subr.mxu0 0.0
    %3000 = vmatpush2.msra.mxu0 0.0
    %3001 = vmatprep.subr.mxu0 0.0
    %3002 = vmatpush2.msra.mxu0 0.0
    %3003 = vmatprep.subr.mxu0 0.0
    %3004 = vmatpush2.msra.mxu0 0.0
    %3005 = vmatprep.subr.mxu0 0.0
    %3006 = vmatpush2.msra.mxu0 0.0
    %3007 = vmatprep.subr.mxu0 0.0
    %3008 = vmatpush2.msra.mxu0 0.0
    %3009 = vmatprep.subr.mxu0 0.0
    %3010 = vmatpush2.msra.mxu0 0.0
    %3011 = vmatprep.subr.mxu0 0.0
    %3012 = vmatpush2.msra.mxu0 0.0
    %3013 = vmatprep.subr.mxu0 0.0
    %3014 = vmatpush2.msra.mxu0 0.0
    %3015 = vmatprep.subr.mxu0 0.0
    %3016 = vmatpush2.msra.mxu0 0.0
    %3017 = vmatprep.subr.mxu0 0.0
    %3018 = vmatpush2.msra.mxu0 0.0
    %3019 = vmatprep.subr.mxu0 0.0
    %3020 = vmatpush2.msra.mxu0 0.0
    %3021 = vmatprep.mubr.f32.mxu0 0.0
    %3022 = vmatmul.mubr.f32.gmra.mxu0 %v2955
    %v3023 = vpop.f32.mrf.mxu0
    %v3024 = vadd.f32 %v2951, %v3023
    %v3025 = vpop.f32.mrf.mxu0
    %3026 = vdwg.mxu0
    %v3027 = vld [vmem:[%s6] sm:$0x1]
    %v3029 = vlaneseq
    %v3030 = vshrl.u32 %v3029, 7
    %v3031 = vsub.s32 0, %v3030
    %v3032 = vrot.slane %v3027, %v3031
    %v3034 = vadd.f32 %v3024, %v3032
    %v3035 = vmax.f32 %v3034, 0.0
    %v3036 = vld [vmem:[%s8] sm:$0xff]
    %v3037 = vld [vmem:[%s8 + $0x8] sm:$0xff]
    %v3038 = vld [vmem:[%s8 + $0x10] sm:$0xff]
    %v3039 = vld [vmem:[%s8 + $0x18] sm:$0xff]
    %v3040 = vld [vmem:[%s9] sm:$0xff]
    %v3041 = vld [vmem:[%s9 + $0x8] sm:$0xff]
    %v3042 = vld [vmem:[%s9 + $0x10] sm:$0xff]
    %v3043 = vld [vmem:[%s9 + $0x18] sm:$0xff]
    %v3044 = vld [vmem:[%s10] sm:$0x1]
    %v3045 = vld [vmem:[%s11] sm:$0xff]
    %v3046 = vld [vmem:[%s11 + $0x8] sm:$0xff]
    %v3047 = vld [vmem:[%s11 + $0x10] sm:$0xff]
    %v3048 = vld [vmem:[%s11 + $0x18] sm:$0xff]
    %v3049 = vld [vmem:[%s12] sm:$0x1]
    %v3050 = vld [vmem:[%s7] sm:$0xff]
    %v3051 = vld [vmem:[%s7 + $0x8] sm:$0xff]
    %v3052 = vld [vmem:[%s7 + $0x10] sm:$0xff]
    %v3053 = vld [vmem:[%s7 + $0x18] sm:$0xff]
    %v3054 = vlaneseq
    %v3055 = vand.u32 %v3054, 127
    %vm3056 = vcmask 261120
    %v3058 = vsel %vm3056, 0.0, 0
    %3060 = vmatprep.subr.mxu0 0.0
    %3061 = vmatpush1.msra.mxu0 0.0
    %3062 = vmatprep.subr.mxu0 0.0
    %3063 = vmatpush1.msra.mxu0 0.0
    %3064 = vmatprep.subr.mxu0 0.0
    %3065 = vmatpush1.msra.mxu0 0.0
    %3066 = vmatprep.subr.mxu0 0.0
    %3067 = vmatpush1.msra.mxu0 0.0
    %3068 = vmatprep.subr.mxu0 0.0
    %3069 = vmatpush1.msra.mxu0 0.0
    %3070 = vmatprep.subr.mxu0 0.0
    %3071 = vmatpush1.msra.mxu0 0.0
    %3072 = vmatprep.subr.mxu0 0.0
    %3073 = vmatpush1.msra.mxu0 0.0
    %3074 = vmatprep.subr.mxu0 0.0
    %3075 = vmatpush1.msra.mxu0 0.0
    %3076 = vmatprep.subr.mxu0 0.0
    %3077 = vmatpush1.msra.mxu0 0.0
    %3078 = vmatprep.subr.mxu0 0.0
    %3079 = vmatpush1.msra.mxu0 0.0
    %3080 = vmatprep.subr.mxu0 0.0
    %3081 = vmatpush1.msra.mxu0 0.0
    %3082 = vmatprep.subr.mxu0 0.0
    %3083 = vmatpush1.msra.mxu0 0.0
    %3084 = vmatprep.subr.mxu0 0.0
    %3085 = vmatpush1.msra.mxu0 %v3043
    %3086 = vmatprep.subr.mxu0 0.0
    %3087 = vmatpush1.msra.mxu0 %v3042
    %3088 = vmatprep.subr.mxu0 0.0
    %3089 = vmatpush1.msra.mxu0 %v3041
    %3090 = vmatprep.subr.mxu0 0.0
    %3091 = vmatpush1.msra.mxu0 %v3040
    %3092 = vmatprep.subr.mxu0 0.0
    %3093 = vmatpush2.msra.mxu0 0.0
    %3094 = vmatprep.subr.mxu0 0.0
    %3095 = vmatpush2.msra.mxu0 0.0
    %3096 = vmatprep.subr.mxu0 0.0
    %3097 = vmatpush2.msra.mxu0 0.0
    %3098 = vmatprep.subr.mxu0 0.0
    %3099 = vmatpush2.msra.mxu0 0.0
    %3100 = vmatprep.subr.mxu0 0.0
    %3101 = vmatpush2.msra.mxu0 0.0
    %3102 = vmatprep.subr.mxu0 0.0
    %3103 = vmatpush2.msra.mxu0 0.0
    %3104 = vmatprep.subr.mxu0 0.0
    %3105 = vmatpush2.msra.mxu0 0.0
    %3106 = vmatprep.subr.mxu0 0.0
    %3107 = vmatpush2.msra.mxu0 0.0
    %3108 = vmatprep.subr.mxu0 0.0
    %3109 = vmatpush2.msra.mxu0 0.0
    %3110 = vmatprep.subr.mxu0 0.0
    %3111 = vmatpush2.msra.mxu0 0.0
    %3112 = vmatprep.subr.mxu0 0.0
    %3113 = vmatpush2.msra.mxu0 0.0
    %3114 = vmatprep.subr.mxu0 0.0
    %3115 = vmatpush2.msra.mxu0 0.0
    %3116 = vmatprep.subr.mxu0 0.0
    %3117 = vmatpush2.msra.mxu0 0.0
    %3118 = vmatprep.subr.mxu0 0.0
    %3119 = vmatpush2.msra.mxu0 0.0
    %3120 = vmatprep.subr.mxu0 0.0
    %3121 = vmatpush2.msra.mxu0 0.0
    %3122 = vmatprep.subr.mxu0 0.0
    %3123 = vmatpush2.msra.mxu0 0.0
    %3124 = vmatprep.mubr.f32.mxu0 0.0
    %3125 = vmatmul.mubr.f32.gmra.mxu0 %v3058
    %v3126 = vpop.f32.mrf.mxu0
    %v3127 = vadd.f32 0.0, %v3126
    %v3128 = vpop.f32.mrf.mxu0
    %3129 = vdwg.mxu0
    %v3131 = vsel %vm3056, %v3035, 0
    %3133 = vmatprep.subr.mxu0 0.0
    %3134 = vmatpush1.msra.mxu0 0.0
    %3135 = vmatprep.subr.mxu0 0.0
    %3136 = vmatpush1.msra.mxu0 0.0
    %3137 = vmatprep.subr.mxu0 0.0
    %3138 = vmatpush1.msra.mxu0 0.0
    %3139 = vmatprep.subr.mxu0 0.0
    %3140 = vmatpush1.msra.mxu0 0.0
    %3141 = vmatprep.subr.mxu0 0.0
    %3142 = vmatpush1.msra.mxu0 0.0
    %3143 = vmatprep.subr.mxu0 0.0
    %3144 = vmatpush1.msra.mxu0 0.0
    %3145 = vmatprep.subr.mxu0 0.0
    %3146 = vmatpush1.msra.mxu0 0.0
    %3147 = vmatprep.subr.mxu0 0.0
    %3148 = vmatpush1.msra.mxu0 0.0
    %3149 = vmatprep.subr.mxu0 0.0
    %3150 = vmatpush1.msra.mxu0 0.0
    %3151 = vmatprep.subr.mxu0 0.0
    %3152 = vmatpush1.msra.mxu0 0.0
    %3153 = vmatprep.subr.mxu0 0.0
    %3154 = vmatpush1.msra.mxu0 0.0
    %3155 = vmatprep.subr.mxu0 0.0
    %3156 = vmatpush1.msra.mxu0 0.0
    %3157 = vmatprep.subr.mxu0 0.0
    %3158 = vmatpush1.msra.mxu0 %v3039
    %3159 = vmatprep.subr.mxu0 0.0
    %3160 = vmatpush1.msra.mxu0 %v3038
    %3161 = vmatprep.subr.mxu0 0.0
    %3162 = vmatpush1.msra.mxu0 %v3037
    %3163 = vmatprep.subr.mxu0 0.0
    %3164 = vmatpush1.msra.mxu0 %v3036
    %3165 = vmatprep.subr.mxu0 0.0
    %3166 = vmatpush2.msra.mxu0 0.0
    %3167 = vmatprep.subr.mxu0 0.0
    %3168 = vmatpush2.msra.mxu0 0.0
    %3169 = vmatprep.subr.mxu0 0.0
    %3170 = vmatpush2.msra.mxu0 0.0
    %3171 = vmatprep.subr.mxu0 0.0
    %3172 = vmatpush2.msra.mxu0 0.0
    %3173 = vmatprep.subr.mxu0 0.0
    %3174 = vmatpush2.msra.mxu0 0.0
    %3175 = vmatprep.subr.mxu0 0.0
    %3176 = vmatpush2.msra.mxu0 0.0
    %3177 = vmatprep.subr.mxu0 0.0
    %3178 = vmatpush2.msra.mxu0 0.0
    %3179 = vmatprep.subr.mxu0 0.0
    %3180 = vmatpush2.msra.mxu0 0.0
    %3181 = vmatprep.subr.mxu0 0.0
    %3182 = vmatpush2.msra.mxu0 0.0
    %3183 = vmatprep.subr.mxu0 0.0
    %3184 = vmatpush2.msra.mxu0 0.0
    %3185 = vmatprep.subr.mxu0 0.0
    %3186 = vmatpush2.msra.mxu0 0.0
    %3187 = vmatprep.subr.mxu0 0.0
    %3188 = vmatpush2.msra.mxu0 0.0
    %3189 = vmatprep.subr.mxu0 0.0
    %3190 = vmatpush2.msra.mxu0 0.0
    %3191 = vmatprep.subr.mxu0 0.0
    %3192 = vmatpush2.msra.mxu0 0.0
    %3193 = vmatprep.subr.mxu0 0.0
    %3194 = vmatpush2.msra.mxu0 0.0
    %3195 = vmatprep.subr.mxu0 0.0
    %3196 = vmatpush2.msra.mxu0 0.0
    %3197 = vmatprep.mubr.f32.mxu0 0.0
    %3198 = vmatmul.mubr.f32.gmra.mxu0 %v3131
    %v3199 = vpop.f32.mrf.mxu0
    %v3200 = vadd.f32 %v3127, %v3199
    %v3201 = vpop.f32.mrf.mxu0
    %3202 = vdwg.mxu0
    %v3204 = vlaneseq
    %v3205 = vshrl.u32 %v3204, 7
    %v3206 = vsub.s32 0, %v3205
    %v3207 = vrot.slane %v3044, %v3206
    %v3209 = vadd.f32 %v3200, %v3207
    %v3210 = vxor.u32 %v3209, 2147483648
    %v3211 = vmul.f32 %v3210, 1.442695
    %v3212 = vpow.pop %v3211
    %v3213 = vadd.f32 %v3212, 1.0
    %v3214 = vrcp.pop %v3213
    %v3215 = vmul.f32 1.0, %v3214
    %3217 = vrot.lane.b32.xlu0 %v3209, 32
    %v3218 = vpop.permute.xlu0 %3217
    %v3220 = vmul.f32 %v3215, %v3218
    %3222 = vrot.lane.b32.xlu0 %v3220, 64
    %v3223 = vpop.permute.xlu0 %3222
    %v3225 = vadd.f32 %v3209, %v3223
    %v3226 = vtanh.pop %v3225
    %v3227 = vsub.f32 1.0, %v3215
    %3229 = vrot.lane.b32.xlu0 %v3226, 96
    %v3230 = vpop.permute.xlu0 %3229
    %v3232 = vmul.f32 %v3227, %v3230
    %v3233 = vmul.f32 %v3215, 0.0
    %v3234 = vadd.f32 %v3232, %v3233
    %v3235 = vld [vmem:[%s13] sm:$0xff]
    %3236 = vset.pattern.permute.xlu0 0
    %3237 = vperm.xlu0 %3236, %v3235
    %v3238 = vpop.permute.xlu0 %3237
    %vm3239 = vcmp.eq.s32.totalorder %v3055, %v3238
    %v3240 = vsel %vm3239, 1, 0
    %v3241 = vcvt.s32.f32 %v3240
    %v3243 = vsel %vm3056, %v3241, 0
    %3245 = vmatprep.subr.mxu0 0.0
    %3246 = vmatpush1.msra.mxu0 0.0
    %3247 = vmatprep.subr.mxu0 0.0
    %3248 = vmatpush1.msra.mxu0 0.0
    %3249 = vmatprep.subr.mxu0 0.0
    %3250 = vmatpush1.msra.mxu0 0.0
    %3251 = vmatprep.subr.mxu0 0.0
    %3252 = vmatpush1.msra.mxu0 0.0
    %3253 = vmatprep.subr.mxu0 0.0
    %3254 = vmatpush1.msra.mxu0 0.0
    %3255 = vmatprep.subr.mxu0 0.0
    %3256 = vmatpush1.msra.mxu0 0.0
    %3257 = vmatprep.subr.mxu0 0.0
    %3258 = vmatpush1.msra.mxu0 0.0
    %3259 = vmatprep.subr.mxu0 0.0
    %3260 = vmatpush1.msra.mxu0 0.0
    %3261 = vmatprep.subr.mxu0 0.0
    %3262 = vmatpush1.msra.mxu0 0.0
    %3263 = vmatprep.subr.mxu0 0.0
    %3264 = vmatpush1.msra.mxu0 0.0
    %3265 = vmatprep.subr.mxu0 0.0
    %3266 = vmatpush1.msra.mxu0 0.0
    %3267 = vmatprep.subr.mxu0 0.0
    %3268 = vmatpush1.msra.mxu0 0.0
    %3269 = vmatprep.subr.mxu0 0.0
    %3270 = vmatpush1.msra.mxu0 %v3053
    %3271 = vmatprep.subr.mxu0 0.0
    %3272 = vmatpush1.msra.mxu0 %v3052
    %3273 = vmatprep.subr.mxu0 0.0
    %3274 = vmatpush1.msra.mxu0 %v3051
    %3275 = vmatprep.subr.mxu0 0.0
    %3276 = vmatpush1.msra.mxu0 %v3050
    %3277 = vmatprep.subr.mxu0 0.0
    %3278 = vmatpush2.msra.mxu0 0.0
    %3279 = vmatprep.subr.mxu0 0.0
    %3280 = vmatpush2.msra.mxu0 0.0
    %3281 = vmatprep.subr.mxu0 0.0
    %3282 = vmatpush2.msra.mxu0 0.0
    %3283 = vmatprep.subr.mxu0 0.0
    %3284 = vmatpush2.msra.mxu0 0.0
    %3285 = vmatprep.subr.mxu0 0.0
    %3286 = vmatpush2.msra.mxu0 0.0
    %3287 = vmatprep.subr.mxu0 0.0
    %3288 = vmatpush2.msra.mxu0 0.0
    %3289 = vmatprep.subr.mxu0 0.0
    %3290 = vmatpush2.msra.mxu0 0.0
    %3291 = vmatprep.subr.mxu0 0.0
    %3292 = vmatpush2.msra.mxu0 0.0
    %3293 = vmatprep.subr.mxu0 0.0
    %3294 = vmatpush2.msra.mxu0 0.0
    %3295 = vmatprep.subr.mxu0 0.0
    %3296 = vmatpush2.msra.mxu0 0.0
    %3297 = vmatprep.subr.mxu0 0.0
    %3298 = vmatpush2.msra.mxu0 0.0
    %3299 = vmatprep.subr.mxu0 0.0
    %3300 = vmatpush2.msra.mxu0 0.0
    %3301 = vmatprep.subr.mxu0 0.0
    %3302 = vmatpush2.msra.mxu0 0.0
    %3303 = vmatprep.subr.mxu0 0.0
    %3304 = vmatpush2.msra.mxu0 0.0
    %3305 = vmatprep.subr.mxu0 0.0
    %3306 = vmatpush2.msra.mxu0 0.0
    %3307 = vmatprep.subr.mxu0 0.0
    %3308 = vmatpush2.msra.mxu0 0.0
    %3309 = vmatprep.mubr.f32.mxu0 0.0
    %3310 = vmatmul.mubr.f32.gmra.mxu0 %v3243
    %v3311 = vpop.f32.mrf.mxu0
    %v3312 = vadd.f32 0.0, %v3311
    %v3313 = vpop.f32.mrf.mxu0
    %3314 = vdwg.mxu0
    %3316 = vrot.lane.b32.xlu0 %v3234, 96
    %v3317 = vpop.permute.xlu0 %3316
    %v3318 = vsel %vm3056, %v3317, 0
    %3320 = vmatprep.subr.mxu0 0.0
    %3321 = vmatpush1.msra.mxu0 0.0
    %3322 = vmatprep.subr.mxu0 0.0
    %3323 = vmatpush1.msra.mxu0 0.0
    %3324 = vmatprep.subr.mxu0 0.0
    %3325 = vmatpush1.msra.mxu0 0.0
    %3326 = vmatprep.subr.mxu0 0.0
    %3327 = vmatpush1.msra.mxu0 0.0
    %3328 = vmatprep.subr.mxu0 0.0
    %3329 = vmatpush1.msra.mxu0 0.0
    %3330 = vmatprep.subr.mxu0 0.0
    %3331 = vmatpush1.msra.mxu0 0.0
    %3332 = vmatprep.subr.mxu0 0.0
    %3333 = vmatpush1.msra.mxu0 0.0
    %3334 = vmatprep.subr.mxu0 0.0
    %3335 = vmatpush1.msra.mxu0 0.0
    %3336 = vmatprep.subr.mxu0 0.0
    %3337 = vmatpush1.msra.mxu0 0.0
    %3338 = vmatprep.subr.mxu0 0.0
    %3339 = vmatpush1.msra.mxu0 0.0
    %3340 = vmatprep.subr.mxu0 0.0
    %3341 = vmatpush1.msra.mxu0 0.0
    %3342 = vmatprep.subr.mxu0 0.0
    %3343 = vmatpush1.msra.mxu0 0.0
    %3344 = vmatprep.subr.mxu0 0.0
    %3345 = vmatpush1.msra.mxu0 %v3043
    %3346 = vmatprep.subr.mxu0 0.0
    %3347 = vmatpush1.msra.mxu0 %v3042
    %3348 = vmatprep.subr.mxu0 0.0
    %3349 = vmatpush1.msra.mxu0 %v3041
    %3350 = vmatprep.subr.mxu0 0.0
    %3351 = vmatpush1.msra.mxu0 %v3040
    %3352 = vmatprep.subr.mxu0 0.0
    %3353 = vmatpush2.msra.mxu0 0.0
    %3354 = vmatprep.subr.mxu0 0.0
    %3355 = vmatpush2.msra.mxu0 0.0
    %3356 = vmatprep.subr.mxu0 0.0
    %3357 = vmatpush2.msra.mxu0 0.0
    %3358 = vmatprep.subr.mxu0 0.0
    %3359 = vmatpush2.msra.mxu0 0.0
    %3360 = vmatprep.subr.mxu0 0.0
    %3361 = vmatpush2.msra.mxu0 0.0
    %3362 = vmatprep.subr.mxu0 0.0
    %3363 = vmatpush2.msra.mxu0 0.0
    %3364 = vmatprep.subr.mxu0 0.0
    %3365 = vmatpush2.msra.mxu0 0.0
    %3366 = vmatprep.subr.mxu0 0.0
    %3367 = vmatpush2.msra.mxu0 0.0
    %3368 = vmatprep.subr.mxu0 0.0
    %3369 = vmatpush2.msra.mxu0 0.0
    %3370 = vmatprep.subr.mxu0 0.0
    %3371 = vmatpush2.msra.mxu0 0.0
    %3372 = vmatprep.subr.mxu0 0.0
    %3373 = vmatpush2.msra.mxu0 0.0
    %3374 = vmatprep.subr.mxu0 0.0
    %3375 = vmatpush2.msra.mxu0 0.0
    %3376 = vmatprep.subr.mxu0 0.0
    %3377 = vmatpush2.msra.mxu0 0.0
    %3378 = vmatprep.subr.mxu0 0.0
    %3379 = vmatpush2.msra.mxu0 0.0
    %3380 = vmatprep.subr.mxu0 0.0
    %3381 = vmatpush2.msra.mxu0 0.0
    %3382 = vmatprep.subr.mxu0 0.0
    %3383 = vmatpush2.msra.mxu0 0.0
    %3384 = vmatprep.mubr.f32.mxu0 0.0
    %3385 = vmatmul.mubr.f32.gmra.mxu0 %v3318
    %v3386 = vpop.f32.mrf.mxu0
    %v3387 = vadd.f32 0.0, %v3386
    %v3388 = vpop.f32.mrf.mxu0
    %3389 = vdwg.mxu0
    %v3391 = vsel %vm3056, %v3312, 0
    %3393 = vmatprep.subr.mxu0 0.0
    %3394 = vmatpush1.msra.mxu0 0.0
    %3395 = vmatprep.subr.mxu0 0.0
    %3396 = vmatpush1.msra.mxu0 0.0
    %3397 = vmatprep.subr.mxu0 0.0
    %3398 = vmatpush1.msra.mxu0 0.0
    %3399 = vmatprep.subr.mxu0 0.0
    %3400 = vmatpush1.msra.mxu0 0.0
    %3401 = vmatprep.subr.mxu0 0.0
    %3402 = vmatpush1.msra.mxu0 0.0
    %3403 = vmatprep.subr.mxu0 0.0
    %3404 = vmatpush1.msra.mxu0 0.0
    %3405 = vmatprep.subr.mxu0 0.0
    %3406 = vmatpush1.msra.mxu0 0.0
    %3407 = vmatprep.subr.mxu0 0.0
    %3408 = vmatpush1.msra.mxu0 0.0
    %3409 = vmatprep.subr.mxu0 0.0
    %3410 = vmatpush1.msra.mxu0 0.0
    %3411 = vmatprep.subr.mxu0 0.0
    %3412 = vmatpush1.msra.mxu0 0.0
    %3413 = vmatprep.subr.mxu0 0.0
    %3414 = vmatpush1.msra.mxu0 0.0
    %3415 = vmatprep.subr.mxu0 0.0
    %3416 = vmatpush1.msra.mxu0 0.0
    %3417 = vmatprep.subr.mxu0 0.0
    %3418 = vmatpush1.msra.mxu0 %v3039
    %3419 = vmatprep.subr.mxu0 0.0
    %3420 = vmatpush1.msra.mxu0 %v3038
    %3421 = vmatprep.subr.mxu0 0.0
    %3422 = vmatpush1.msra.mxu0 %v3037
    %3423 = vmatprep.subr.mxu0 0.0
    %3424 = vmatpush1.msra.mxu0 %v3036
    %3425 = vmatprep.subr.mxu0 0.0
    %3426 = vmatpush2.msra.mxu0 0.0
    %3427 = vmatprep.subr.mxu0 0.0
    %3428 = vmatpush2.msra.mxu0 0.0
    %3429 = vmatprep.subr.mxu0 0.0
    %3430 = vmatpush2.msra.mxu0 0.0
    %3431 = vmatprep.subr.mxu0 0.0
    %3432 = vmatpush2.msra.mxu0 0.0
    %3433 = vmatprep.subr.mxu0 0.0
    %3434 = vmatpush2.msra.mxu0 0.0
    %3435 = vmatprep.subr.mxu0 0.0
    %3436 = vmatpush2.msra.mxu0 0.0
    %3437 = vmatprep.subr.mxu0 0.0
    %3438 = vmatpush2.msra.mxu0 0.0
    %3439 = vmatprep.subr.mxu0 0.0
    %3440 = vmatpush2.msra.mxu0 0.0
    %3441 = vmatprep.subr.mxu0 0.0
    %3442 = vmatpush2.msra.mxu0 0.0
    %3443 = vmatprep.subr.mxu0 0.0
    %3444 = vmatpush2.msra.mxu0 0.0
    %3445 = vmatprep.subr.mxu0 0.0
    %3446 = vmatpush2.msra.mxu0 0.0
    %3447 = vmatprep.subr.mxu0 0.0
    %3448 = vmatpush2.msra.mxu0 0.0
    %3449 = vmatprep.subr.mxu0 0.0
    %3450 = vmatpush2.msra.mxu0 0.0
    %3451 = vmatprep.subr.mxu0 0.0
    %3452 = vmatpush2.msra.mxu0 0.0
    %3453 = vmatprep.subr.mxu0 0.0
    %3454 = vmatpush2.msra.mxu0 0.0
    %3455 = vmatprep.subr.mxu0 0.0
    %3456 = vmatpush2.msra.mxu0 0.0
    %3457 = vmatprep.mubr.f32.mxu0 0.0
    %3458 = vmatmul.mubr.f32.gmra.mxu0 %v3391
    %v3459 = vpop.f32.mrf.mxu0
    %v3460 = vadd.f32 %v3387, %v3459
    %v3461 = vpop.f32.mrf.mxu0
    %3462 = vdwg.mxu0
    %v3463 = vadd.f32 %v3460, %v3207
    %v3464 = vxor.u32 %v3463, 2147483648
    %v3465 = vmul.f32 %v3464, 1.442695
    %v3466 = vpow.pop %v3465
    %v3467 = vadd.f32 %v3466, 1.0
    %v3468 = vrcp.pop %v3467
    %v3469 = vmul.f32 1.0, %v3468
    %3471 = vrot.lane.b32.xlu0 %v3463, 32
    %v3472 = vpop.permute.xlu0 %3471
    %v3474 = vmul.f32 %v3469, %v3472
    %3476 = vrot.lane.b32.xlu0 %v3474, 64
    %v3477 = vpop.permute.xlu0 %3476
    %v3479 = vadd.f32 %v3463, %v3477
    %v3480 = vtanh.pop %v3479
    %v3481 = vsub.f32 1.0, %v3469
    %3483 = vrot.lane.b32.xlu0 %v3480, 96
    %v3484 = vpop.permute.xlu0 %3483
    %v3486 = vmul.f32 %v3481, %v3484
    %v3487 = vmul.f32 %v3469, %v3234
    %v3488 = vadd.f32 %v3486, %v3487
    %v3490 = vlaneseq
    %v3491 = vshrl.u32 %v3490, 7
    %v3492 = vsub.s32 0, %v3491
    %v3493 = vrot.slane %v3049, %v3492
    %3496 = vrot.lane.b32.xlu0 %v3488, 96
    %v3497 = vpop.permute.xlu0 %3496
    %v3498 = vsel %vm3056, %v3497, 0
    %3500 = vmatprep.subr.mxu0 0.0
    %3501 = vmatpush1.msra.mxu0 0.0
    %3502 = vmatprep.subr.mxu0 0.0
    %3503 = vmatpush1.msra.mxu0 0.0
    %3504 = vmatprep.subr.mxu0 0.0
    %3505 = vmatpush1.msra.mxu0 0.0
    %3506 = vmatprep.subr.mxu0 0.0
    %3507 = vmatpush1.msra.mxu0 0.0
    %3508 = vmatprep.subr.mxu0 0.0
    %3509 = vmatpush1.msra.mxu0 0.0
    %3510 = vmatprep.subr.mxu0 0.0
    %3511 = vmatpush1.msra.mxu0 0.0
    %3512 = vmatprep.subr.mxu0 0.0
    %3513 = vmatpush1.msra.mxu0 0.0
    %3514 = vmatprep.subr.mxu0 0.0
    %3515 = vmatpush1.msra.mxu0 0.0
    %3516 = vmatprep.subr.mxu0 0.0
    %3517 = vmatpush1.msra.mxu0 0.0
    %3518 = vmatprep.subr.mxu0 0.0
    %3519 = vmatpush1.msra.mxu0 0.0
    %3520 = vmatprep.subr.mxu0 0.0
    %3521 = vmatpush1.msra.mxu0 0.0
    %3522 = vmatprep.subr.mxu0 0.0
    %3523 = vmatpush1.msra.mxu0 0.0
    %3524 = vmatprep.subr.mxu0 0.0
    %3525 = vmatpush1.msra.mxu0 %v3048
    %3526 = vmatprep.subr.mxu0 0.0
    %3527 = vmatpush1.msra.mxu0 %v3047
    %3528 = vmatprep.subr.mxu0 0.0
    %3529 = vmatpush1.msra.mxu0 %v3046
    %3530 = vmatprep.subr.mxu0 0.0
    %3531 = vmatpush1.msra.mxu0 %v3045
    %3532 = vmatprep.subr.mxu0 0.0
    %3533 = vmatpush2.msra.mxu0 0.0
    %3534 = vmatprep.subr.mxu0 0.0
    %3535 = vmatpush2.msra.mxu0 0.0
    %3536 = vmatprep.subr.mxu0 0.0
    %3537 = vmatpush2.msra.mxu0 0.0
    %3538 = vmatprep.subr.mxu0 0.0
    %3539 = vmatpush2.msra.mxu0 0.0
    %3540 = vmatprep.subr.mxu0 0.0
    %3541 = vmatpush2.msra.mxu0 0.0
    %3542 = vmatprep.subr.mxu0 0.0
    %3543 = vmatpush2.msra.mxu0 0.0
    %3544 = vmatprep.subr.mxu0 0.0
    %3545 = vmatpush2.msra.mxu0 0.0
    %3546 = vmatprep.subr.mxu0 0.0
    %3547 = vmatpush2.msra.mxu0 0.0
    %3548 = vmatprep.subr.mxu0 0.0
    %3549 = vmatpush2.msra.mxu0 0.0
    %3550 = vmatprep.subr.mxu0 0.0
    %3551 = vmatpush2.msra.mxu0 0.0
    %3552 = vmatprep.subr.mxu0 0.0
    %3553 = vmatpush2.msra.mxu0 0.0
    %3554 = vmatprep.subr.mxu0 0.0
    %3555 = vmatpush2.msra.mxu0 0.0
    %3556 = vmatprep.subr.mxu0 0.0
    %3557 = vmatpush2.msra.mxu0 0.0
    %3558 = vmatprep.subr.mxu0 0.0
    %3559 = vmatpush2.msra.mxu0 0.0
    %3560 = vmatprep.subr.mxu0 0.0
    %3561 = vmatpush2.msra.mxu0 0.0
    %3562 = vmatprep.subr.mxu0 0.0
    %3563 = vmatpush2.msra.mxu0 0.0
    %3564 = vmatprep.mubr.f32.mxu0 0.0
    %3565 = vmatmul.mubr.f32.gmra.mxu0 %v3498
    %v3566 = vpop.f32.mrf.mxu0
    %v3567 = vadd.f32 %v3493, %v3566
    %v3568 = vpop.f32.mrf.mxu0
    %3569 = vdwg.mxu0
    %v3570 = vsel %vm3056, %v3567, -inf
    %3571 = vmax.xlane.f32.xlu0 %v3570
    %v3572 = vpop.xlane.xlu0 %3571
    %v3573 = vsub.f32 %v3567, %v3572
    %v3574 = vmul.f32 %v3573, 1.442695
    %v3575 = vpow.pop %v3574
    %v3576 = vsel %vm3056, %v3575, 0.0
    %3577 = vadd.xlane.f32.xlu0 %v3576
    %v3578 = vpop.xlane.xlu0 %3577
    %v3579 = vlog2.pop %v3578
    %v3580 = vmul.f32 %v3579, 0.6931472
    %v3581 = vadd.f32 %v3580, %v3572
    %v3582 = vld [vmem:[%s14] sm:$0xff]
    %3583 = vset.pattern.permute.xlu0 0
    %3584 = vperm.xlu0 %3583, %v3582
    %v3585 = vpop.permute.xlu0 %3584
    %vm3586 = vcmp.eq.s32.totalorder %v3055, %v3585
    %v3587 = vsel %vm3586, %v3567, 0.0
    %v3588 = vsel %vm3056, %v3587, 0.0
    %3589 = vadd.xlane.f32.xlu0 %v3588
    %v3590 = vpop.xlane.xlu0 %3589
    %v3591 = vsub.f32 %v3581, %v3590
    %vm3592 = vcmask 7168
    %v3593 = vsel %vm3592, %v3591, 0.0
    %3594 = vadd.xlane.f32.xlu0 %v3593
    %v3595 = vpop.xlane.xlu0 %3594
    %v3596 = vrot.slane %v3595, 4
    %v3597 = vadd.f32 %v3595, %v3596
    %v3598 = vrot.slane %v3597, 2
    %v3599 = vadd.f32 %v3597, %v3598
    %v3600 = vrot.slane %v3599, 1
    %v3601 = vadd.f32 %v3599, %v3600
    %s3602 = vtos %v3601
    %v3603 = vstv %s3602
    %v3604 = vadd.f32 %v3603, 0.0
    %s3605 = scalar_lea.vmem %s13, 8
    %v3606 = vld [vmem:[%s3605] sm:$0xff]
    %3607 = vset.pattern.permute.xlu0 0
    %3608 = vperm.xlu0 %3607, %v3606
    %v3609 = vpop.permute.xlu0 %3608
    %vm3610 = vcmp.eq.s32.totalorder %v3055, %v3609
    %v3611 = vsel %vm3610, 1, 0
    %v3612 = vcvt.s32.f32 %v3611
    %v3614 = vsel %vm3056, %v3612, 0
    %3616 = vmatprep.subr.mxu0 0.0
    %3617 = vmatpush1.msra.mxu0 0.0
    %3618 = vmatprep.subr.mxu0 0.0
    %3619 = vmatpush1.msra.mxu0 0.0
    %3620 = vmatprep.subr.mxu0 0.0
    %3621 = vmatpush1.msra.mxu0 0.0
    %3622 = vmatprep.subr.mxu0 0.0
    %3623 = vmatpush1.msra.mxu0 0.0
    %3624 = vmatprep.subr.mxu0 0.0
    %3625 = vmatpush1.msra.mxu0 0.0
    %3626 = vmatprep.subr.mxu0 0.0
    %3627 = vmatpush1.msra.mxu0 0.0
    %3628 = vmatprep.subr.mxu0 0.0
    %3629 = vmatpush1.msra.mxu0 0.0
    %3630 = vmatprep.subr.mxu0 0.0
    %3631 = vmatpush1.msra.mxu0 0.0
    %3632 = vmatprep.subr.mxu0 0.0
    %3633 = vmatpush1.msra.mxu0 0.0
    %3634 = vmatprep.subr.mxu0 0.0
    %3635 = vmatpush1.msra.mxu0 0.0
    %3636 = vmatprep.subr.mxu0 0.0
    %3637 = vmatpush1.msra.mxu0 0.0
    %3638 = vmatprep.subr.mxu0 0.0
    %3639 = vmatpush1.msra.mxu0 0.0
    %3640 = vmatprep.subr.mxu0 0.0
    %3641 = vmatpush1.msra.mxu0 %v3053
    %3642 = vmatprep.subr.mxu0 0.0
    %3643 = vmatpush1.msra.mxu0 %v3052
    %3644 = vmatprep.subr.mxu0 0.0
    %3645 = vmatpush1.msra.mxu0 %v3051
    %3646 = vmatprep.subr.mxu0 0.0
    %3647 = vmatpush1.msra.mxu0 %v3050
    %3648 = vmatprep.subr.mxu0 0.0
    %3649 = vmatpush2.msra.mxu0 0.0
    %3650 = vmatprep.subr.mxu0 0.0
    %3651 = vmatpush2.msra.mxu0 0.0
    %3652 = vmatprep.subr.mxu0 0.0
    %3653 = vmatpush2.msra.mxu0 0.0
    %3654 = vmatprep.subr.mxu0 0.0
    %3655 = vmatpush2.msra.mxu0 0.0
    %3656 = vmatprep.subr.mxu0 0.0
    %3657 = vmatpush2.msra.mxu0 0.0
    %3658 = vmatprep.subr.mxu0 0.0
    %3659 = vmatpush2.msra.mxu0 0.0
    %3660 = vmatprep.subr.mxu0 0.0
    %3661 = vmatpush2.msra.mxu0 0.0
    %3662 = vmatprep.subr.mxu0 0.0
    %3663 = vmatpush2.msra.mxu0 0.0
    %3664 = vmatprep.subr.mxu0 0.0
    %3665 = vmatpush2.msra.mxu0 0.0
    %3666 = vmatprep.subr.mxu0 0.0
    %3667 = vmatpush2.msra.mxu0 0.0
    %3668 = vmatprep.subr.mxu0 0.0
    %3669 = vmatpush2.msra.mxu0 0.0
    %3670 = vmatprep.subr.mxu0 0.0
    %3671 = vmatpush2.msra.mxu0 0.0
    %3672 = vmatprep.subr.mxu0 0.0
    %3673 = vmatpush2.msra.mxu0 0.0
    %3674 = vmatprep.subr.mxu0 0.0
    %3675 = vmatpush2.msra.mxu0 0.0
    %3676 = vmatprep.subr.mxu0 0.0
    %3677 = vmatpush2.msra.mxu0 0.0
    %3678 = vmatprep.subr.mxu0 0.0
    %3679 = vmatpush2.msra.mxu0 0.0
    %3680 = vmatprep.mubr.f32.mxu0 0.0
    %3681 = vmatmul.mubr.f32.gmra.mxu0 %v3614
    %v3682 = vpop.f32.mrf.mxu0
    %v3683 = vadd.f32 0.0, %v3682
    %v3684 = vpop.f32.mrf.mxu0
    %3685 = vdwg.mxu0
    %3686 = vmatprep.subr.mxu0 0.0
    %3687 = vmatpush1.msra.mxu0 0.0
    %3688 = vmatprep.subr.mxu0 0.0
    %3689 = vmatpush1.msra.mxu0 0.0
    %3690 = vmatprep.subr.mxu0 0.0
    %3691 = vmatpush1.msra.mxu0 0.0
    %3692 = vmatprep.subr.mxu0 0.0
    %3693 = vmatpush1.msra.mxu0 0.0
    %3694 = vmatprep.subr.mxu0 0.0
    %3695 = vmatpush1.msra.mxu0 0.0
    %3696 = vmatprep.subr.mxu0 0.0
    %3697 = vmatpush1.msra.mxu0 0.0
    %3698 = vmatprep.subr.mxu0 0.0
    %3699 = vmatpush1.msra.mxu0 0.0
    %3700 = vmatprep.subr.mxu0 0.0
    %3701 = vmatpush1.msra.mxu0 0.0
    %3702 = vmatprep.subr.mxu0 0.0
    %3703 = vmatpush1.msra.mxu0 0.0
    %3704 = vmatprep.subr.mxu0 0.0
    %3705 = vmatpush1.msra.mxu0 0.0
    %3706 = vmatprep.subr.mxu0 0.0
    %3707 = vmatpush1.msra.mxu0 0.0
    %3708 = vmatprep.subr.mxu0 0.0
    %3709 = vmatpush1.msra.mxu0 0.0
    %3710 = vmatprep.subr.mxu0 0.0
    %3711 = vmatpush1.msra.mxu0 %v3043
    %3712 = vmatprep.subr.mxu0 0.0
    %3713 = vmatpush1.msra.mxu0 %v3042
    %3714 = vmatprep.subr.mxu0 0.0
    %3715 = vmatpush1.msra.mxu0 %v3041
    %3716 = vmatprep.subr.mxu0 0.0
    %3717 = vmatpush1.msra.mxu0 %v3040
    %3718 = vmatprep.subr.mxu0 0.0
    %3719 = vmatpush2.msra.mxu0 0.0
    %3720 = vmatprep.subr.mxu0 0.0
    %3721 = vmatpush2.msra.mxu0 0.0
    %3722 = vmatprep.subr.mxu0 0.0
    %3723 = vmatpush2.msra.mxu0 0.0
    %3724 = vmatprep.subr.mxu0 0.0
    %3725 = vmatpush2.msra.mxu0 0.0
    %3726 = vmatprep.subr.mxu0 0.0
    %3727 = vmatpush2.msra.mxu0 0.0
    %3728 = vmatprep.subr.mxu0 0.0
    %3729 = vmatpush2.msra.mxu0 0.0
    %3730 = vmatprep.subr.mxu0 0.0
    %3731 = vmatpush2.msra.mxu0 0.0
    %3732 = vmatprep.subr.mxu0 0.0
    %3733 = vmatpush2.msra.mxu0 0.0
    %3734 = vmatprep.subr.mxu0 0.0
    %3735 = vmatpush2.msra.mxu0 0.0
    %3736 = vmatprep.subr.mxu0 0.0
    %3737 = vmatpush2.msra.mxu0 0.0
    %3738 = vmatprep.subr.mxu0 0.0
    %3739 = vmatpush2.msra.mxu0 0.0
    %3740 = vmatprep.subr.mxu0 0.0
    %3741 = vmatpush2.msra.mxu0 0.0
    %3742 = vmatprep.subr.mxu0 0.0
    %3743 = vmatpush2.msra.mxu0 0.0
    %3744 = vmatprep.subr.mxu0 0.0
    %3745 = vmatpush2.msra.mxu0 0.0
    %3746 = vmatprep.subr.mxu0 0.0
    %3747 = vmatpush2.msra.mxu0 0.0
    %3748 = vmatprep.subr.mxu0 0.0
    %3749 = vmatpush2.msra.mxu0 0.0
    %3750 = vmatprep.mubr.f32.mxu0 0.0
    %3751 = vmatmul.mubr.f32.gmra.mxu0 %v3498
    %v3752 = vpop.f32.mrf.mxu0
    %v3753 = vadd.f32 0.0, %v3752
    %v3754 = vpop.f32.mrf.mxu0
    %3755 = vdwg.mxu0
    %v3757 = vsel %vm3056, %v3683, 0
    %3759 = vmatprep.subr.mxu0 0.0
    %3760 = vmatpush1.msra.mxu0 0.0
    %3761 = vmatprep.subr.mxu0 0.0
    %3762 = vmatpush1.msra.mxu0 0.0
    %3763 = vmatprep.subr.mxu0 0.0
    %3764 = vmatpush1.msra.mxu0 0.0
    %3765 = vmatprep.subr.mxu0 0.0
    %3766 = vmatpush1.msra.mxu0 0.0
    %3767 = vmatprep.subr.mxu0 0.0
    %3768 = vmatpush1.msra.mxu0 0.0
    %3769 = vmatprep.subr.mxu0 0.0
    %3770 = vmatpush1.msra.mxu0 0.0
    %3771 = vmatprep.subr.mxu0 0.0
    %3772 = vmatpush1.msra.mxu0 0.0
    %3773 = vmatprep.subr.mxu0 0.0
    %3774 = vmatpush1.msra.mxu0 0.0
    %3775 = vmatprep.subr.mxu0 0.0
    %3776 = vmatpush1.msra.mxu0 0.0
    %3777 = vmatprep.subr.mxu0 0.0
    %3778 = vmatpush1.msra.mxu0 0.0
    %3779 = vmatprep.subr.mxu0 0.0
    %3780 = vmatpush1.msra.mxu0 0.0
    %3781 = vmatprep.subr.mxu0 0.0
    %3782 = vmatpush1.msra.mxu0 0.0
    %3783 = vmatprep.subr.mxu0 0.0
    %3784 = vmatpush1.msra.mxu0 %v3039
    %3785 = vmatprep.subr.mxu0 0.0
    %3786 = vmatpush1.msra.mxu0 %v3038
    %3787 = vmatprep.subr.mxu0 0.0
    %3788 = vmatpush1.msra.mxu0 %v3037
    %3789 = vmatprep.subr.mxu0 0.0
    %3790 = vmatpush1.msra.mxu0 %v3036
    %3791 = vmatprep.subr.mxu0 0.0
    %3792 = vmatpush2.msra.mxu0 0.0
    %3793 = vmatprep.subr.mxu0 0.0
    %3794 = vmatpush2.msra.mxu0 0.0
    %3795 = vmatprep.subr.mxu0 0.0
    %3796 = vmatpush2.msra.mxu0 0.0
    %3797 = vmatprep.subr.mxu0 0.0
    %3798 = vmatpush2.msra.mxu0 0.0
    %3799 = vmatprep.subr.mxu0 0.0
    %3800 = vmatpush2.msra.mxu0 0.0
    %3801 = vmatprep.subr.mxu0 0.0
    %3802 = vmatpush2.msra.mxu0 0.0
    %3803 = vmatprep.subr.mxu0 0.0
    %3804 = vmatpush2.msra.mxu0 0.0
    %3805 = vmatprep.subr.mxu0 0.0
    %3806 = vmatpush2.msra.mxu0 0.0
    %3807 = vmatprep.subr.mxu0 0.0
    %3808 = vmatpush2.msra.mxu0 0.0
    %3809 = vmatprep.subr.mxu0 0.0
    %3810 = vmatpush2.msra.mxu0 0.0
    %3811 = vmatprep.subr.mxu0 0.0
    %3812 = vmatpush2.msra.mxu0 0.0
    %3813 = vmatprep.subr.mxu0 0.0
    %3814 = vmatpush2.msra.mxu0 0.0
    %3815 = vmatprep.subr.mxu0 0.0
    %3816 = vmatpush2.msra.mxu0 0.0
    %3817 = vmatprep.subr.mxu0 0.0
    %3818 = vmatpush2.msra.mxu0 0.0
    %3819 = vmatprep.subr.mxu0 0.0
    %3820 = vmatpush2.msra.mxu0 0.0
    %3821 = vmatprep.subr.mxu0 0.0
    %3822 = vmatpush2.msra.mxu0 0.0
    %3823 = vmatprep.mubr.f32.mxu0 0.0
    %3824 = vmatmul.mubr.f32.gmra.mxu0 %v3757
    %v3825 = vpop.f32.mrf.mxu0
    %v3826 = vadd.f32 %v3753, %v3825
    %v3827 = vpop.f32.mrf.mxu0
    %3828 = vdwg.mxu0
    %v3829 = vadd.f32 %v3826, %v3207
    %v3830 = vxor.u32 %v3829, 2147483648
    %v3831 = vmul.f32 %v3830, 1.442695
    %v3832 = vpow.pop %v3831
    %v3833 = vadd.f32 %v3832, 1.0
    %v3834 = vrcp.pop %v3833
    %v3835 = vmul.f32 1.0, %v3834
    %3837 = vrot.lane.b32.xlu0 %v3829, 32
    %v3838 = vpop.permute.xlu0 %3837
    %v3840 = vmul.f32 %v3835, %v3838
    %3842 = vrot.lane.b32.xlu0 %v3840, 64
    %v3843 = vpop.permute.xlu0 %3842
    %v3845 = vadd.f32 %v3829, %v3843
    %v3846 = vtanh.pop %v3845
    %v3847 = vsub.f32 1.0, %v3835
    %3849 = vrot.lane.b32.xlu0 %v3846, 96
    %v3850 = vpop.permute.xlu0 %3849
    %v3852 = vmul.f32 %v3847, %v3850
    %v3853 = vmul.f32 %v3835, %v3488
    %v3854 = vadd.f32 %v3852, %v3853
    %3856 = vrot.lane.b32.xlu0 %v3854, 96
    %v3857 = vpop.permute.xlu0 %3856
    %v3858 = vsel %vm3056, %v3857, 0
    %3860 = vmatprep.subr.mxu0 0.0
    %3861 = vmatpush1.msra.mxu0 0.0
    %3862 = vmatprep.subr.mxu0 0.0
    %3863 = vmatpush1.msra.mxu0 0.0
    %3864 = vmatprep.subr.mxu0 0.0
    %3865 = vmatpush1.msra.mxu0 0.0
    %3866 = vmatprep.subr.mxu0 0.0
    %3867 = vmatpush1.msra.mxu0 0.0
    %3868 = vmatprep.subr.mxu0 0.0
    %3869 = vmatpush1.msra.mxu0 0.0
    %3870 = vmatprep.subr.mxu0 0.0
    %3871 = vmatpush1.msra.mxu0 0.0
    %3872 = vmatprep.subr.mxu0 0.0
    %3873 = vmatpush1.msra.mxu0 0.0
    %3874 = vmatprep.subr.mxu0 0.0
    %3875 = vmatpush1.msra.mxu0 0.0
    %3876 = vmatprep.subr.mxu0 0.0
    %3877 = vmatpush1.msra.mxu0 0.0
    %3878 = vmatprep.subr.mxu0 0.0
    %3879 = vmatpush1.msra.mxu0 0.0
    %3880 = vmatprep.subr.mxu0 0.0
    %3881 = vmatpush1.msra.mxu0 0.0
    %3882 = vmatprep.subr.mxu0 0.0
    %3883 = vmatpush1.msra.mxu0 0.0
    %3884 = vmatprep.subr.mxu0 0.0
    %3885 = vmatpush1.msra.mxu0 %v3048
    %3886 = vmatprep.subr.mxu0 0.0
    %3887 = vmatpush1.msra.mxu0 %v3047
    %3888 = vmatprep.subr.mxu0 0.0
    %3889 = vmatpush1.msra.mxu0 %v3046
    %3890 = vmatprep.subr.mxu0 0.0
    %3891 = vmatpush1.msra.mxu0 %v3045
    %3892 = vmatprep.subr.mxu0 0.0
    %3893 = vmatpush2.msra.mxu0 0.0
    %3894 = vmatprep.subr.mxu0 0.0
    %3895 = vmatpush2.msra.mxu0 0.0
    %3896 = vmatprep.subr.mxu0 0.0
    %3897 = vmatpush2.msra.mxu0 0.0
    %3898 = vmatprep.subr.mxu0 0.0
    %3899 = vmatpush2.msra.mxu0 0.0
    %3900 = vmatprep.subr.mxu0 0.0
    %3901 = vmatpush2.msra.mxu0 0.0
    %3902 = vmatprep.subr.mxu0 0.0
    %3903 = vmatpush2.msra.mxu0 0.0
    %3904 = vmatprep.subr.mxu0 0.0
    %3905 = vmatpush2.msra.mxu0 0.0
    %3906 = vmatprep.subr.mxu0 0.0
    %3907 = vmatpush2.msra.mxu0 0.0
    %3908 = vmatprep.subr.mxu0 0.0
    %3909 = vmatpush2.msra.mxu0 0.0
    %3910 = vmatprep.subr.mxu0 0.0
    %3911 = vmatpush2.msra.mxu0 0.0
    %3912 = vmatprep.subr.mxu0 0.0
    %3913 = vmatpush2.msra.mxu0 0.0
    %3914 = vmatprep.subr.mxu0 0.0
    %3915 = vmatpush2.msra.mxu0 0.0
    %3916 = vmatprep.subr.mxu0 0.0
    %3917 = vmatpush2.msra.mxu0 0.0
    %3918 = vmatprep.subr.mxu0 0.0
    %3919 = vmatpush2.msra.mxu0 0.0
    %3920 = vmatprep.subr.mxu0 0.0
    %3921 = vmatpush2.msra.mxu0 0.0
    %3922 = vmatprep.subr.mxu0 0.0
    %3923 = vmatpush2.msra.mxu0 0.0
    %3924 = vmatprep.mubr.f32.mxu0 0.0
    %3925 = vmatmul.mubr.f32.gmra.mxu0 %v3858
    %v3926 = vpop.f32.mrf.mxu0
    %v3927 = vadd.f32 %v3493, %v3926
    %v3928 = vpop.f32.mrf.mxu0
    %3929 = vdwg.mxu0
    %v3930 = vsel %vm3056, %v3927, -inf
    %3931 = vmax.xlane.f32.xlu0 %v3930
    %v3932 = vpop.xlane.xlu0 %3931
    %v3933 = vsub.f32 %v3927, %v3932
    %v3934 = vmul.f32 %v3933, 1.442695
    %v3935 = vpow.pop %v3934
    %v3936 = vsel %vm3056, %v3935, 0.0
    %3937 = vadd.xlane.f32.xlu0 %v3936
    %v3938 = vpop.xlane.xlu0 %3937
    %v3939 = vlog2.pop %v3938
    %v3940 = vmul.f32 %v3939, 0.6931472
    %v3941 = vadd.f32 %v3940, %v3932
    %s3942 = scalar_lea.vmem %s14, 8
    %v3943 = vld [vmem:[%s3942] sm:$0xff]
    %3944 = vset.pattern.permute.xlu0 0
    %3945 = vperm.xlu0 %3944, %v3943
    %v3946 = vpop.permute.xlu0 %3945
    %vm3947 = vcmp.eq.s32.totalorder %v3055, %v3946
    %v3948 = vsel %vm3947, %v3927, 0.0
    %v3949 = vsel %vm3056, %v3948, 0.0
    %3950 = vadd.xlane.f32.xlu0 %v3949
    %v3951 = vpop.xlane.xlu0 %3950
    %v3952 = vsub.f32 %v3941, %v3951
    %v3953 = vsel %vm3592, %v3952, 0.0
    %3954 = vadd.xlane.f32.xlu0 %v3953
    %v3955 = vpop.xlane.xlu0 %3954
    %v3956 = vrot.slane %v3955, 4
    %v3957 = vadd.f32 %v3955, %v3956
    %v3958 = vrot.slane %v3957, 2
    %v3959 = vadd.f32 %v3957, %v3958
    %v3960 = vrot.slane %v3959, 1
    %v3961 = vadd.f32 %v3959, %v3960
    %s3962 = vtos %v3961
    %v3963 = vstv %s3962
    %v3964 = vadd.f32 %v3604, %v3963
    %s3965 = scalar_lea.vmem %s13, 16
    %v3966 = vld [vmem:[%s3965] sm:$0xff]
    %3967 = vset.pattern.permute.xlu0 0
    %3968 = vperm.xlu0 %3967, %v3966
    %v3969 = vpop.permute.xlu0 %3968
    %vm3970 = vcmp.eq.s32.totalorder %v3055, %v3969
    %v3971 = vsel %vm3970, 1, 0
    %v3972 = vcvt.s32.f32 %v3971
    %v3974 = vsel %vm3056, %v3972, 0
    %3976 = vmatprep.subr.mxu0 0.0
    %3977 = vmatpush1.msra.mxu0 0.0
    %3978 = vmatprep.subr.mxu0 0.0
    %3979 = vmatpush1.msra.mxu0 0.0
    %3980 = vmatprep.subr.mxu0 0.0
    %3981 = vmatpush1.msra.mxu0 0.0
    %3982 = vmatprep.subr.mxu0 0.0
    %3983 = vmatpush1.msra.mxu0 0.0
    %3984 = vmatprep.subr.mxu0 0.0
    %3985 = vmatpush1.msra.mxu0 0.0
    %3986 = vmatprep.subr.mxu0 0.0
    %3987 = vmatpush1.msra.mxu0 0.0
    %3988 = vmatprep.subr.mxu0 0.0
    %3989 = vmatpush1.msra.mxu0 0.0
    %3990 = vmatprep.subr.mxu0 0.0
    %3991 = vmatpush1.msra.mxu0 0.0
    %3992 = vmatprep.subr.mxu0 0.0
    %3993 = vmatpush1.msra.mxu0 0.0
    %3994 = vmatprep.subr.mxu0 0.0
    %3995 = vmatpush1.msra.mxu0 0.0
    %3996 = vmatprep.subr.mxu0 0.0
    %3997 = vmatpush1.msra.mxu0 0.0
    %3998 = vmatprep.subr.mxu0 0.0
    %3999 = vmatpush1.msra.mxu0 0.0
    %4000 = vmatprep.subr.mxu0 0.0
    %4001 = vmatpush1.msra.mxu0 %v3053
    %4002 = vmatprep.subr.mxu0 0.0
    %4003 = vmatpush1.msra.mxu0 %v3052
    %4004 = vmatprep.subr.mxu0 0.0
    %4005 = vmatpush1.msra.mxu0 %v3051
    %4006 = vmatprep.subr.mxu0 0.0
    %4007 = vmatpush1.msra.mxu0 %v3050
    %4008 = vmatprep.subr.mxu0 0.0
    %4009 = vmatpush2.msra.mxu0 0.0
    %4010 = vmatprep.subr.mxu0 0.0
    %4011 = vmatpush2.msra.mxu0 0.0
    %4012 = vmatprep.subr.mxu0 0.0
    %4013 = vmatpush2.msra.mxu0 0.0
    %4014 = vmatprep.subr.mxu0 0.0
    %4015 = vmatpush2.msra.mxu0 0.0
    %4016 = vmatprep.subr.mxu0 0.0
    %4017 = vmatpush2.msra.mxu0 0.0
    %4018 = vmatprep.subr.mxu0 0.0
    %4019 = vmatpush2.msra.mxu0 0.0
    %4020 = vmatprep.subr.mxu0 0.0
    %4021 = vmatpush2.msra.mxu0 0.0
    %4022 = vmatprep.subr.mxu0 0.0
    %4023 = vmatpush2.msra.mxu0 0.0
    %4024 = vmatprep.subr.mxu0 0.0
    %4025 = vmatpush2.msra.mxu0 0.0
    %4026 = vmatprep.subr.mxu0 0.0
    %4027 = vmatpush2.msra.mxu0 0.0
    %4028 = vmatprep.subr.mxu0 0.0
    %4029 = vmatpush2.msra.mxu0 0.0
    %4030 = vmatprep.subr.mxu0 0.0
    %4031 = vmatpush2.msra.mxu0 0.0
    %4032 = vmatprep.subr.mxu0 0.0
    %4033 = vmatpush2.msra.mxu0 0.0
    %4034 = vmatprep.subr.mxu0 0.0
    %4035 = vmatpush2.msra.mxu0 0.0
    %4036 = vmatprep.subr.mxu0 0.0
    %4037 = vmatpush2.msra.mxu0 0.0
    %4038 = vmatprep.subr.mxu0 0.0
    %4039 = vmatpush2.msra.mxu0 0.0
    %4040 = vmatprep.mubr.f32.mxu0 0.0
    %4041 = vmatmul.mubr.f32.gmra.mxu0 %v3974
    %v4042 = vpop.f32.mrf.mxu0
    %v4043 = vadd.f32 0.0, %v4042
    %v4044 = vpop.f32.mrf.mxu0
    %4045 = vdwg.mxu0
    %4046 = vmatprep.subr.mxu0 0.0
    %4047 = vmatpush1.msra.mxu0 0.0
    %4048 = vmatprep.subr.mxu0 0.0
    %4049 = vmatpush1.msra.mxu0 0.0
    %4050 = vmatprep.subr.mxu0 0.0
    %4051 = vmatpush1.msra.mxu0 0.0
    %4052 = vmatprep.subr.mxu0 0.0
    %4053 = vmatpush1.msra.mxu0 0.0
    %4054 = vmatprep.subr.mxu0 0.0
    %4055 = vmatpush1.msra.mxu0 0.0
    %4056 = vmatprep.subr.mxu0 0.0
    %4057 = vmatpush1.msra.mxu0 0.0
    %4058 = vmatprep.subr.mxu0 0.0
    %4059 = vmatpush1.msra.mxu0 0.0
    %4060 = vmatprep.subr.mxu0 0.0
    %4061 = vmatpush1.msra.mxu0 0.0
    %4062 = vmatprep.subr.mxu0 0.0
    %4063 = vmatpush1.msra.mxu0 0.0
    %4064 = vmatprep.subr.mxu0 0.0
    %4065 = vmatpush1.msra.mxu0 0.0
    %4066 = vmatprep.subr.mxu0 0.0
    %4067 = vmatpush1.msra.mxu0 0.0
    %4068 = vmatprep.subr.mxu0 0.0
    %4069 = vmatpush1.msra.mxu0 0.0
    %4070 = vmatprep.subr.mxu0 0.0
    %4071 = vmatpush1.msra.mxu0 %v3043
    %4072 = vmatprep.subr.mxu0 0.0
    %4073 = vmatpush1.msra.mxu0 %v3042
    %4074 = vmatprep.subr.mxu0 0.0
    %4075 = vmatpush1.msra.mxu0 %v3041
    %4076 = vmatprep.subr.mxu0 0.0
    %4077 = vmatpush1.msra.mxu0 %v3040
    %4078 = vmatprep.subr.mxu0 0.0
    %4079 = vmatpush2.msra.mxu0 0.0
    %4080 = vmatprep.subr.mxu0 0.0
    %4081 = vmatpush2.msra.mxu0 0.0
    %4082 = vmatprep.subr.mxu0 0.0
    %4083 = vmatpush2.msra.mxu0 0.0
    %4084 = vmatprep.subr.mxu0 0.0
    %4085 = vmatpush2.msra.mxu0 0.0
    %4086 = vmatprep.subr.mxu0 0.0
    %4087 = vmatpush2.msra.mxu0 0.0
    %4088 = vmatprep.subr.mxu0 0.0
    %4089 = vmatpush2.msra.mxu0 0.0
    %4090 = vmatprep.subr.mxu0 0.0
    %4091 = vmatpush2.msra.mxu0 0.0
    %4092 = vmatprep.subr.mxu0 0.0
    %4093 = vmatpush2.msra.mxu0 0.0
    %4094 = vmatprep.subr.mxu0 0.0
    %4095 = vmatpush2.msra.mxu0 0.0
    %4096 = vmatprep.subr.mxu0 0.0
    %4097 = vmatpush2.msra.mxu0 0.0
    %4098 = vmatprep.subr.mxu0 0.0
    %4099 = vmatpush2.msra.mxu0 0.0
    %4100 = vmatprep.subr.mxu0 0.0
    %4101 = vmatpush2.msra.mxu0 0.0
    %4102 = vmatprep.subr.mxu0 0.0
    %4103 = vmatpush2.msra.mxu0 0.0
    %4104 = vmatprep.subr.mxu0 0.0
    %4105 = vmatpush2.msra.mxu0 0.0
    %4106 = vmatprep.subr.mxu0 0.0
    %4107 = vmatpush2.msra.mxu0 0.0
    %4108 = vmatprep.subr.mxu0 0.0
    %4109 = vmatpush2.msra.mxu0 0.0
    %4110 = vmatprep.mubr.f32.mxu0 0.0
    %4111 = vmatmul.mubr.f32.gmra.mxu0 %v3858
    %v4112 = vpop.f32.mrf.mxu0
    %v4113 = vadd.f32 0.0, %v4112
    %v4114 = vpop.f32.mrf.mxu0
    %4115 = vdwg.mxu0
    %v4117 = vsel %vm3056, %v4043, 0
    %4119 = vmatprep.subr.mxu0 0.0
    %4120 = vmatpush1.msra.mxu0 0.0
    %4121 = vmatprep.subr.mxu0 0.0
    %4122 = vmatpush1.msra.mxu0 0.0
    %4123 = vmatprep.subr.mxu0 0.0
    %4124 = vmatpush1.msra.mxu0 0.0
    %4125 = vmatprep.subr.mxu0 0.0
    %4126 = vmatpush1.msra.mxu0 0.0
    %4127 = vmatprep.subr.mxu0 0.0
    %4128 = vmatpush1.msra.mxu0 0.0
    %4129 = vmatprep.subr.mxu0 0.0
    %4130 = vmatpush1.msra.mxu0 0.0
    %4131 = vmatprep.subr.mxu0 0.0
    %4132 = vmatpush1.msra.mxu0 0.0
    %4133 = vmatprep.subr.mxu0 0.0
    %4134 = vmatpush1.msra.mxu0 0.0
    %4135 = vmatprep.subr.mxu0 0.0
    %4136 = vmatpush1.msra.mxu0 0.0
    %4137 = vmatprep.subr.mxu0 0.0
    %4138 = vmatpush1.msra.mxu0 0.0
    %4139 = vmatprep.subr.mxu0 0.0
    %4140 = vmatpush1.msra.mxu0 0.0
    %4141 = vmatprep.subr.mxu0 0.0
    %4142 = vmatpush1.msra.mxu0 0.0
    %4143 = vmatprep.subr.mxu0 0.0
    %4144 = vmatpush1.msra.mxu0 %v3039
    %4145 = vmatprep.subr.mxu0 0.0
    %4146 = vmatpush1.msra.mxu0 %v3038
    %4147 = vmatprep.subr.mxu0 0.0
    %4148 = vmatpush1.msra.mxu0 %v3037
    %4149 = vmatprep.subr.mxu0 0.0
    %4150 = vmatpush1.msra.mxu0 %v3036
    %4151 = vmatprep.subr.mxu0 0.0
    %4152 = vmatpush2.msra.mxu0 0.0
    %4153 = vmatprep.subr.mxu0 0.0
    %4154 = vmatpush2.msra.mxu0 0.0
    %4155 = vmatprep.subr.mxu0 0.0
    %4156 = vmatpush2.msra.mxu0 0.0
    %4157 = vmatprep.subr.mxu0 0.0
    %4158 = vmatpush2.msra.mxu0 0.0
    %4159 = vmatprep.subr.mxu0 0.0
    %4160 = vmatpush2.msra.mxu0 0.0
    %4161 = vmatprep.subr.mxu0 0.0
    %4162 = vmatpush2.msra.mxu0 0.0
    %4163 = vmatprep.subr.mxu0 0.0
    %4164 = vmatpush2.msra.mxu0 0.0
    %4165 = vmatprep.subr.mxu0 0.0
    %4166 = vmatpush2.msra.mxu0 0.0
    %4167 = vmatprep.subr.mxu0 0.0
    %4168 = vmatpush2.msra.mxu0 0.0
    %4169 = vmatprep.subr.mxu0 0.0
    %4170 = vmatpush2.msra.mxu0 0.0
    %4171 = vmatprep.subr.mxu0 0.0
    %4172 = vmatpush2.msra.mxu0 0.0
    %4173 = vmatprep.subr.mxu0 0.0
    %4174 = vmatpush2.msra.mxu0 0.0
    %4175 = vmatprep.subr.mxu0 0.0
    %4176 = vmatpush2.msra.mxu0 0.0
    %4177 = vmatprep.subr.mxu0 0.0
    %4178 = vmatpush2.msra.mxu0 0.0
    %4179 = vmatprep.subr.mxu0 0.0
    %4180 = vmatpush2.msra.mxu0 0.0
    %4181 = vmatprep.subr.mxu0 0.0
    %4182 = vmatpush2.msra.mxu0 0.0
    %4183 = vmatprep.mubr.f32.mxu0 0.0
    %4184 = vmatmul.mubr.f32.gmra.mxu0 %v4117
    %v4185 = vpop.f32.mrf.mxu0
    %v4186 = vadd.f32 %v4113, %v4185
    %v4187 = vpop.f32.mrf.mxu0
    %4188 = vdwg.mxu0
    %v4189 = vadd.f32 %v4186, %v3207
    %v4190 = vxor.u32 %v4189, 2147483648
    %v4191 = vmul.f32 %v4190, 1.442695
    %v4192 = vpow.pop %v4191
    %v4193 = vadd.f32 %v4192, 1.0
    %v4194 = vrcp.pop %v4193
    %v4195 = vmul.f32 1.0, %v4194
    %4197 = vrot.lane.b32.xlu0 %v4189, 32
    %v4198 = vpop.permute.xlu0 %4197
    %v4200 = vmul.f32 %v4195, %v4198
    %4202 = vrot.lane.b32.xlu0 %v4200, 64
    %v4203 = vpop.permute.xlu0 %4202
    %v4205 = vadd.f32 %v4189, %v4203
    %v4206 = vtanh.pop %v4205
    %v4207 = vsub.f32 1.0, %v4195
    %4209 = vrot.lane.b32.xlu0 %v4206, 96
    %v4210 = vpop.permute.xlu0 %4209
    %v4212 = vmul.f32 %v4207, %v4210
    %v4213 = vmul.f32 %v4195, %v3854
    %v4214 = vadd.f32 %v4212, %v4213
    %4216 = vrot.lane.b32.xlu0 %v4214, 96
    %v4217 = vpop.permute.xlu0 %4216
    %v4218 = vsel %vm3056, %v4217, 0
    %4220 = vmatprep.subr.mxu0 0.0
    %4221 = vmatpush1.msra.mxu0 0.0
    %4222 = vmatprep.subr.mxu0 0.0
    %4223 = vmatpush1.msra.mxu0 0.0
    %4224 = vmatprep.subr.mxu0 0.0
    %4225 = vmatpush1.msra.mxu0 0.0
    %4226 = vmatprep.subr.mxu0 0.0
    %4227 = vmatpush1.msra.mxu0 0.0
    %4228 = vmatprep.subr.mxu0 0.0
    %4229 = vmatpush1.msra.mxu0 0.0
    %4230 = vmatprep.subr.mxu0 0.0
    %4231 = vmatpush1.msra.mxu0 0.0
    %4232 = vmatprep.subr.mxu0 0.0
    %4233 = vmatpush1.msra.mxu0 0.0
    %4234 = vmatprep.subr.mxu0 0.0
    %4235 = vmatpush1.msra.mxu0 0.0
    %4236 = vmatprep.subr.mxu0 0.0
    %4237 = vmatpush1.msra.mxu0 0.0
    %4238 = vmatprep.subr.mxu0 0.0
    %4239 = vmatpush1.msra.mxu0 0.0
    %4240 = vmatprep.subr.mxu0 0.0
    %4241 = vmatpush1.msra.mxu0 0.0
    %4242 = vmatprep.subr.mxu0 0.0
    %4243 = vmatpush1.msra.mxu0 0.0
    %4244 = vmatprep.subr.mxu0 0.0
    %4245 = vmatpush1.msra.mxu0 %v3048
    %4246 = vmatprep.subr.mxu0 0.0
    %4247 = vmatpush1.msra.mxu0 %v3047
    %4248 = vmatprep.subr.mxu0 0.0
    %4249 = vmatpush1.msra.mxu0 %v3046
    %4250 = vmatprep.subr.mxu0 0.0
    %4251 = vmatpush1.msra.mxu0 %v3045
    %4252 = vmatprep.subr.mxu0 0.0
    %4253 = vmatpush2.msra.mxu0 0.0
    %4254 = vmatprep.subr.mxu0 0.0
    %4255 = vmatpush2.msra.mxu0 0.0
    %4256 = vmatprep.subr.mxu0 0.0
    %4257 = vmatpush2.msra.mxu0 0.0
    %4258 = vmatprep.subr.mxu0 0.0
    %4259 = vmatpush2.msra.mxu0 0.0
    %4260 = vmatprep.subr.mxu0 0.0
    %4261 = vmatpush2.msra.mxu0 0.0
    %4262 = vmatprep.subr.mxu0 0.0
    %4263 = vmatpush2.msra.mxu0 0.0
    %4264 = vmatprep.subr.mxu0 0.0
    %4265 = vmatpush2.msra.mxu0 0.0
    %4266 = vmatprep.subr.mxu0 0.0
    %4267 = vmatpush2.msra.mxu0 0.0
    %4268 = vmatprep.subr.mxu0 0.0
    %4269 = vmatpush2.msra.mxu0 0.0
    %4270 = vmatprep.subr.mxu0 0.0
    %4271 = vmatpush2.msra.mxu0 0.0
    %4272 = vmatprep.subr.mxu0 0.0
    %4273 = vmatpush2.msra.mxu0 0.0
    %4274 = vmatprep.subr.mxu0 0.0
    %4275 = vmatpush2.msra.mxu0 0.0
    %4276 = vmatprep.subr.mxu0 0.0
    %4277 = vmatpush2.msra.mxu0 0.0
    %4278 = vmatprep.subr.mxu0 0.0
    %4279 = vmatpush2.msra.mxu0 0.0
    %4280 = vmatprep.subr.mxu0 0.0
    %4281 = vmatpush2.msra.mxu0 0.0
    %4282 = vmatprep.subr.mxu0 0.0
    %4283 = vmatpush2.msra.mxu0 0.0
    %4284 = vmatprep.mubr.f32.mxu0 0.0
    %4285 = vmatmul.mubr.f32.gmra.mxu0 %v4218
    %v4286 = vpop.f32.mrf.mxu0
    %v4287 = vadd.f32 %v3493, %v4286
    %v4288 = vpop.f32.mrf.mxu0
    %4289 = vdwg.mxu0
    %v4290 = vsel %vm3056, %v4287, -inf
    %4291 = vmax.xlane.f32.xlu0 %v4290
    %v4292 = vpop.xlane.xlu0 %4291
    %v4293 = vsub.f32 %v4287, %v4292
    %v4294 = vmul.f32 %v4293, 1.442695
    %v4295 = vpow.pop %v4294
    %v4296 = vsel %vm3056, %v4295, 0.0
    %4297 = vadd.xlane.f32.xlu0 %v4296
    %v4298 = vpop.xlane.xlu0 %4297
    %v4299 = vlog2.pop %v4298
    %v4300 = vmul.f32 %v4299, 0.6931472
    %v4301 = vadd.f32 %v4300, %v4292
    %s4302 = scalar_lea.vmem %s14, 16
    %v4303 = vld [vmem:[%s4302] sm:$0xff]
    %4304 = vset.pattern.permute.xlu0 0
    %4305 = vperm.xlu0 %4304, %v4303
    %v4306 = vpop.permute.xlu0 %4305
    %vm4307 = vcmp.eq.s32.totalorder %v3055, %v4306
    %v4308 = vsel %vm4307, %v4287, 0.0
    %v4309 = vsel %vm3056, %v4308, 0.0
    %4310 = vadd.xlane.f32.xlu0 %v4309
    %v4311 = vpop.xlane.xlu0 %4310
    %v4312 = vsub.f32 %v4301, %v4311
    %v4313 = vsel %vm3592, %v4312, 0.0
    %4314 = vadd.xlane.f32.xlu0 %v4313
    %v4315 = vpop.xlane.xlu0 %4314
    %v4316 = vrot.slane %v4315, 4
    %v4317 = vadd.f32 %v4315, %v4316
    %v4318 = vrot.slane %v4317, 2
    %v4319 = vadd.f32 %v4317, %v4318
    %v4320 = vrot.slane %v4319, 1
    %v4321 = vadd.f32 %v4319, %v4320
    %s4322 = vtos %v4321
    %v4323 = vstv %s4322
    %v4324 = vadd.f32 %v3964, %v4323
    %s4325 = scalar_lea.vmem %s13, 24
    %v4326 = vld [vmem:[%s4325] sm:$0xff]
    %4327 = vset.pattern.permute.xlu0 0
    %4328 = vperm.xlu0 %4327, %v4326
    %v4329 = vpop.permute.xlu0 %4328
    %vm4330 = vcmp.eq.s32.totalorder %v3055, %v4329
    %v4331 = vsel %vm4330, 1, 0
    %v4332 = vcvt.s32.f32 %v4331
    %v4334 = vsel %vm3056, %v4332, 0
    %4336 = vmatprep.subr.mxu0 0.0
    %4337 = vmatpush1.msra.mxu0 0.0
    %4338 = vmatprep.subr.mxu0 0.0
    %4339 = vmatpush1.msra.mxu0 0.0
    %4340 = vmatprep.subr.mxu0 0.0
    %4341 = vmatpush1.msra.mxu0 0.0
    %4342 = vmatprep.subr.mxu0 0.0
    %4343 = vmatpush1.msra.mxu0 0.0
    %4344 = vmatprep.subr.mxu0 0.0
    %4345 = vmatpush1.msra.mxu0 0.0
    %4346 = vmatprep.subr.mxu0 0.0
    %4347 = vmatpush1.msra.mxu0 0.0
    %4348 = vmatprep.subr.mxu0 0.0
    %4349 = vmatpush1.msra.mxu0 0.0
    %4350 = vmatprep.subr.mxu0 0.0
    %4351 = vmatpush1.msra.mxu0 0.0
    %4352 = vmatprep.subr.mxu0 0.0
    %4353 = vmatpush1.msra.mxu0 0.0
    %4354 = vmatprep.subr.mxu0 0.0
    %4355 = vmatpush1.msra.mxu0 0.0
    %4356 = vmatprep.subr.mxu0 0.0
    %4357 = vmatpush1.msra.mxu0 0.0
    %4358 = vmatprep.subr.mxu0 0.0
    %4359 = vmatpush1.msra.mxu0 0.0
    %4360 = vmatprep.subr.mxu0 0.0
    %4361 = vmatpush1.msra.mxu0 %v3053
    %4362 = vmatprep.subr.mxu0 0.0
    %4363 = vmatpush1.msra.mxu0 %v3052
    %4364 = vmatprep.subr.mxu0 0.0
    %4365 = vmatpush1.msra.mxu0 %v3051
    %4366 = vmatprep.subr.mxu0 0.0
    %4367 = vmatpush1.msra.mxu0 %v3050
    %4368 = vmatprep.subr.mxu0 0.0
    %4369 = vmatpush2.msra.mxu0 0.0
    %4370 = vmatprep.subr.mxu0 0.0
    %4371 = vmatpush2.msra.mxu0 0.0
    %4372 = vmatprep.subr.mxu0 0.0
    %4373 = vmatpush2.msra.mxu0 0.0
    %4374 = vmatprep.subr.mxu0 0.0
    %4375 = vmatpush2.msra.mxu0 0.0
    %4376 = vmatprep.subr.mxu0 0.0
    %4377 = vmatpush2.msra.mxu0 0.0
    %4378 = vmatprep.subr.mxu0 0.0
    %4379 = vmatpush2.msra.mxu0 0.0
    %4380 = vmatprep.subr.mxu0 0.0
    %4381 = vmatpush2.msra.mxu0 0.0
    %4382 = vmatprep.subr.mxu0 0.0
    %4383 = vmatpush2.msra.mxu0 0.0
    %4384 = vmatprep.subr.mxu0 0.0
    %4385 = vmatpush2.msra.mxu0 0.0
    %4386 = vmatprep.subr.mxu0 0.0
    %4387 = vmatpush2.msra.mxu0 0.0
    %4388 = vmatprep.subr.mxu0 0.0
    %4389 = vmatpush2.msra.mxu0 0.0
    %4390 = vmatprep.subr.mxu0 0.0
    %4391 = vmatpush2.msra.mxu0 0.0
    %4392 = vmatprep.subr.mxu0 0.0
    %4393 = vmatpush2.msra.mxu0 0.0
    %4394 = vmatprep.subr.mxu0 0.0
    %4395 = vmatpush2.msra.mxu0 0.0
    %4396 = vmatprep.subr.mxu0 0.0
    %4397 = vmatpush2.msra.mxu0 0.0
    %4398 = vmatprep.subr.mxu0 0.0
    %4399 = vmatpush2.msra.mxu0 0.0
    %4400 = vmatprep.mubr.f32.mxu0 0.0
    %4401 = vmatmul.mubr.f32.gmra.mxu0 %v4334
    %v4402 = vpop.f32.mrf.mxu0
    %v4403 = vadd.f32 0.0, %v4402
    %v4404 = vpop.f32.mrf.mxu0
    %4405 = vdwg.mxu0
    %4406 = vmatprep.subr.mxu0 0.0
    %4407 = vmatpush1.msra.mxu0 0.0
    %4408 = vmatprep.subr.mxu0 0.0
    %4409 = vmatpush1.msra.mxu0 0.0
    %4410 = vmatprep.subr.mxu0 0.0
    %4411 = vmatpush1.msra.mxu0 0.0
    %4412 = vmatprep.subr.mxu0 0.0
    %4413 = vmatpush1.msra.mxu0 0.0
    %4414 = vmatprep.subr.mxu0 0.0
    %4415 = vmatpush1.msra.mxu0 0.0
    %4416 = vmatprep.subr.mxu0 0.0
    %4417 = vmatpush1.msra.mxu0 0.0
    %4418 = vmatprep.subr.mxu0 0.0
    %4419 = vmatpush1.msra.mxu0 0.0
    %4420 = vmatprep.subr.mxu0 0.0
    %4421 = vmatpush1.msra.mxu0 0.0
    %4422 = vmatprep.subr.mxu0 0.0
    %4423 = vmatpush1.msra.mxu0 0.0
    %4424 = vmatprep.subr.mxu0 0.0
    %4425 = vmatpush1.msra.mxu0 0.0
    %4426 = vmatprep.subr.mxu0 0.0
    %4427 = vmatpush1.msra.mxu0 0.0
    %4428 = vmatprep.subr.mxu0 0.0
    %4429 = vmatpush1.msra.mxu0 0.0
    %4430 = vmatprep.subr.mxu0 0.0
    %4431 = vmatpush1.msra.mxu0 %v3043
    %4432 = vmatprep.subr.mxu0 0.0
    %4433 = vmatpush1.msra.mxu0 %v3042
    %4434 = vmatprep.subr.mxu0 0.0
    %4435 = vmatpush1.msra.mxu0 %v3041
    %4436 = vmatprep.subr.mxu0 0.0
    %4437 = vmatpush1.msra.mxu0 %v3040
    %4438 = vmatprep.subr.mxu0 0.0
    %4439 = vmatpush2.msra.mxu0 0.0
    %4440 = vmatprep.subr.mxu0 0.0
    %4441 = vmatpush2.msra.mxu0 0.0
    %4442 = vmatprep.subr.mxu0 0.0
    %4443 = vmatpush2.msra.mxu0 0.0
    %4444 = vmatprep.subr.mxu0 0.0
    %4445 = vmatpush2.msra.mxu0 0.0
    %4446 = vmatprep.subr.mxu0 0.0
    %4447 = vmatpush2.msra.mxu0 0.0
    %4448 = vmatprep.subr.mxu0 0.0
    %4449 = vmatpush2.msra.mxu0 0.0
    %4450 = vmatprep.subr.mxu0 0.0
    %4451 = vmatpush2.msra.mxu0 0.0
    %4452 = vmatprep.subr.mxu0 0.0
    %4453 = vmatpush2.msra.mxu0 0.0
    %4454 = vmatprep.subr.mxu0 0.0
    %4455 = vmatpush2.msra.mxu0 0.0
    %4456 = vmatprep.subr.mxu0 0.0
    %4457 = vmatpush2.msra.mxu0 0.0
    %4458 = vmatprep.subr.mxu0 0.0
    %4459 = vmatpush2.msra.mxu0 0.0
    %4460 = vmatprep.subr.mxu0 0.0
    %4461 = vmatpush2.msra.mxu0 0.0
    %4462 = vmatprep.subr.mxu0 0.0
    %4463 = vmatpush2.msra.mxu0 0.0
    %4464 = vmatprep.subr.mxu0 0.0
    %4465 = vmatpush2.msra.mxu0 0.0
    %4466 = vmatprep.subr.mxu0 0.0
    %4467 = vmatpush2.msra.mxu0 0.0
    %4468 = vmatprep.subr.mxu0 0.0
    %4469 = vmatpush2.msra.mxu0 0.0
    %4470 = vmatprep.mubr.f32.mxu0 0.0
    %4471 = vmatmul.mubr.f32.gmra.mxu0 %v4218
    %v4472 = vpop.f32.mrf.mxu0
    %v4473 = vadd.f32 0.0, %v4472
    %v4474 = vpop.f32.mrf.mxu0
    %4475 = vdwg.mxu0
    %v4477 = vsel %vm3056, %v4403, 0
    %4479 = vmatprep.subr.mxu0 0.0
    %4480 = vmatpush1.msra.mxu0 0.0
    %4481 = vmatprep.subr.mxu0 0.0
    %4482 = vmatpush1.msra.mxu0 0.0
    %4483 = vmatprep.subr.mxu0 0.0
    %4484 = vmatpush1.msra.mxu0 0.0
    %4485 = vmatprep.subr.mxu0 0.0
    %4486 = vmatpush1.msra.mxu0 0.0
    %4487 = vmatprep.subr.mxu0 0.0
    %4488 = vmatpush1.msra.mxu0 0.0
    %4489 = vmatprep.subr.mxu0 0.0
    %4490 = vmatpush1.msra.mxu0 0.0
    %4491 = vmatprep.subr.mxu0 0.0
    %4492 = vmatpush1.msra.mxu0 0.0
    %4493 = vmatprep.subr.mxu0 0.0
    %4494 = vmatpush1.msra.mxu0 0.0
    %4495 = vmatprep.subr.mxu0 0.0
    %4496 = vmatpush1.msra.mxu0 0.0
    %4497 = vmatprep.subr.mxu0 0.0
    %4498 = vmatpush1.msra.mxu0 0.0
    %4499 = vmatprep.subr.mxu0 0.0
    %4500 = vmatpush1.msra.mxu0 0.0
    %4501 = vmatprep.subr.mxu0 0.0
    %4502 = vmatpush1.msra.mxu0 0.0
    %4503 = vmatprep.subr.mxu0 0.0
    %4504 = vmatpush1.msra.mxu0 %v3039
    %4505 = vmatprep.subr.mxu0 0.0
    %4506 = vmatpush1.msra.mxu0 %v3038
    %4507 = vmatprep.subr.mxu0 0.0
    %4508 = vmatpush1.msra.mxu0 %v3037
    %4509 = vmatprep.subr.mxu0 0.0
    %4510 = vmatpush1.msra.mxu0 %v3036
    %4511 = vmatprep.subr.mxu0 0.0
    %4512 = vmatpush2.msra.mxu0 0.0
    %4513 = vmatprep.subr.mxu0 0.0
    %4514 = vmatpush2.msra.mxu0 0.0
    %4515 = vmatprep.subr.mxu0 0.0
    %4516 = vmatpush2.msra.mxu0 0.0
    %4517 = vmatprep.subr.mxu0 0.0
    %4518 = vmatpush2.msra.mxu0 0.0
    %4519 = vmatprep.subr.mxu0 0.0
    %4520 = vmatpush2.msra.mxu0 0.0
    %4521 = vmatprep.subr.mxu0 0.0
    %4522 = vmatpush2.msra.mxu0 0.0
    %4523 = vmatprep.subr.mxu0 0.0
    %4524 = vmatpush2.msra.mxu0 0.0
    %4525 = vmatprep.subr.mxu0 0.0
    %4526 = vmatpush2.msra.mxu0 0.0
    %4527 = vmatprep.subr.mxu0 0.0
    %4528 = vmatpush2.msra.mxu0 0.0
    %4529 = vmatprep.subr.mxu0 0.0
    %4530 = vmatpush2.msra.mxu0 0.0
    %4531 = vmatprep.subr.mxu0 0.0
    %4532 = vmatpush2.msra.mxu0 0.0
    %4533 = vmatprep.subr.mxu0 0.0
    %4534 = vmatpush2.msra.mxu0 0.0
    %4535 = vmatprep.subr.mxu0 0.0
    %4536 = vmatpush2.msra.mxu0 0.0
    %4537 = vmatprep.subr.mxu0 0.0
    %4538 = vmatpush2.msra.mxu0 0.0
    %4539 = vmatprep.subr.mxu0 0.0
    %4540 = vmatpush2.msra.mxu0 0.0
    %4541 = vmatprep.subr.mxu0 0.0
    %4542 = vmatpush2.msra.mxu0 0.0
    %4543 = vmatprep.mubr.f32.mxu0 0.0
    %4544 = vmatmul.mubr.f32.gmra.mxu0 %v4477
    %v4545 = vpop.f32.mrf.mxu0
    %v4546 = vadd.f32 %v4473, %v4545
    %v4547 = vpop.f32.mrf.mxu0
    %4548 = vdwg.mxu0
    %v4549 = vadd.f32 %v4546, %v3207
    %v4550 = vxor.u32 %v4549, 2147483648
    %v4551 = vmul.f32 %v4550, 1.442695
    %v4552 = vpow.pop %v4551
    %v4553 = vadd.f32 %v4552, 1.0
    %v4554 = vrcp.pop %v4553
    %v4555 = vmul.f32 1.0, %v4554
    %4557 = vrot.lane.b32.xlu0 %v4549, 32
    %v4558 = vpop.permute.xlu0 %4557
    %v4560 = vmul.f32 %v4555, %v4558
    %4562 = vrot.lane.b32.xlu0 %v4560, 64
    %v4563 = vpop.permute.xlu0 %4562
    %v4565 = vadd.f32 %v4549, %v4563
    %v4566 = vtanh.pop %v4565
    %v4567 = vsub.f32 1.0, %v4555
    %4569 = vrot.lane.b32.xlu0 %v4566, 96
    %v4570 = vpop.permute.xlu0 %4569
    %v4572 = vmul.f32 %v4567, %v4570
    %v4573 = vmul.f32 %v4555, %v4214
    %v4574 = vadd.f32 %v4572, %v4573
    %4576 = vrot.lane.b32.xlu0 %v4574, 96
    %v4577 = vpop.permute.xlu0 %4576
    %v4578 = vsel %vm3056, %v4577, 0
    %4580 = vmatprep.subr.mxu0 0.0
    %4581 = vmatpush1.msra.mxu0 0.0
    %4582 = vmatprep.subr.mxu0 0.0
    %4583 = vmatpush1.msra.mxu0 0.0
    %4584 = vmatprep.subr.mxu0 0.0
    %4585 = vmatpush1.msra.mxu0 0.0
    %4586 = vmatprep.subr.mxu0 0.0
    %4587 = vmatpush1.msra.mxu0 0.0
    %4588 = vmatprep.subr.mxu0 0.0
    %4589 = vmatpush1.msra.mxu0 0.0
    %4590 = vmatprep.subr.mxu0 0.0
    %4591 = vmatpush1.msra.mxu0 0.0
    %4592 = vmatprep.subr.mxu0 0.0
    %4593 = vmatpush1.msra.mxu0 0.0
    %4594 = vmatprep.subr.mxu0 0.0
    %4595 = vmatpush1.msra.mxu0 0.0
    %4596 = vmatprep.subr.mxu0 0.0
    %4597 = vmatpush1.msra.mxu0 0.0
    %4598 = vmatprep.subr.mxu0 0.0
    %4599 = vmatpush1.msra.mxu0 0.0
    %4600 = vmatprep.subr.mxu0 0.0
    %4601 = vmatpush1.msra.mxu0 0.0
    %4602 = vmatprep.subr.mxu0 0.0
    %4603 = vmatpush1.msra.mxu0 0.0
    %4604 = vmatprep.subr.mxu0 0.0
    %4605 = vmatpush1.msra.mxu0 %v3048
    %4606 = vmatprep.subr.mxu0 0.0
    %4607 = vmatpush1.msra.mxu0 %v3047
    %4608 = vmatprep.subr.mxu0 0.0
    %4609 = vmatpush1.msra.mxu0 %v3046
    %4610 = vmatprep.subr.mxu0 0.0
    %4611 = vmatpush1.msra.mxu0 %v3045
    %4612 = vmatprep.subr.mxu0 0.0
    %4613 = vmatpush2.msra.mxu0 0.0
    %4614 = vmatprep.subr.mxu0 0.0
    %4615 = vmatpush2.msra.mxu0 0.0
    %4616 = vmatprep.subr.mxu0 0.0
    %4617 = vmatpush2.msra.mxu0 0.0
    %4618 = vmatprep.subr.mxu0 0.0
    %4619 = vmatpush2.msra.mxu0 0.0
    %4620 = vmatprep.subr.mxu0 0.0
    %4621 = vmatpush2.msra.mxu0 0.0
    %4622 = vmatprep.subr.mxu0 0.0
    %4623 = vmatpush2.msra.mxu0 0.0
    %4624 = vmatprep.subr.mxu0 0.0
    %4625 = vmatpush2.msra.mxu0 0.0
    %4626 = vmatprep.subr.mxu0 0.0
    %4627 = vmatpush2.msra.mxu0 0.0
    %4628 = vmatprep.subr.mxu0 0.0
    %4629 = vmatpush2.msra.mxu0 0.0
    %4630 = vmatprep.subr.mxu0 0.0
    %4631 = vmatpush2.msra.mxu0 0.0
    %4632 = vmatprep.subr.mxu0 0.0
    %4633 = vmatpush2.msra.mxu0 0.0
    %4634 = vmatprep.subr.mxu0 0.0
    %4635 = vmatpush2.msra.mxu0 0.0
    %4636 = vmatprep.subr.mxu0 0.0
    %4637 = vmatpush2.msra.mxu0 0.0
    %4638 = vmatprep.subr.mxu0 0.0
    %4639 = vmatpush2.msra.mxu0 0.0
    %4640 = vmatprep.subr.mxu0 0.0
    %4641 = vmatpush2.msra.mxu0 0.0
    %4642 = vmatprep.subr.mxu0 0.0
    %4643 = vmatpush2.msra.mxu0 0.0
    %4644 = vmatprep.mubr.f32.mxu0 0.0
    %4645 = vmatmul.mubr.f32.gmra.mxu0 %v4578
    %v4646 = vpop.f32.mrf.mxu0
    %v4647 = vadd.f32 %v3493, %v4646
    %v4648 = vpop.f32.mrf.mxu0
    %4649 = vdwg.mxu0
    %v4650 = vsel %vm3056, %v4647, -inf
    %4651 = vmax.xlane.f32.xlu0 %v4650
    %v4652 = vpop.xlane.xlu0 %4651
    %v4653 = vsub.f32 %v4647, %v4652
    %v4654 = vmul.f32 %v4653, 1.442695
    %v4655 = vpow.pop %v4654
    %v4656 = vsel %vm3056, %v4655, 0.0
    %4657 = vadd.xlane.f32.xlu0 %v4656
    %v4658 = vpop.xlane.xlu0 %4657
    %v4659 = vlog2.pop %v4658
    %v4660 = vmul.f32 %v4659, 0.6931472
    %v4661 = vadd.f32 %v4660, %v4652
    %s4662 = scalar_lea.vmem %s14, 24
    %v4663 = vld [vmem:[%s4662] sm:$0xff]
    %4664 = vset.pattern.permute.xlu0 0
    %4665 = vperm.xlu0 %4664, %v4663
    %v4666 = vpop.permute.xlu0 %4665
    %vm4667 = vcmp.eq.s32.totalorder %v3055, %v4666
    %v4668 = vsel %vm4667, %v4647, 0.0
    %v4669 = vsel %vm3056, %v4668, 0.0
    %4670 = vadd.xlane.f32.xlu0 %v4669
    %v4671 = vpop.xlane.xlu0 %4670
    %v4672 = vsub.f32 %v4661, %v4671
    %v4673 = vsel %vm3592, %v4672, 0.0
    %4674 = vadd.xlane.f32.xlu0 %v4673
    %v4675 = vpop.xlane.xlu0 %4674
    %v4676 = vrot.slane %v4675, 4
    %v4677 = vadd.f32 %v4675, %v4676
    %v4678 = vrot.slane %v4677, 2
    %v4679 = vadd.f32 %v4677, %v4678
    %v4680 = vrot.slane %v4679, 1
    %v4681 = vadd.f32 %v4679, %v4680
    %s4682 = vtos %v4681
    %v4683 = vstv %s4682
    %v4684 = vadd.f32 %v4324, %v4683
    %s4685 = scalar_lea.vmem %s13, 32
    %v4686 = vld [vmem:[%s4685] sm:$0xff]
    %4687 = vset.pattern.permute.xlu0 0
    %4688 = vperm.xlu0 %4687, %v4686
    %v4689 = vpop.permute.xlu0 %4688
    %vm4690 = vcmp.eq.s32.totalorder %v3055, %v4689
    %v4691 = vsel %vm4690, 1, 0
    %v4692 = vcvt.s32.f32 %v4691
    %v4694 = vsel %vm3056, %v4692, 0
    %4696 = vmatprep.subr.mxu0 0.0
    %4697 = vmatpush1.msra.mxu0 0.0
    %4698 = vmatprep.subr.mxu0 0.0
    %4699 = vmatpush1.msra.mxu0 0.0
    %4700 = vmatprep.subr.mxu0 0.0
    %4701 = vmatpush1.msra.mxu0 0.0
    %4702 = vmatprep.subr.mxu0 0.0
    %4703 = vmatpush1.msra.mxu0 0.0
    %4704 = vmatprep.subr.mxu0 0.0
    %4705 = vmatpush1.msra.mxu0 0.0
    %4706 = vmatprep.subr.mxu0 0.0
    %4707 = vmatpush1.msra.mxu0 0.0
    %4708 = vmatprep.subr.mxu0 0.0
    %4709 = vmatpush1.msra.mxu0 0.0
    %4710 = vmatprep.subr.mxu0 0.0
    %4711 = vmatpush1.msra.mxu0 0.0
    %4712 = vmatprep.subr.mxu0 0.0
    %4713 = vmatpush1.msra.mxu0 0.0
    %4714 = vmatprep.subr.mxu0 0.0
    %4715 = vmatpush1.msra.mxu0 0.0
    %4716 = vmatprep.subr.mxu0 0.0
    %4717 = vmatpush1.msra.mxu0 0.0
    %4718 = vmatprep.subr.mxu0 0.0
    %4719 = vmatpush1.msra.mxu0 0.0
    %4720 = vmatprep.subr.mxu0 0.0
    %4721 = vmatpush1.msra.mxu0 %v3053
    %4722 = vmatprep.subr.mxu0 0.0
    %4723 = vmatpush1.msra.mxu0 %v3052
    %4724 = vmatprep.subr.mxu0 0.0
    %4725 = vmatpush1.msra.mxu0 %v3051
    %4726 = vmatprep.subr.mxu0 0.0
    %4727 = vmatpush1.msra.mxu0 %v3050
    %4728 = vmatprep.subr.mxu0 0.0
    %4729 = vmatpush2.msra.mxu0 0.0
    %4730 = vmatprep.subr.mxu0 0.0
    %4731 = vmatpush2.msra.mxu0 0.0
    %4732 = vmatprep.subr.mxu0 0.0
    %4733 = vmatpush2.msra.mxu0 0.0
    %4734 = vmatprep.subr.mxu0 0.0
    %4735 = vmatpush2.msra.mxu0 0.0
    %4736 = vmatprep.subr.mxu0 0.0
    %4737 = vmatpush2.msra.mxu0 0.0
    %4738 = vmatprep.subr.mxu0 0.0
    %4739 = vmatpush2.msra.mxu0 0.0
    %4740 = vmatprep.subr.mxu0 0.0
    %4741 = vmatpush2.msra.mxu0 0.0
    %4742 = vmatprep.subr.mxu0 0.0
    %4743 = vmatpush2.msra.mxu0 0.0
    %4744 = vmatprep.subr.mxu0 0.0
    %4745 = vmatpush2.msra.mxu0 0.0
    %4746 = vmatprep.subr.mxu0 0.0
    %4747 = vmatpush2.msra.mxu0 0.0
    %4748 = vmatprep.subr.mxu0 0.0
    %4749 = vmatpush2.msra.mxu0 0.0
    %4750 = vmatprep.subr.mxu0 0.0
    %4751 = vmatpush2.msra.mxu0 0.0
    %4752 = vmatprep.subr.mxu0 0.0
    %4753 = vmatpush2.msra.mxu0 0.0
    %4754 = vmatprep.subr.mxu0 0.0
    %4755 = vmatpush2.msra.mxu0 0.0
    %4756 = vmatprep.subr.mxu0 0.0
    %4757 = vmatpush2.msra.mxu0 0.0
    %4758 = vmatprep.subr.mxu0 0.0
    %4759 = vmatpush2.msra.mxu0 0.0
    %4760 = vmatprep.mubr.f32.mxu0 0.0
    %4761 = vmatmul.mubr.f32.gmra.mxu0 %v4694
    %v4762 = vpop.f32.mrf.mxu0
    %v4763 = vadd.f32 0.0, %v4762
    %v4764 = vpop.f32.mrf.mxu0
    %4765 = vdwg.mxu0
    %4766 = vmatprep.subr.mxu0 0.0
    %4767 = vmatpush1.msra.mxu0 0.0
    %4768 = vmatprep.subr.mxu0 0.0
    %4769 = vmatpush1.msra.mxu0 0.0
    %4770 = vmatprep.subr.mxu0 0.0
    %4771 = vmatpush1.msra.mxu0 0.0
    %4772 = vmatprep.subr.mxu0 0.0
    %4773 = vmatpush1.msra.mxu0 0.0
    %4774 = vmatprep.subr.mxu0 0.0
    %4775 = vmatpush1.msra.mxu0 0.0
    %4776 = vmatprep.subr.mxu0 0.0
    %4777 = vmatpush1.msra.mxu0 0.0
    %4778 = vmatprep.subr.mxu0 0.0
    %4779 = vmatpush1.msra.mxu0 0.0
    %4780 = vmatprep.subr.mxu0 0.0
    %4781 = vmatpush1.msra.mxu0 0.0
    %4782 = vmatprep.subr.mxu0 0.0
    %4783 = vmatpush1.msra.mxu0 0.0
    %4784 = vmatprep.subr.mxu0 0.0
    %4785 = vmatpush1.msra.mxu0 0.0
    %4786 = vmatprep.subr.mxu0 0.0
    %4787 = vmatpush1.msra.mxu0 0.0
    %4788 = vmatprep.subr.mxu0 0.0
    %4789 = vmatpush1.msra.mxu0 0.0
    %4790 = vmatprep.subr.mxu0 0.0
    %4791 = vmatpush1.msra.mxu0 %v3043
    %4792 = vmatprep.subr.mxu0 0.0
    %4793 = vmatpush1.msra.mxu0 %v3042
    %4794 = vmatprep.subr.mxu0 0.0
    %4795 = vmatpush1.msra.mxu0 %v3041
    %4796 = vmatprep.subr.mxu0 0.0
    %4797 = vmatpush1.msra.mxu0 %v3040
    %4798 = vmatprep.subr.mxu0 0.0
    %4799 = vmatpush2.msra.mxu0 0.0
    %4800 = vmatprep.subr.mxu0 0.0
    %4801 = vmatpush2.msra.mxu0 0.0
    %4802 = vmatprep.subr.mxu0 0.0
    %4803 = vmatpush2.msra.mxu0 0.0
    %4804 = vmatprep.subr.mxu0 0.0
    %4805 = vmatpush2.msra.mxu0 0.0
    %4806 = vmatprep.subr.mxu0 0.0
    %4807 = vmatpush2.msra.mxu0 0.0
    %4808 = vmatprep.subr.mxu0 0.0
    %4809 = vmatpush2.msra.mxu0 0.0
    %4810 = vmatprep.subr.mxu0 0.0
    %4811 = vmatpush2.msra.mxu0 0.0
    %4812 = vmatprep.subr.mxu0 0.0
    %4813 = vmatpush2.msra.mxu0 0.0
    %4814 = vmatprep.subr.mxu0 0.0
    %4815 = vmatpush2.msra.mxu0 0.0
    %4816 = vmatprep.subr.mxu0 0.0
    %4817 = vmatpush2.msra.mxu0 0.0
    %4818 = vmatprep.subr.mxu0 0.0
    %4819 = vmatpush2.msra.mxu0 0.0
    %4820 = vmatprep.subr.mxu0 0.0
    %4821 = vmatpush2.msra.mxu0 0.0
    %4822 = vmatprep.subr.mxu0 0.0
    %4823 = vmatpush2.msra.mxu0 0.0
    %4824 = vmatprep.subr.mxu0 0.0
    %4825 = vmatpush2.msra.mxu0 0.0
    %4826 = vmatprep.subr.mxu0 0.0
    %4827 = vmatpush2.msra.mxu0 0.0
    %4828 = vmatprep.subr.mxu0 0.0
    %4829 = vmatpush2.msra.mxu0 0.0
    %4830 = vmatprep.mubr.f32.mxu0 0.0
    %4831 = vmatmul.mubr.f32.gmra.mxu0 %v4578
    %v4832 = vpop.f32.mrf.mxu0
    %v4833 = vadd.f32 0.0, %v4832
    %v4834 = vpop.f32.mrf.mxu0
    %4835 = vdwg.mxu0
    %v4837 = vsel %vm3056, %v4763, 0
    %4839 = vmatprep.subr.mxu0 0.0
    %4840 = vmatpush1.msra.mxu0 0.0
    %4841 = vmatprep.subr.mxu0 0.0
    %4842 = vmatpush1.msra.mxu0 0.0
    %4843 = vmatprep.subr.mxu0 0.0
    %4844 = vmatpush1.msra.mxu0 0.0
    %4845 = vmatprep.subr.mxu0 0.0
    %4846 = vmatpush1.msra.mxu0 0.0
    %4847 = vmatprep.subr.mxu0 0.0
    %4848 = vmatpush1.msra.mxu0 0.0
    %4849 = vmatprep.subr.mxu0 0.0
    %4850 = vmatpush1.msra.mxu0 0.0
    %4851 = vmatprep.subr.mxu0 0.0
    %4852 = vmatpush1.msra.mxu0 0.0
    %4853 = vmatprep.subr.mxu0 0.0
    %4854 = vmatpush1.msra.mxu0 0.0
    %4855 = vmatprep.subr.mxu0 0.0
    %4856 = vmatpush1.msra.mxu0 0.0
    %4857 = vmatprep.subr.mxu0 0.0
    %4858 = vmatpush1.msra.mxu0 0.0
    %4859 = vmatprep.subr.mxu0 0.0
    %4860 = vmatpush1.msra.mxu0 0.0
    %4861 = vmatprep.subr.mxu0 0.0
    %4862 = vmatpush1.msra.mxu0 0.0
    %4863 = vmatprep.subr.mxu0 0.0
    %4864 = vmatpush1.msra.mxu0 %v3039
    %4865 = vmatprep.subr.mxu0 0.0
    %4866 = vmatpush1.msra.mxu0 %v3038
    %4867 = vmatprep.subr.mxu0 0.0
    %4868 = vmatpush1.msra.mxu0 %v3037
    %4869 = vmatprep.subr.mxu0 0.0
    %4870 = vmatpush1.msra.mxu0 %v3036
    %4871 = vmatprep.subr.mxu0 0.0
    %4872 = vmatpush2.msra.mxu0 0.0
    %4873 = vmatprep.subr.mxu0 0.0
    %4874 = vmatpush2.msra.mxu0 0.0
    %4875 = vmatprep.subr.mxu0 0.0
    %4876 = vmatpush2.msra.mxu0 0.0
    %4877 = vmatprep.subr.mxu0 0.0
    %4878 = vmatpush2.msra.mxu0 0.0
    %4879 = vmatprep.subr.mxu0 0.0
    %4880 = vmatpush2.msra.mxu0 0.0
    %4881 = vmatprep.subr.mxu0 0.0
    %4882 = vmatpush2.msra.mxu0 0.0
    %4883 = vmatprep.subr.mxu0 0.0
    %4884 = vmatpush2.msra.mxu0 0.0
    %4885 = vmatprep.subr.mxu0 0.0
    %4886 = vmatpush2.msra.mxu0 0.0
    %4887 = vmatprep.subr.mxu0 0.0
    %4888 = vmatpush2.msra.mxu0 0.0
    %4889 = vmatprep.subr.mxu0 0.0
    %4890 = vmatpush2.msra.mxu0 0.0
    %4891 = vmatprep.subr.mxu0 0.0
    %4892 = vmatpush2.msra.mxu0 0.0
    %4893 = vmatprep.subr.mxu0 0.0
    %4894 = vmatpush2.msra.mxu0 0.0
    %4895 = vmatprep.subr.mxu0 0.0
    %4896 = vmatpush2.msra.mxu0 0.0
    %4897 = vmatprep.subr.mxu0 0.0
    %4898 = vmatpush2.msra.mxu0 0.0
    %4899 = vmatprep.subr.mxu0 0.0
    %4900 = vmatpush2.msra.mxu0 0.0
    %4901 = vmatprep.subr.mxu0 0.0
    %4902 = vmatpush2.msra.mxu0 0.0
    %4903 = vmatprep.mubr.f32.mxu0 0.0
    %4904 = vmatmul.mubr.f32.gmra.mxu0 %v4837
    %v4905 = vpop.f32.mrf.mxu0
    %v4906 = vadd.f32 %v4833, %v4905
    %v4907 = vpop.f32.mrf.mxu0
    %4908 = vdwg.mxu0
    %v4909 = vadd.f32 %v4906, %v3207
    %v4910 = vxor.u32 %v4909, 2147483648
    %v4911 = vmul.f32 %v4910, 1.442695
    %v4912 = vpow.pop %v4911
    %v4913 = vadd.f32 %v4912, 1.0
    %v4914 = vrcp.pop %v4913
    %v4915 = vmul.f32 1.0, %v4914
    %4917 = vrot.lane.b32.xlu0 %v4909, 32
    %v4918 = vpop.permute.xlu0 %4917
    %v4920 = vmul.f32 %v4915, %v4918
    %4922 = vrot.lane.b32.xlu0 %v4920, 64
    %v4923 = vpop.permute.xlu0 %4922
    %v4925 = vadd.f32 %v4909, %v4923
    %v4926 = vtanh.pop %v4925
    %v4927 = vsub.f32 1.0, %v4915
    %4929 = vrot.lane.b32.xlu0 %v4926, 96
    %v4930 = vpop.permute.xlu0 %4929
    %v4932 = vmul.f32 %v4927, %v4930
    %v4933 = vmul.f32 %v4915, %v4574
    %v4934 = vadd.f32 %v4932, %v4933
    %4936 = vrot.lane.b32.xlu0 %v4934, 96
    %v4937 = vpop.permute.xlu0 %4936
    %v4938 = vsel %vm3056, %v4937, 0
    %4940 = vmatprep.subr.mxu0 0.0
    %4941 = vmatpush1.msra.mxu0 0.0
    %4942 = vmatprep.subr.mxu0 0.0
    %4943 = vmatpush1.msra.mxu0 0.0
    %4944 = vmatprep.subr.mxu0 0.0
    %4945 = vmatpush1.msra.mxu0 0.0
    %4946 = vmatprep.subr.mxu0 0.0
    %4947 = vmatpush1.msra.mxu0 0.0
    %4948 = vmatprep.subr.mxu0 0.0
    %4949 = vmatpush1.msra.mxu0 0.0
    %4950 = vmatprep.subr.mxu0 0.0
    %4951 = vmatpush1.msra.mxu0 0.0
    %4952 = vmatprep.subr.mxu0 0.0
    %4953 = vmatpush1.msra.mxu0 0.0
    %4954 = vmatprep.subr.mxu0 0.0
    %4955 = vmatpush1.msra.mxu0 0.0
    %4956 = vmatprep.subr.mxu0 0.0
    %4957 = vmatpush1.msra.mxu0 0.0
    %4958 = vmatprep.subr.mxu0 0.0
    %4959 = vmatpush1.msra.mxu0 0.0
    %4960 = vmatprep.subr.mxu0 0.0
    %4961 = vmatpush1.msra.mxu0 0.0
    %4962 = vmatprep.subr.mxu0 0.0
    %4963 = vmatpush1.msra.mxu0 0.0
    %4964 = vmatprep.subr.mxu0 0.0
    %4965 = vmatpush1.msra.mxu0 %v3048
    %4966 = vmatprep.subr.mxu0 0.0
    %4967 = vmatpush1.msra.mxu0 %v3047
    %4968 = vmatprep.subr.mxu0 0.0
    %4969 = vmatpush1.msra.mxu0 %v3046
    %4970 = vmatprep.subr.mxu0 0.0
    %4971 = vmatpush1.msra.mxu0 %v3045
    %4972 = vmatprep.subr.mxu0 0.0
    %4973 = vmatpush2.msra.mxu0 0.0
    %4974 = vmatprep.subr.mxu0 0.0
    %4975 = vmatpush2.msra.mxu0 0.0
    %4976 = vmatprep.subr.mxu0 0.0
    %4977 = vmatpush2.msra.mxu0 0.0
    %4978 = vmatprep.subr.mxu0 0.0
    %4979 = vmatpush2.msra.mxu0 0.0
    %4980 = vmatprep.subr.mxu0 0.0
    %4981 = vmatpush2.msra.mxu0 0.0
    %4982 = vmatprep.subr.mxu0 0.0
    %4983 = vmatpush2.msra.mxu0 0.0
    %4984 = vmatprep.subr.mxu0 0.0
    %4985 = vmatpush2.msra.mxu0 0.0
    %4986 = vmatprep.subr.mxu0 0.0
    %4987 = vmatpush2.msra.mxu0 0.0
    %4988 = vmatprep.subr.mxu0 0.0
    %4989 = vmatpush2.msra.mxu0 0.0
    %4990 = vmatprep.subr.mxu0 0.0
    %4991 = vmatpush2.msra.mxu0 0.0
    %4992 = vmatprep.subr.mxu0 0.0
    %4993 = vmatpush2.msra.mxu0 0.0
    %4994 = vmatprep.subr.mxu0 0.0
    %4995 = vmatpush2.msra.mxu0 0.0
    %4996 = vmatprep.subr.mxu0 0.0
    %4997 = vmatpush2.msra.mxu0 0.0
    %4998 = vmatprep.subr.mxu0 0.0
    %4999 = vmatpush2.msra.mxu0 0.0
    %5000 = vmatprep.subr.mxu0 0.0
    %5001 = vmatpush2.msra.mxu0 0.0
    %5002 = vmatprep.subr.mxu0 0.0
    %5003 = vmatpush2.msra.mxu0 0.0
    %5004 = vmatprep.mubr.f32.mxu0 0.0
    %5005 = vmatmul.mubr.f32.gmra.mxu0 %v4938
    %v5006 = vpop.f32.mrf.mxu0
    %v5007 = vadd.f32 %v3493, %v5006
    %v5008 = vpop.f32.mrf.mxu0
    %5009 = vdwg.mxu0
    %v5010 = vsel %vm3056, %v5007, -inf
    %5011 = vmax.xlane.f32.xlu0 %v5010
    %v5012 = vpop.xlane.xlu0 %5011
    %v5013 = vsub.f32 %v5007, %v5012
    %v5014 = vmul.f32 %v5013, 1.442695
    %v5015 = vpow.pop %v5014
    %v5016 = vsel %vm3056, %v5015, 0.0
    %5017 = vadd.xlane.f32.xlu0 %v5016
    %v5018 = vpop.xlane.xlu0 %5017
    %v5019 = vlog2.pop %v5018
    %v5020 = vmul.f32 %v5019, 0.6931472
    %v5021 = vadd.f32 %v5020, %v5012
    %s5022 = scalar_lea.vmem %s14, 32
    %v5023 = vld [vmem:[%s5022] sm:$0xff]
    %5024 = vset.pattern.permute.xlu0 0
    %5025 = vperm.xlu0 %5024, %v5023
    %v5026 = vpop.permute.xlu0 %5025
    %vm5027 = vcmp.eq.s32.totalorder %v3055, %v5026
    %v5028 = vsel %vm5027, %v5007, 0.0
    %v5029 = vsel %vm3056, %v5028, 0.0
    %5030 = vadd.xlane.f32.xlu0 %v5029
    %v5031 = vpop.xlane.xlu0 %5030
    %v5032 = vsub.f32 %v5021, %v5031
    %v5033 = vsel %vm3592, %v5032, 0.0
    %5034 = vadd.xlane.f32.xlu0 %v5033
    %v5035 = vpop.xlane.xlu0 %5034
    %v5036 = vrot.slane %v5035, 4
    %v5037 = vadd.f32 %v5035, %v5036
    %v5038 = vrot.slane %v5037, 2
    %v5039 = vadd.f32 %v5037, %v5038
    %v5040 = vrot.slane %v5039, 1
    %v5041 = vadd.f32 %v5039, %v5040
    %s5042 = vtos %v5041
    %v5043 = vstv %s5042
    %v5044 = vadd.f32 %v4684, %v5043
    %s5045 = scalar_lea.vmem %s13, 40
    %v5046 = vld [vmem:[%s5045] sm:$0xff]
    %5047 = vset.pattern.permute.xlu0 0
    %5048 = vperm.xlu0 %5047, %v5046
    %v5049 = vpop.permute.xlu0 %5048
    %vm5050 = vcmp.eq.s32.totalorder %v3055, %v5049
    %v5051 = vsel %vm5050, 1, 0
    %v5052 = vcvt.s32.f32 %v5051
    %v5054 = vsel %vm3056, %v5052, 0
    %5056 = vmatprep.subr.mxu0 0.0
    %5057 = vmatpush1.msra.mxu0 0.0
    %5058 = vmatprep.subr.mxu0 0.0
    %5059 = vmatpush1.msra.mxu0 0.0
    %5060 = vmatprep.subr.mxu0 0.0
    %5061 = vmatpush1.msra.mxu0 0.0
    %5062 = vmatprep.subr.mxu0 0.0
    %5063 = vmatpush1.msra.mxu0 0.0
    %5064 = vmatprep.subr.mxu0 0.0
    %5065 = vmatpush1.msra.mxu0 0.0
    %5066 = vmatprep.subr.mxu0 0.0
    %5067 = vmatpush1.msra.mxu0 0.0
    %5068 = vmatprep.subr.mxu0 0.0
    %5069 = vmatpush1.msra.mxu0 0.0
    %5070 = vmatprep.subr.mxu0 0.0
    %5071 = vmatpush1.msra.mxu0 0.0
    %5072 = vmatprep.subr.mxu0 0.0
    %5073 = vmatpush1.msra.mxu0 0.0
    %5074 = vmatprep.subr.mxu0 0.0
    %5075 = vmatpush1.msra.mxu0 0.0
    %5076 = vmatprep.subr.mxu0 0.0
    %5077 = vmatpush1.msra.mxu0 0.0
    %5078 = vmatprep.subr.mxu0 0.0
    %5079 = vmatpush1.msra.mxu0 0.0
    %5080 = vmatprep.subr.mxu0 0.0
    %5081 = vmatpush1.msra.mxu0 %v3053
    %5082 = vmatprep.subr.mxu0 0.0
    %5083 = vmatpush1.msra.mxu0 %v3052
    %5084 = vmatprep.subr.mxu0 0.0
    %5085 = vmatpush1.msra.mxu0 %v3051
    %5086 = vmatprep.subr.mxu0 0.0
    %5087 = vmatpush1.msra.mxu0 %v3050
    %5088 = vmatprep.subr.mxu0 0.0
    %5089 = vmatpush2.msra.mxu0 0.0
    %5090 = vmatprep.subr.mxu0 0.0
    %5091 = vmatpush2.msra.mxu0 0.0
    %5092 = vmatprep.subr.mxu0 0.0
    %5093 = vmatpush2.msra.mxu0 0.0
    %5094 = vmatprep.subr.mxu0 0.0
    %5095 = vmatpush2.msra.mxu0 0.0
    %5096 = vmatprep.subr.mxu0 0.0
    %5097 = vmatpush2.msra.mxu0 0.0
    %5098 = vmatprep.subr.mxu0 0.0
    %5099 = vmatpush2.msra.mxu0 0.0
    %5100 = vmatprep.subr.mxu0 0.0
    %5101 = vmatpush2.msra.mxu0 0.0
    %5102 = vmatprep.subr.mxu0 0.0
    %5103 = vmatpush2.msra.mxu0 0.0
    %5104 = vmatprep.subr.mxu0 0.0
    %5105 = vmatpush2.msra.mxu0 0.0
    %5106 = vmatprep.subr.mxu0 0.0
    %5107 = vmatpush2.msra.mxu0 0.0
    %5108 = vmatprep.subr.mxu0 0.0
    %5109 = vmatpush2.msra.mxu0 0.0
    %5110 = vmatprep.subr.mxu0 0.0
    %5111 = vmatpush2.msra.mxu0 0.0
    %5112 = vmatprep.subr.mxu0 0.0
    %5113 = vmatpush2.msra.mxu0 0.0
    %5114 = vmatprep.subr.mxu0 0.0
    %5115 = vmatpush2.msra.mxu0 0.0
    %5116 = vmatprep.subr.mxu0 0.0
    %5117 = vmatpush2.msra.mxu0 0.0
    %5118 = vmatprep.subr.mxu0 0.0
    %5119 = vmatpush2.msra.mxu0 0.0
    %5120 = vmatprep.mubr.f32.mxu0 0.0
    %5121 = vmatmul.mubr.f32.gmra.mxu0 %v5054
    %v5122 = vpop.f32.mrf.mxu0
    %v5123 = vadd.f32 0.0, %v5122
    %v5124 = vpop.f32.mrf.mxu0
    %5125 = vdwg.mxu0
    %5126 = vmatprep.subr.mxu0 0.0
    %5127 = vmatpush1.msra.mxu0 0.0
    %5128 = vmatprep.subr.mxu0 0.0
    %5129 = vmatpush1.msra.mxu0 0.0
    %5130 = vmatprep.subr.mxu0 0.0
    %5131 = vmatpush1.msra.mxu0 0.0
    %5132 = vmatprep.subr.mxu0 0.0
    %5133 = vmatpush1.msra.mxu0 0.0
    %5134 = vmatprep.subr.mxu0 0.0
    %5135 = vmatpush1.msra.mxu0 0.0
    %5136 = vmatprep.subr.mxu0 0.0
    %5137 = vmatpush1.msra.mxu0 0.0
    %5138 = vmatprep.subr.mxu0 0.0
    %5139 = vmatpush1.msra.mxu0 0.0
    %5140 = vmatprep.subr.mxu0 0.0
    %5141 = vmatpush1.msra.mxu0 0.0
    %5142 = vmatprep.subr.mxu0 0.0
    %5143 = vmatpush1.msra.mxu0 0.0
    %5144 = vmatprep.subr.mxu0 0.0
    %5145 = vmatpush1.msra.mxu0 0.0
    %5146 = vmatprep.subr.mxu0 0.0
    %5147 = vmatpush1.msra.mxu0 0.0
    %5148 = vmatprep.subr.mxu0 0.0
    %5149 = vmatpush1.msra.mxu0 0.0
    %5150 = vmatprep.subr.mxu0 0.0
    %5151 = vmatpush1.msra.mxu0 %v3043
    %5152 = vmatprep.subr.mxu0 0.0
    %5153 = vmatpush1.msra.mxu0 %v3042
    %5154 = vmatprep.subr.mxu0 0.0
    %5155 = vmatpush1.msra.mxu0 %v3041
    %5156 = vmatprep.subr.mxu0 0.0
    %5157 = vmatpush1.msra.mxu0 %v3040
    %5158 = vmatprep.subr.mxu0 0.0
    %5159 = vmatpush2.msra.mxu0 0.0
    %5160 = vmatprep.subr.mxu0 0.0
    %5161 = vmatpush2.msra.mxu0 0.0
    %5162 = vmatprep.subr.mxu0 0.0
    %5163 = vmatpush2.msra.mxu0 0.0
    %5164 = vmatprep.subr.mxu0 0.0
    %5165 = vmatpush2.msra.mxu0 0.0
    %5166 = vmatprep.subr.mxu0 0.0
    %5167 = vmatpush2.msra.mxu0 0.0
    %5168 = vmatprep.subr.mxu0 0.0
    %5169 = vmatpush2.msra.mxu0 0.0
    %5170 = vmatprep.subr.mxu0 0.0
    %5171 = vmatpush2.msra.mxu0 0.0
    %5172 = vmatprep.subr.mxu0 0.0
    %5173 = vmatpush2.msra.mxu0 0.0
    %5174 = vmatprep.subr.mxu0 0.0
    %5175 = vmatpush2.msra.mxu0 0.0
    %5176 = vmatprep.subr.mxu0 0.0
    %5177 = vmatpush2.msra.mxu0 0.0
    %5178 = vmatprep.subr.mxu0 0.0
    %5179 = vmatpush2.msra.mxu0 0.0
    %5180 = vmatprep.subr.mxu0 0.0
    %5181 = vmatpush2.msra.mxu0 0.0
    %5182 = vmatprep.subr.mxu0 0.0
    %5183 = vmatpush2.msra.mxu0 0.0
    %5184 = vmatprep.subr.mxu0 0.0
    %5185 = vmatpush2.msra.mxu0 0.0
    %5186 = vmatprep.subr.mxu0 0.0
    %5187 = vmatpush2.msra.mxu0 0.0
    %5188 = vmatprep.subr.mxu0 0.0
    %5189 = vmatpush2.msra.mxu0 0.0
    %5190 = vmatprep.mubr.f32.mxu0 0.0
    %5191 = vmatmul.mubr.f32.gmra.mxu0 %v4938
    %v5192 = vpop.f32.mrf.mxu0
    %v5193 = vadd.f32 0.0, %v5192
    %v5194 = vpop.f32.mrf.mxu0
    %5195 = vdwg.mxu0
    %v5197 = vsel %vm3056, %v5123, 0
    %5199 = vmatprep.subr.mxu0 0.0
    %5200 = vmatpush1.msra.mxu0 0.0
    %5201 = vmatprep.subr.mxu0 0.0
    %5202 = vmatpush1.msra.mxu0 0.0
    %5203 = vmatprep.subr.mxu0 0.0
    %5204 = vmatpush1.msra.mxu0 0.0
    %5205 = vmatprep.subr.mxu0 0.0
    %5206 = vmatpush1.msra.mxu0 0.0
    %5207 = vmatprep.subr.mxu0 0.0
    %5208 = vmatpush1.msra.mxu0 0.0
    %5209 = vmatprep.subr.mxu0 0.0
    %5210 = vmatpush1.msra.mxu0 0.0
    %5211 = vmatprep.subr.mxu0 0.0
    %5212 = vmatpush1.msra.mxu0 0.0
    %5213 = vmatprep.subr.mxu0 0.0
    %5214 = vmatpush1.msra.mxu0 0.0
    %5215 = vmatprep.subr.mxu0 0.0
    %5216 = vmatpush1.msra.mxu0 0.0
    %5217 = vmatprep.subr.mxu0 0.0
    %5218 = vmatpush1.msra.mxu0 0.0
    %5219 = vmatprep.subr.mxu0 0.0
    %5220 = vmatpush1.msra.mxu0 0.0
    %5221 = vmatprep.subr.mxu0 0.0
    %5222 = vmatpush1.msra.mxu0 0.0
    %5223 = vmatprep.subr.mxu0 0.0
    %5224 = vmatpush1.msra.mxu0 %v3039
    %5225 = vmatprep.subr.mxu0 0.0
    %5226 = vmatpush1.msra.mxu0 %v3038
    %5227 = vmatprep.subr.mxu0 0.0
    %5228 = vmatpush1.msra.mxu0 %v3037
    %5229 = vmatprep.subr.mxu0 0.0
    %5230 = vmatpush1.msra.mxu0 %v3036
    %5231 = vmatprep.subr.mxu0 0.0
    %5232 = vmatpush2.msra.mxu0 0.0
    %5233 = vmatprep.subr.mxu0 0.0
    %5234 = vmatpush2.msra.mxu0 0.0
    %5235 = vmatprep.subr.mxu0 0.0
    %5236 = vmatpush2.msra.mxu0 0.0
    %5237 = vmatprep.subr.mxu0 0.0
    %5238 = vmatpush2.msra.mxu0 0.0
    %5239 = vmatprep.subr.mxu0 0.0
    %5240 = vmatpush2.msra.mxu0 0.0
    %5241 = vmatprep.subr.mxu0 0.0
    %5242 = vmatpush2.msra.mxu0 0.0
    %5243 = vmatprep.subr.mxu0 0.0
    %5244 = vmatpush2.msra.mxu0 0.0
    %5245 = vmatprep.subr.mxu0 0.0
    %5246 = vmatpush2.msra.mxu0 0.0
    %5247 = vmatprep.subr.mxu0 0.0
    %5248 = vmatpush2.msra.mxu0 0.0
    %5249 = vmatprep.subr.mxu0 0.0
    %5250 = vmatpush2.msra.mxu0 0.0
    %5251 = vmatprep.subr.mxu0 0.0
    %5252 = vmatpush2.msra.mxu0 0.0
    %5253 = vmatprep.subr.mxu0 0.0
    %5254 = vmatpush2.msra.mxu0 0.0
    %5255 = vmatprep.subr.mxu0 0.0
    %5256 = vmatpush2.msra.mxu0 0.0
    %5257 = vmatprep.subr.mxu0 0.0
    %5258 = vmatpush2.msra.mxu0 0.0
    %5259 = vmatprep.subr.mxu0 0.0
    %5260 = vmatpush2.msra.mxu0 0.0
    %5261 = vmatprep.subr.mxu0 0.0
    %5262 = vmatpush2.msra.mxu0 0.0
    %5263 = vmatprep.mubr.f32.mxu0 0.0
    %5264 = vmatmul.mubr.f32.gmra.mxu0 %v5197
    %v5265 = vpop.f32.mrf.mxu0
    %v5266 = vadd.f32 %v5193, %v5265
    %v5267 = vpop.f32.mrf.mxu0
    %5268 = vdwg.mxu0
    %v5269 = vadd.f32 %v5266, %v3207
    %v5270 = vxor.u32 %v5269, 2147483648
    %v5271 = vmul.f32 %v5270, 1.442695
    %v5272 = vpow.pop %v5271
    %v5273 = vadd.f32 %v5272, 1.0
    %v5274 = vrcp.pop %v5273
    %v5275 = vmul.f32 1.0, %v5274
    %5277 = vrot.lane.b32.xlu0 %v5269, 32
    %v5278 = vpop.permute.xlu0 %5277
    %v5280 = vmul.f32 %v5275, %v5278
    %5282 = vrot.lane.b32.xlu0 %v5280, 64
    %v5283 = vpop.permute.xlu0 %5282
    %v5285 = vadd.f32 %v5269, %v5283
    %v5286 = vtanh.pop %v5285
    %v5287 = vsub.f32 1.0, %v5275
    %5289 = vrot.lane.b32.xlu0 %v5286, 96
    %v5290 = vpop.permute.xlu0 %5289
    %v5292 = vmul.f32 %v5287, %v5290
    %v5293 = vmul.f32 %v5275, %v4934
    %v5294 = vadd.f32 %v5292, %v5293
    %5296 = vrot.lane.b32.xlu0 %v5294, 96
    %v5297 = vpop.permute.xlu0 %5296
    %v5298 = vsel %vm3056, %v5297, 0
    %5300 = vmatprep.subr.mxu0 0.0
    %5301 = vmatpush1.msra.mxu0 0.0
    %5302 = vmatprep.subr.mxu0 0.0
    %5303 = vmatpush1.msra.mxu0 0.0
    %5304 = vmatprep.subr.mxu0 0.0
    %5305 = vmatpush1.msra.mxu0 0.0
    %5306 = vmatprep.subr.mxu0 0.0
    %5307 = vmatpush1.msra.mxu0 0.0
    %5308 = vmatprep.subr.mxu0 0.0
    %5309 = vmatpush1.msra.mxu0 0.0
    %5310 = vmatprep.subr.mxu0 0.0
    %5311 = vmatpush1.msra.mxu0 0.0
    %5312 = vmatprep.subr.mxu0 0.0
    %5313 = vmatpush1.msra.mxu0 0.0
    %5314 = vmatprep.subr.mxu0 0.0
    %5315 = vmatpush1.msra.mxu0 0.0
    %5316 = vmatprep.subr.mxu0 0.0
    %5317 = vmatpush1.msra.mxu0 0.0
    %5318 = vmatprep.subr.mxu0 0.0
    %5319 = vmatpush1.msra.mxu0 0.0
    %5320 = vmatprep.subr.mxu0 0.0
    %5321 = vmatpush1.msra.mxu0 0.0
    %5322 = vmatprep.subr.mxu0 0.0
    %5323 = vmatpush1.msra.mxu0 0.0
    %5324 = vmatprep.subr.mxu0 0.0
    %5325 = vmatpush1.msra.mxu0 %v3048
    %5326 = vmatprep.subr.mxu0 0.0
    %5327 = vmatpush1.msra.mxu0 %v3047
    %5328 = vmatprep.subr.mxu0 0.0
    %5329 = vmatpush1.msra.mxu0 %v3046
    %5330 = vmatprep.subr.mxu0 0.0
    %5331 = vmatpush1.msra.mxu0 %v3045
    %5332 = vmatprep.subr.mxu0 0.0
    %5333 = vmatpush2.msra.mxu0 0.0
    %5334 = vmatprep.subr.mxu0 0.0
    %5335 = vmatpush2.msra.mxu0 0.0
    %5336 = vmatprep.subr.mxu0 0.0
    %5337 = vmatpush2.msra.mxu0 0.0
    %5338 = vmatprep.subr.mxu0 0.0
    %5339 = vmatpush2.msra.mxu0 0.0
    %5340 = vmatprep.subr.mxu0 0.0
    %5341 = vmatpush2.msra.mxu0 0.0
    %5342 = vmatprep.subr.mxu0 0.0
    %5343 = vmatpush2.msra.mxu0 0.0
    %5344 = vmatprep.subr.mxu0 0.0
    %5345 = vmatpush2.msra.mxu0 0.0
    %5346 = vmatprep.subr.mxu0 0.0
    %5347 = vmatpush2.msra.mxu0 0.0
    %5348 = vmatprep.subr.mxu0 0.0
    %5349 = vmatpush2.msra.mxu0 0.0
    %5350 = vmatprep.subr.mxu0 0.0
    %5351 = vmatpush2.msra.mxu0 0.0
    %5352 = vmatprep.subr.mxu0 0.0
    %5353 = vmatpush2.msra.mxu0 0.0
    %5354 = vmatprep.subr.mxu0 0.0
    %5355 = vmatpush2.msra.mxu0 0.0
    %5356 = vmatprep.subr.mxu0 0.0
    %5357 = vmatpush2.msra.mxu0 0.0
    %5358 = vmatprep.subr.mxu0 0.0
    %5359 = vmatpush2.msra.mxu0 0.0
    %5360 = vmatprep.subr.mxu0 0.0
    %5361 = vmatpush2.msra.mxu0 0.0
    %5362 = vmatprep.subr.mxu0 0.0
    %5363 = vmatpush2.msra.mxu0 0.0
    %5364 = vmatprep.mubr.f32.mxu0 0.0
    %5365 = vmatmul.mubr.f32.gmra.mxu0 %v5298
    %v5366 = vpop.f32.mrf.mxu0
    %v5367 = vadd.f32 %v3493, %v5366
    %v5368 = vpop.f32.mrf.mxu0
    %5369 = vdwg.mxu0
    %v5370 = vsel %vm3056, %v5367, -inf
    %5371 = vmax.xlane.f32.xlu0 %v5370
    %v5372 = vpop.xlane.xlu0 %5371
    %v5373 = vsub.f32 %v5367, %v5372
    %v5374 = vmul.f32 %v5373, 1.442695
    %v5375 = vpow.pop %v5374
    %v5376 = vsel %vm3056, %v5375, 0.0
    %5377 = vadd.xlane.f32.xlu0 %v5376
    %v5378 = vpop.xlane.xlu0 %5377
    %v5379 = vlog2.pop %v5378
    %v5380 = vmul.f32 %v5379, 0.6931472
    %v5381 = vadd.f32 %v5380, %v5372
    %s5382 = scalar_lea.vmem %s14, 40
    %v5383 = vld [vmem:[%s5382] sm:$0xff]
    %5384 = vset.pattern.permute.xlu0 0
    %5385 = vperm.xlu0 %5384, %v5383
    %v5386 = vpop.permute.xlu0 %5385
    %vm5387 = vcmp.eq.s32.totalorder %v3055, %v5386
    %v5388 = vsel %vm5387, %v5367, 0.0
    %v5389 = vsel %vm3056, %v5388, 0.0
    %5390 = vadd.xlane.f32.xlu0 %v5389
    %v5391 = vpop.xlane.xlu0 %5390
    %v5392 = vsub.f32 %v5381, %v5391
    %v5393 = vsel %vm3592, %v5392, 0.0
    %5394 = vadd.xlane.f32.xlu0 %v5393
    %v5395 = vpop.xlane.xlu0 %5394
    %v5396 = vrot.slane %v5395, 4
    %v5397 = vadd.f32 %v5395, %v5396
    %v5398 = vrot.slane %v5397, 2
    %v5399 = vadd.f32 %v5397, %v5398
    %v5400 = vrot.slane %v5399, 1
    %v5401 = vadd.f32 %v5399, %v5400
    %s5402 = vtos %v5401
    %v5403 = vstv %s5402
    %v5404 = vadd.f32 %v5044, %v5403
    %s5405 = scalar_lea.vmem %s13, 48
    %v5406 = vld [vmem:[%s5405] sm:$0xff]
    %5407 = vset.pattern.permute.xlu0 0
    %5408 = vperm.xlu0 %5407, %v5406
    %v5409 = vpop.permute.xlu0 %5408
    %vm5410 = vcmp.eq.s32.totalorder %v3055, %v5409
    %v5411 = vsel %vm5410, 1, 0
    %v5412 = vcvt.s32.f32 %v5411
    %v5414 = vsel %vm3056, %v5412, 0
    %5416 = vmatprep.subr.mxu0 0.0
    %5417 = vmatpush1.msra.mxu0 0.0
    %5418 = vmatprep.subr.mxu0 0.0
    %5419 = vmatpush1.msra.mxu0 0.0
    %5420 = vmatprep.subr.mxu0 0.0
    %5421 = vmatpush1.msra.mxu0 0.0
    %5422 = vmatprep.subr.mxu0 0.0
    %5423 = vmatpush1.msra.mxu0 0.0
    %5424 = vmatprep.subr.mxu0 0.0
    %5425 = vmatpush1.msra.mxu0 0.0
    %5426 = vmatprep.subr.mxu0 0.0
    %5427 = vmatpush1.msra.mxu0 0.0
    %5428 = vmatprep.subr.mxu0 0.0
    %5429 = vmatpush1.msra.mxu0 0.0
    %5430 = vmatprep.subr.mxu0 0.0
    %5431 = vmatpush1.msra.mxu0 0.0
    %5432 = vmatprep.subr.mxu0 0.0
    %5433 = vmatpush1.msra.mxu0 0.0
    %5434 = vmatprep.subr.mxu0 0.0
    %5435 = vmatpush1.msra.mxu0 0.0
    %5436 = vmatprep.subr.mxu0 0.0
    %5437 = vmatpush1.msra.mxu0 0.0
    %5438 = vmatprep.subr.mxu0 0.0
    %5439 = vmatpush1.msra.mxu0 0.0
    %5440 = vmatprep.subr.mxu0 0.0
    %5441 = vmatpush1.msra.mxu0 %v3053
    %5442 = vmatprep.subr.mxu0 0.0
    %5443 = vmatpush1.msra.mxu0 %v3052
    %5444 = vmatprep.subr.mxu0 0.0
    %5445 = vmatpush1.msra.mxu0 %v3051
    %5446 = vmatprep.subr.mxu0 0.0
    %5447 = vmatpush1.msra.mxu0 %v3050
    %5448 = vmatprep.subr.mxu0 0.0
    %5449 = vmatpush2.msra.mxu0 0.0
    %5450 = vmatprep.subr.mxu0 0.0
    %5451 = vmatpush2.msra.mxu0 0.0
    %5452 = vmatprep.subr.mxu0 0.0
    %5453 = vmatpush2.msra.mxu0 0.0
    %5454 = vmatprep.subr.mxu0 0.0
    %5455 = vmatpush2.msra.mxu0 0.0
    %5456 = vmatprep.subr.mxu0 0.0
    %5457 = vmatpush2.msra.mxu0 0.0
    %5458 = vmatprep.subr.mxu0 0.0
    %5459 = vmatpush2.msra.mxu0 0.0
    %5460 = vmatprep.subr.mxu0 0.0
    %5461 = vmatpush2.msra.mxu0 0.0
    %5462 = vmatprep.subr.mxu0 0.0
    %5463 = vmatpush2.msra.mxu0 0.0
    %5464 = vmatprep.subr.mxu0 0.0
    %5465 = vmatpush2.msra.mxu0 0.0
    %5466 = vmatprep.subr.mxu0 0.0
    %5467 = vmatpush2.msra.mxu0 0.0
    %5468 = vmatprep.subr.mxu0 0.0
    %5469 = vmatpush2.msra.mxu0 0.0
    %5470 = vmatprep.subr.mxu0 0.0
    %5471 = vmatpush2.msra.mxu0 0.0
    %5472 = vmatprep.subr.mxu0 0.0
    %5473 = vmatpush2.msra.mxu0 0.0
    %5474 = vmatprep.subr.mxu0 0.0
    %5475 = vmatpush2.msra.mxu0 0.0
    %5476 = vmatprep.subr.mxu0 0.0
    %5477 = vmatpush2.msra.mxu0 0.0
    %5478 = vmatprep.subr.mxu0 0.0
    %5479 = vmatpush2.msra.mxu0 0.0
    %5480 = vmatprep.mubr.f32.mxu0 0.0
    %5481 = vmatmul.mubr.f32.gmra.mxu0 %v5414
    %v5482 = vpop.f32.mrf.mxu0
    %v5483 = vadd.f32 0.0, %v5482
    %v5484 = vpop.f32.mrf.mxu0
    %5485 = vdwg.mxu0
    %5486 = vmatprep.subr.mxu0 0.0
    %5487 = vmatpush1.msra.mxu0 0.0
    %5488 = vmatprep.subr.mxu0 0.0
    %5489 = vmatpush1.msra.mxu0 0.0
    %5490 = vmatprep.subr.mxu0 0.0
    %5491 = vmatpush1.msra.mxu0 0.0
    %5492 = vmatprep.subr.mxu0 0.0
    %5493 = vmatpush1.msra.mxu0 0.0
    %5494 = vmatprep.subr.mxu0 0.0
    %5495 = vmatpush1.msra.mxu0 0.0
    %5496 = vmatprep.subr.mxu0 0.0
    %5497 = vmatpush1.msra.mxu0 0.0
    %5498 = vmatprep.subr.mxu0 0.0
    %5499 = vmatpush1.msra.mxu0 0.0
    %5500 = vmatprep.subr.mxu0 0.0
    %5501 = vmatpush1.msra.mxu0 0.0
    %5502 = vmatprep.subr.mxu0 0.0
    %5503 = vmatpush1.msra.mxu0 0.0
    %5504 = vmatprep.subr.mxu0 0.0
    %5505 = vmatpush1.msra.mxu0 0.0
    %5506 = vmatprep.subr.mxu0 0.0
    %5507 = vmatpush1.msra.mxu0 0.0
    %5508 = vmatprep.subr.mxu0 0.0
    %5509 = vmatpush1.msra.mxu0 0.0
    %5510 = vmatprep.subr.mxu0 0.0
    %5511 = vmatpush1.msra.mxu0 %v3043
    %5512 = vmatprep.subr.mxu0 0.0
    %5513 = vmatpush1.msra.mxu0 %v3042
    %5514 = vmatprep.subr.mxu0 0.0
    %5515 = vmatpush1.msra.mxu0 %v3041
    %5516 = vmatprep.subr.mxu0 0.0
    %5517 = vmatpush1.msra.mxu0 %v3040
    %5518 = vmatprep.subr.mxu0 0.0
    %5519 = vmatpush2.msra.mxu0 0.0
    %5520 = vmatprep.subr.mxu0 0.0
    %5521 = vmatpush2.msra.mxu0 0.0
    %5522 = vmatprep.subr.mxu0 0.0
    %5523 = vmatpush2.msra.mxu0 0.0
    %5524 = vmatprep.subr.mxu0 0.0
    %5525 = vmatpush2.msra.mxu0 0.0
    %5526 = vmatprep.subr.mxu0 0.0
    %5527 = vmatpush2.msra.mxu0 0.0
    %5528 = vmatprep.subr.mxu0 0.0
    %5529 = vmatpush2.msra.mxu0 0.0
    %5530 = vmatprep.subr.mxu0 0.0
    %5531 = vmatpush2.msra.mxu0 0.0
    %5532 = vmatprep.subr.mxu0 0.0
    %5533 = vmatpush2.msra.mxu0 0.0
    %5534 = vmatprep.subr.mxu0 0.0
    %5535 = vmatpush2.msra.mxu0 0.0
    %5536 = vmatprep.subr.mxu0 0.0
    %5537 = vmatpush2.msra.mxu0 0.0
    %5538 = vmatprep.subr.mxu0 0.0
    %5539 = vmatpush2.msra.mxu0 0.0
    %5540 = vmatprep.subr.mxu0 0.0
    %5541 = vmatpush2.msra.mxu0 0.0
    %5542 = vmatprep.subr.mxu0 0.0
    %5543 = vmatpush2.msra.mxu0 0.0
    %5544 = vmatprep.subr.mxu0 0.0
    %5545 = vmatpush2.msra.mxu0 0.0
    %5546 = vmatprep.subr.mxu0 0.0
    %5547 = vmatpush2.msra.mxu0 0.0
    %5548 = vmatprep.subr.mxu0 0.0
    %5549 = vmatpush2.msra.mxu0 0.0
    %5550 = vmatprep.mubr.f32.mxu0 0.0
    %5551 = vmatmul.mubr.f32.gmra.mxu0 %v5298
    %v5552 = vpop.f32.mrf.mxu0
    %v5553 = vadd.f32 0.0, %v5552
    %v5554 = vpop.f32.mrf.mxu0
    %5555 = vdwg.mxu0
    %v5557 = vsel %vm3056, %v5483, 0
    %5559 = vmatprep.subr.mxu0 0.0
    %5560 = vmatpush1.msra.mxu0 0.0
    %5561 = vmatprep.subr.mxu0 0.0
    %5562 = vmatpush1.msra.mxu0 0.0
    %5563 = vmatprep.subr.mxu0 0.0
    %5564 = vmatpush1.msra.mxu0 0.0
    %5565 = vmatprep.subr.mxu0 0.0
    %5566 = vmatpush1.msra.mxu0 0.0
    %5567 = vmatprep.subr.mxu0 0.0
    %5568 = vmatpush1.msra.mxu0 0.0
    %5569 = vmatprep.subr.mxu0 0.0
    %5570 = vmatpush1.msra.mxu0 0.0
    %5571 = vmatprep.subr.mxu0 0.0
    %5572 = vmatpush1.msra.mxu0 0.0
    %5573 = vmatprep.subr.mxu0 0.0
    %5574 = vmatpush1.msra.mxu0 0.0
    %5575 = vmatprep.subr.mxu0 0.0
    %5576 = vmatpush1.msra.mxu0 0.0
    %5577 = vmatprep.subr.mxu0 0.0
    %5578 = vmatpush1.msra.mxu0 0.0
    %5579 = vmatprep.subr.mxu0 0.0
    %5580 = vmatpush1.msra.mxu0 0.0
    %5581 = vmatprep.subr.mxu0 0.0
    %5582 = vmatpush1.msra.mxu0 0.0
    %5583 = vmatprep.subr.mxu0 0.0
    %5584 = vmatpush1.msra.mxu0 %v3039
    %5585 = vmatprep.subr.mxu0 0.0
    %5586 = vmatpush1.msra.mxu0 %v3038
    %5587 = vmatprep.subr.mxu0 0.0
    %5588 = vmatpush1.msra.mxu0 %v3037
    %5589 = vmatprep.subr.mxu0 0.0
    %5590 = vmatpush1.msra.mxu0 %v3036
    %5591 = vmatprep.subr.mxu0 0.0
    %5592 = vmatpush2.msra.mxu0 0.0
    %5593 = vmatprep.subr.mxu0 0.0
    %5594 = vmatpush2.msra.mxu0 0.0
    %5595 = vmatprep.subr.mxu0 0.0
    %5596 = vmatpush2.msra.mxu0 0.0
    %5597 = vmatprep.subr.mxu0 0.0
    %5598 = vmatpush2.msra.mxu0 0.0
    %5599 = vmatprep.subr.mxu0 0.0
    %5600 = vmatpush2.msra.mxu0 0.0
    %5601 = vmatprep.subr.mxu0 0.0
    %5602 = vmatpush2.msra.mxu0 0.0
    %5603 = vmatprep.subr.mxu0 0.0
    %5604 = vmatpush2.msra.mxu0 0.0
    %5605 = vmatprep.subr.mxu0 0.0
    %5606 = vmatpush2.msra.mxu0 0.0
    %5607 = vmatprep.subr.mxu0 0.0
    %5608 = vmatpush2.msra.mxu0 0.0
    %5609 = vmatprep.subr.mxu0 0.0
    %5610 = vmatpush2.msra.mxu0 0.0
    %5611 = vmatprep.subr.mxu0 0.0
    %5612 = vmatpush2.msra.mxu0 0.0
    %5613 = vmatprep.subr.mxu0 0.0
    %5614 = vmatpush2.msra.mxu0 0.0
    %5615 = vmatprep.subr.mxu0 0.0
    %5616 = vmatpush2.msra.mxu0 0.0
    %5617 = vmatprep.subr.mxu0 0.0
    %5618 = vmatpush2.msra.mxu0 0.0
    %5619 = vmatprep.subr.mxu0 0.0
    %5620 = vmatpush2.msra.mxu0 0.0
    %5621 = vmatprep.subr.mxu0 0.0
    %5622 = vmatpush2.msra.mxu0 0.0
    %5623 = vmatprep.mubr.f32.mxu0 0.0
    %5624 = vmatmul.mubr.f32.gmra.mxu0 %v5557
    %v5625 = vpop.f32.mrf.mxu0
    %v5626 = vadd.f32 %v5553, %v5625
    %v5627 = vpop.f32.mrf.mxu0
    %5628 = vdwg.mxu0
    %v5629 = vadd.f32 %v5626, %v3207
    %v5630 = vxor.u32 %v5629, 2147483648
    %v5631 = vmul.f32 %v5630, 1.442695
    %v5632 = vpow.pop %v5631
    %v5633 = vadd.f32 %v5632, 1.0
    %v5634 = vrcp.pop %v5633
    %v5635 = vmul.f32 1.0, %v5634
    %5637 = vrot.lane.b32.xlu0 %v5629, 32
    %v5638 = vpop.permute.xlu0 %5637
    %v5640 = vmul.f32 %v5635, %v5638
    %5642 = vrot.lane.b32.xlu0 %v5640, 64
    %v5643 = vpop.permute.xlu0 %5642
    %v5645 = vadd.f32 %v5629, %v5643
    %v5646 = vtanh.pop %v5645
    %v5647 = vsub.f32 1.0, %v5635
    %5649 = vrot.lane.b32.xlu0 %v5646, 96
    %v5650 = vpop.permute.xlu0 %5649
    %v5652 = vmul.f32 %v5647, %v5650
    %v5653 = vmul.f32 %v5635, %v5294
    %v5654 = vadd.f32 %v5652, %v5653
    %5656 = vrot.lane.b32.xlu0 %v5654, 96
    %v5657 = vpop.permute.xlu0 %5656
    %v5658 = vsel %vm3056, %v5657, 0
    %5660 = vmatprep.subr.mxu0 0.0
    %5661 = vmatpush1.msra.mxu0 0.0
    %5662 = vmatprep.subr.mxu0 0.0
    %5663 = vmatpush1.msra.mxu0 0.0
    %5664 = vmatprep.subr.mxu0 0.0
    %5665 = vmatpush1.msra.mxu0 0.0
    %5666 = vmatprep.subr.mxu0 0.0
    %5667 = vmatpush1.msra.mxu0 0.0
    %5668 = vmatprep.subr.mxu0 0.0
    %5669 = vmatpush1.msra.mxu0 0.0
    %5670 = vmatprep.subr.mxu0 0.0
    %5671 = vmatpush1.msra.mxu0 0.0
    %5672 = vmatprep.subr.mxu0 0.0
    %5673 = vmatpush1.msra.mxu0 0.0
    %5674 = vmatprep.subr.mxu0 0.0
    %5675 = vmatpush1.msra.mxu0 0.0
    %5676 = vmatprep.subr.mxu0 0.0
    %5677 = vmatpush1.msra.mxu0 0.0
    %5678 = vmatprep.subr.mxu0 0.0
    %5679 = vmatpush1.msra.mxu0 0.0
    %5680 = vmatprep.subr.mxu0 0.0
    %5681 = vmatpush1.msra.mxu0 0.0
    %5682 = vmatprep.subr.mxu0 0.0
    %5683 = vmatpush1.msra.mxu0 0.0
    %5684 = vmatprep.subr.mxu0 0.0
    %5685 = vmatpush1.msra.mxu0 %v3048
    %5686 = vmatprep.subr.mxu0 0.0
    %5687 = vmatpush1.msra.mxu0 %v3047
    %5688 = vmatprep.subr.mxu0 0.0
    %5689 = vmatpush1.msra.mxu0 %v3046
    %5690 = vmatprep.subr.mxu0 0.0
    %5691 = vmatpush1.msra.mxu0 %v3045
    %5692 = vmatprep.subr.mxu0 0.0
    %5693 = vmatpush2.msra.mxu0 0.0
    %5694 = vmatprep.subr.mxu0 0.0
    %5695 = vmatpush2.msra.mxu0 0.0
    %5696 = vmatprep.subr.mxu0 0.0
    %5697 = vmatpush2.msra.mxu0 0.0
    %5698 = vmatprep.subr.mxu0 0.0
    %5699 = vmatpush2.msra.mxu0 0.0
    %5700 = vmatprep.subr.mxu0 0.0
    %5701 = vmatpush2.msra.mxu0 0.0
    %5702 = vmatprep.subr.mxu0 0.0
    %5703 = vmatpush2.msra.mxu0 0.0
    %5704 = vmatprep.subr.mxu0 0.0
    %5705 = vmatpush2.msra.mxu0 0.0
    %5706 = vmatprep.subr.mxu0 0.0
    %5707 = vmatpush2.msra.mxu0 0.0
    %5708 = vmatprep.subr.mxu0 0.0
    %5709 = vmatpush2.msra.mxu0 0.0
    %5710 = vmatprep.subr.mxu0 0.0
    %5711 = vmatpush2.msra.mxu0 0.0
    %5712 = vmatprep.subr.mxu0 0.0
    %5713 = vmatpush2.msra.mxu0 0.0
    %5714 = vmatprep.subr.mxu0 0.0
    %5715 = vmatpush2.msra.mxu0 0.0
    %5716 = vmatprep.subr.mxu0 0.0
    %5717 = vmatpush2.msra.mxu0 0.0
    %5718 = vmatprep.subr.mxu0 0.0
    %5719 = vmatpush2.msra.mxu0 0.0
    %5720 = vmatprep.subr.mxu0 0.0
    %5721 = vmatpush2.msra.mxu0 0.0
    %5722 = vmatprep.subr.mxu0 0.0
    %5723 = vmatpush2.msra.mxu0 0.0
    %5724 = vmatprep.mubr.f32.mxu0 0.0
    %5725 = vmatmul.mubr.f32.gmra.mxu0 %v5658
    %v5726 = vpop.f32.mrf.mxu0
    %v5727 = vadd.f32 %v3493, %v5726
    %v5728 = vpop.f32.mrf.mxu0
    %5729 = vdwg.mxu0
    %v5730 = vsel %vm3056, %v5727, -inf
    %5731 = vmax.xlane.f32.xlu0 %v5730
    %v5732 = vpop.xlane.xlu0 %5731
    %v5733 = vsub.f32 %v5727, %v5732
    %v5734 = vmul.f32 %v5733, 1.442695
    %v5735 = vpow.pop %v5734
    %v5736 = vsel %vm3056, %v5735, 0.0
    %5737 = vadd.xlane.f32.xlu0 %v5736
    %v5738 = vpop.xlane.xlu0 %5737
    %v5739 = vlog2.pop %v5738
    %v5740 = vmul.f32 %v5739, 0.6931472
    %v5741 = vadd.f32 %v5740, %v5732
    %s5742 = scalar_lea.vmem %s14, 48
    %v5743 = vld [vmem:[%s5742] sm:$0xff]
    %5744 = vset.pattern.permute.xlu0 0
    %5745 = vperm.xlu0 %5744, %v5743
    %v5746 = vpop.permute.xlu0 %5745
    %vm5747 = vcmp.eq.s32.totalorder %v3055, %v5746
    %v5748 = vsel %vm5747, %v5727, 0.0
    %v5749 = vsel %vm3056, %v5748, 0.0
    %5750 = vadd.xlane.f32.xlu0 %v5749
    %v5751 = vpop.xlane.xlu0 %5750
    %v5752 = vsub.f32 %v5741, %v5751
    %v5753 = vsel %vm3592, %v5752, 0.0
    %5754 = vadd.xlane.f32.xlu0 %v5753
    %v5755 = vpop.xlane.xlu0 %5754
    %v5756 = vrot.slane %v5755, 4
    %v5757 = vadd.f32 %v5755, %v5756
    %v5758 = vrot.slane %v5757, 2
    %v5759 = vadd.f32 %v5757, %v5758
    %v5760 = vrot.slane %v5759, 1
    %v5761 = vadd.f32 %v5759, %v5760
    %s5762 = vtos %v5761
    %v5763 = vstv %s5762
    %v5764 = vadd.f32 %v5404, %v5763
    %s5765 = scalar_lea.vmem %s13, 56
    %v5766 = vld [vmem:[%s5765] sm:$0xff]
    %5767 = vset.pattern.permute.xlu0 0
    %5768 = vperm.xlu0 %5767, %v5766
    %v5769 = vpop.permute.xlu0 %5768
    %vm5770 = vcmp.eq.s32.totalorder %v3055, %v5769
    %v5771 = vsel %vm5770, 1, 0
    %v5772 = vcvt.s32.f32 %v5771
    %v5774 = vsel %vm3056, %v5772, 0
    %5776 = vmatprep.subr.mxu0 0.0
    %5777 = vmatpush1.msra.mxu0 0.0
    %5778 = vmatprep.subr.mxu0 0.0
    %5779 = vmatpush1.msra.mxu0 0.0
    %5780 = vmatprep.subr.mxu0 0.0
    %5781 = vmatpush1.msra.mxu0 0.0
    %5782 = vmatprep.subr.mxu0 0.0
    %5783 = vmatpush1.msra.mxu0 0.0
    %5784 = vmatprep.subr.mxu0 0.0
    %5785 = vmatpush1.msra.mxu0 0.0
    %5786 = vmatprep.subr.mxu0 0.0
    %5787 = vmatpush1.msra.mxu0 0.0
    %5788 = vmatprep.subr.mxu0 0.0
    %5789 = vmatpush1.msra.mxu0 0.0
    %5790 = vmatprep.subr.mxu0 0.0
    %5791 = vmatpush1.msra.mxu0 0.0
    %5792 = vmatprep.subr.mxu0 0.0
    %5793 = vmatpush1.msra.mxu0 0.0
    %5794 = vmatprep.subr.mxu0 0.0
    %5795 = vmatpush1.msra.mxu0 0.0
    %5796 = vmatprep.subr.mxu0 0.0
    %5797 = vmatpush1.msra.mxu0 0.0
    %5798 = vmatprep.subr.mxu0 0.0
    %5799 = vmatpush1.msra.mxu0 0.0
    %5800 = vmatprep.subr.mxu0 0.0
    %5801 = vmatpush1.msra.mxu0 %v3053
    %5802 = vmatprep.subr.mxu0 0.0
    %5803 = vmatpush1.msra.mxu0 %v3052
    %5804 = vmatprep.subr.mxu0 0.0
    %5805 = vmatpush1.msra.mxu0 %v3051
    %5806 = vmatprep.subr.mxu0 0.0
    %5807 = vmatpush1.msra.mxu0 %v3050
    %5808 = vmatprep.subr.mxu0 0.0
    %5809 = vmatpush2.msra.mxu0 0.0
    %5810 = vmatprep.subr.mxu0 0.0
    %5811 = vmatpush2.msra.mxu0 0.0
    %5812 = vmatprep.subr.mxu0 0.0
    %5813 = vmatpush2.msra.mxu0 0.0
    %5814 = vmatprep.subr.mxu0 0.0
    %5815 = vmatpush2.msra.mxu0 0.0
    %5816 = vmatprep.subr.mxu0 0.0
    %5817 = vmatpush2.msra.mxu0 0.0
    %5818 = vmatprep.subr.mxu0 0.0
    %5819 = vmatpush2.msra.mxu0 0.0
    %5820 = vmatprep.subr.mxu0 0.0
    %5821 = vmatpush2.msra.mxu0 0.0
    %5822 = vmatprep.subr.mxu0 0.0
    %5823 = vmatpush2.msra.mxu0 0.0
    %5824 = vmatprep.subr.mxu0 0.0
    %5825 = vmatpush2.msra.mxu0 0.0
    %5826 = vmatprep.subr.mxu0 0.0
    %5827 = vmatpush2.msra.mxu0 0.0
    %5828 = vmatprep.subr.mxu0 0.0
    %5829 = vmatpush2.msra.mxu0 0.0
    %5830 = vmatprep.subr.mxu0 0.0
    %5831 = vmatpush2.msra.mxu0 0.0
    %5832 = vmatprep.subr.mxu0 0.0
    %5833 = vmatpush2.msra.mxu0 0.0
    %5834 = vmatprep.subr.mxu0 0.0
    %5835 = vmatpush2.msra.mxu0 0.0
    %5836 = vmatprep.subr.mxu0 0.0
    %5837 = vmatpush2.msra.mxu0 0.0
    %5838 = vmatprep.subr.mxu0 0.0
    %5839 = vmatpush2.msra.mxu0 0.0
    %5840 = vmatprep.mubr.f32.mxu0 0.0
    %5841 = vmatmul.mubr.f32.gmra.mxu0 %v5774
    %v5842 = vpop.f32.mrf.mxu0
    %v5843 = vadd.f32 0.0, %v5842
    %v5844 = vpop.f32.mrf.mxu0
    %5845 = vdwg.mxu0
    %5846 = vmatprep.subr.mxu0 0.0
    %5847 = vmatpush1.msra.mxu0 0.0
    %5848 = vmatprep.subr.mxu0 0.0
    %5849 = vmatpush1.msra.mxu0 0.0
    %5850 = vmatprep.subr.mxu0 0.0
    %5851 = vmatpush1.msra.mxu0 0.0
    %5852 = vmatprep.subr.mxu0 0.0
    %5853 = vmatpush1.msra.mxu0 0.0
    %5854 = vmatprep.subr.mxu0 0.0
    %5855 = vmatpush1.msra.mxu0 0.0
    %5856 = vmatprep.subr.mxu0 0.0
    %5857 = vmatpush1.msra.mxu0 0.0
    %5858 = vmatprep.subr.mxu0 0.0
    %5859 = vmatpush1.msra.mxu0 0.0
    %5860 = vmatprep.subr.mxu0 0.0
    %5861 = vmatpush1.msra.mxu0 0.0
    %5862 = vmatprep.subr.mxu0 0.0
    %5863 = vmatpush1.msra.mxu0 0.0
    %5864 = vmatprep.subr.mxu0 0.0
    %5865 = vmatpush1.msra.mxu0 0.0
    %5866 = vmatprep.subr.mxu0 0.0
    %5867 = vmatpush1.msra.mxu0 0.0
    %5868 = vmatprep.subr.mxu0 0.0
    %5869 = vmatpush1.msra.mxu0 0.0
    %5870 = vmatprep.subr.mxu0 0.0
    %5871 = vmatpush1.msra.mxu0 %v3043
    %5872 = vmatprep.subr.mxu0 0.0
    %5873 = vmatpush1.msra.mxu0 %v3042
    %5874 = vmatprep.subr.mxu0 0.0
    %5875 = vmatpush1.msra.mxu0 %v3041
    %5876 = vmatprep.subr.mxu0 0.0
    %5877 = vmatpush1.msra.mxu0 %v3040
    %5878 = vmatprep.subr.mxu0 0.0
    %5879 = vmatpush2.msra.mxu0 0.0
    %5880 = vmatprep.subr.mxu0 0.0
    %5881 = vmatpush2.msra.mxu0 0.0
    %5882 = vmatprep.subr.mxu0 0.0
    %5883 = vmatpush2.msra.mxu0 0.0
    %5884 = vmatprep.subr.mxu0 0.0
    %5885 = vmatpush2.msra.mxu0 0.0
    %5886 = vmatprep.subr.mxu0 0.0
    %5887 = vmatpush2.msra.mxu0 0.0
    %5888 = vmatprep.subr.mxu0 0.0
    %5889 = vmatpush2.msra.mxu0 0.0
    %5890 = vmatprep.subr.mxu0 0.0
    %5891 = vmatpush2.msra.mxu0 0.0
    %5892 = vmatprep.subr.mxu0 0.0
    %5893 = vmatpush2.msra.mxu0 0.0
    %5894 = vmatprep.subr.mxu0 0.0
    %5895 = vmatpush2.msra.mxu0 0.0
    %5896 = vmatprep.subr.mxu0 0.0
    %5897 = vmatpush2.msra.mxu0 0.0
    %5898 = vmatprep.subr.mxu0 0.0
    %5899 = vmatpush2.msra.mxu0 0.0
    %5900 = vmatprep.subr.mxu0 0.0
    %5901 = vmatpush2.msra.mxu0 0.0
    %5902 = vmatprep.subr.mxu0 0.0
    %5903 = vmatpush2.msra.mxu0 0.0
    %5904 = vmatprep.subr.mxu0 0.0
    %5905 = vmatpush2.msra.mxu0 0.0
    %5906 = vmatprep.subr.mxu0 0.0
    %5907 = vmatpush2.msra.mxu0 0.0
    %5908 = vmatprep.subr.mxu0 0.0
    %5909 = vmatpush2.msra.mxu0 0.0
    %5910 = vmatprep.mubr.f32.mxu0 0.0
    %5911 = vmatmul.mubr.f32.gmra.mxu0 %v5658
    %v5912 = vpop.f32.mrf.mxu0
    %v5913 = vadd.f32 0.0, %v5912
    %v5914 = vpop.f32.mrf.mxu0
    %5915 = vdwg.mxu0
    %v5917 = vsel %vm3056, %v5843, 0
    %5919 = vmatprep.subr.mxu0 0.0
    %5920 = vmatpush1.msra.mxu0 0.0
    %5921 = vmatprep.subr.mxu0 0.0
    %5922 = vmatpush1.msra.mxu0 0.0
    %5923 = vmatprep.subr.mxu0 0.0
    %5924 = vmatpush1.msra.mxu0 0.0
    %5925 = vmatprep.subr.mxu0 0.0
    %5926 = vmatpush1.msra.mxu0 0.0
    %5927 = vmatprep.subr.mxu0 0.0
    %5928 = vmatpush1.msra.mxu0 0.0
    %5929 = vmatprep.subr.mxu0 0.0
    %5930 = vmatpush1.msra.mxu0 0.0
    %5931 = vmatprep.subr.mxu0 0.0
    %5932 = vmatpush1.msra.mxu0 0.0
    %5933 = vmatprep.subr.mxu0 0.0
    %5934 = vmatpush1.msra.mxu0 0.0
    %5935 = vmatprep.subr.mxu0 0.0
    %5936 = vmatpush1.msra.mxu0 0.0
    %5937 = vmatprep.subr.mxu0 0.0
    %5938 = vmatpush1.msra.mxu0 0.0
    %5939 = vmatprep.subr.mxu0 0.0
    %5940 = vmatpush1.msra.mxu0 0.0
    %5941 = vmatprep.subr.mxu0 0.0
    %5942 = vmatpush1.msra.mxu0 0.0
    %5943 = vmatprep.subr.mxu0 0.0
    %5944 = vmatpush1.msra.mxu0 %v3039
    %5945 = vmatprep.subr.mxu0 0.0
    %5946 = vmatpush1.msra.mxu0 %v3038
    %5947 = vmatprep.subr.mxu0 0.0
    %5948 = vmatpush1.msra.mxu0 %v3037
    %5949 = vmatprep.subr.mxu0 0.0
    %5950 = vmatpush1.msra.mxu0 %v3036
    %5951 = vmatprep.subr.mxu0 0.0
    %5952 = vmatpush2.msra.mxu0 0.0
    %5953 = vmatprep.subr.mxu0 0.0
    %5954 = vmatpush2.msra.mxu0 0.0
    %5955 = vmatprep.subr.mxu0 0.0
    %5956 = vmatpush2.msra.mxu0 0.0
    %5957 = vmatprep.subr.mxu0 0.0
    %5958 = vmatpush2.msra.mxu0 0.0
    %5959 = vmatprep.subr.mxu0 0.0
    %5960 = vmatpush2.msra.mxu0 0.0
    %5961 = vmatprep.subr.mxu0 0.0
    %5962 = vmatpush2.msra.mxu0 0.0
    %5963 = vmatprep.subr.mxu0 0.0
    %5964 = vmatpush2.msra.mxu0 0.0
    %5965 = vmatprep.subr.mxu0 0.0
    %5966 = vmatpush2.msra.mxu0 0.0
    %5967 = vmatprep.subr.mxu0 0.0
    %5968 = vmatpush2.msra.mxu0 0.0
    %5969 = vmatprep.subr.mxu0 0.0
    %5970 = vmatpush2.msra.mxu0 0.0
    %5971 = vmatprep.subr.mxu0 0.0
    %5972 = vmatpush2.msra.mxu0 0.0
    %5973 = vmatprep.subr.mxu0 0.0
    %5974 = vmatpush2.msra.mxu0 0.0
    %5975 = vmatprep.subr.mxu0 0.0
    %5976 = vmatpush2.msra.mxu0 0.0
    %5977 = vmatprep.subr.mxu0 0.0
    %5978 = vmatpush2.msra.mxu0 0.0
    %5979 = vmatprep.subr.mxu0 0.0
    %5980 = vmatpush2.msra.mxu0 0.0
    %5981 = vmatprep.subr.mxu0 0.0
    %5982 = vmatpush2.msra.mxu0 0.0
    %5983 = vmatprep.mubr.f32.mxu0 0.0
    %5984 = vmatmul.mubr.f32.gmra.mxu0 %v5917
    %v5985 = vpop.f32.mrf.mxu0
    %v5986 = vadd.f32 %v5913, %v5985
    %v5987 = vpop.f32.mrf.mxu0
    %5988 = vdwg.mxu0
    %v5989 = vadd.f32 %v5986, %v3207
    %v5990 = vxor.u32 %v5989, 2147483648
    %v5991 = vmul.f32 %v5990, 1.442695
    %v5992 = vpow.pop %v5991
    %v5993 = vadd.f32 %v5992, 1.0
    %v5994 = vrcp.pop %v5993
    %v5995 = vmul.f32 1.0, %v5994
    %5997 = vrot.lane.b32.xlu0 %v5989, 32
    %v5998 = vpop.permute.xlu0 %5997
    %v6000 = vmul.f32 %v5995, %v5998
    %6002 = vrot.lane.b32.xlu0 %v6000, 64
    %v6003 = vpop.permute.xlu0 %6002
    %v6005 = vadd.f32 %v5989, %v6003
    %v6006 = vtanh.pop %v6005
    %v6007 = vsub.f32 1.0, %v5995
    %6009 = vrot.lane.b32.xlu0 %v6006, 96
    %v6010 = vpop.permute.xlu0 %6009
    %v6012 = vmul.f32 %v6007, %v6010
    %v6013 = vmul.f32 %v5995, %v5654
    %v6014 = vadd.f32 %v6012, %v6013
    %6016 = vrot.lane.b32.xlu0 %v6014, 96
    %v6017 = vpop.permute.xlu0 %6016
    %v6018 = vsel %vm3056, %v6017, 0
    %6020 = vmatprep.subr.mxu0 0.0
    %6021 = vmatpush1.msra.mxu0 0.0
    %6022 = vmatprep.subr.mxu0 0.0
    %6023 = vmatpush1.msra.mxu0 0.0
    %6024 = vmatprep.subr.mxu0 0.0
    %6025 = vmatpush1.msra.mxu0 0.0
    %6026 = vmatprep.subr.mxu0 0.0
    %6027 = vmatpush1.msra.mxu0 0.0
    %6028 = vmatprep.subr.mxu0 0.0
    %6029 = vmatpush1.msra.mxu0 0.0
    %6030 = vmatprep.subr.mxu0 0.0
    %6031 = vmatpush1.msra.mxu0 0.0
    %6032 = vmatprep.subr.mxu0 0.0
    %6033 = vmatpush1.msra.mxu0 0.0
    %6034 = vmatprep.subr.mxu0 0.0
    %6035 = vmatpush1.msra.mxu0 0.0
    %6036 = vmatprep.subr.mxu0 0.0
    %6037 = vmatpush1.msra.mxu0 0.0
    %6038 = vmatprep.subr.mxu0 0.0
    %6039 = vmatpush1.msra.mxu0 0.0
    %6040 = vmatprep.subr.mxu0 0.0
    %6041 = vmatpush1.msra.mxu0 0.0
    %6042 = vmatprep.subr.mxu0 0.0
    %6043 = vmatpush1.msra.mxu0 0.0
    %6044 = vmatprep.subr.mxu0 0.0
    %6045 = vmatpush1.msra.mxu0 %v3048
    %6046 = vmatprep.subr.mxu0 0.0
    %6047 = vmatpush1.msra.mxu0 %v3047
    %6048 = vmatprep.subr.mxu0 0.0
    %6049 = vmatpush1.msra.mxu0 %v3046
    %6050 = vmatprep.subr.mxu0 0.0
    %6051 = vmatpush1.msra.mxu0 %v3045
    %6052 = vmatprep.subr.mxu0 0.0
    %6053 = vmatpush2.msra.mxu0 0.0
    %6054 = vmatprep.subr.mxu0 0.0
    %6055 = vmatpush2.msra.mxu0 0.0
    %6056 = vmatprep.subr.mxu0 0.0
    %6057 = vmatpush2.msra.mxu0 0.0
    %6058 = vmatprep.subr.mxu0 0.0
    %6059 = vmatpush2.msra.mxu0 0.0
    %6060 = vmatprep.subr.mxu0 0.0
    %6061 = vmatpush2.msra.mxu0 0.0
    %6062 = vmatprep.subr.mxu0 0.0
    %6063 = vmatpush2.msra.mxu0 0.0
    %6064 = vmatprep.subr.mxu0 0.0
    %6065 = vmatpush2.msra.mxu0 0.0
    %6066 = vmatprep.subr.mxu0 0.0
    %6067 = vmatpush2.msra.mxu0 0.0
    %6068 = vmatprep.subr.mxu0 0.0
    %6069 = vmatpush2.msra.mxu0 0.0
    %6070 = vmatprep.subr.mxu0 0.0
    %6071 = vmatpush2.msra.mxu0 0.0
    %6072 = vmatprep.subr.mxu0 0.0
    %6073 = vmatpush2.msra.mxu0 0.0
    %6074 = vmatprep.subr.mxu0 0.0
    %6075 = vmatpush2.msra.mxu0 0.0
    %6076 = vmatprep.subr.mxu0 0.0
    %6077 = vmatpush2.msra.mxu0 0.0
    %6078 = vmatprep.subr.mxu0 0.0
    %6079 = vmatpush2.msra.mxu0 0.0
    %6080 = vmatprep.subr.mxu0 0.0
    %6081 = vmatpush2.msra.mxu0 0.0
    %6082 = vmatprep.subr.mxu0 0.0
    %6083 = vmatpush2.msra.mxu0 0.0
    %6084 = vmatprep.mubr.f32.mxu0 0.0
    %6085 = vmatmul.mubr.f32.gmra.mxu0 %v6018
    %v6086 = vpop.f32.mrf.mxu0
    %v6087 = vadd.f32 %v3493, %v6086
    %v6088 = vpop.f32.mrf.mxu0
    %6089 = vdwg.mxu0
    %v6090 = vsel %vm3056, %v6087, -inf
    %6091 = vmax.xlane.f32.xlu0 %v6090
    %v6092 = vpop.xlane.xlu0 %6091
    %v6093 = vsub.f32 %v6087, %v6092
    %v6094 = vmul.f32 %v6093, 1.442695
    %v6095 = vpow.pop %v6094
    %v6096 = vsel %vm3056, %v6095, 0.0
    %6097 = vadd.xlane.f32.xlu0 %v6096
    %v6098 = vpop.xlane.xlu0 %6097
    %v6099 = vlog2.pop %v6098
    %v6100 = vmul.f32 %v6099, 0.6931472
    %v6101 = vadd.f32 %v6100, %v6092
    %s6102 = scalar_lea.vmem %s14, 56
    %v6103 = vld [vmem:[%s6102] sm:$0xff]
    %6104 = vset.pattern.permute.xlu0 0
    %6105 = vperm.xlu0 %6104, %v6103
    %v6106 = vpop.permute.xlu0 %6105
    %vm6107 = vcmp.eq.s32.totalorder %v3055, %v6106
    %v6108 = vsel %vm6107, %v6087, 0.0
    %v6109 = vsel %vm3056, %v6108, 0.0
    %6110 = vadd.xlane.f32.xlu0 %v6109
    %v6111 = vpop.xlane.xlu0 %6110
    %v6112 = vsub.f32 %v6101, %v6111
    %v6113 = vsel %vm3592, %v6112, 0.0
    %6114 = vadd.xlane.f32.xlu0 %v6113
    %v6115 = vpop.xlane.xlu0 %6114
    %v6116 = vrot.slane %v6115, 4
    %v6117 = vadd.f32 %v6115, %v6116
    %v6118 = vrot.slane %v6117, 2
    %v6119 = vadd.f32 %v6117, %v6118
    %v6120 = vrot.slane %v6119, 1
    %v6121 = vadd.f32 %v6119, %v6120
    %s6122 = vtos %v6121
    %v6123 = vstv %s6122
    %v6124 = vadd.f32 %v5764, %v6123
    %v6125 = vmul.f32 %v6124, 0.125
    %vm6126 = vcmask 0
    %6127 = vst.msk [vmem:[#allocation2] sm:$0x1] %vm6126, %v6125
    // Predicated region
    $region62: #{generator_mle_loss.1} parent=1 // pred_check
      _
    $region63: #{generator_mle_loss.1} parent=1 // pred_check_branch
      %6129 = sbr.rel (0) target = $region65
    $region64: #{generator_mle_loss.1} parent=1 // pred_region
      %s6131 = ssub.s32 16, 16
      %6132 = vsyncadd [#allocation3], %s6131
      %s6134 = sshll.u32 [#allocation2], 4
      %s6135 = int_to_ptr.vmem [resolvable:$true] %s6134
      %6137 = dma.vmem_to_hbm [thread:$0]  %s6135, 16, %s15, [#allocation3]
    $region65: #{generator_mle_loss.1} parent=1 // pred_fallthru
      _
    // Predicated region
    $region66: #{generator_mle_loss.1} parent=1 // pred_check
      _
    $region67: #{generator_mle_loss.1} parent=1 // pred_check_branch
      %6139 = sbr.rel (0) target = $region69
    $region68: #{generator_mle_loss.1} parent=1 // pred_region
      %6140 = dma.done [#allocation3], 16
    $region69: #{generator_mle_loss.1} parent=1 // pred_fallthru
      _
    %6141 = vsyncpa [#allocation3], 1

</llo_original>
